<compile_context>
chip_gen: v7x
topology: tpu7x:2x2x1
jax: 0.10.0
libtpu: 0.0.40
codegen_flags: <defaults>
</compile_context>

<pallas_src>
import math

import jax
import jax.numpy as jnp
from jax.experimental import pallas as pl
from jax.experimental.pallas import tpu as pltpu


# ----------------------------------------------------------------------------
# Pallas kernels
# ----------------------------------------------------------------------------
def _knn_score_kernel(xdt_ref, xs_ref, o_ref):
    """kNN scores for one (batch, row-tile):  o[i, j] = 2<x_i, x_j> - ||x_j||^2.

    This equals -||x_i - x_j||^2 + ||x_i||^2; the dropped term is constant per
    row i, so per-row top-k ordering is identical to the true negative squared
    distance (and we avoid the cross-lane transpose of the row-norm vector).

    xdt_ref: [1, Ti, C] (dst points, rows)   xs_ref: [1, C, N] (src points, cols)
    o_ref:   [1, Ti, N]
    """
    xdt = xdt_ref[0]                                                   # [Ti, C]
    xs = xs_ref[0]                                                     # [C, N]
    inner = jnp.dot(xdt, xs, preferred_element_type=jnp.float32)       # [Ti, N]
    xx_src = jnp.sum(xs * xs, axis=0, keepdims=True)                   # [1, N]
    o_ref[0] = 2.0 * inner - xx_src


def _edgeconv_kernel(xs_ref, xd_ref, idx_ref, w1d_ref, w1cd_ref, b1_ref,
                     w2_ref, b2_ref, o_ref):
    """Fused DGCNN edge-conv: gather + edge features + 2x(Conv1x1+BN+GELU) + max over K.

    The PyTorch edge feature is concat([nei - cen, cen]) over channels; with
    W1 = [W1_d | W1_c] this gives  W1_d @ nei + (W1_c - W1_d) @ cen + b1, so only
    the gathered neighbors are needed per k and the center term is shared.

    xs_ref:  [1, C, N]    full source points (channels-first, bf16-castable)
    xd_ref:  [1, C, Ti]   this tile's center points
    idx_ref: [1, K, Ti]   neighbor indices (int32) for this tile
    w1d_ref: [Ch, C]  w1cd_ref: [Ch, C]  b1_ref: [Ch, 1]
    w2_ref:  [Cout, Ch]  b2_ref: [Cout, 1]
    o_ref:   [1, Cout, Ti]  (lane-dense)
    """
    xs = xs_ref[0].astype(jnp.bfloat16)                                # [C, N]
    xd = xd_ref[0].astype(jnp.bfloat16)                                # [C, Ti]
    idx = idx_ref[0]                                                   # [K, Ti]
    n_src = xs.shape[1]
    ti = xd.shape[1]
    k_near = idx.shape[0]

    # Per-point center term (shared by all K neighbors): (W1_c - W1_d) @ x_cen + b1.
    cen = jnp.dot(w1cd_ref[...], xd, preferred_element_type=jnp.float32) + b1_ref[...]

    src_iota = jax.lax.broadcasted_iota(jnp.int32, (n_src, ti), 0)
    acc = None
    for k in range(k_near):                                            # K is small (unrolled)
        # Lane gather of neighbor slot k as a one-hot selection matmul on the MXU.
        sel = (src_iota == idx[k:k + 1, :]).astype(jnp.bfloat16)       # [N, Ti]
        nei = jnp.dot(xs, sel, preferred_element_type=jnp.float32)     # [C, Ti] (exact copy)
        h = jnp.dot(w1d_ref[...], nei.astype(jnp.bfloat16),
                    preferred_element_type=jnp.float32) + cen          # [Ch, Ti]
        h = jax.nn.gelu(h)
        h = jnp.dot(w2_ref[...], h.astype(jnp.bfloat16),
                    preferred_element_type=jnp.float32) + b2_ref[...]  # [Cout, Ti]
        h = jax.nn.gelu(h)
        acc = h if acc is None else jnp.maximum(acc, h)
    o_ref[0] = acc


def _mlp1d_kernel(x_ref, w1_ref, b1_ref, w2_ref, b2_ref, o_ref):
    """Fused 1-D MLP (two folded Conv1d-1x1+BN+GELU), channels-first.

    x_ref: [1, Cin, Ti] -> o_ref: [1, Cout, Ti]
    """
    x = x_ref[0].astype(jnp.bfloat16)                                  # [Cin, Ti]
    h = jnp.dot(w1_ref[...], x, preferred_element_type=jnp.float32) + b1_ref[...]
    h = jax.nn.gelu(h)
    h = jnp.dot(w2_ref[...], h.astype(jnp.bfloat16),
                preferred_element_type=jnp.float32) + b2_ref[...]
    o_ref[0] = jax.nn.gelu(h)


# ----------------------------------------------------------------------------
# pallas_call wrappers
# ----------------------------------------------------------------------------
def _pick_tile(n):
    for t in (512, 256, 128):
        if n % t == 0:
            return t
    return n  # fall back to one full-row block (still a legal full-dim block)


def knn_indices(x_cf, k):
    """x_cf: [bs, C, N] channels-first -> neighbor indices [bs, K, N] (self included)."""
    bs, c, n = x_cf.shape
    x_cl = x_cf.transpose(0, 2, 1)                   # [bs, N, C] rows for the dst operand
    tile = _pick_tile(n)
    scores = pl.pallas_call(
        _knn_score_kernel,
        out_shape=jax.ShapeDtypeStruct((bs, n, n), jnp.float32),
        grid=(bs, n // tile),
        in_specs=[
            pl.BlockSpec((1, tile, c), lambda b, t: (b, t, 0)),
            pl.BlockSpec((1, c, n), lambda b, t: (b, 0, 0)),
        ],
        out_specs=pl.BlockSpec((1, tile, n), lambda b, t: (b, t, 0)),
        compiler_params=pltpu.CompilerParams(
            dimension_semantics=("parallel", "parallel")),
    )(x_cl, x_cf)
    # TODO(synk): the top-k selection itself stays in XLA; an in-kernel running
    # top-k would remove the [bs, N, N] HBM round-trip for very large N.
    _, idx = jax.lax.top_k(scores, k)                # [bs, N, K]
    return idx.transpose(0, 2, 1)                    # [bs, K, N] (lane axis = points)


def edgeconv(x, idx, p):
    """x: [bs, C, N], idx: [bs, K, N] -> [bs, Cout, N] (fused gather+MLP+max)."""
    bs, c, n = x.shape
    k = idx.shape[1]
    ch = p["w1d"].shape[0]
    cout = p["w2"].shape[0]
    tile = _pick_tile(n)
    return pl.pallas_call(
        _edgeconv_kernel,
        out_shape=jax.ShapeDtypeStruct((bs, cout, n), jnp.float32),
        grid=(bs, n // tile),
        in_specs=[
            pl.BlockSpec((1, c, n), lambda b, t: (b, 0, 0)),       # x (full source)
            pl.BlockSpec((1, c, tile), lambda b, t: (b, 0, t)),    # x (center tile)
            pl.BlockSpec((1, k, tile), lambda b, t: (b, 0, t)),    # neighbor indices
            pl.BlockSpec((ch, c), lambda b, t: (0, 0)),            # w1 (difference half)
            pl.BlockSpec((ch, c), lambda b, t: (0, 0)),            # w1_cen - w1_diff
            pl.BlockSpec((ch, 1), lambda b, t: (0, 0)),            # b1
            pl.BlockSpec((cout, ch), lambda b, t: (0, 0)),         # w2
            pl.BlockSpec((cout, 1), lambda b, t: (0, 0)),          # b2
        ],
        out_specs=pl.BlockSpec((1, cout, tile), lambda b, t: (b, 0, t)),
        compiler_params=pltpu.CompilerParams(
            dimension_semantics=("parallel", "parallel")),
    )(x, x, idx, p["w1d"], p["w1cd"], p["b1"], p["w2"], p["b2"])


def mlp1d(x, p):
    """x: [bs, Cin, N] -> [bs, Cout, N]."""
    bs, cin, n = x.shape
    ch = p["w1"].shape[0]
    cout = p["w2"].shape[0]
    tile = _pick_tile(n)
    return pl.pallas_call(
        _mlp1d_kernel,
        out_shape=jax.ShapeDtypeStruct((bs, cout, n), jnp.float32),
        grid=(bs, n // tile),
        in_specs=[
            pl.BlockSpec((1, cin, tile), lambda b, t: (b, 0, t)),
            pl.BlockSpec((ch, cin), lambda b, t: (0, 0)),
            pl.BlockSpec((ch, 1), lambda b, t: (0, 0)),
            pl.BlockSpec((cout, ch), lambda b, t: (0, 0)),
            pl.BlockSpec((cout, 1), lambda b, t: (0, 0)),
        ],
        out_specs=pl.BlockSpec((1, cout, tile), lambda b, t: (b, 0, t)),
        compiler_params=pltpu.CompilerParams(
            dimension_semantics=("parallel", "parallel")),
    )(x, p["w1"], p["b1"], p["w2"], p["b2"])


# ----------------------------------------------------------------------------
# Parameters (deterministic, shapes match the module __init__; BN folded at init)
# ----------------------------------------------------------------------------
def gcn_channel_sizes(emb_in, emb_out):
    emb_inc = (emb_out / (4 * emb_in)) ** 0.25
    l1_0 = emb_in * 2
    l1_1 = int(l1_0 * emb_inc)
    l1_2 = int(l1_0 * emb_inc ** 2)
    l2_0 = l1_2 * 2
    l2_1 = int(l2_0 * emb_inc)
    l2_2 = emb_out
    l3_0 = l2_2 + l1_2
    l3_1 = int((emb_out / l3_0) ** 0.5 * l3_0)
    l3_2 = emb_out
    return (l1_0, l1_1, l1_2), (l2_0, l2_1, l2_2), (l3_0, l3_1, l3_2)


def _init_conv_bn(key, cin, cout):
    """1x1 conv (PyTorch-style uniform init, [out, in]) with eval-mode BN folded in."""
    kw, kb = jax.random.split(key)
    bound = 1.0 / math.sqrt(cin)
    w = jax.random.uniform(kw, (cout, cin), jnp.float32, -bound, bound)
    b = jax.random.uniform(kb, (cout,), jnp.float32, -bound, bound)
    scale = 1.0 / math.sqrt(1.0 + 1e-5)   # BN init: gamma=1, beta=0, mean=0, var=1
    return w * scale, (b * scale).reshape(cout, 1)


def init_gcn_params(key, emb_in, emb_out):
    (l1_0, l1_1, l1_2), (l2_0, l2_1, l2_2), (l3_0, l3_1, l3_2) = gcn_channel_sizes(
        emb_in, emb_out)
    ks = jax.random.split(key, 6)

    def edge_layer(k0, k1, c2, ch, cout):
        w1, b1 = _init_conv_bn(k0, c2, ch)              # [ch, 2C]
        w2, b2 = _init_conv_bn(k1, ch, cout)
        c = c2 // 2
        w1d = w1[:, :c]                                  # acts on (neighbor - center)
        w1c = w1[:, c:]                                  # acts on center
        return dict(w1d=w1d.astype(jnp.bfloat16),
                    w1cd=(w1c - w1d).astype(jnp.bfloat16),
                    b1=b1,
                    w2=w2.astype(jnp.bfloat16), b2=b2)

    def mlp_layer(k0, k1, cin, ch, cout):
        w1, b1 = _init_conv_bn(k0, cin, ch)
        w2, b2 = _init_conv_bn(k1, ch, cout)
        return dict(w1=w1.astype(jnp.bfloat16), b1=b1,
                    w2=w2.astype(jnp.bfloat16), b2=b2)

    return {
        "conv1": edge_layer(ks[0], ks[1], l1_0, l1_1, l1_2),
        "conv2": edge_layer(ks[2], ks[3], l2_0, l2_1, l2_2),
        "conv3": mlp_layer(ks[4], ks[5], l3_0, l3_1, l3_2),
    }


# ----------------------------------------------------------------------------
# GCNEncoder forward
# ----------------------------------------------------------------------------
def gcn_encoder_forward(x, params, n_near):
    """x: [bs, emb_in, n_point] -> [bs, emb_out, n_point] (PyTorch channels-first)."""
    idx = knn_indices(x, n_near)                 # [bs, K, N]
    x1 = edgeconv(x, idx, params["conv1"])       # [bs, l1_2, N]
    idx = knn_indices(x1, n_near)
    x2 = edgeconv(x1, idx, params["conv2"])      # [bs, emb_out, N]
    xc = jnp.concatenate([x1, x2], axis=1)       # [bs, l1_2 + emb_out, N]
    return mlp1d(xc, params["conv3"])            # [bs, emb_out, N]


if __name__ == "__main__":
    key = jax.random.PRNGKey(0)
    bs, n_point = 2, 128
    emb_in, emb_out, n_near = 2, 32, 10

    k_x, k_p = jax.random.split(key)
    x = jax.random.normal(k_x, (bs, emb_in, n_point), jnp.float32)
    params = init_gcn_params(k_p, emb_in, emb_out)

    fwd = jax.jit(lambda a: gcn_encoder_forward(a, params, n_near))
    out = jax.block_until_ready(fwd(x))

    assert out.shape == (bs, emb_out, n_point), out.shape
    assert out.dtype == jnp.float32
    assert bool(jnp.all(jnp.isfinite(out)))
    print("KERNEL_OK")
</pallas_src>

<mosaic_0001>
module attributes {stable_mosaic.version = 11 : i64} {
  func.func @_knn_score_kernel(%arg0: i32, %arg1: i32, %arg2: memref<1x128x2xf32, #tpu.memory_space<vmem>>, %arg3: memref<1x2x128xf32, #tpu.memory_space<vmem>>, %arg4: memref<1x128x128xf32, #tpu.memory_space<vmem>>) attributes {dimension_semantics = [#tpu.dimension_semantics<parallel>, #tpu.dimension_semantics<parallel>], iteration_bounds = array<i64: 2, 1>, scalar_prefetch = 0 : i64, scratch_operands = 0 : i64, tpu.core_type = #tpu.core_type<tc>, window_params = [{transform_indices = @transform_0, window_bounds = array<i64: 1, 128, 2>}, {transform_indices = @transform_1, window_bounds = array<i64: 1, 2, 128>}, {transform_indices = @transform_2, window_bounds = array<i64: 1, 128, 128>}]} {
    %c0 = arith.constant 0 : index
    %c0_0 = arith.constant 0 : index
    %c0_1 = arith.constant 0 : index
    %0 = vector.load %arg2[%c0, %c0_0, %c0_1] : memref<1x128x2xf32, #tpu.memory_space<vmem>>, vector<1x128x2xf32>
    %1 = vector.shape_cast %0 : vector<1x128x2xf32> to vector<128x2xf32>
    %c0_2 = arith.constant 0 : index
    %c0_3 = arith.constant 0 : index
    %c0_4 = arith.constant 0 : index
    %2 = vector.load %arg3[%c0_2, %c0_3, %c0_4] : memref<1x2x128xf32, #tpu.memory_space<vmem>>, vector<1x2x128xf32>
    %3 = vector.shape_cast %2 : vector<1x2x128xf32> to vector<2x128xf32>
    %cst = arith.constant dense<0.000000e+00> : vector<128x128xf32>
    %4 = tpu.matmul %1, %3, %cst {dimension_numbers = #tpu.dot_dimension_numbers<[1], [0], [0], [1], [0, 0, 1, 1], [], []>} : vector<128x2xf32>, vector<2x128xf32>, vector<128x128xf32> -> vector<128x128xf32>
    %5 = arith.mulf %3, %3 : vector<2x128xf32>
    %cst_5 = arith.constant dense<0.000000e+00> : vector<128xf32>
    %6 = vector.multi_reduction <add>, %5, %cst_5 [0] : vector<2x128xf32> to vector<128xf32>
    %7 = vector.shape_cast %6 : vector<128xf32> to vector<1x128xf32>
    %cst_6 = arith.constant 2.000000e+00 : f32
    %8 = vector.broadcast %cst_6 : f32 to vector<128x128xf32>
    %9 = arith.mulf %8, %4 : vector<128x128xf32>
    %10 = vector.broadcast %7 : vector<1x128xf32> to vector<128x128xf32>
    %11 = arith.subf %9, %10 : vector<128x128xf32>
    %c0_7 = arith.constant 0 : index
    %c0_8 = arith.constant 0 : index
    %c0_9 = arith.constant 0 : index
    %12 = vector.load %arg4[%c0_7, %c0_8, %c0_9] : memref<1x128x128xf32, #tpu.memory_space<vmem>>, vector<1x128x128xf32>
    %13 = vector.shape_cast %12 : vector<1x128x128xf32> to vector<128x128xf32>
    %14 = vector.shape_cast %11 : vector<128x128xf32> to vector<1x128x128xf32>
    tpu.vector_store %arg4[%c0_7, %c0_8, %c0_9], %14 {strides = array<i32>} : memref<1x128x128xf32, #tpu.memory_space<vmem>>, vector<1x128x128xf32>,
    return
  }
  func.func @transform_0(%arg0: i32, %arg1: i32) -> (i32, i32, i32) {
    %c0_i32 = arith.constant 0 : i32
    %c0_i32_0 = arith.constant 0 : i32
    return %arg0, %arg1, %c0_i32 : i32, i32, i32
  }
  func.func @transform_1(%arg0: i32, %arg1: i32) -> (i32, i32, i32) {
    %c0_i32 = arith.constant 0 : i32
    %c0_i32_0 = arith.constant 0 : i32
    %c0_i32_1 = arith.constant 0 : i32
    return %arg0, %c0_i32, %c0_i32_0 : i32, i32, i32
  }
  func.func @transform_2(%arg0: i32, %arg1: i32) -> (i32, i32, i32) {
    %c0_i32 = arith.constant 0 : i32
    %c0_i32_0 = arith.constant 0 : i32
    return %arg0, %arg1, %c0_i32 : i32, i32, i32
  }
}

module attributes {stable_mosaic.version = 11 : i64} {
  func.func @_edgeconv_kernel(%arg0: i32, %arg1: i32, %arg2: memref<1x2x128xf32, #tpu.memory_space<vmem>>, %arg3: memref<1x2x128xf32, #tpu.memory_space<vmem>>, %arg4: memref<1x10x128xi32, #tpu.memory_space<vmem>>, %arg5: memref<5x2xbf16, #tpu.memory_space<vmem>>, %arg6: memref<5x2xbf16, #tpu.memory_space<vmem>>, %arg7: memref<5x1xf32, #tpu.memory_space<vmem>>, %arg8: memref<8x5xbf16, #tpu.memory_space<vmem>>, %arg9: memref<8x1xf32, #tpu.memory_space<vmem>>, %arg10: memref<1x8x128xf32, #tpu.memory_space<vmem>>) attributes {dimension_semantics = [#tpu.dimension_semantics<parallel>, #tpu.dimension_semantics<parallel>], iteration_bounds = array<i64: 2, 1>, scalar_prefetch = 0 : i64, scratch_operands = 0 : i64, tpu.core_type = #tpu.core_type<tc>, window_params = [{transform_indices = @transform_0, window_bounds = array<i64: 1, 2, 128>}, {transform_indices = @transform_1, window_bounds = array<i64: 1, 2, 128>}, {transform_indices = @transform_2, window_bounds = array<i64: 1, 10, 128>}, {pipeline_mode = #tpu.pipeline_mode<synchronous>, transform_indices = @transform_3, window_bounds = array<i64: 5, 2>}, {pipeline_mode = #tpu.pipeline_mode<synchronous>, transform_indices = @transform_4, window_bounds = array<i64: 5, 2>}, {pipeline_mode = #tpu.pipeline_mode<synchronous>, transform_indices = @transform_5, window_bounds = array<i64: 5, 1>}, {pipeline_mode = #tpu.pipeline_mode<synchronous>, transform_indices = @transform_6, window_bounds = array<i64: 8, 5>}, {pipeline_mode = #tpu.pipeline_mode<synchronous>, transform_indices = @transform_7, window_bounds = array<i64: 8, 1>}, {transform_indices = @transform_8, window_bounds = array<i64: 1, 8, 128>}]} {
    %c0 = arith.constant 0 : index
    %c0_0 = arith.constant 0 : index
    %c0_1 = arith.constant 0 : index
    %0 = vector.load %arg2[%c0, %c0_0, %c0_1] : memref<1x2x128xf32, #tpu.memory_space<vmem>>, vector<1x2x128xf32>
    %1 = vector.shape_cast %0 : vector<1x2x128xf32> to vector<2x128xf32>
    %2 = arith.truncf %1 : vector<2x128xf32> to vector<2x128xbf16>
    %c0_2 = arith.constant 0 : index
    %c0_3 = arith.constant 0 : index
    %c0_4 = arith.constant 0 : index
    %3 = vector.load %arg3[%c0_2, %c0_3, %c0_4] : memref<1x2x128xf32, #tpu.memory_space<vmem>>, vector<1x2x128xf32>
    %4 = vector.shape_cast %3 : vector<1x2x128xf32> to vector<2x128xf32>
    %5 = arith.truncf %4 : vector<2x128xf32> to vector<2x128xbf16>
    %c0_5 = arith.constant 0 : index
    %c0_6 = arith.constant 0 : index
    %c0_7 = arith.constant 0 : index
    %6 = vector.load %arg4[%c0_5, %c0_6, %c0_7] : memref<1x10x128xi32, #tpu.memory_space<vmem>>, vector<1x10x128xi32>
    %7 = vector.shape_cast %6 : vector<1x10x128xi32> to vector<10x128xi32>
    %c0_8 = arith.constant 0 : index
    %c0_9 = arith.constant 0 : index
    %8 = vector.load %arg6[%c0_8, %c0_9] : memref<5x2xbf16, #tpu.memory_space<vmem>>, vector<5x2xbf16>
    %cst = arith.constant dense<0.000000e+00> : vector<5x128xf32>
    %9 = tpu.matmul %8, %5, %cst {dimension_numbers = #tpu.dot_dimension_numbers<[1], [0], [0], [1], [0, 0, 1, 1], [], []>} : vector<5x2xbf16>, vector<2x128xbf16>, vector<5x128xf32> -> vector<5x128xf32>
    %c0_10 = arith.constant 0 : index
    %c0_11 = arith.constant 0 : index
    %10 = vector.load %arg7[%c0_10, %c0_11] : memref<5x1xf32, #tpu.memory_space<vmem>>, vector<5x1xf32>
    %11 = vector.broadcast %10 : vector<5x1xf32> to vector<5x128xf32>
    %12 = arith.addf %9, %11 : vector<5x128xf32>
    %13 = tpu.iota {dimensions = array<i32: 0>} : vector<128x128xi32>
    %14 = vector.extract_strided_slice %7 {offsets = [0, 0], sizes = [1, 128], strides = [1, 1]} : vector<10x128xi32> to vector<1x128xi32>
    %15 = vector.broadcast %14 : vector<1x128xi32> to vector<128x128xi32>
    %16 = arith.cmpi eq, %13, %15 : vector<128x128xi32>
    %17 = arith.extui %16 : vector<128x128xi1> to vector<128x128xi32>
    %18 = arith.sitofp %17 : vector<128x128xi32> to vector<128x128xf32>
    %19 = arith.truncf %18 : vector<128x128xf32> to vector<128x128xbf16>
    %cst_12 = arith.constant dense<0.000000e+00> : vector<2x128xf32>
    %20 = tpu.matmul %2, %19, %cst_12 {dimension_numbers = #tpu.dot_dimension_numbers<[1], [0], [0], [1], [0, 0, 1, 1], [], []>} : vector<2x128xbf16>, vector<128x128xbf16>, vector<2x128xf32> -> vector<2x128xf32>
    %c0_13 = arith.constant 0 : index
    %c0_14 = arith.constant 0 : index
    %21 = vector.load %arg5[%c0_13, %c0_14] : memref<5x2xbf16, #tpu.memory_space<vmem>>, vector<5x2xbf16>
    %22 = arith.truncf %20 : vector<2x128xf32> to vector<2x128xbf16>
    %cst_15 = arith.constant dense<0.000000e+00> : vector<5x128xf32>
    %23 = tpu.matmul %21, %22, %cst_15 {dimension_numbers = #tpu.dot_dimension_numbers<[1], [0], [0], [1], [0, 0, 1, 1], [], []>} : vector<5x2xbf16>, vector<2x128xbf16>, vector<5x128xf32> -> vector<5x128xf32>
    %24 = arith.addf %23, %12 : vector<5x128xf32>
    %25 = arith.mulf %24, %24 : vector<5x128xf32>
    %26 = arith.mulf %24, %25 : vector<5x128xf32>
    %cst_16 = arith.constant 4.471500e-02 : f32
    %27 = vector.broadcast %cst_16 : f32 to vector<5x128xf32>
    %28 = arith.mulf %27, %26 : vector<5x128xf32>
    %29 = arith.addf %24, %28 : vector<5x128xf32>
    %cst_17 = arith.constant 0.797884583 : f32
    %30 = vector.broadcast %cst_17 : f32 to vector<5x128xf32>
    %31 = arith.mulf %30, %29 : vector<5x128xf32>
    %32 = math.tanh %31 : vector<5x128xf32>
    %cst_18 = arith.constant 1.000000e+00 : f32
    %33 = vector.broadcast %cst_18 : f32 to vector<5x128xf32>
    %34 = arith.addf %33, %32 : vector<5x128xf32>
    %cst_19 = arith.constant 5.000000e-01 : f32
    %35 = vector.broadcast %cst_19 : f32 to vector<5x128xf32>
    %36 = arith.mulf %35, %34 : vector<5x128xf32>
    %37 = arith.mulf %24, %36 : vector<5x128xf32>
    %c0_20 = arith.constant 0 : index
    %c0_21 = arith.constant 0 : index
    %38 = vector.load %arg8[%c0_20, %c0_21] : memref<8x5xbf16, #tpu.memory_space<vmem>>, vector<8x5xbf16>
    %39 = arith.truncf %37 : vector<5x128xf32> to vector<5x128xbf16>
    %cst_22 = arith.constant dense<0.000000e+00> : vector<8x128xf32>
    %40 = tpu.matmul %38, %39, %cst_22 {dimension_numbers = #tpu.dot_dimension_numbers<[1], [0], [0], [1], [0, 0, 1, 1], [], []>} : vector<8x5xbf16>, vector<5x128xbf16>, vector<8x128xf32> -> vector<8x128xf32>
    %c0_23 = arith.constant 0 : index
    %c0_24 = arith.constant 0 : index
    %41 = vector.load %arg9[%c0_23, %c0_24] : memref<8x1xf32, #tpu.memory_space<vmem>>, vector<8x1xf32>
    %42 = vector.broadcast %41 : vector<8x1xf32> to vector<8x128xf32>
    %43 = arith.addf %40, %42 : vector<8x128xf32>
    %44 = arith.mulf %43, %43 : vector<8x128xf32>
    %45 = arith.mulf %43, %44 : vector<8x128xf32>
    %cst_25 = arith.constant 4.471500e-02 : f32
    %46 = vector.broadcast %cst_25 : f32 to vector<8x128xf32>
    %47 = arith.mulf %46, %45 : vector<8x128xf32>
    %48 = arith.addf %43, %47 : vector<8x128xf32>
    %cst_26 = arith.constant 0.797884583 : f32
    %49 = vector.broadcast %cst_26 : f32 to vector<8x128xf32>
    %50 = arith.mulf %49, %48 : vector<8x128xf32>
    %51 = math.tanh %50 : vector<8x128xf32>
    %cst_27 = arith.constant 1.000000e+00 : f32
    %52 = vector.broadcast %cst_27 : f32 to vector<8x128xf32>
    %53 = arith.addf %52, %51 : vector<8x128xf32>
    %cst_28 = arith.constant 5.000000e-01 : f32
    %54 = vector.broadcast %cst_28 : f32 to vector<8x128xf32>
    %55 = arith.mulf %54, %53 : vector<8x128xf32>
    %56 = arith.mulf %43, %55 : vector<8x128xf32>
    %57 = vector.extract_strided_slice %7 {offsets = [1, 0], sizes = [1, 128], strides = [1, 1]} : vector<10x128xi32> to vector<1x128xi32>
    %58 = vector.broadcast %57 : vector<1x128xi32> to vector<128x128xi32>
    %59 = arith.cmpi eq, %13, %58 : vector<128x128xi32>
    %60 = arith.extui %59 : vector<128x128xi1> to vector<128x128xi32>
    %61 = arith.sitofp %60 : vector<128x128xi32> to vector<128x128xf32>
    %62 = arith.truncf %61 : vector<128x128xf32> to vector<128x128xbf16>
    %cst_29 = arith.constant dense<0.000000e+00> : vector<2x128xf32>
    %63 = tpu.matmul %2, %62, %cst_29 {dimension_numbers = #tpu.dot_dimension_numbers<[1], [0], [0], [1], [0, 0, 1, 1], [], []>} : vector<2x128xbf16>, vector<128x128xbf16>, vector<2x128xf32> -> vector<2x128xf32>
    %c0_30 = arith.constant 0 : index
    %c0_31 = arith.constant 0 : index
    %64 = vector.load %arg5[%c0_30, %c0_31] : memref<5x2xbf16, #tpu.memory_space<vmem>>, vector<5x2xbf16>
    %65 = arith.truncf %63 : vector<2x128xf32> to vector<2x128xbf16>
    %cst_32 = arith.constant dense<0.000000e+00> : vector<5x128xf32>
    %66 = tpu.matmul %64, %65, %cst_32 {dimension_numbers = #tpu.dot_dimension_numbers<[1], [0], [0], [1], [0, 0, 1, 1], [], []>} : vector<5x2xbf16>, vector<2x128xbf16>, vector<5x128xf32> -> vector<5x128xf32>
    %67 = arith.addf %66, %12 : vector<5x128xf32>
    %68 = arith.mulf %67, %67 : vector<5x128xf32>
    %69 = arith.mulf %67, %68 : vector<5x128xf32>
    %cst_33 = arith.constant 4.471500e-02 : f32
    %70 = vector.broadcast %cst_33 : f32 to vector<5x128xf32>
    %71 = arith.mulf %70, %69 : vector<5x128xf32>
    %72 = arith.addf %67, %71 : vector<5x128xf32>
    %cst_34 = arith.constant 0.797884583 : f32
    %73 = vector.broadcast %cst_34 : f32 to vector<5x128xf32>
    %74 = arith.mulf %73, %72 : vector<5x128xf32>
    %75 = math.tanh %74 : vector<5x128xf32>
    %cst_35 = arith.constant 1.000000e+00 : f32
    %76 = vector.broadcast %cst_35 : f32 to vector<5x128xf32>
    %77 = arith.addf %76, %75 : vector<5x128xf32>
    %cst_36 = arith.constant 5.000000e-01 : f32
    %78 = vector.broadcast %cst_36 : f32 to vector<5x128xf32>
    %79 = arith.mulf %78, %77 : vector<5x128xf32>
    %80 = arith.mulf %67, %79 : vector<5x128xf32>
    %c0_37 = arith.constant 0 : index
    %c0_38 = arith.constant 0 : index
    %81 = vector.load %arg8[%c0_37, %c0_38] : memref<8x5xbf16, #tpu.memory_space<vmem>>, vector<8x5xbf16>
    %82 = arith.truncf %80 : vector<5x128xf32> to vector<5x128xbf16>
    %cst_39 = arith.constant dense<0.000000e+00> : vector<8x128xf32>
    %83 = tpu.matmul %81, %82, %cst_39 {dimension_numbers = #tpu.dot_dimension_numbers<[1], [0], [0], [1], [0, 0, 1, 1], [], []>} : vector<8x5xbf16>, vector<5x128xbf16>, vector<8x128xf32> -> vector<8x128xf32>
    %c0_40 = arith.constant 0 : index
    %c0_41 = arith.constant 0 : index
    %84 = vector.load %arg9[%c0_40, %c0_41] : memref<8x1xf32, #tpu.memory_space<vmem>>, vector<8x1xf32>
    %85 = vector.broadcast %84 : vector<8x1xf32> to vector<8x128xf32>
    %86 = arith.addf %83, %85 : vector<8x128xf32>
    %87 = arith.mulf %86, %86 : vector<8x128xf32>
    %88 = arith.mulf %86, %87 : vector<8x128xf32>
    %cst_42 = arith.constant 4.471500e-02 : f32
    %89 = vector.broadcast %cst_42 : f32 to vector<8x128xf32>
    %90 = arith.mulf %89, %88 : vector<8x128xf32>
    %91 = arith.addf %86, %90 : vector<8x128xf32>
    %cst_43 = arith.constant 0.797884583 : f32
    %92 = vector.broadcast %cst_43 : f32 to vector<8x128xf32>
    %93 = arith.mulf %92, %91 : vector<8x128xf32>
    %94 = math.tanh %93 : vector<8x128xf32>
    %cst_44 = arith.constant 1.000000e+00 : f32
    %95 = vector.broadcast %cst_44 : f32 to vector<8x128xf32>
    %96 = arith.addf %95, %94 : vector<8x128xf32>
    %cst_45 = arith.constant 5.000000e-01 : f32
    %97 = vector.broadcast %cst_45 : f32 to vector<8x128xf32>
    %98 = arith.mulf %97, %96 : vector<8x128xf32>
    %99 = arith.mulf %86, %98 : vector<8x128xf32>
    %100 = arith.maximumf %56, %99 : vector<8x128xf32>
    %101 = vector.extract_strided_slice %7 {offsets = [2, 0], sizes = [1, 128], strides = [1, 1]} : vector<10x128xi32> to vector<1x128xi32>
    %102 = vector.broadcast %101 : vector<1x128xi32> to vector<128x128xi32>
    %103 = arith.cmpi eq, %13, %102 : vector<128x128xi32>
    %104 = arith.extui %103 : vector<128x128xi1> to vector<128x128xi32>
    %105 = arith.sitofp %104 : vector<128x128xi32> to vector<128x128xf32>
    %106 = arith.truncf %105 : vector<128x128xf32> to vector<128x128xbf16>
    %cst_46 = arith.constant dense<0.000000e+00> : vector<2x128xf32>
    %107 = tpu.matmul %2, %106, %cst_46 {dimension_numbers = #tpu.dot_dimension_numbers<[1], [0], [0], [1], [0, 0, 1, 1], [], []>} : vector<2x128xbf16>, vector<128x128xbf16>, vector<2x128xf32> -> vector<2x128xf32>
    %c0_47 = arith.constant 0 : index
    %c0_48 = arith.constant 0 : index
    %108 = vector.load %arg5[%c0_47, %c0_48] : memref<5x2xbf16, #tpu.memory_space<vmem>>, vector<5x2xbf16>
    %109 = arith.truncf %107 : vector<2x128xf32> to vector<2x128xbf16>
    %cst_49 = arith.constant dense<0.000000e+00> : vector<5x128xf32>
    %110 = tpu.matmul %108, %109, %cst_49 {dimension_numbers = #tpu.dot_dimension_numbers<[1], [0], [0], [1], [0, 0, 1, 1], [], []>} : vector<5x2xbf16>, vector<2x128xbf16>, vector<5x128xf32> -> vector<5x128xf32>
    %111 = arith.addf %110, %12 : vector<5x128xf32>
    %112 = arith.mulf %111, %111 : vector<5x128xf32>
    %113 = arith.mulf %111, %112 : vector<5x128xf32>
    %cst_50 = arith.constant 4.471500e-02 : f32
    %114 = vector.broadcast %cst_50 : f32 to vector<5x128xf32>
    %115 = arith.mulf %114, %113 : vector<5x128xf32>
    %116 = arith.addf %111, %115 : vector<5x128xf32>
    %cst_51 = arith.constant 0.797884583 : f32
    %117 = vector.broadcast %cst_51 : f32 to vector<5x128xf32>
    %118 = arith.mulf %117, %116 : vector<5x128xf32>
    %119 = math.tanh %118 : vector<5x128xf32>
    %cst_52 = arith.constant 1.000000e+00 : f32
    %120 = vector.broadcast %cst_52 : f32 to vector<5x128xf32>
    %121 = arith.addf %120, %119 : vector<5x128xf32>
    %cst_53 = arith.constant 5.000000e-01 : f32
    %122 = vector.broadcast %cst_53 : f32 to vector<5x128xf32>
    %123 = arith.mulf %122, %121 : vector<5x128xf32>
    %124 = arith.mulf %111, %123 : vector<5x128xf32>
    %c0_54 = arith.constant 0 : index
    %c0_55 = arith.constant 0 : index
    %125 = vector.load %arg8[%c0_54, %c0_55] : memref<8x5xbf16, #tpu.memory_space<vmem>>, vector<8x5xbf16>
    %126 = arith.truncf %124 : vector<5x128xf32> to vector<5x128xbf16>
    %cst_56 = arith.constant dense<0.000000e+00> : vector<8x128xf32>
    %127 = tpu.matmul %125, %126, %cst_56 {dimension_numbers = #tpu.dot_dimension_numbers<[1], [0], [0], [1], [0, 0, 1, 1], [], []>} : vector<8x5xbf16>, vector<5x128xbf16>, vector<8x128xf32> -> vector<8x128xf32>
    %c0_57 = arith.constant 0 : index
    %c0_58 = arith.constant 0 : index
    %128 = vector.load %arg9[%c0_57, %c0_58] : memref<8x1xf32, #tpu.memory_space<vmem>>, vector<8x1xf32>
    %129 = vector.broadcast %128 : vector<8x1xf32> to vector<8x128xf32>
    %130 = arith.addf %127, %129 : vector<8x128xf32>
    %131 = arith.mulf %130, %130 : vector<8x128xf32>
    %132 = arith.mulf %130, %131 : vector<8x128xf32>
    %cst_59 = arith.constant 4.471500e-02 : f32
    %133 = vector.broadcast %cst_59 : f32 to vector<8x128xf32>
    %134 = arith.mulf %133, %132 : vector<8x128xf32>
    %135 = arith.addf %130, %134 : vector<8x128xf32>
    %cst_60 = arith.constant 0.797884583 : f32
    %136 = vector.broadcast %cst_60 : f32 to vector<8x128xf32>
    %137 = arith.mulf %136, %135 : vector<8x128xf32>
    %138 = math.tanh %137 : vector<8x128xf32>
    %cst_61 = arith.constant 1.000000e+00 : f32
    %139 = vector.broadcast %cst_61 : f32 to vector<8x128xf32>
    %140 = arith.addf %139, %138 : vector<8x128xf32>
    %cst_62 = arith.constant 5.000000e-01 : f32
    %141 = vector.broadcast %cst_62 : f32 to vector<8x128xf32>
    %142 = arith.mulf %141, %140 : vector<8x128xf32>
    %143 = arith.mulf %130, %142 : vector<8x128xf32>
    %144 = arith.maximumf %100, %143 : vector<8x128xf32>
    %145 = vector.extract_strided_slice %7 {offsets = [3, 0], sizes = [1, 128], strides = [1, 1]} : vector<10x128xi32> to vector<1x128xi32>
    %146 = vector.broadcast %145 : vector<1x128xi32> to vector<128x128xi32>
    %147 = arith.cmpi eq, %13, %146 : vector<128x128xi32>
    %148 = arith.extui %147 : vector<128x128xi1> to vector<128x128xi32>
    %149 = arith.sitofp %148 : vector<128x128xi32> to vector<128x128xf32>
    %150 = arith.truncf %149 : vector<128x128xf32> to vector<128x128xbf16>
    %cst_63 = arith.constant dense<0.000000e+00> : vector<2x128xf32>
    %151 = tpu.matmul %2, %150, %cst_63 {dimension_numbers = #tpu.dot_dimension_numbers<[1], [0], [0], [1], [0, 0, 1, 1], [], []>} : vector<2x128xbf16>, vector<128x128xbf16>, vector<2x128xf32> -> vector<2x128xf32>
    %c0_64 = arith.constant 0 : index
    %c0_65 = arith.constant 0 : index
    %152 = vector.load %arg5[%c0_64, %c0_65] : memref<5x2xbf16, #tpu.memory_space<vmem>>, vector<5x2xbf16>
    %153 = arith.truncf %151 : vector<2x128xf32> to vector<2x128xbf16>
    %cst_66 = arith.constant dense<0.000000e+00> : vector<5x128xf32>
    %154 = tpu.matmul %152, %153, %cst_66 {dimension_numbers = #tpu.dot_dimension_numbers<[1], [0], [0], [1], [0, 0, 1, 1], [], []>} : vector<5x2xbf16>, vector<2x128xbf16>, vector<5x128xf32> -> vector<5x128xf32>
    %155 = arith.addf %154, %12 : vector<5x128xf32>
    %156 = arith.mulf %155, %155 : vector<5x128xf32>
    %157 = arith.mulf %155, %156 : vector<5x128xf32>
    %cst_67 = arith.constant 4.471500e-02 : f32
    %158 = vector.broadcast %cst_67 : f32 to vector<5x128xf32>
    %159 = arith.mulf %158, %157 : vector<5x128xf32>
    %160 = arith.addf %155, %159 : vector<5x128xf32>
    %cst_68 = arith.constant 0.797884583 : f32
    %161 = vector.broadcast %cst_68 : f32 to vector<5x128xf32>
    %162 = arith.mulf %161, %160 : vector<5x128xf32>
    %163 = math.tanh %162 : vector<5x128xf32>
    %cst_69 = arith.constant 1.000000e+00 : f32
    %164 = vector.broadcast %cst_69 : f32 to vector<5x128xf32>
    %165 = arith.addf %164, %163 : vector<5x128xf32>
    %cst_70 = arith.constant 5.000000e-01 : f32
    %166 = vector.broadcast %cst_70 : f32 to vector<5x128xf32>
    %167 = arith.mulf %166, %165 : vector<5x128xf32>
    %168 = arith.mulf %155, %167 : vector<5x128xf32>
    %c0_71 = arith.constant 0 : index
    %c0_72 = arith.constant 0 : index
    %169 = vector.load %arg8[%c0_71, %c0_72] : memref<8x5xbf16, #tpu.memory_space<vmem>>, vector<8x5xbf16>
    %170 = arith.truncf %168 : vector<5x128xf32> to vector<5x128xbf16>
    %cst_73 = arith.constant dense<0.000000e+00> : vector<8x128xf32>
    %171 = tpu.matmul %169, %170, %cst_73 {dimension_numbers = #tpu.dot_dimension_numbers<[1], [0], [0], [1], [0, 0, 1, 1], [], []>} : vector<8x5xbf16>, vector<5x128xbf16>, vector<8x128xf32> -> vector<8x128xf32>
    %c0_74 = arith.constant 0 : index
    %c0_75 = arith.constant 0 : index
    %172 = vector.load %arg9[%c0_74, %c0_75] : memref<8x1xf32, #tpu.memory_space<vmem>>, vector<8x1xf32>
    %173 = vector.broadcast %172 : vector<8x1xf32> to vector<8x128xf32>
    %174 = arith.addf %171, %173 : vector<8x128xf32>
    %175 = arith.mulf %174, %174 : vector<8x128xf32>
    %176 = arith.mulf %174, %175 : vector<8x128xf32>
    %cst_76 = arith.constant 4.471500e-02 : f32
    %177 = vector.broadcast %cst_76 : f32 to vector<8x128xf32>
    %178 = arith.mulf %177, %176 : vector<8x128xf32>
    %179 = arith.addf %174, %178 : vector<8x128xf32>
    %cst_77 = arith.constant 0.797884583 : f32
    %180 = vector.broadcast %cst_77 : f32 to vector<8x128xf32>
    %181 = arith.mulf %180, %179 : vector<8x128xf32>
    %182 = math.tanh %181 : vector<8x128xf32>
    %cst_78 = arith.constant 1.000000e+00 : f32
    %183 = vector.broadcast %cst_78 : f32 to vector<8x128xf32>
    %184 = arith.addf %183, %182 : vector<8x128xf32>
    %cst_79 = arith.constant 5.000000e-01 : f32
    %185 = vector.broadcast %cst_79 : f32 to vector<8x128xf32>
    %186 = arith.mulf %185, %184 : vector<8x128xf32>
    %187 = arith.mulf %174, %186 : vector<8x128xf32>
    %188 = arith.maximumf %144, %187 : vector<8x128xf32>
    %189 = vector.extract_strided_slice %7 {offsets = [4, 0], sizes = [1, 128], strides = [1, 1]} : vector<10x128xi32> to vector<1x128xi32>
    %190 = vector.broadcast %189 : vector<1x128xi32> to vector<128x128xi32>
    %191 = arith.cmpi eq, %13, %190 : vector<128x128xi32>
    %192 = arith.extui %191 : vector<128x128xi1> to vector<128x128xi32>
    %193 = arith.sitofp %192 : vector<128x128xi32> to vector<128x128xf32>
    %194 = arith.truncf %193 : vector<128x128xf32> to vector<128x128xbf16>
    %cst_80 = arith.constant dense<0.000000e+00> : vector<2x128xf32>
    %195 = tpu.matmul %2, %194, %cst_80 {dimension_numbers = #tpu.dot_dimension_numbers<[1], [0], [0], [1], [0, 0, 1, 1], [], []>} : vector<2x128xbf16>, vector<128x128xbf16>, vector<2x128xf32> -> vector<2x128xf32>
    %c0_81 = arith.constant 0 : index
    %c0_82 = arith.constant 0 : index
    %196 = vector.load %arg5[%c0_81, %c0_82] : memref<5x2xbf16, #tpu.memory_space<vmem>>, vector<5x2xbf16>
    %197 = arith.truncf %195 : vector<2x128xf32> to vector<2x128xbf16>
    %cst_83 = arith.constant dense<0.000000e+00> : vector<5x128xf32>
    %198 = tpu.matmul %196, %197, %cst_83 {dimension_numbers = #tpu.dot_dimension_numbers<[1], [0], [0], [1], [0, 0, 1, 1], [], []>} : vector<5x2xbf16>, vector<2x128xbf16>, vector<5x128xf32> -> vector<5x128xf32>
    %199 = arith.addf %198, %12 : vector<5x128xf32>
    %200 = arith.mulf %199, %199 : vector<5x128xf32>
    %201 = arith.mulf %199, %200 : vector<5x128xf32>
    %cst_84 = arith.constant 4.471500e-02 : f32
    %202 = vector.broadcast %cst_84 : f32 to vector<5x128xf32>
    %203 = arith.mulf %202, %201 : vector<5x128xf32>
    %204 = arith.addf %199, %203 : vector<5x128xf32>
    %cst_85 = arith.constant 0.797884583 : f32
    %205 = vector.broadcast %cst_85 : f32 to vector<5x128xf32>
    %206 = arith.mulf %205, %204 : vector<5x128xf32>
    %207 = math.tanh %206 : vector<5x128xf32>
    %cst_86 = arith.constant 1.000000e+00 : f32
    %208 = vector.broadcast %cst_86 : f32 to vector<5x128xf32>
    %209 = arith.addf %208, %207 : vector<5x128xf32>
    %cst_87 = arith.constant 5.000000e-01 : f32
    %210 = vector.broadcast %cst_87 : f32 to vector<5x128xf32>
    %211 = arith.mulf %210, %209 : vector<5x128xf32>
    %212 = arith.mulf %199, %211 : vector<5x128xf32>
    %c0_88 = arith.constant 0 : index
    %c0_89 = arith.constant 0 : index
    %213 = vector.load %arg8[%c0_88, %c0_89] : memref<8x5xbf16, #tpu.memory_space<vmem>>, vector<8x5xbf16>
    %214 = arith.truncf %212 : vector<5x128xf32> to vector<5x128xbf16>
    %cst_90 = arith.constant dense<0.000000e+00> : vector<8x128xf32>
    %215 = tpu.matmul %213, %214, %cst_90 {dimension_numbers = #tpu.dot_dimension_numbers<[1], [0], [0], [1], [0, 0, 1, 1], [], []>} : vector<8x5xbf16>, vector<5x128xbf16>, vector<8x128xf32> -> vector<8x128xf32>
    %c0_91 = arith.constant 0 : index
    %c0_92 = arith.constant 0 : index
    %216 = vector.load %arg9[%c0_91, %c0_92] : memref<8x1xf32, #tpu.memory_space<vmem>>, vector<8x1xf32>
    %217 = vector.broadcast %216 : vector<8x1xf32> to vector<8x128xf32>
    %218 = arith.addf %215, %217 : vector<8x128xf32>
    %219 = arith.mulf %218, %218 : vector<8x128xf32>
    %220 = arith.mulf %218, %219 : vector<8x128xf32>
    %cst_93 = arith.constant 4.471500e-02 : f32
    %221 = vector.broadcast %cst_93 : f32 to vector<8x128xf32>
    %222 = arith.mulf %221, %220 : vector<8x128xf32>
    %223 = arith.addf %218, %222 : vector<8x128xf32>
    %cst_94 = arith.constant 0.797884583 : f32
    %224 = vector.broadcast %cst_94 : f32 to vector<8x128xf32>
    %225 = arith.mulf %224, %223 : vector<8x128xf32>
    %226 = math.tanh %225 : vector<8x128xf32>
    %cst_95 = arith.constant 1.000000e+00 : f32
    %227 = vector.broadcast %cst_95 : f32 to vector<8x128xf32>
    %228 = arith.addf %227, %226 : vector<8x128xf32>
    %cst_96 = arith.constant 5.000000e-01 : f32
    %229 = vector.broadcast %cst_96 : f32 to vector<8x128xf32>
    %230 = arith.mulf %229, %228 : vector<8x128xf32>
    %231 = arith.mulf %218, %230 : vector<8x128xf32>
    %232 = arith.maximumf %188, %231 : vector<8x128xf32>
    %233 = vector.extract_strided_slice %7 {offsets = [5, 0], sizes = [1, 128], strides = [1, 1]} : vector<10x128xi32> to vector<1x128xi32>
    %234 = vector.broadcast %233 : vector<1x128xi32> to vector<128x128xi32>
    %235 = arith.cmpi eq, %13, %234 : vector<128x128xi32>
    %236 = arith.extui %235 : vector<128x128xi1> to vector<128x128xi32>
    %237 = arith.sitofp %236 : vector<128x128xi32> to vector<128x128xf32>
    %238 = arith.truncf %237 : vector<128x128xf32> to vector<128x128xbf16>
    %cst_97 = arith.constant dense<0.000000e+00> : vector<2x128xf32>
    %239 = tpu.matmul %2, %238, %cst_97 {dimension_numbers = #tpu.dot_dimension_numbers<[1], [0], [0], [1], [0, 0, 1, 1], [], []>} : vector<2x128xbf16>, vector<128x128xbf16>, vector<2x128xf32> -> vector<2x128xf32>
    %c0_98 = arith.constant 0 : index
    %c0_99 = arith.constant 0 : index
    %240 = vector.load %arg5[%c0_98, %c0_99] : memref<5x2xbf16, #tpu.memory_space<vmem>>, vector<5x2xbf16>
    %241 = arith.truncf %239 : vector<2x128xf32> to vector<2x128xbf16>
    %cst_100 = arith.constant dense<0.000000e+00> : vector<5x128xf32>
    %242 = tpu.matmul %240, %241, %cst_100 {dimension_numbers = #tpu.dot_dimension_numbers<[1], [0], [0], [1], [0, 0, 1, 1], [], []>} : vector<5x2xbf16>, vector<2x128xbf16>, vector<5x128xf32> -> vector<5x128xf32>
    %243 = arith.addf %242, %12 : vector<5x128xf32>
    %244 = arith.mulf %243, %243 : vector<5x128xf32>
    %245 = arith.mulf %243, %244 : vector<5x128xf32>
    %cst_101 = arith.constant 4.471500e-02 : f32
    %246 = vector.broadcast %cst_101 : f32 to vector<5x128xf32>
    %247 = arith.mulf %246, %245 : vector<5x128xf32>
    %248 = arith.addf %243, %247 : vector<5x128xf32>
    %cst_102 = arith.constant 0.797884583 : f32
    %249 = vector.broadcast %cst_102 : f32 to vector<5x128xf32>
    %250 = arith.mulf %249, %248 : vector<5x128xf32>
    %251 = math.tanh %250 : vector<5x128xf32>
    %cst_103 = arith.constant 1.000000e+00 : f32
    %252 = vector.broadcast %cst_103 : f32 to vector<5x128xf32>
    %253 = arith.addf %252, %251 : vector<5x128xf32>
    %cst_104 = arith.constant 5.000000e-01 : f32
    %254 = vector.broadcast %cst_104 : f32 to vector<5x128xf32>
    %255 = arith.mulf %254, %253 : vector<5x128xf32>
    %256 = arith.mulf %243, %255 : vector<5x128xf32>
    %c0_105 = arith.constant 0 : index
    %c0_106 = arith.constant 0 : index
    %257 = vector.load %arg8[%c0_105, %c0_106] : memref<8x5xbf16, #tpu.memory_space<vmem>>, vector<8x5xbf16>
    %258 = arith.truncf %256 : vector<5x128xf32> to vector<5x128xbf16>
    %cst_107 = arith.constant dense<0.000000e+00> : vector<8x128xf32>
    %259 = tpu.matmul %257, %258, %cst_107 {dimension_numbers = #tpu.dot_dimension_numbers<[1], [0], [0], [1], [0, 0, 1, 1], [], []>} : vector<8x5xbf16>, vector<5x128xbf16>, vector<8x128xf32> -> vector<8x128xf32>
    %c0_108 = arith.constant 0 : index
    %c0_109 = arith.constant 0 : index
    %260 = vector.load %arg9[%c0_108, %c0_109] : memref<8x1xf32, #tpu.memory_space<vmem>>, vector<8x1xf32>
    %261 = vector.broadcast %260 : vector<8x1xf32> to vector<8x128xf32>
    %262 = arith.addf %259, %261 : vector<8x128xf32>
    %263 = arith.mulf %262, %262 : vector<8x128xf32>
    %264 = arith.mulf %262, %263 : vector<8x128xf32>
    %cst_110 = arith.constant 4.471500e-02 : f32
    %265 = vector.broadcast %cst_110 : f32 to vector<8x128xf32>
    %266 = arith.mulf %265, %264 : vector<8x128xf32>
    %267 = arith.addf %262, %266 : vector<8x128xf32>
    %cst_111 = arith.constant 0.797884583 : f32
    %268 = vector.broadcast %cst_111 : f32 to vector<8x128xf32>
    %269 = arith.mulf %268, %267 : vector<8x128xf32>
    %270 = math.tanh %269 : vector<8x128xf32>
    %cst_112 = arith.constant 1.000000e+00 : f32
    %271 = vector.broadcast %cst_112 : f32 to vector<8x128xf32>
    %272 = arith.addf %271, %270 : vector<8x128xf32>
    %cst_113 = arith.constant 5.000000e-01 : f32
    %273 = vector.broadcast %cst_113 : f32 to vector<8x128xf32>
    %274 = arith.mulf %273, %272 : vector<8x128xf32>
    %275 = arith.mulf %262, %274 : vector<8x128xf32>
    %276 = arith.maximumf %232, %275 : vector<8x128xf32>
    %277 = vector.extract_strided_slice %7 {offsets = [6, 0], sizes = [1, 128], strides = [1, 1]} : vector<10x128xi32> to vector<1x128xi32>
    %278 = vector.broadcast %277 : vector<1x128xi32> to vector<128x128xi32>
    %279 = arith.cmpi eq, %13, %278 : vector<128x128xi32>
    %280 = arith.extui %279 : vector<128x128xi1> to vector<128x128xi32>
    %281 = arith.sitofp %280 : vector<128x128xi32> to vector<128x128xf32>
    %282 = arith.truncf %281 : vector<128x128xf32> to vector<128x128xbf16>
    %cst_114 = arith.constant dense<0.000000e+00> : vector<2x128xf32>
    %283 = tpu.matmul %2, %282, %cst_114 {dimension_numbers = #tpu.dot_dimension_numbers<[1], [0], [0], [1], [0, 0, 1, 1], [], []>} : vector<2x128xbf16>, vector<128x128xbf16>, vector<2x128xf32> -> vector<2x128xf32>
    %c0_115 = arith.constant 0 : index
    %c0_116 = arith.constant 0 : index
    %284 = vector.load %arg5[%c0_115, %c0_116] : memref<5x2xbf16, #tpu.memory_space<vmem>>, vector<5x2xbf16>
    %285 = arith.truncf %283 : vector<2x128xf32> to vector<2x128xbf16>
    %cst_117 = arith.constant dense<0.000000e+00> : vector<5x128xf32>
    %286 = tpu.matmul %284, %285, %cst_117 {dimension_numbers = #tpu.dot_dimension_numbers<[1], [0], [0], [1], [0, 0, 1, 1], [], []>} : vector<5x2xbf16>, vector<2x128xbf16>, vector<5x128xf32> -> vector<5x128xf32>
    %287 = arith.addf %286, %12 : vector<5x128xf32>
    %288 = arith.mulf %287, %287 : vector<5x128xf32>
    %289 = arith.mulf %287, %288 : vector<5x128xf32>
    %cst_118 = arith.constant 4.471500e-02 : f32
    %290 = vector.broadcast %cst_118 : f32 to vector<5x128xf32>
    %291 = arith.mulf %290, %289 : vector<5x128xf32>
    %292 = arith.addf %287, %291 : vector<5x128xf32>
    %cst_119 = arith.constant 0.797884583 : f32
    %293 = vector.broadcast %cst_119 : f32 to vector<5x128xf32>
    %294 = arith.mulf %293, %292 : vector<5x128xf32>
    %295 = math.tanh %294 : vector<5x128xf32>
    %cst_120 = arith.constant 1.000000e+00 : f32
    %296 = vector.broadcast %cst_120 : f32 to vector<5x128xf32>
    %297 = arith.addf %296, %295 : vector<5x128xf32>
    %cst_121 = arith.constant 5.000000e-01 : f32
    %298 = vector.broadcast %cst_121 : f32 to vector<5x128xf32>
    %299 = arith.mulf %298, %297 : vector<5x128xf32>
    %300 = arith.mulf %287, %299 : vector<5x128xf32>
    %c0_122 = arith.constant 0 : index
    %c0_123 = arith.constant 0 : index
    %301 = vector.load %arg8[%c0_122, %c0_123] : memref<8x5xbf16, #tpu.memory_space<vmem>>, vector<8x5xbf16>
    %302 = arith.truncf %300 : vector<5x128xf32> to vector<5x128xbf16>
    %cst_124 = arith.constant dense<0.000000e+00> : vector<8x128xf32>
    %303 = tpu.matmul %301, %302, %cst_124 {dimension_numbers = #tpu.dot_dimension_numbers<[1], [0], [0], [1], [0, 0, 1, 1], [], []>} : vector<8x5xbf16>, vector<5x128xbf16>, vector<8x128xf32> -> vector<8x128xf32>
    %c0_125 = arith.constant 0 : index
    %c0_126 = arith.constant 0 : index
    %304 = vector.load %arg9[%c0_125, %c0_126] : memref<8x1xf32, #tpu.memory_space<vmem>>, vector<8x1xf32>
    %305 = vector.broadcast %304 : vector<8x1xf32> to vector<8x128xf32>
    %306 = arith.addf %303, %305 : vector<8x128xf32>
    %307 = arith.mulf %306, %306 : vector<8x128xf32>
    %308 = arith.mulf %306, %307 : vector<8x128xf32>
    %cst_127 = arith.constant 4.471500e-02 : f32
    %309 = vector.broadcast %cst_127 : f32 to vector<8x128xf32>
    %310 = arith.mulf %309, %308 : vector<8x128xf32>
    %311 = arith.addf %306, %310 : vector<8x128xf32>
    %cst_128 = arith.constant 0.797884583 : f32
    %312 = vector.broadcast %cst_128 : f32 to vector<8x128xf32>
    %313 = arith.mulf %312, %311 : vector<8x128xf32>
    %314 = math.tanh %313 : vector<8x128xf32>
    %cst_129 = arith.constant 1.000000e+00 : f32
    %315 = vector.broadcast %cst_129 : f32 to vector<8x128xf32>
    %316 = arith.addf %315, %314 : vector<8x128xf32>
    %cst_130 = arith.constant 5.000000e-01 : f32
    %317 = vector.broadcast %cst_130 : f32 to vector<8x128xf32>
    %318 = arith.mulf %317, %316 : vector<8x128xf32>
    %319 = arith.mulf %306, %318 : vector<8x128xf32>
    %320 = arith.maximumf %276, %319 : vector<8x128xf32>
    %321 = vector.extract_strided_slice %7 {offsets = [7, 0], sizes = [1, 128], strides = [1, 1]} : vector<10x128xi32> to vector<1x128xi32>
    %322 = vector.broadcast %321 : vector<1x128xi32> to vector<128x128xi32>
    %323 = arith.cmpi eq, %13, %322 : vector<128x128xi32>
    %324 = arith.extui %323 : vector<128x128xi1> to vector<128x128xi32>
    %325 = arith.sitofp %324 : vector<128x128xi32> to vector<128x128xf32>
    %326 = arith.truncf %325 : vector<128x128xf32> to vector<128x128xbf16>
    %cst_131 = arith.constant dense<0.000000e+00> : vector<2x128xf32>
    %327 = tpu.matmul %2, %326, %cst_131 {dimension_numbers = #tpu.dot_dimension_numbers<[1], [0], [0], [1], [0, 0, 1, 1], [], []>} : vector<2x128xbf16>, vector<128x128xbf16>, vector<2x128xf32> -> vector<2x128xf32>
    %c0_132 = arith.constant 0 : index
    %c0_133 = arith.constant 0 : index
    %328 = vector.load %arg5[%c0_132, %c0_133] : memref<5x2xbf16, #tpu.memory_space<vmem>>, vector<5x2xbf16>
    %329 = arith.truncf %327 : vector<2x128xf32> to vector<2x128xbf16>
    %cst_134 = arith.constant dense<0.000000e+00> : vector<5x128xf32>
    %330 = tpu.matmul %328, %329, %cst_134 {dimension_numbers = #tpu.dot_dimension_numbers<[1], [0], [0], [1], [0, 0, 1, 1], [], []>} : vector<5x2xbf16>, vector<2x128xbf16>, vector<5x128xf32> -> vector<5x128xf32>
    %331 = arith.addf %330, %12 : vector<5x128xf32>
    %332 = arith.mulf %331, %331 : vector<5x128xf32>
    %333 = arith.mulf %331, %332 : vector<5x128xf32>
    %cst_135 = arith.constant 4.471500e-02 : f32
    %334 = vector.broadcast %cst_135 : f32 to vector<5x128xf32>
    %335 = arith.mulf %334, %333 : vector<5x128xf32>
    %336 = arith.addf %331, %335 : vector<5x128xf32>
    %cst_136 = arith.constant 0.797884583 : f32
    %337 = vector.broadcast %cst_136 : f32 to vector<5x128xf32>
    %338 = arith.mulf %337, %336 : vector<5x128xf32>
    %339 = math.tanh %338 : vector<5x128xf32>
    %cst_137 = arith.constant 1.000000e+00 : f32
    %340 = vector.broadcast %cst_137 : f32 to vector<5x128xf32>
    %341 = arith.addf %340, %339 : vector<5x128xf32>
    %cst_138 = arith.constant 5.000000e-01 : f32
    %342 = vector.broadcast %cst_138 : f32 to vector<5x128xf32>
    %343 = arith.mulf %342, %341 : vector<5x128xf32>
    %344 = arith.mulf %331, %343 : vector<5x128xf32>
    %c0_139 = arith.constant 0 : index
    %c0_140 = arith.constant 0 : index
    %345 = vector.load %arg8[%c0_139, %c0_140] : memref<8x5xbf16, #tpu.memory_space<vmem>>, vector<8x5xbf16>
    %346 = arith.truncf %344 : vector<5x128xf32> to vector<5x128xbf16>
    %cst_141 = arith.constant dense<0.000000e+00> : vector<8x128xf32>
    %347 = tpu.matmul %345, %346, %cst_141 {dimension_numbers = #tpu.dot_dimension_numbers<[1], [0], [0], [1], [0, 0, 1, 1], [], []>} : vector<8x5xbf16>, vector<5x128xbf16>, vector<8x128xf32> -> vector<8x128xf32>
    %c0_142 = arith.constant 0 : index
    %c0_143 = arith.constant 0 : index
    %348 = vector.load %arg9[%c0_142, %c0_143] : memref<8x1xf32, #tpu.memory_space<vmem>>, vector<8x1xf32>
    %349 = vector.broadcast %348 : vector<8x1xf32> to vector<8x128xf32>
    %350 = arith.addf %347, %349 : vector<8x128xf32>
    %351 = arith.mulf %350, %350 : vector<8x128xf32>
    %352 = arith.mulf %350, %351 : vector<8x128xf32>
    %cst_144 = arith.constant 4.471500e-02 : f32
    %353 = vector.broadcast %cst_144 : f32 to vector<8x128xf32>
    %354 = arith.mulf %353, %352 : vector<8x128xf32>
    %355 = arith.addf %350, %354 : vector<8x128xf32>
    %cst_145 = arith.constant 0.797884583 : f32
    %356 = vector.broadcast %cst_145 : f32 to vector<8x128xf32>
    %357 = arith.mulf %356, %355 : vector<8x128xf32>
    %358 = math.tanh %357 : vector<8x128xf32>
    %cst_146 = arith.constant 1.000000e+00 : f32
    %359 = vector.broadcast %cst_146 : f32 to vector<8x128xf32>
    %360 = arith.addf %359, %358 : vector<8x128xf32>
    %cst_147 = arith.constant 5.000000e-01 : f32
    %361 = vector.broadcast %cst_147 : f32 to vector<8x128xf32>
    %362 = arith.mulf %361, %360 : vector<8x128xf32>
    %363 = arith.mulf %350, %362 : vector<8x128xf32>
    %364 = arith.maximumf %320, %363 : vector<8x128xf32>
    %365 = vector.extract_strided_slice %7 {offsets = [8, 0], sizes = [1, 128], strides = [1, 1]} : vector<10x128xi32> to vector<1x128xi32>
    %366 = vector.broadcast %365 : vector<1x128xi32> to vector<128x128xi32>
    %367 = arith.cmpi eq, %13, %366 : vector<128x128xi32>
    %368 = arith.extui %367 : vector<128x128xi1> to vector<128x128xi32>
    %369 = arith.sitofp %368 : vector<128x128xi32> to vector<128x128xf32>
    %370 = arith.truncf %369 : vector<128x128xf32> to vector<128x128xbf16>
    %cst_148 = arith.constant dense<0.000000e+00> : vector<2x128xf32>
    %371 = tpu.matmul %2, %370, %cst_148 {dimension_numbers = #tpu.dot_dimension_numbers<[1], [0], [0], [1], [0, 0, 1, 1], [], []>} : vector<2x128xbf16>, vector<128x128xbf16>, vector<2x128xf32> -> vector<2x128xf32>
    %c0_149 = arith.constant 0 : index
    %c0_150 = arith.constant 0 : index
    %372 = vector.load %arg5[%c0_149, %c0_150] : memref<5x2xbf16, #tpu.memory_space<vmem>>, vector<5x2xbf16>
    %373 = arith.truncf %371 : vector<2x128xf32> to vector<2x128xbf16>
    %cst_151 = arith.constant dense<0.000000e+00> : vector<5x128xf32>
    %374 = tpu.matmul %372, %373, %cst_151 {dimension_numbers = #tpu.dot_dimension_numbers<[1], [0], [0], [1], [0, 0, 1, 1], [], []>} : vector<5x2xbf16>, vector<2x128xbf16>, vector<5x128xf32> -> vector<5x128xf32>
    %375 = arith.addf %374, %12 : vector<5x128xf32>
    %376 = arith.mulf %375, %375 : vector<5x128xf32>
    %377 = arith.mulf %375, %376 : vector<5x128xf32>
    %cst_152 = arith.constant 4.471500e-02 : f32
    %378 = vector.broadcast %cst_152 : f32 to vector<5x128xf32>
    %379 = arith.mulf %378, %377 : vector<5x128xf32>
    %380 = arith.addf %375, %379 : vector<5x128xf32>
    %cst_153 = arith.constant 0.797884583 : f32
    %381 = vector.broadcast %cst_153 : f32 to vector<5x128xf32>
    %382 = arith.mulf %381, %380 : vector<5x128xf32>
    %383 = math.tanh %382 : vector<5x128xf32>
    %cst_154 = arith.constant 1.000000e+00 : f32
    %384 = vector.broadcast %cst_154 : f32 to vector<5x128xf32>
    %385 = arith.addf %384, %383 : vector<5x128xf32>
    %cst_155 = arith.constant 5.000000e-01 : f32
    %386 = vector.broadcast %cst_155 : f32 to vector<5x128xf32>
    %387 = arith.mulf %386, %385 : vector<5x128xf32>
    %388 = arith.mulf %375, %387 : vector<5x128xf32>
    %c0_156 = arith.constant 0 : index
    %c0_157 = arith.constant 0 : index
    %389 = vector.load %arg8[%c0_156, %c0_157] : memref<8x5xbf16, #tpu.memory_space<vmem>>, vector<8x5xbf16>
    %390 = arith.truncf %388 : vector<5x128xf32> to vector<5x128xbf16>
    %cst_158 = arith.constant dense<0.000000e+00> : vector<8x128xf32>
    %391 = tpu.matmul %389, %390, %cst_158 {dimension_numbers = #tpu.dot_dimension_numbers<[1], [0], [0], [1], [0, 0, 1, 1], [], []>} : vector<8x5xbf16>, vector<5x128xbf16>, vector<8x128xf32> -> vector<8x128xf32>
    %c0_159 = arith.constant 0 : index
    %c0_160 = arith.constant 0 : index
    %392 = vector.load %arg9[%c0_159, %c0_160] : memref<8x1xf32, #tpu.memory_space<vmem>>, vector<8x1xf32>
    %393 = vector.broadcast %392 : vector<8x1xf32> to vector<8x128xf32>
    %394 = arith.addf %391, %393 : vector<8x128xf32>
    %395 = arith.mulf %394, %394 : vector<8x128xf32>
    %396 = arith.mulf %394, %395 : vector<8x128xf32>
    %cst_161 = arith.constant 4.471500e-02 : f32
    %397 = vector.broadcast %cst_161 : f32 to vector<8x128xf32>
    %398 = arith.mulf %397, %396 : vector<8x128xf32>
    %399 = arith.addf %394, %398 : vector<8x128xf32>
    %cst_162 = arith.constant 0.797884583 : f32
    %400 = vector.broadcast %cst_162 : f32 to vector<8x128xf32>
    %401 = arith.mulf %400, %399 : vector<8x128xf32>
    %402 = math.tanh %401 : vector<8x128xf32>
    %cst_163 = arith.constant 1.000000e+00 : f32
    %403 = vector.broadcast %cst_163 : f32 to vector<8x128xf32>
    %404 = arith.addf %403, %402 : vector<8x128xf32>
    %cst_164 = arith.constant 5.000000e-01 : f32
    %405 = vector.broadcast %cst_164 : f32 to vector<8x128xf32>
    %406 = arith.mulf %405, %404 : vector<8x128xf32>
    %407 = arith.mulf %394, %406 : vector<8x128xf32>
    %408 = arith.maximumf %364, %407 : vector<8x128xf32>
    %409 = vector.extract_strided_slice %7 {offsets = [9, 0], sizes = [1, 128], strides = [1, 1]} : vector<10x128xi32> to vector<1x128xi32>
    %410 = vector.broadcast %409 : vector<1x128xi32> to vector<128x128xi32>
    %411 = arith.cmpi eq, %13, %410 : vector<128x128xi32>
    %412 = arith.extui %411 : vector<128x128xi1> to vector<128x128xi32>
    %413 = arith.sitofp %412 : vector<128x128xi32> to vector<128x128xf32>
    %414 = arith.truncf %413 : vector<128x128xf32> to vector<128x128xbf16>
    %cst_165 = arith.constant dense<0.000000e+00> : vector<2x128xf32>
    %415 = tpu.matmul %2, %414, %cst_165 {dimension_numbers = #tpu.dot_dimension_numbers<[1], [0], [0], [1], [0, 0, 1, 1], [], []>} : vector<2x128xbf16>, vector<128x128xbf16>, vector<2x128xf32> -> vector<2x128xf32>
    %c0_166 = arith.constant 0 : index
    %c0_167 = arith.constant 0 : index
    %416 = vector.load %arg5[%c0_166, %c0_167] : memref<5x2xbf16, #tpu.memory_space<vmem>>, vector<5x2xbf16>
    %417 = arith.truncf %415 : vector<2x128xf32> to vector<2x128xbf16>
    %cst_168 = arith.constant dense<0.000000e+00> : vector<5x128xf32>
    %418 = tpu.matmul %416, %417, %cst_168 {dimension_numbers = #tpu.dot_dimension_numbers<[1], [0], [0], [1], [0, 0, 1, 1], [], []>} : vector<5x2xbf16>, vector<2x128xbf16>, vector<5x128xf32> -> vector<5x128xf32>
    %419 = arith.addf %418, %12 : vector<5x128xf32>
    %420 = arith.mulf %419, %419 : vector<5x128xf32>
    %421 = arith.mulf %419, %420 : vector<5x128xf32>
    %cst_169 = arith.constant 4.471500e-02 : f32
    %422 = vector.broadcast %cst_169 : f32 to vector<5x128xf32>
    %423 = arith.mulf %422, %421 : vector<5x128xf32>
    %424 = arith.addf %419, %423 : vector<5x128xf32>
    %cst_170 = arith.constant 0.797884583 : f32
    %425 = vector.broadcast %cst_170 : f32 to vector<5x128xf32>
    %426 = arith.mulf %425, %424 : vector<5x128xf32>
    %427 = math.tanh %426 : vector<5x128xf32>
    %cst_171 = arith.constant 1.000000e+00 : f32
    %428 = vector.broadcast %cst_171 : f32 to vector<5x128xf32>
    %429 = arith.addf %428, %427 : vector<5x128xf32>
    %cst_172 = arith.constant 5.000000e-01 : f32
    %430 = vector.broadcast %cst_172 : f32 to vector<5x128xf32>
    %431 = arith.mulf %430, %429 : vector<5x128xf32>
    %432 = arith.mulf %419, %431 : vector<5x128xf32>
    %c0_173 = arith.constant 0 : index
    %c0_174 = arith.constant 0 : index
    %433 = vector.load %arg8[%c0_173, %c0_174] : memref<8x5xbf16, #tpu.memory_space<vmem>>, vector<8x5xbf16>
    %434 = arith.truncf %432 : vector<5x128xf32> to vector<5x128xbf16>
    %cst_175 = arith.constant dense<0.000000e+00> : vector<8x128xf32>
    %435 = tpu.matmul %433, %434, %cst_175 {dimension_numbers = #tpu.dot_dimension_numbers<[1], [0], [0], [1], [0, 0, 1, 1], [], []>} : vector<8x5xbf16>, vector<5x128xbf16>, vector<8x128xf32> -> vector<8x128xf32>
    %c0_176 = arith.constant 0 : index
    %c0_177 = arith.constant 0 : index
    %436 = vector.load %arg9[%c0_176, %c0_177] : memref<8x1xf32, #tpu.memory_space<vmem>>, vector<8x1xf32>
    %437 = vector.broadcast %436 : vector<8x1xf32> to vector<8x128xf32>
    %438 = arith.addf %435, %437 : vector<8x128xf32>
    %439 = arith.mulf %438, %438 : vector<8x128xf32>
    %440 = arith.mulf %438, %439 : vector<8x128xf32>
    %cst_178 = arith.constant 4.471500e-02 : f32
    %441 = vector.broadcast %cst_178 : f32 to vector<8x128xf32>
    %442 = arith.mulf %441, %440 : vector<8x128xf32>
    %443 = arith.addf %438, %442 : vector<8x128xf32>
    %cst_179 = arith.constant 0.797884583 : f32
    %444 = vector.broadcast %cst_179 : f32 to vector<8x128xf32>
    %445 = arith.mulf %444, %443 : vector<8x128xf32>
    %446 = math.tanh %445 : vector<8x128xf32>
    %cst_180 = arith.constant 1.000000e+00 : f32
    %447 = vector.broadcast %cst_180 : f32 to vector<8x128xf32>
    %448 = arith.addf %447, %446 : vector<8x128xf32>
    %cst_181 = arith.constant 5.000000e-01 : f32
    %449 = vector.broadcast %cst_181 : f32 to vector<8x128xf32>
    %450 = arith.mulf %449, %448 : vector<8x128xf32>
    %451 = arith.mulf %438, %450 : vector<8x128xf32>
    %452 = arith.maximumf %408, %451 : vector<8x128xf32>
    %c0_182 = arith.constant 0 : index
    %c0_183 = arith.constant 0 : index
    %c0_184 = arith.constant 0 : index
    %453 = vector.load %arg10[%c0_182, %c0_183, %c0_184] : memref<1x8x128xf32, #tpu.memory_space<vmem>>, vector<1x8x128xf32>
    %454 = vector.shape_cast %453 : vector<1x8x128xf32> to vector<8x128xf32>
    %455 = vector.shape_cast %452 : vector<8x128xf32> to vector<1x8x128xf32>
    tpu.vector_store %arg10[%c0_182, %c0_183, %c0_184], %455 {strides = array<i32>} : memref<1x8x128xf32, #tpu.memory_space<vmem>>, vector<1x8x128xf32>,
    return
  }
  func.func @transform_0(%arg0: i32, %arg1: i32) -> (i32, i32, i32) {
    %c0_i32 = arith.constant 0 : i32
    %c0_i32_0 = arith.constant 0 : i32
    %c0_i32_1 = arith.constant 0 : i32
    return %arg0, %c0_i32, %c0_i32_0 : i32, i32, i32
  }
  func.func @transform_1(%arg0: i32, %arg1: i32) -> (i32, i32, i32) {
    %c0_i32 = arith.constant 0 : i32
    %c0_i32_0 = arith.constant 0 : i32
    return %arg0, %c0_i32, %arg1 : i32, i32, i32
  }
  func.func @transform_2(%arg0: i32, %arg1: i32) -> (i32, i32, i32) {
    %c0_i32 = arith.constant 0 : i32
    %c0_i32_0 = arith.constant 0 : i32
    return %arg0, %c0_i32, %arg1 : i32, i32, i32
  }
  func.func @transform_3(%arg0: i32, %arg1: i32) -> (i32, i32) {
    %c0_i32 = arith.constant 0 : i32
    %c0_i32_0 = arith.constant 0 : i32
    %c0_i32_1 = arith.constant 0 : i32
    return %c0_i32, %c0_i32_0 : i32, i32
  }
  func.func @transform_4(%arg0: i32, %arg1: i32) -> (i32, i32) {
    %c0_i32 = arith.constant 0 : i32
    %c0_i32_0 = arith.constant 0 : i32
    %c0_i32_1 = arith.constant 0 : i32
    return %c0_i32, %c0_i32_0 : i32, i32
  }
  func.func @transform_5(%arg0: i32, %arg1: i32) -> (i32, i32) {
    %c0_i32 = arith.constant 0 : i32
    %c0_i32_0 = arith.constant 0 : i32
    %c0_i32_1 = arith.constant 0 : i32
    return %c0_i32, %c0_i32_0 : i32, i32
  }
  func.func @transform_6(%arg0: i32, %arg1: i32) -> (i32, i32) {
    %c0_i32 = arith.constant 0 : i32
    %c0_i32_0 = arith.constant 0 : i32
    %c0_i32_1 = arith.constant 0 : i32
    return %c0_i32, %c0_i32_0 : i32, i32
  }
  func.func @transform_7(%arg0: i32, %arg1: i32) -> (i32, i32) {
    %c0_i32 = arith.constant 0 : i32
    %c0_i32_0 = arith.constant 0 : i32
    %c0_i32_1 = arith.constant 0 : i32
    return %c0_i32, %c0_i32_0 : i32, i32
  }
  func.func @transform_8(%arg0: i32, %arg1: i32) -> (i32, i32, i32) {
    %c0_i32 = arith.constant 0 : i32
    %c0_i32_0 = arith.constant 0 : i32
    return %arg0, %c0_i32, %arg1 : i32, i32, i32
  }
}

module attributes {stable_mosaic.version = 11 : i64} {
  func.func @_knn_score_kernel(%arg0: i32, %arg1: i32, %arg2: memref<1x128x8xf32, #tpu.memory_space<vmem>>, %arg3: memref<1x8x128xf32, #tpu.memory_space<vmem>>, %arg4: memref<1x128x128xf32, #tpu.memory_space<vmem>>) attributes {dimension_semantics = [#tpu.dimension_semantics<parallel>, #tpu.dimension_semantics<parallel>], iteration_bounds = array<i64: 2, 1>, scalar_prefetch = 0 : i64, scratch_operands = 0 : i64, tpu.core_type = #tpu.core_type<tc>, window_params = [{transform_indices = @transform_0, window_bounds = array<i64: 1, 128, 8>}, {transform_indices = @transform_1, window_bounds = array<i64: 1, 8, 128>}, {transform_indices = @transform_2, window_bounds = array<i64: 1, 128, 128>}]} {
    %c0 = arith.constant 0 : index
    %c0_0 = arith.constant 0 : index
    %c0_1 = arith.constant 0 : index
    %0 = vector.load %arg2[%c0, %c0_0, %c0_1] : memref<1x128x8xf32, #tpu.memory_space<vmem>>, vector<1x128x8xf32>
    %1 = vector.shape_cast %0 : vector<1x128x8xf32> to vector<128x8xf32>
    %c0_2 = arith.constant 0 : index
    %c0_3 = arith.constant 0 : index
    %c0_4 = arith.constant 0 : index
    %2 = vector.load %arg3[%c0_2, %c0_3, %c0_4] : memref<1x8x128xf32, #tpu.memory_space<vmem>>, vector<1x8x128xf32>
    %3 = vector.shape_cast %2 : vector<1x8x128xf32> to vector<8x128xf32>
    %cst = arith.constant dense<0.000000e+00> : vector<128x128xf32>
    %4 = tpu.matmul %1, %3, %cst {dimension_numbers = #tpu.dot_dimension_numbers<[1], [0], [0], [1], [0, 0, 1, 1], [], []>} : vector<128x8xf32>, vector<8x128xf32>, vector<128x128xf32> -> vector<128x128xf32>
    %5 = arith.mulf %3, %3 : vector<8x128xf32>
    %cst_5 = arith.constant dense<0.000000e+00> : vector<128xf32>
    %6 = vector.multi_reduction <add>, %5, %cst_5 [0] : vector<8x128xf32> to vector<128xf32>
    %7 = vector.shape_cast %6 : vector<128xf32> to vector<1x128xf32>
    %cst_6 = arith.constant 2.000000e+00 : f32
    %8 = vector.broadcast %cst_6 : f32 to vector<128x128xf32>
    %9 = arith.mulf %8, %4 : vector<128x128xf32>
    %10 = vector.broadcast %7 : vector<1x128xf32> to vector<128x128xf32>
    %11 = arith.subf %9, %10 : vector<128x128xf32>
    %c0_7 = arith.constant 0 : index
    %c0_8 = arith.constant 0 : index
    %c0_9 = arith.constant 0 : index
    %12 = vector.load %arg4[%c0_7, %c0_8, %c0_9] : memref<1x128x128xf32, #tpu.memory_space<vmem>>, vector<1x128x128xf32>
    %13 = vector.shape_cast %12 : vector<1x128x128xf32> to vector<128x128xf32>
    %14 = vector.shape_cast %11 : vector<128x128xf32> to vector<1x128x128xf32>
    tpu.vector_store %arg4[%c0_7, %c0_8, %c0_9], %14 {strides = array<i32>} : memref<1x128x128xf32, #tpu.memory_space<vmem>>, vector<1x128x128xf32>,
    return
  }
  func.func @transform_0(%arg0: i32, %arg1: i32) -> (i32, i32, i32) {
    %c0_i32 = arith.constant 0 : i32
    %c0_i32_0 = arith.constant 0 : i32
    return %arg0, %arg1, %c0_i32 : i32, i32, i32
  }
  func.func @transform_1(%arg0: i32, %arg1: i32) -> (i32, i32, i32) {
    %c0_i32 = arith.constant 0 : i32
    %c0_i32_0 = arith.constant 0 : i32
    %c0_i32_1 = arith.constant 0 : i32
    return %arg0, %c0_i32, %c0_i32_0 : i32, i32, i32
  }
  func.func @transform_2(%arg0: i32, %arg1: i32) -> (i32, i32, i32) {
    %c0_i32 = arith.constant 0 : i32
    %c0_i32_0 = arith.constant 0 : i32
    return %arg0, %arg1, %c0_i32 : i32, i32, i32
  }
}

module attributes {stable_mosaic.version = 11 : i64} {
  func.func @_mlp1d_kernel(%arg0: i32, %arg1: i32, %arg2: memref<1x40x128xf32, #tpu.memory_space<vmem>>, %arg3: memref<35x40xbf16, #tpu.memory_space<vmem>>, %arg4: memref<35x1xf32, #tpu.memory_space<vmem>>, %arg5: memref<32x35xbf16, #tpu.memory_space<vmem>>, %arg6: memref<32x1xf32, #tpu.memory_space<vmem>>, %arg7: memref<1x32x128xf32, #tpu.memory_space<vmem>>) attributes {dimension_semantics = [#tpu.dimension_semantics<parallel>, #tpu.dimension_semantics<parallel>], iteration_bounds = array<i64: 2, 1>, scalar_prefetch = 0 : i64, scratch_operands = 0 : i64, tpu.core_type = #tpu.core_type<tc>, window_params = [{transform_indices = @transform_0, window_bounds = array<i64: 1, 40, 128>}, {pipeline_mode = #tpu.pipeline_mode<synchronous>, transform_indices = @transform_1, window_bounds = array<i64: 35, 40>}, {pipeline_mode = #tpu.pipeline_mode<synchronous>, transform_indices = @transform_2, window_bounds = array<i64: 35, 1>}, {pipeline_mode = #tpu.pipeline_mode<synchronous>, transform_indices = @transform_3, window_bounds = array<i64: 32, 35>}, {pipeline_mode = #tpu.pipeline_mode<synchronous>, transform_indices = @transform_4, window_bounds = array<i64: 32, 1>}, {transform_indices = @transform_5, window_bounds = array<i64: 1, 32, 128>}]} {
    %c0 = arith.constant 0 : index
    %c0_0 = arith.constant 0 : index
    %c0_1 = arith.constant 0 : index
    %0 = vector.load %arg2[%c0, %c0_0, %c0_1] : memref<1x40x128xf32, #tpu.memory_space<vmem>>, vector<1x40x128xf32>
    %1 = vector.shape_cast %0 : vector<1x40x128xf32> to vector<40x128xf32>
    %2 = arith.truncf %1 : vector<40x128xf32> to vector<40x128xbf16>
    %c0_2 = arith.constant 0 : index
    %c0_3 = arith.constant 0 : index
    %3 = vector.load %arg3[%c0_2, %c0_3] : memref<35x40xbf16, #tpu.memory_space<vmem>>, vector<35x40xbf16>
    %cst = arith.constant dense<0.000000e+00> : vector<35x128xf32>
    %4 = tpu.matmul %3, %2, %cst {dimension_numbers = #tpu.dot_dimension_numbers<[1], [0], [0], [1], [0, 0, 1, 1], [], []>} : vector<35x40xbf16>, vector<40x128xbf16>, vector<35x128xf32> -> vector<35x128xf32>
    %c0_4 = arith.constant 0 : index
    %c0_5 = arith.constant 0 : index
    %5 = vector.load %arg4[%c0_4, %c0_5] : memref<35x1xf32, #tpu.memory_space<vmem>>, vector<35x1xf32>
    %6 = vector.broadcast %5 : vector<35x1xf32> to vector<35x128xf32>
    %7 = arith.addf %4, %6 : vector<35x128xf32>
    %8 = arith.mulf %7, %7 : vector<35x128xf32>
    %9 = arith.mulf %7, %8 : vector<35x128xf32>
    %cst_6 = arith.constant 4.471500e-02 : f32
    %10 = vector.broadcast %cst_6 : f32 to vector<35x128xf32>
    %11 = arith.mulf %10, %9 : vector<35x128xf32>
    %12 = arith.addf %7, %11 : vector<35x128xf32>
    %cst_7 = arith.constant 0.797884583 : f32
    %13 = vector.broadcast %cst_7 : f32 to vector<35x128xf32>
    %14 = arith.mulf %13, %12 : vector<35x128xf32>
    %15 = math.tanh %14 : vector<35x128xf32>
    %cst_8 = arith.constant 1.000000e+00 : f32
    %16 = vector.broadcast %cst_8 : f32 to vector<35x128xf32>
    %17 = arith.addf %16, %15 : vector<35x128xf32>
    %cst_9 = arith.constant 5.000000e-01 : f32
    %18 = vector.broadcast %cst_9 : f32 to vector<35x128xf32>
    %19 = arith.mulf %18, %17 : vector<35x128xf32>
    %20 = arith.mulf %7, %19 : vector<35x128xf32>
    %c0_10 = arith.constant 0 : index
    %c0_11 = arith.constant 0 : index
    %21 = vector.load %arg5[%c0_10, %c0_11] : memref<32x35xbf16, #tpu.memory_space<vmem>>, vector<32x35xbf16>
    %22 = arith.truncf %20 : vector<35x128xf32> to vector<35x128xbf16>
    %cst_12 = arith.constant dense<0.000000e+00> : vector<32x128xf32>
    %23 = tpu.matmul %21, %22, %cst_12 {dimension_numbers = #tpu.dot_dimension_numbers<[1], [0], [0], [1], [0, 0, 1, 1], [], []>} : vector<32x35xbf16>, vector<35x128xbf16>, vector<32x128xf32> -> vector<32x128xf32>
    %c0_13 = arith.constant 0 : index
    %c0_14 = arith.constant 0 : index
    %24 = vector.load %arg6[%c0_13, %c0_14] : memref<32x1xf32, #tpu.memory_space<vmem>>, vector<32x1xf32>
    %25 = vector.broadcast %24 : vector<32x1xf32> to vector<32x128xf32>
    %26 = arith.addf %23, %25 : vector<32x128xf32>
    %27 = arith.mulf %26, %26 : vector<32x128xf32>
    %28 = arith.mulf %26, %27 : vector<32x128xf32>
    %cst_15 = arith.constant 4.471500e-02 : f32
    %29 = vector.broadcast %cst_15 : f32 to vector<32x128xf32>
    %30 = arith.mulf %29, %28 : vector<32x128xf32>
    %31 = arith.addf %26, %30 : vector<32x128xf32>
    %cst_16 = arith.constant 0.797884583 : f32
    %32 = vector.broadcast %cst_16 : f32 to vector<32x128xf32>
    %33 = arith.mulf %32, %31 : vector<32x128xf32>
    %34 = math.tanh %33 : vector<32x128xf32>
    %cst_17 = arith.constant 1.000000e+00 : f32
    %35 = vector.broadcast %cst_17 : f32 to vector<32x128xf32>
    %36 = arith.addf %35, %34 : vector<32x128xf32>
    %cst_18 = arith.constant 5.000000e-01 : f32
    %37 = vector.broadcast %cst_18 : f32 to vector<32x128xf32>
    %38 = arith.mulf %37, %36 : vector<32x128xf32>
    %39 = arith.mulf %26, %38 : vector<32x128xf32>
    %c0_19 = arith.constant 0 : index
    %c0_20 = arith.constant 0 : index
    %c0_21 = arith.constant 0 : index
    %40 = vector.load %arg7[%c0_19, %c0_20, %c0_21] : memref<1x32x128xf32, #tpu.memory_space<vmem>>, vector<1x32x128xf32>
    %41 = vector.shape_cast %40 : vector<1x32x128xf32> to vector<32x128xf32>
    %42 = vector.shape_cast %39 : vector<32x128xf32> to vector<1x32x128xf32>
    tpu.vector_store %arg7[%c0_19, %c0_20, %c0_21], %42 {strides = array<i32>} : memref<1x32x128xf32, #tpu.memory_space<vmem>>, vector<1x32x128xf32>,
    return
  }
  func.func @transform_0(%arg0: i32, %arg1: i32) -> (i32, i32, i32) {
    %c0_i32 = arith.constant 0 : i32
    %c0_i32_0 = arith.constant 0 : i32
    return %arg0, %c0_i32, %arg1 : i32, i32, i32
  }
  func.func @transform_1(%arg0: i32, %arg1: i32) -> (i32, i32) {
    %c0_i32 = arith.constant 0 : i32
    %c0_i32_0 = arith.constant 0 : i32
    %c0_i32_1 = arith.constant 0 : i32
    return %c0_i32, %c0_i32_0 : i32, i32
  }
  func.func @transform_2(%arg0: i32, %arg1: i32) -> (i32, i32) {
    %c0_i32 = arith.constant 0 : i32
    %c0_i32_0 = arith.constant 0 : i32
    %c0_i32_1 = arith.constant 0 : i32
    return %c0_i32, %c0_i32_0 : i32, i32
  }
  func.func @transform_3(%arg0: i32, %arg1: i32) -> (i32, i32) {
    %c0_i32 = arith.constant 0 : i32
    %c0_i32_0 = arith.constant 0 : i32
    %c0_i32_1 = arith.constant 0 : i32
    return %c0_i32, %c0_i32_0 : i32, i32
  }
  func.func @transform_4(%arg0: i32, %arg1: i32) -> (i32, i32) {
    %c0_i32 = arith.constant 0 : i32
    %c0_i32_0 = arith.constant 0 : i32
    %c0_i32_1 = arith.constant 0 : i32
    return %c0_i32, %c0_i32_0 : i32, i32
  }
  func.func @transform_5(%arg0: i32, %arg1: i32) -> (i32, i32, i32) {
    %c0_i32 = arith.constant 0 : i32
    %c0_i32_0 = arith.constant 0 : i32
    return %arg0, %c0_i32, %arg1 : i32, i32, i32
  }
}

module attributes {stable_mosaic.version = 11 : i64} {
  func.func @_edgeconv_kernel(%arg0: i32, %arg1: i32, %arg2: memref<1x8x128xf32, #tpu.memory_space<vmem>>, %arg3: memref<1x8x128xf32, #tpu.memory_space<vmem>>, %arg4: memref<1x10x128xi32, #tpu.memory_space<vmem>>, %arg5: memref<22x8xbf16, #tpu.memory_space<vmem>>, %arg6: memref<22x8xbf16, #tpu.memory_space<vmem>>, %arg7: memref<22x1xf32, #tpu.memory_space<vmem>>, %arg8: memref<32x22xbf16, #tpu.memory_space<vmem>>, %arg9: memref<32x1xf32, #tpu.memory_space<vmem>>, %arg10: memref<1x32x128xf32, #tpu.memory_space<vmem>>) attributes {dimension_semantics = [#tpu.dimension_semantics<parallel>, #tpu.dimension_semantics<parallel>], iteration_bounds = array<i64: 2, 1>, scalar_prefetch = 0 : i64, scratch_operands = 0 : i64, tpu.core_type = #tpu.core_type<tc>, window_params = [{transform_indices = @transform_0, window_bounds = array<i64: 1, 8, 128>}, {transform_indices = @transform_1, window_bounds = array<i64: 1, 8, 128>}, {transform_indices = @transform_2, window_bounds = array<i64: 1, 10, 128>}, {pipeline_mode = #tpu.pipeline_mode<synchronous>, transform_indices = @transform_3, window_bounds = array<i64: 22, 8>}, {pipeline_mode = #tpu.pipeline_mode<synchronous>, transform_indices = @transform_4, window_bounds = array<i64: 22, 8>}, {pipeline_mode = #tpu.pipeline_mode<synchronous>, transform_indices = @transform_5, window_bounds = array<i64: 22, 1>}, {pipeline_mode = #tpu.pipeline_mode<synchronous>, transform_indices = @transform_6, window_bounds = array<i64: 32, 22>}, {pipeline_mode = #tpu.pipeline_mode<synchronous>, transform_indices = @transform_7, window_bounds = array<i64: 32, 1>}, {transform_indices = @transform_8, window_bounds = array<i64: 1, 32, 128>}]} {
    %c0 = arith.constant 0 : index
    %c0_0 = arith.constant 0 : index
    %c0_1 = arith.constant 0 : index
    %0 = vector.load %arg2[%c0, %c0_0, %c0_1] : memref<1x8x128xf32, #tpu.memory_space<vmem>>, vector<1x8x128xf32>
    %1 = vector.shape_cast %0 : vector<1x8x128xf32> to vector<8x128xf32>
    %2 = arith.truncf %1 : vector<8x128xf32> to vector<8x128xbf16>
    %c0_2 = arith.constant 0 : index
    %c0_3 = arith.constant 0 : index
    %c0_4 = arith.constant 0 : index
    %3 = vector.load %arg3[%c0_2, %c0_3, %c0_4] : memref<1x8x128xf32, #tpu.memory_space<vmem>>, vector<1x8x128xf32>
    %4 = vector.shape_cast %3 : vector<1x8x128xf32> to vector<8x128xf32>
    %5 = arith.truncf %4 : vector<8x128xf32> to vector<8x128xbf16>
    %c0_5 = arith.constant 0 : index
    %c0_6 = arith.constant 0 : index
    %c0_7 = arith.constant 0 : index
    %6 = vector.load %arg4[%c0_5, %c0_6, %c0_7] : memref<1x10x128xi32, #tpu.memory_space<vmem>>, vector<1x10x128xi32>
    %7 = vector.shape_cast %6 : vector<1x10x128xi32> to vector<10x128xi32>
    %c0_8 = arith.constant 0 : index
    %c0_9 = arith.constant 0 : index
    %8 = vector.load %arg6[%c0_8, %c0_9] : memref<22x8xbf16, #tpu.memory_space<vmem>>, vector<22x8xbf16>
    %cst = arith.constant dense<0.000000e+00> : vector<22x128xf32>
    %9 = tpu.matmul %8, %5, %cst {dimension_numbers = #tpu.dot_dimension_numbers<[1], [0], [0], [1], [0, 0, 1, 1], [], []>} : vector<22x8xbf16>, vector<8x128xbf16>, vector<22x128xf32> -> vector<22x128xf32>
    %c0_10 = arith.constant 0 : index
    %c0_11 = arith.constant 0 : index
    %10 = vector.load %arg7[%c0_10, %c0_11] : memref<22x1xf32, #tpu.memory_space<vmem>>, vector<22x1xf32>
    %11 = vector.broadcast %10 : vector<22x1xf32> to vector<22x128xf32>
    %12 = arith.addf %9, %11 : vector<22x128xf32>
    %13 = tpu.iota {dimensions = array<i32: 0>} : vector<128x128xi32>
    %14 = vector.extract_strided_slice %7 {offsets = [0, 0], sizes = [1, 128], strides = [1, 1]} : vector<10x128xi32> to vector<1x128xi32>
    %15 = vector.broadcast %14 : vector<1x128xi32> to vector<128x128xi32>
    %16 = arith.cmpi eq, %13, %15 : vector<128x128xi32>
    %17 = arith.extui %16 : vector<128x128xi1> to vector<128x128xi32>
    %18 = arith.sitofp %17 : vector<128x128xi32> to vector<128x128xf32>
    %19 = arith.truncf %18 : vector<128x128xf32> to vector<128x128xbf16>
    %cst_12 = arith.constant dense<0.000000e+00> : vector<8x128xf32>
    %20 = tpu.matmul %2, %19, %cst_12 {dimension_numbers = #tpu.dot_dimension_numbers<[1], [0], [0], [1], [0, 0, 1, 1], [], []>} : vector<8x128xbf16>, vector<128x128xbf16>, vector<8x128xf32> -> vector<8x128xf32>
    %c0_13 = arith.constant 0 : index
    %c0_14 = arith.constant 0 : index
    %21 = vector.load %arg5[%c0_13, %c0_14] : memref<22x8xbf16, #tpu.memory_space<vmem>>, vector<22x8xbf16>
    %22 = arith.truncf %20 : vector<8x128xf32> to vector<8x128xbf16>
    %cst_15 = arith.constant dense<0.000000e+00> : vector<22x128xf32>
    %23 = tpu.matmul %21, %22, %cst_15 {dimension_numbers = #tpu.dot_dimension_numbers<[1], [0], [0], [1], [0, 0, 1, 1], [], []>} : vector<22x8xbf16>, vector<8x128xbf16>, vector<22x128xf32> -> vector<22x128xf32>
    %24 = arith.addf %23, %12 : vector<22x128xf32>
    %25 = arith.mulf %24, %24 : vector<22x128xf32>
    %26 = arith.mulf %24, %25 : vector<22x128xf32>
    %cst_16 = arith.constant 4.471500e-02 : f32
    %27 = vector.broadcast %cst_16 : f32 to vector<22x128xf32>
    %28 = arith.mulf %27, %26 : vector<22x128xf32>
    %29 = arith.addf %24, %28 : vector<22x128xf32>
    %cst_17 = arith.constant 0.797884583 : f32
    %30 = vector.broadcast %cst_17 : f32 to vector<22x128xf32>
    %31 = arith.mulf %30, %29 : vector<22x128xf32>
    %32 = math.tanh %31 : vector<22x128xf32>
    %cst_18 = arith.constant 1.000000e+00 : f32
    %33 = vector.broadcast %cst_18 : f32 to vector<22x128xf32>
    %34 = arith.addf %33, %32 : vector<22x128xf32>
    %cst_19 = arith.constant 5.000000e-01 : f32
    %35 = vector.broadcast %cst_19 : f32 to vector<22x128xf32>
    %36 = arith.mulf %35, %34 : vector<22x128xf32>
    %37 = arith.mulf %24, %36 : vector<22x128xf32>
    %c0_20 = arith.constant 0 : index
    %c0_21 = arith.constant 0 : index
    %38 = vector.load %arg8[%c0_20, %c0_21] : memref<32x22xbf16, #tpu.memory_space<vmem>>, vector<32x22xbf16>
    %39 = arith.truncf %37 : vector<22x128xf32> to vector<22x128xbf16>
    %cst_22 = arith.constant dense<0.000000e+00> : vector<32x128xf32>
    %40 = tpu.matmul %38, %39, %cst_22 {dimension_numbers = #tpu.dot_dimension_numbers<[1], [0], [0], [1], [0, 0, 1, 1], [], []>} : vector<32x22xbf16>, vector<22x128xbf16>, vector<32x128xf32> -> vector<32x128xf32>
    %c0_23 = arith.constant 0 : index
    %c0_24 = arith.constant 0 : index
    %41 = vector.load %arg9[%c0_23, %c0_24] : memref<32x1xf32, #tpu.memory_space<vmem>>, vector<32x1xf32>
    %42 = vector.broadcast %41 : vector<32x1xf32> to vector<32x128xf32>
    %43 = arith.addf %40, %42 : vector<32x128xf32>
    %44 = arith.mulf %43, %43 : vector<32x128xf32>
    %45 = arith.mulf %43, %44 : vector<32x128xf32>
    %cst_25 = arith.constant 4.471500e-02 : f32
    %46 = vector.broadcast %cst_25 : f32 to vector<32x128xf32>
    %47 = arith.mulf %46, %45 : vector<32x128xf32>
    %48 = arith.addf %43, %47 : vector<32x128xf32>
    %cst_26 = arith.constant 0.797884583 : f32
    %49 = vector.broadcast %cst_26 : f32 to vector<32x128xf32>
    %50 = arith.mulf %49, %48 : vector<32x128xf32>
    %51 = math.tanh %50 : vector<32x128xf32>
    %cst_27 = arith.constant 1.000000e+00 : f32
    %52 = vector.broadcast %cst_27 : f32 to vector<32x128xf32>
    %53 = arith.addf %52, %51 : vector<32x128xf32>
    %cst_28 = arith.constant 5.000000e-01 : f32
    %54 = vector.broadcast %cst_28 : f32 to vector<32x128xf32>
    %55 = arith.mulf %54, %53 : vector<32x128xf32>
    %56 = arith.mulf %43, %55 : vector<32x128xf32>
    %57 = vector.extract_strided_slice %7 {offsets = [1, 0], sizes = [1, 128], strides = [1, 1]} : vector<10x128xi32> to vector<1x128xi32>
    %58 = vector.broadcast %57 : vector<1x128xi32> to vector<128x128xi32>
    %59 = arith.cmpi eq, %13, %58 : vector<128x128xi32>
    %60 = arith.extui %59 : vector<128x128xi1> to vector<128x128xi32>
    %61 = arith.sitofp %60 : vector<128x128xi32> to vector<128x128xf32>
    %62 = arith.truncf %61 : vector<128x128xf32> to vector<128x128xbf16>
    %cst_29 = arith.constant dense<0.000000e+00> : vector<8x128xf32>
    %63 = tpu.matmul %2, %62, %cst_29 {dimension_numbers = #tpu.dot_dimension_numbers<[1], [0], [0], [1], [0, 0, 1, 1], [], []>} : vector<8x128xbf16>, vector<128x128xbf16>, vector<8x128xf32> -> vector<8x128xf32>
    %c0_30 = arith.constant 0 : index
    %c0_31 = arith.constant 0 : index
    %64 = vector.load %arg5[%c0_30, %c0_31] : memref<22x8xbf16, #tpu.memory_space<vmem>>, vector<22x8xbf16>
    %65 = arith.truncf %63 : vector<8x128xf32> to vector<8x128xbf16>
    %cst_32 = arith.constant dense<0.000000e+00> : vector<22x128xf32>
    %66 = tpu.matmul %64, %65, %cst_32 {dimension_numbers = #tpu.dot_dimension_numbers<[1], [0], [0], [1], [0, 0, 1, 1], [], []>} : vector<22x8xbf16>, vector<8x128xbf16>, vector<22x128xf32> -> vector<22x128xf32>
    %67 = arith.addf %66, %12 : vector<22x128xf32>
    %68 = arith.mulf %67, %67 : vector<22x128xf32>
    %69 = arith.mulf %67, %68 : vector<22x128xf32>
    %cst_33 = arith.constant 4.471500e-02 : f32
    %70 = vector.broadcast %cst_33 : f32 to vector<22x128xf32>
    %71 = arith.mulf %70, %69 : vector<22x128xf32>
    %72 = arith.addf %67, %71 : vector<22x128xf32>
    %cst_34 = arith.constant 0.797884583 : f32
    %73 = vector.broadcast %cst_34 : f32 to vector<22x128xf32>
    %74 = arith.mulf %73, %72 : vector<22x128xf32>
    %75 = math.tanh %74 : vector<22x128xf32>
    %cst_35 = arith.constant 1.000000e+00 : f32
    %76 = vector.broadcast %cst_35 : f32 to vector<22x128xf32>
    %77 = arith.addf %76, %75 : vector<22x128xf32>
    %cst_36 = arith.constant 5.000000e-01 : f32
    %78 = vector.broadcast %cst_36 : f32 to vector<22x128xf32>
    %79 = arith.mulf %78, %77 : vector<22x128xf32>
    %80 = arith.mulf %67, %79 : vector<22x128xf32>
    %c0_37 = arith.constant 0 : index
    %c0_38 = arith.constant 0 : index
    %81 = vector.load %arg8[%c0_37, %c0_38] : memref<32x22xbf16, #tpu.memory_space<vmem>>, vector<32x22xbf16>
    %82 = arith.truncf %80 : vector<22x128xf32> to vector<22x128xbf16>
    %cst_39 = arith.constant dense<0.000000e+00> : vector<32x128xf32>
    %83 = tpu.matmul %81, %82, %cst_39 {dimension_numbers = #tpu.dot_dimension_numbers<[1], [0], [0], [1], [0, 0, 1, 1], [], []>} : vector<32x22xbf16>, vector<22x128xbf16>, vector<32x128xf32> -> vector<32x128xf32>
    %c0_40 = arith.constant 0 : index
    %c0_41 = arith.constant 0 : index
    %84 = vector.load %arg9[%c0_40, %c0_41] : memref<32x1xf32, #tpu.memory_space<vmem>>, vector<32x1xf32>
    %85 = vector.broadcast %84 : vector<32x1xf32> to vector<32x128xf32>
    %86 = arith.addf %83, %85 : vector<32x128xf32>
    %87 = arith.mulf %86, %86 : vector<32x128xf32>
    %88 = arith.mulf %86, %87 : vector<32x128xf32>
    %cst_42 = arith.constant 4.471500e-02 : f32
    %89 = vector.broadcast %cst_42 : f32 to vector<32x128xf32>
    %90 = arith.mulf %89, %88 : vector<32x128xf32>
    %91 = arith.addf %86, %90 : vector<32x128xf32>
    %cst_43 = arith.constant 0.797884583 : f32
    %92 = vector.broadcast %cst_43 : f32 to vector<32x128xf32>
    %93 = arith.mulf %92, %91 : vector<32x128xf32>
    %94 = math.tanh %93 : vector<32x128xf32>
    %cst_44 = arith.constant 1.000000e+00 : f32
    %95 = vector.broadcast %cst_44 : f32 to vector<32x128xf32>
    %96 = arith.addf %95, %94 : vector<32x128xf32>
    %cst_45 = arith.constant 5.000000e-01 : f32
    %97 = vector.broadcast %cst_45 : f32 to vector<32x128xf32>
    %98 = arith.mulf %97, %96 : vector<32x128xf32>
    %99 = arith.mulf %86, %98 : vector<32x128xf32>
    %100 = arith.maximumf %56, %99 : vector<32x128xf32>
    %101 = vector.extract_strided_slice %7 {offsets = [2, 0], sizes = [1, 128], strides = [1, 1]} : vector<10x128xi32> to vector<1x128xi32>
    %102 = vector.broadcast %101 : vector<1x128xi32> to vector<128x128xi32>
    %103 = arith.cmpi eq, %13, %102 : vector<128x128xi32>
    %104 = arith.extui %103 : vector<128x128xi1> to vector<128x128xi32>
    %105 = arith.sitofp %104 : vector<128x128xi32> to vector<128x128xf32>
    %106 = arith.truncf %105 : vector<128x128xf32> to vector<128x128xbf16>
    %cst_46 = arith.constant dense<0.000000e+00> : vector<8x128xf32>
    %107 = tpu.matmul %2, %106, %cst_46 {dimension_numbers = #tpu.dot_dimension_numbers<[1], [0], [0], [1], [0, 0, 1, 1], [], []>} : vector<8x128xbf16>, vector<128x128xbf16>, vector<8x128xf32> -> vector<8x128xf32>
    %c0_47 = arith.constant 0 : index
    %c0_48 = arith.constant 0 : index
    %108 = vector.load %arg5[%c0_47, %c0_48] : memref<22x8xbf16, #tpu.memory_space<vmem>>, vector<22x8xbf16>
    %109 = arith.truncf %107 : vector<8x128xf32> to vector<8x128xbf16>
    %cst_49 = arith.constant dense<0.000000e+00> : vector<22x128xf32>
    %110 = tpu.matmul %108, %109, %cst_49 {dimension_numbers = #tpu.dot_dimension_numbers<[1], [0], [0], [1], [0, 0, 1, 1], [], []>} : vector<22x8xbf16>, vector<8x128xbf16>, vector<22x128xf32> -> vector<22x128xf32>
    %111 = arith.addf %110, %12 : vector<22x128xf32>
    %112 = arith.mulf %111, %111 : vector<22x128xf32>
    %113 = arith.mulf %111, %112 : vector<22x128xf32>
    %cst_50 = arith.constant 4.471500e-02 : f32
    %114 = vector.broadcast %cst_50 : f32 to vector<22x128xf32>
    %115 = arith.mulf %114, %113 : vector<22x128xf32>
    %116 = arith.addf %111, %115 : vector<22x128xf32>
    %cst_51 = arith.constant 0.797884583 : f32
    %117 = vector.broadcast %cst_51 : f32 to vector<22x128xf32>
    %118 = arith.mulf %117, %116 : vector<22x128xf32>
    %119 = math.tanh %118 : vector<22x128xf32>
    %cst_52 = arith.constant 1.000000e+00 : f32
    %120 = vector.broadcast %cst_52 : f32 to vector<22x128xf32>
    %121 = arith.addf %120, %119 : vector<22x128xf32>
    %cst_53 = arith.constant 5.000000e-01 : f32
    %122 = vector.broadcast %cst_53 : f32 to vector<22x128xf32>
    %123 = arith.mulf %122, %121 : vector<22x128xf32>
    %124 = arith.mulf %111, %123 : vector<22x128xf32>
    %c0_54 = arith.constant 0 : index
    %c0_55 = arith.constant 0 : index
    %125 = vector.load %arg8[%c0_54, %c0_55] : memref<32x22xbf16, #tpu.memory_space<vmem>>, vector<32x22xbf16>
    %126 = arith.truncf %124 : vector<22x128xf32> to vector<22x128xbf16>
    %cst_56 = arith.constant dense<0.000000e+00> : vector<32x128xf32>
    %127 = tpu.matmul %125, %126, %cst_56 {dimension_numbers = #tpu.dot_dimension_numbers<[1], [0], [0], [1], [0, 0, 1, 1], [], []>} : vector<32x22xbf16>, vector<22x128xbf16>, vector<32x128xf32> -> vector<32x128xf32>
    %c0_57 = arith.constant 0 : index
    %c0_58 = arith.constant 0 : index
    %128 = vector.load %arg9[%c0_57, %c0_58] : memref<32x1xf32, #tpu.memory_space<vmem>>, vector<32x1xf32>
    %129 = vector.broadcast %128 : vector<32x1xf32> to vector<32x128xf32>
    %130 = arith.addf %127, %129 : vector<32x128xf32>
    %131 = arith.mulf %130, %130 : vector<32x128xf32>
    %132 = arith.mulf %130, %131 : vector<32x128xf32>
    %cst_59 = arith.constant 4.471500e-02 : f32
    %133 = vector.broadcast %cst_59 : f32 to vector<32x128xf32>
    %134 = arith.mulf %133, %132 : vector<32x128xf32>
    %135 = arith.addf %130, %134 : vector<32x128xf32>
    %cst_60 = arith.constant 0.797884583 : f32
    %136 = vector.broadcast %cst_60 : f32 to vector<32x128xf32>
    %137 = arith.mulf %136, %135 : vector<32x128xf32>
    %138 = math.tanh %137 : vector<32x128xf32>
    %cst_61 = arith.constant 1.000000e+00 : f32
    %139 = vector.broadcast %cst_61 : f32 to vector<32x128xf32>
    %140 = arith.addf %139, %138 : vector<32x128xf32>
    %cst_62 = arith.constant 5.000000e-01 : f32
    %141 = vector.broadcast %cst_62 : f32 to vector<32x128xf32>
    %142 = arith.mulf %141, %140 : vector<32x128xf32>
    %143 = arith.mulf %130, %142 : vector<32x128xf32>
    %144 = arith.maximumf %100, %143 : vector<32x128xf32>
    %145 = vector.extract_strided_slice %7 {offsets = [3, 0], sizes = [1, 128], strides = [1, 1]} : vector<10x128xi32> to vector<1x128xi32>
    %146 = vector.broadcast %145 : vector<1x128xi32> to vector<128x128xi32>
    %147 = arith.cmpi eq, %13, %146 : vector<128x128xi32>
    %148 = arith.extui %147 : vector<128x128xi1> to vector<128x128xi32>
    %149 = arith.sitofp %148 : vector<128x128xi32> to vector<128x128xf32>
    %150 = arith.truncf %149 : vector<128x128xf32> to vector<128x128xbf16>
    %cst_63 = arith.constant dense<0.000000e+00> : vector<8x128xf32>
    %151 = tpu.matmul %2, %150, %cst_63 {dimension_numbers = #tpu.dot_dimension_numbers<[1], [0], [0], [1], [0, 0, 1, 1], [], []>} : vector<8x128xbf16>, vector<128x128xbf16>, vector<8x128xf32> -> vector<8x128xf32>
    %c0_64 = arith.constant 0 : index
    %c0_65 = arith.constant 0 : index
    %152 = vector.load %arg5[%c0_64, %c0_65] : memref<22x8xbf16, #tpu.memory_space<vmem>>, vector<22x8xbf16>
    %153 = arith.truncf %151 : vector<8x128xf32> to vector<8x128xbf16>
    %cst_66 = arith.constant dense<0.000000e+00> : vector<22x128xf32>
    %154 = tpu.matmul %152, %153, %cst_66 {dimension_numbers = #tpu.dot_dimension_numbers<[1], [0], [0], [1], [0, 0, 1, 1], [], []>} : vector<22x8xbf16>, vector<8x128xbf16>, vector<22x128xf32> -> vector<22x128xf32>
    %155 = arith.addf %154, %12 : vector<22x128xf32>
    %156 = arith.mulf %155, %155 : vector<22x128xf32>
    %157 = arith.mulf %155, %156 : vector<22x128xf32>
    %cst_67 = arith.constant 4.471500e-02 : f32
    %158 = vector.broadcast %cst_67 : f32 to vector<22x128xf32>
    %159 = arith.mulf %158, %157 : vector<22x128xf32>
    %160 = arith.addf %155, %159 : vector<22x128xf32>
    %cst_68 = arith.constant 0.797884583 : f32
    %161 = vector.broadcast %cst_68 : f32 to vector<22x128xf32>
    %162 = arith.mulf %161, %160 : vector<22x128xf32>
    %163 = math.tanh %162 : vector<22x128xf32>
    %cst_69 = arith.constant 1.000000e+00 : f32
    %164 = vector.broadcast %cst_69 : f32 to vector<22x128xf32>
    %165 = arith.addf %164, %163 : vector<22x128xf32>
    %cst_70 = arith.constant 5.000000e-01 : f32
    %166 = vector.broadcast %cst_70 : f32 to vector<22x128xf32>
    %167 = arith.mulf %166, %165 : vector<22x128xf32>
    %168 = arith.mulf %155, %167 : vector<22x128xf32>
    %c0_71 = arith.constant 0 : index
    %c0_72 = arith.constant 0 : index
    %169 = vector.load %arg8[%c0_71, %c0_72] : memref<32x22xbf16, #tpu.memory_space<vmem>>, vector<32x22xbf16>
    %170 = arith.truncf %168 : vector<22x128xf32> to vector<22x128xbf16>
    %cst_73 = arith.constant dense<0.000000e+00> : vector<32x128xf32>
    %171 = tpu.matmul %169, %170, %cst_73 {dimension_numbers = #tpu.dot_dimension_numbers<[1], [0], [0], [1], [0, 0, 1, 1], [], []>} : vector<32x22xbf16>, vector<22x128xbf16>, vector<32x128xf32> -> vector<32x128xf32>
    %c0_74 = arith.constant 0 : index
    %c0_75 = arith.constant 0 : index
    %172 = vector.load %arg9[%c0_74, %c0_75] : memref<32x1xf32, #tpu.memory_space<vmem>>, vector<32x1xf32>
    %173 = vector.broadcast %172 : vector<32x1xf32> to vector<32x128xf32>
    %174 = arith.addf %171, %173 : vector<32x128xf32>
    %175 = arith.mulf %174, %174 : vector<32x128xf32>
    %176 = arith.mulf %174, %175 : vector<32x128xf32>
    %cst_76 = arith.constant 4.471500e-02 : f32
    %177 = vector.broadcast %cst_76 : f32 to vector<32x128xf32>
    %178 = arith.mulf %177, %176 : vector<32x128xf32>
    %179 = arith.addf %174, %178 : vector<32x128xf32>
    %cst_77 = arith.constant 0.797884583 : f32
    %180 = vector.broadcast %cst_77 : f32 to vector<32x128xf32>
    %181 = arith.mulf %180, %179 : vector<32x128xf32>
    %182 = math.tanh %181 : vector<32x128xf32>
    %cst_78 = arith.constant 1.000000e+00 : f32
    %183 = vector.broadcast %cst_78 : f32 to vector<32x128xf32>
    %184 = arith.addf %183, %182 : vector<32x128xf32>
    %cst_79 = arith.constant 5.000000e-01 : f32
    %185 = vector.broadcast %cst_79 : f32 to vector<32x128xf32>
    %186 = arith.mulf %185, %184 : vector<32x128xf32>
    %187 = arith.mulf %174, %186 : vector<32x128xf32>
    %188 = arith.maximumf %144, %187 : vector<32x128xf32>
    %189 = vector.extract_strided_slice %7 {offsets = [4, 0], sizes = [1, 128], strides = [1, 1]} : vector<10x128xi32> to vector<1x128xi32>
    %190 = vector.broadcast %189 : vector<1x128xi32> to vector<128x128xi32>
    %191 = arith.cmpi eq, %13, %190 : vector<128x128xi32>
    %192 = arith.extui %191 : vector<128x128xi1> to vector<128x128xi32>
    %193 = arith.sitofp %192 : vector<128x128xi32> to vector<128x128xf32>
    %194 = arith.truncf %193 : vector<128x128xf32> to vector<128x128xbf16>
    %cst_80 = arith.constant dense<0.000000e+00> : vector<8x128xf32>
    %195 = tpu.matmul %2, %194, %cst_80 {dimension_numbers = #tpu.dot_dimension_numbers<[1], [0], [0], [1], [0, 0, 1, 1], [], []>} : vector<8x128xbf16>, vector<128x128xbf16>, vector<8x128xf32> -> vector<8x128xf32>
    %c0_81 = arith.constant 0 : index
    %c0_82 = arith.constant 0 : index
    %196 = vector.load %arg5[%c0_81, %c0_82] : memref<22x8xbf16, #tpu.memory_space<vmem>>, vector<22x8xbf16>
    %197 = arith.truncf %195 : vector<8x128xf32> to vector<8x128xbf16>
    %cst_83 = arith.constant dense<0.000000e+00> : vector<22x128xf32>
    %198 = tpu.matmul %196, %197, %cst_83 {dimension_numbers = #tpu.dot_dimension_numbers<[1], [0], [0], [1], [0, 0, 1, 1], [], []>} : vector<22x8xbf16>, vector<8x128xbf16>, vector<22x128xf32> -> vector<22x128xf32>
    %199 = arith.addf %198, %12 : vector<22x128xf32>
    %200 = arith.mulf %199, %199 : vector<22x128xf32>
    %201 = arith.mulf %199, %200 : vector<22x128xf32>
    %cst_84 = arith.constant 4.471500e-02 : f32
    %202 = vector.broadcast %cst_84 : f32 to vector<22x128xf32>
    %203 = arith.mulf %202, %201 : vector<22x128xf32>
    %204 = arith.addf %199, %203 : vector<22x128xf32>
    %cst_85 = arith.constant 0.797884583 : f32
    %205 = vector.broadcast %cst_85 : f32 to vector<22x128xf32>
    %206 = arith.mulf %205, %204 : vector<22x128xf32>
    %207 = math.tanh %206 : vector<22x128xf32>
    %cst_86 = arith.constant 1.000000e+00 : f32
    %208 = vector.broadcast %cst_86 : f32 to vector<22x128xf32>
    %209 = arith.addf %208, %207 : vector<22x128xf32>
    %cst_87 = arith.constant 5.000000e-01 : f32
    %210 = vector.broadcast %cst_87 : f32 to vector<22x128xf32>
    %211 = arith.mulf %210, %209 : vector<22x128xf32>
    %212 = arith.mulf %199, %211 : vector<22x128xf32>
    %c0_88 = arith.constant 0 : index
    %c0_89 = arith.constant 0 : index
    %213 = vector.load %arg8[%c0_88, %c0_89] : memref<32x22xbf16, #tpu.memory_space<vmem>>, vector<32x22xbf16>
    %214 = arith.truncf %212 : vector<22x128xf32> to vector<22x128xbf16>
    %cst_90 = arith.constant dense<0.000000e+00> : vector<32x128xf32>
    %215 = tpu.matmul %213, %214, %cst_90 {dimension_numbers = #tpu.dot_dimension_numbers<[1], [0], [0], [1], [0, 0, 1, 1], [], []>} : vector<32x22xbf16>, vector<22x128xbf16>, vector<32x128xf32> -> vector<32x128xf32>
    %c0_91 = arith.constant 0 : index
    %c0_92 = arith.constant 0 : index
    %216 = vector.load %arg9[%c0_91, %c0_92] : memref<32x1xf32, #tpu.memory_space<vmem>>, vector<32x1xf32>
    %217 = vector.broadcast %216 : vector<32x1xf32> to vector<32x128xf32>
    %218 = arith.addf %215, %217 : vector<32x128xf32>
    %219 = arith.mulf %218, %218 : vector<32x128xf32>
    %220 = arith.mulf %218, %219 : vector<32x128xf32>
    %cst_93 = arith.constant 4.471500e-02 : f32
    %221 = vector.broadcast %cst_93 : f32 to vector<32x128xf32>
    %222 = arith.mulf %221, %220 : vector<32x128xf32>
    %223 = arith.addf %218, %222 : vector<32x128xf32>
    %cst_94 = arith.constant 0.797884583 : f32
    %224 = vector.broadcast %cst_94 : f32 to vector<32x128xf32>
    %225 = arith.mulf %224, %223 : vector<32x128xf32>
    %226 = math.tanh %225 : vector<32x128xf32>
    %cst_95 = arith.constant 1.000000e+00 : f32
    %227 = vector.broadcast %cst_95 : f32 to vector<32x128xf32>
    %228 = arith.addf %227, %226 : vector<32x128xf32>
    %cst_96 = arith.constant 5.000000e-01 : f32
    %229 = vector.broadcast %cst_96 : f32 to vector<32x128xf32>
    %230 = arith.mulf %229, %228 : vector<32x128xf32>
    %231 = arith.mulf %218, %230 : vector<32x128xf32>
    %232 = arith.maximumf %188, %231 : vector<32x128xf32>
    %233 = vector.extract_strided_slice %7 {offsets = [5, 0], sizes = [1, 128], strides = [1, 1]} : vector<10x128xi32> to vector<1x128xi32>
    %234 = vector.broadcast %233 : vector<1x128xi32> to vector<128x128xi32>
    %235 = arith.cmpi eq, %13, %234 : vector<128x128xi32>
    %236 = arith.extui %235 : vector<128x128xi1> to vector<128x128xi32>
    %237 = arith.sitofp %236 : vector<128x128xi32> to vector<128x128xf32>
    %238 = arith.truncf %237 : vector<128x128xf32> to vector<128x128xbf16>
    %cst_97 = arith.constant dense<0.000000e+00> : vector<8x128xf32>
    %239 = tpu.matmul %2, %238, %cst_97 {dimension_numbers = #tpu.dot_dimension_numbers<[1], [0], [0], [1], [0, 0, 1, 1], [], []>} : vector<8x128xbf16>, vector<128x128xbf16>, vector<8x128xf32> -> vector<8x128xf32>
    %c0_98 = arith.constant 0 : index
    %c0_99 = arith.constant 0 : index
    %240 = vector.load %arg5[%c0_98, %c0_99] : memref<22x8xbf16, #tpu.memory_space<vmem>>, vector<22x8xbf16>
    %241 = arith.truncf %239 : vector<8x128xf32> to vector<8x128xbf16>
    %cst_100 = arith.constant dense<0.000000e+00> : vector<22x128xf32>
    %242 = tpu.matmul %240, %241, %cst_100 {dimension_numbers = #tpu.dot_dimension_numbers<[1], [0], [0], [1], [0, 0, 1, 1], [], []>} : vector<22x8xbf16>, vector<8x128xbf16>, vector<22x128xf32> -> vector<22x128xf32>
    %243 = arith.addf %242, %12 : vector<22x128xf32>
    %244 = arith.mulf %243, %243 : vector<22x128xf32>
    %245 = arith.mulf %243, %244 : vector<22x128xf32>
    %cst_101 = arith.constant 4.471500e-02 : f32
    %246 = vector.broadcast %cst_101 : f32 to vector<22x128xf32>
    %247 = arith.mulf %246, %245 : vector<22x128xf32>
    %248 = arith.addf %243, %247 : vector<22x128xf32>
    %cst_102 = arith.constant 0.797884583 : f32
    %249 = vector.broadcast %cst_102 : f32 to vector<22x128xf32>
    %250 = arith.mulf %249, %248 : vector<22x128xf32>
    %251 = math.tanh %250 : vector<22x128xf32>
    %cst_103 = arith.constant 1.000000e+00 : f32
    %252 = vector.broadcast %cst_103 : f32 to vector<22x128xf32>
    %253 = arith.addf %252, %251 : vector<22x128xf32>
    %cst_104 = arith.constant 5.000000e-01 : f32
    %254 = vector.broadcast %cst_104 : f32 to vector<22x128xf32>
    %255 = arith.mulf %254, %253 : vector<22x128xf32>
    %256 = arith.mulf %243, %255 : vector<22x128xf32>
    %c0_105 = arith.constant 0 : index
    %c0_106 = arith.constant 0 : index
    %257 = vector.load %arg8[%c0_105, %c0_106] : memref<32x22xbf16, #tpu.memory_space<vmem>>, vector<32x22xbf16>
    %258 = arith.truncf %256 : vector<22x128xf32> to vector<22x128xbf16>
    %cst_107 = arith.constant dense<0.000000e+00> : vector<32x128xf32>
    %259 = tpu.matmul %257, %258, %cst_107 {dimension_numbers = #tpu.dot_dimension_numbers<[1], [0], [0], [1], [0, 0, 1, 1], [], []>} : vector<32x22xbf16>, vector<22x128xbf16>, vector<32x128xf32> -> vector<32x128xf32>
    %c0_108 = arith.constant 0 : index
    %c0_109 = arith.constant 0 : index
    %260 = vector.load %arg9[%c0_108, %c0_109] : memref<32x1xf32, #tpu.memory_space<vmem>>, vector<32x1xf32>
    %261 = vector.broadcast %260 : vector<32x1xf32> to vector<32x128xf32>
    %262 = arith.addf %259, %261 : vector<32x128xf32>
    %263 = arith.mulf %262, %262 : vector<32x128xf32>
    %264 = arith.mulf %262, %263 : vector<32x128xf32>
    %cst_110 = arith.constant 4.471500e-02 : f32
    %265 = vector.broadcast %cst_110 : f32 to vector<32x128xf32>
    %266 = arith.mulf %265, %264 : vector<32x128xf32>
    %267 = arith.addf %262, %266 : vector<32x128xf32>
    %cst_111 = arith.constant 0.797884583 : f32
    %268 = vector.broadcast %cst_111 : f32 to vector<32x128xf32>
    %269 = arith.mulf %268, %267 : vector<32x128xf32>
    %270 = math.tanh %269 : vector<32x128xf32>
    %cst_112 = arith.constant 1.000000e+00 : f32
    %271 = vector.broadcast %cst_112 : f32 to vector<32x128xf32>
    %272 = arith.addf %271, %270 : vector<32x128xf32>
    %cst_113 = arith.constant 5.000000e-01 : f32
    %273 = vector.broadcast %cst_113 : f32 to vector<32x128xf32>
    %274 = arith.mulf %273, %272 : vector<32x128xf32>
    %275 = arith.mulf %262, %274 : vector<32x128xf32>
    %276 = arith.maximumf %232, %275 : vector<32x128xf32>
    %277 = vector.extract_strided_slice %7 {offsets = [6, 0], sizes = [1, 128], strides = [1, 1]} : vector<10x128xi32> to vector<1x128xi32>
    %278 = vector.broadcast %277 : vector<1x128xi32> to vector<128x128xi32>
    %279 = arith.cmpi eq, %13, %278 : vector<128x128xi32>
    %280 = arith.extui %279 : vector<128x128xi1> to vector<128x128xi32>
    %281 = arith.sitofp %280 : vector<128x128xi32> to vector<128x128xf32>
    %282 = arith.truncf %281 : vector<128x128xf32> to vector<128x128xbf16>
    %cst_114 = arith.constant dense<0.000000e+00> : vector<8x128xf32>
    %283 = tpu.matmul %2, %282, %cst_114 {dimension_numbers = #tpu.dot_dimension_numbers<[1], [0], [0], [1], [0, 0, 1, 1], [], []>} : vector<8x128xbf16>, vector<128x128xbf16>, vector<8x128xf32> -> vector<8x128xf32>
    %c0_115 = arith.constant 0 : index
    %c0_116 = arith.constant 0 : index
    %284 = vector.load %arg5[%c0_115, %c0_116] : memref<22x8xbf16, #tpu.memory_space<vmem>>, vector<22x8xbf16>
    %285 = arith.truncf %283 : vector<8x128xf32> to vector<8x128xbf16>
    %cst_117 = arith.constant dense<0.000000e+00> : vector<22x128xf32>
    %286 = tpu.matmul %284, %285, %cst_117 {dimension_numbers = #tpu.dot_dimension_numbers<[1], [0], [0], [1], [0, 0, 1, 1], [], []>} : vector<22x8xbf16>, vector<8x128xbf16>, vector<22x128xf32> -> vector<22x128xf32>
    %287 = arith.addf %286, %12 : vector<22x128xf32>
    %288 = arith.mulf %287, %287 : vector<22x128xf32>
    %289 = arith.mulf %287, %288 : vector<22x128xf32>
    %cst_118 = arith.constant 4.471500e-02 : f32
    %290 = vector.broadcast %cst_118 : f32 to vector<22x128xf32>
    %291 = arith.mulf %290, %289 : vector<22x128xf32>
    %292 = arith.addf %287, %291 : vector<22x128xf32>
    %cst_119 = arith.constant 0.797884583 : f32
    %293 = vector.broadcast %cst_119 : f32 to vector<22x128xf32>
    %294 = arith.mulf %293, %292 : vector<22x128xf32>
    %295 = math.tanh %294 : vector<22x128xf32>
    %cst_120 = arith.constant 1.000000e+00 : f32
    %296 = vector.broadcast %cst_120 : f32 to vector<22x128xf32>
    %297 = arith.addf %296, %295 : vector<22x128xf32>
    %cst_121 = arith.constant 5.000000e-01 : f32
    %298 = vector.broadcast %cst_121 : f32 to vector<22x128xf32>
    %299 = arith.mulf %298, %297 : vector<22x128xf32>
    %300 = arith.mulf %287, %299 : vector<22x128xf32>
    %c0_122 = arith.constant 0 : index
    %c0_123 = arith.constant 0 : index
    %301 = vector.load %arg8[%c0_122, %c0_123] : memref<32x22xbf16, #tpu.memory_space<vmem>>, vector<32x22xbf16>
    %302 = arith.truncf %300 : vector<22x128xf32> to vector<22x128xbf16>
    %cst_124 = arith.constant dense<0.000000e+00> : vector<32x128xf32>
    %303 = tpu.matmul %301, %302, %cst_124 {dimension_numbers = #tpu.dot_dimension_numbers<[1], [0], [0], [1], [0, 0, 1, 1], [], []>} : vector<32x22xbf16>, vector<22x128xbf16>, vector<32x128xf32> -> vector<32x128xf32>
    %c0_125 = arith.constant 0 : index
    %c0_126 = arith.constant 0 : index
    %304 = vector.load %arg9[%c0_125, %c0_126] : memref<32x1xf32, #tpu.memory_space<vmem>>, vector<32x1xf32>
    %305 = vector.broadcast %304 : vector<32x1xf32> to vector<32x128xf32>
    %306 = arith.addf %303, %305 : vector<32x128xf32>
    %307 = arith.mulf %306, %306 : vector<32x128xf32>
    %308 = arith.mulf %306, %307 : vector<32x128xf32>
    %cst_127 = arith.constant 4.471500e-02 : f32
    %309 = vector.broadcast %cst_127 : f32 to vector<32x128xf32>
    %310 = arith.mulf %309, %308 : vector<32x128xf32>
    %311 = arith.addf %306, %310 : vector<32x128xf32>
    %cst_128 = arith.constant 0.797884583 : f32
    %312 = vector.broadcast %cst_128 : f32 to vector<32x128xf32>
    %313 = arith.mulf %312, %311 : vector<32x128xf32>
    %314 = math.tanh %313 : vector<32x128xf32>
    %cst_129 = arith.constant 1.000000e+00 : f32
    %315 = vector.broadcast %cst_129 : f32 to vector<32x128xf32>
    %316 = arith.addf %315, %314 : vector<32x128xf32>
    %cst_130 = arith.constant 5.000000e-01 : f32
    %317 = vector.broadcast %cst_130 : f32 to vector<32x128xf32>
    %318 = arith.mulf %317, %316 : vector<32x128xf32>
    %319 = arith.mulf %306, %318 : vector<32x128xf32>
    %320 = arith.maximumf %276, %319 : vector<32x128xf32>
    %321 = vector.extract_strided_slice %7 {offsets = [7, 0], sizes = [1, 128], strides = [1, 1]} : vector<10x128xi32> to vector<1x128xi32>
    %322 = vector.broadcast %321 : vector<1x128xi32> to vector<128x128xi32>
    %323 = arith.cmpi eq, %13, %322 : vector<128x128xi32>
    %324 = arith.extui %323 : vector<128x128xi1> to vector<128x128xi32>
    %325 = arith.sitofp %324 : vector<128x128xi32> to vector<128x128xf32>
    %326 = arith.truncf %325 : vector<128x128xf32> to vector<128x128xbf16>
    %cst_131 = arith.constant dense<0.000000e+00> : vector<8x128xf32>
    %327 = tpu.matmul %2, %326, %cst_131 {dimension_numbers = #tpu.dot_dimension_numbers<[1], [0], [0], [1], [0, 0, 1, 1], [], []>} : vector<8x128xbf16>, vector<128x128xbf16>, vector<8x128xf32> -> vector<8x128xf32>
    %c0_132 = arith.constant 0 : index
    %c0_133 = arith.constant 0 : index
    %328 = vector.load %arg5[%c0_132, %c0_133] : memref<22x8xbf16, #tpu.memory_space<vmem>>, vector<22x8xbf16>
    %329 = arith.truncf %327 : vector<8x128xf32> to vector<8x128xbf16>
    %cst_134 = arith.constant dense<0.000000e+00> : vector<22x128xf32>
    %330 = tpu.matmul %328, %329, %cst_134 {dimension_numbers = #tpu.dot_dimension_numbers<[1], [0], [0], [1], [0, 0, 1, 1], [], []>} : vector<22x8xbf16>, vector<8x128xbf16>, vector<22x128xf32> -> vector<22x128xf32>
    %331 = arith.addf %330, %12 : vector<22x128xf32>
    %332 = arith.mulf %331, %331 : vector<22x128xf32>
    %333 = arith.mulf %331, %332 : vector<22x128xf32>
    %cst_135 = arith.constant 4.471500e-02 : f32
    %334 = vector.broadcast %cst_135 : f32 to vector<22x128xf32>
    %335 = arith.mulf %334, %333 : vector<22x128xf32>
    %336 = arith.addf %331, %335 : vector<22x128xf32>
    %cst_136 = arith.constant 0.797884583 : f32
    %337 = vector.broadcast %cst_136 : f32 to vector<22x128xf32>
    %338 = arith.mulf %337, %336 : vector<22x128xf32>
    %339 = math.tanh %338 : vector<22x128xf32>
    %cst_137 = arith.constant 1.000000e+00 : f32
    %340 = vector.broadcast %cst_137 : f32 to vector<22x128xf32>
    %341 = arith.addf %340, %339 : vector<22x128xf32>
    %cst_138 = arith.constant 5.000000e-01 : f32
    %342 = vector.broadcast %cst_138 : f32 to vector<22x128xf32>
    %343 = arith.mulf %342, %341 : vector<22x128xf32>
    %344 = arith.mulf %331, %343 : vector<22x128xf32>
    %c0_139 = arith.constant 0 : index
    %c0_140 = arith.constant 0 : index
    %345 = vector.load %arg8[%c0_139, %c0_140] : memref<32x22xbf16, #tpu.memory_space<vmem>>, vector<32x22xbf16>
    %346 = arith.truncf %344 : vector<22x128xf32> to vector<22x128xbf16>
    %cst_141 = arith.constant dense<0.000000e+00> : vector<32x128xf32>
    %347 = tpu.matmul %345, %346, %cst_141 {dimension_numbers = #tpu.dot_dimension_numbers<[1], [0], [0], [1], [0, 0, 1, 1], [], []>} : vector<32x22xbf16>, vector<22x128xbf16>, vector<32x128xf32> -> vector<32x128xf32>
    %c0_142 = arith.constant 0 : index
    %c0_143 = arith.constant 0 : index
    %348 = vector.load %arg9[%c0_142, %c0_143] : memref<32x1xf32, #tpu.memory_space<vmem>>, vector<32x1xf32>
    %349 = vector.broadcast %348 : vector<32x1xf32> to vector<32x128xf32>
    %350 = arith.addf %347, %349 : vector<32x128xf32>
    %351 = arith.mulf %350, %350 : vector<32x128xf32>
    %352 = arith.mulf %350, %351 : vector<32x128xf32>
    %cst_144 = arith.constant 4.471500e-02 : f32
    %353 = vector.broadcast %cst_144 : f32 to vector<32x128xf32>
    %354 = arith.mulf %353, %352 : vector<32x128xf32>
    %355 = arith.addf %350, %354 : vector<32x128xf32>
    %cst_145 = arith.constant 0.797884583 : f32
    %356 = vector.broadcast %cst_145 : f32 to vector<32x128xf32>
    %357 = arith.mulf %356, %355 : vector<32x128xf32>
    %358 = math.tanh %357 : vector<32x128xf32>
    %cst_146 = arith.constant 1.000000e+00 : f32
    %359 = vector.broadcast %cst_146 : f32 to vector<32x128xf32>
    %360 = arith.addf %359, %358 : vector<32x128xf32>
    %cst_147 = arith.constant 5.000000e-01 : f32
    %361 = vector.broadcast %cst_147 : f32 to vector<32x128xf32>
    %362 = arith.mulf %361, %360 : vector<32x128xf32>
    %363 = arith.mulf %350, %362 : vector<32x128xf32>
    %364 = arith.maximumf %320, %363 : vector<32x128xf32>
    %365 = vector.extract_strided_slice %7 {offsets = [8, 0], sizes = [1, 128], strides = [1, 1]} : vector<10x128xi32> to vector<1x128xi32>
    %366 = vector.broadcast %365 : vector<1x128xi32> to vector<128x128xi32>
    %367 = arith.cmpi eq, %13, %366 : vector<128x128xi32>
    %368 = arith.extui %367 : vector<128x128xi1> to vector<128x128xi32>
    %369 = arith.sitofp %368 : vector<128x128xi32> to vector<128x128xf32>
    %370 = arith.truncf %369 : vector<128x128xf32> to vector<128x128xbf16>
    %cst_148 = arith.constant dense<0.000000e+00> : vector<8x128xf32>
    %371 = tpu.matmul %2, %370, %cst_148 {dimension_numbers = #tpu.dot_dimension_numbers<[1], [0], [0], [1], [0, 0, 1, 1], [], []>} : vector<8x128xbf16>, vector<128x128xbf16>, vector<8x128xf32> -> vector<8x128xf32>
    %c0_149 = arith.constant 0 : index
    %c0_150 = arith.constant 0 : index
    %372 = vector.load %arg5[%c0_149, %c0_150] : memref<22x8xbf16, #tpu.memory_space<vmem>>, vector<22x8xbf16>
    %373 = arith.truncf %371 : vector<8x128xf32> to vector<8x128xbf16>
    %cst_151 = arith.constant dense<0.000000e+00> : vector<22x128xf32>
    %374 = tpu.matmul %372, %373, %cst_151 {dimension_numbers = #tpu.dot_dimension_numbers<[1], [0], [0], [1], [0, 0, 1, 1], [], []>} : vector<22x8xbf16>, vector<8x128xbf16>, vector<22x128xf32> -> vector<22x128xf32>
    %375 = arith.addf %374, %12 : vector<22x128xf32>
    %376 = arith.mulf %375, %375 : vector<22x128xf32>
    %377 = arith.mulf %375, %376 : vector<22x128xf32>
    %cst_152 = arith.constant 4.471500e-02 : f32
    %378 = vector.broadcast %cst_152 : f32 to vector<22x128xf32>
    %379 = arith.mulf %378, %377 : vector<22x128xf32>
    %380 = arith.addf %375, %379 : vector<22x128xf32>
    %cst_153 = arith.constant 0.797884583 : f32
    %381 = vector.broadcast %cst_153 : f32 to vector<22x128xf32>
    %382 = arith.mulf %381, %380 : vector<22x128xf32>
    %383 = math.tanh %382 : vector<22x128xf32>
    %cst_154 = arith.constant 1.000000e+00 : f32
    %384 = vector.broadcast %cst_154 : f32 to vector<22x128xf32>
    %385 = arith.addf %384, %383 : vector<22x128xf32>
    %cst_155 = arith.constant 5.000000e-01 : f32
    %386 = vector.broadcast %cst_155 : f32 to vector<22x128xf32>
    %387 = arith.mulf %386, %385 : vector<22x128xf32>
    %388 = arith.mulf %375, %387 : vector<22x128xf32>
    %c0_156 = arith.constant 0 : index
    %c0_157 = arith.constant 0 : index
    %389 = vector.load %arg8[%c0_156, %c0_157] : memref<32x22xbf16, #tpu.memory_space<vmem>>, vector<32x22xbf16>
    %390 = arith.truncf %388 : vector<22x128xf32> to vector<22x128xbf16>
    %cst_158 = arith.constant dense<0.000000e+00> : vector<32x128xf32>
    %391 = tpu.matmul %389, %390, %cst_158 {dimension_numbers = #tpu.dot_dimension_numbers<[1], [0], [0], [1], [0, 0, 1, 1], [], []>} : vector<32x22xbf16>, vector<22x128xbf16>, vector<32x128xf32> -> vector<32x128xf32>
    %c0_159 = arith.constant 0 : index
    %c0_160 = arith.constant 0 : index
    %392 = vector.load %arg9[%c0_159, %c0_160] : memref<32x1xf32, #tpu.memory_space<vmem>>, vector<32x1xf32>
    %393 = vector.broadcast %392 : vector<32x1xf32> to vector<32x128xf32>
    %394 = arith.addf %391, %393 : vector<32x128xf32>
    %395 = arith.mulf %394, %394 : vector<32x128xf32>
    %396 = arith.mulf %394, %395 : vector<32x128xf32>
    %cst_161 = arith.constant 4.471500e-02 : f32
    %397 = vector.broadcast %cst_161 : f32 to vector<32x128xf32>
    %398 = arith.mulf %397, %396 : vector<32x128xf32>
    %399 = arith.addf %394, %398 : vector<32x128xf32>
    %cst_162 = arith.constant 0.797884583 : f32
    %400 = vector.broadcast %cst_162 : f32 to vector<32x128xf32>
    %401 = arith.mulf %400, %399 : vector<32x128xf32>
    %402 = math.tanh %401 : vector<32x128xf32>
    %cst_163 = arith.constant 1.000000e+00 : f32
    %403 = vector.broadcast %cst_163 : f32 to vector<32x128xf32>
    %404 = arith.addf %403, %402 : vector<32x128xf32>
    %cst_164 = arith.constant 5.000000e-01 : f32
    %405 = vector.broadcast %cst_164 : f32 to vector<32x128xf32>
    %406 = arith.mulf %405, %404 : vector<32x128xf32>
    %407 = arith.mulf %394, %406 : vector<32x128xf32>
    %408 = arith.maximumf %364, %407 : vector<32x128xf32>
    %409 = vector.extract_strided_slice %7 {offsets = [9, 0], sizes = [1, 128], strides = [1, 1]} : vector<10x128xi32> to vector<1x128xi32>
    %410 = vector.broadcast %409 : vector<1x128xi32> to vector<128x128xi32>
    %411 = arith.cmpi eq, %13, %410 : vector<128x128xi32>
    %412 = arith.extui %411 : vector<128x128xi1> to vector<128x128xi32>
    %413 = arith.sitofp %412 : vector<128x128xi32> to vector<128x128xf32>
    %414 = arith.truncf %413 : vector<128x128xf32> to vector<128x128xbf16>
    %cst_165 = arith.constant dense<0.000000e+00> : vector<8x128xf32>
    %415 = tpu.matmul %2, %414, %cst_165 {dimension_numbers = #tpu.dot_dimension_numbers<[1], [0], [0], [1], [0, 0, 1, 1], [], []>} : vector<8x128xbf16>, vector<128x128xbf16>, vector<8x128xf32> -> vector<8x128xf32>
    %c0_166 = arith.constant 0 : index
    %c0_167 = arith.constant 0 : index
    %416 = vector.load %arg5[%c0_166, %c0_167] : memref<22x8xbf16, #tpu.memory_space<vmem>>, vector<22x8xbf16>
    %417 = arith.truncf %415 : vector<8x128xf32> to vector<8x128xbf16>
    %cst_168 = arith.constant dense<0.000000e+00> : vector<22x128xf32>
    %418 = tpu.matmul %416, %417, %cst_168 {dimension_numbers = #tpu.dot_dimension_numbers<[1], [0], [0], [1], [0, 0, 1, 1], [], []>} : vector<22x8xbf16>, vector<8x128xbf16>, vector<22x128xf32> -> vector<22x128xf32>
    %419 = arith.addf %418, %12 : vector<22x128xf32>
    %420 = arith.mulf %419, %419 : vector<22x128xf32>
    %421 = arith.mulf %419, %420 : vector<22x128xf32>
    %cst_169 = arith.constant 4.471500e-02 : f32
    %422 = vector.broadcast %cst_169 : f32 to vector<22x128xf32>
    %423 = arith.mulf %422, %421 : vector<22x128xf32>
    %424 = arith.addf %419, %423 : vector<22x128xf32>
    %cst_170 = arith.constant 0.797884583 : f32
    %425 = vector.broadcast %cst_170 : f32 to vector<22x128xf32>
    %426 = arith.mulf %425, %424 : vector<22x128xf32>
    %427 = math.tanh %426 : vector<22x128xf32>
    %cst_171 = arith.constant 1.000000e+00 : f32
    %428 = vector.broadcast %cst_171 : f32 to vector<22x128xf32>
    %429 = arith.addf %428, %427 : vector<22x128xf32>
    %cst_172 = arith.constant 5.000000e-01 : f32
    %430 = vector.broadcast %cst_172 : f32 to vector<22x128xf32>
    %431 = arith.mulf %430, %429 : vector<22x128xf32>
    %432 = arith.mulf %419, %431 : vector<22x128xf32>
    %c0_173 = arith.constant 0 : index
    %c0_174 = arith.constant 0 : index
    %433 = vector.load %arg8[%c0_173, %c0_174] : memref<32x22xbf16, #tpu.memory_space<vmem>>, vector<32x22xbf16>
    %434 = arith.truncf %432 : vector<22x128xf32> to vector<22x128xbf16>
    %cst_175 = arith.constant dense<0.000000e+00> : vector<32x128xf32>
    %435 = tpu.matmul %433, %434, %cst_175 {dimension_numbers = #tpu.dot_dimension_numbers<[1], [0], [0], [1], [0, 0, 1, 1], [], []>} : vector<32x22xbf16>, vector<22x128xbf16>, vector<32x128xf32> -> vector<32x128xf32>
    %c0_176 = arith.constant 0 : index
    %c0_177 = arith.constant 0 : index
    %436 = vector.load %arg9[%c0_176, %c0_177] : memref<32x1xf32, #tpu.memory_space<vmem>>, vector<32x1xf32>
    %437 = vector.broadcast %436 : vector<32x1xf32> to vector<32x128xf32>
    %438 = arith.addf %435, %437 : vector<32x128xf32>
    %439 = arith.mulf %438, %438 : vector<32x128xf32>
    %440 = arith.mulf %438, %439 : vector<32x128xf32>
    %cst_178 = arith.constant 4.471500e-02 : f32
    %441 = vector.broadcast %cst_178 : f32 to vector<32x128xf32>
    %442 = arith.mulf %441, %440 : vector<32x128xf32>
    %443 = arith.addf %438, %442 : vector<32x128xf32>
    %cst_179 = arith.constant 0.797884583 : f32
    %444 = vector.broadcast %cst_179 : f32 to vector<32x128xf32>
    %445 = arith.mulf %444, %443 : vector<32x128xf32>
    %446 = math.tanh %445 : vector<32x128xf32>
    %cst_180 = arith.constant 1.000000e+00 : f32
    %447 = vector.broadcast %cst_180 : f32 to vector<32x128xf32>
    %448 = arith.addf %447, %446 : vector<32x128xf32>
    %cst_181 = arith.constant 5.000000e-01 : f32
    %449 = vector.broadcast %cst_181 : f32 to vector<32x128xf32>
    %450 = arith.mulf %449, %448 : vector<32x128xf32>
    %451 = arith.mulf %438, %450 : vector<32x128xf32>
    %452 = arith.maximumf %408, %451 : vector<32x128xf32>
    %c0_182 = arith.constant 0 : index
    %c0_183 = arith.constant 0 : index
    %c0_184 = arith.constant 0 : index
    %453 = vector.load %arg10[%c0_182, %c0_183, %c0_184] : memref<1x32x128xf32, #tpu.memory_space<vmem>>, vector<1x32x128xf32>
    %454 = vector.shape_cast %453 : vector<1x32x128xf32> to vector<32x128xf32>
    %455 = vector.shape_cast %452 : vector<32x128xf32> to vector<1x32x128xf32>
    tpu.vector_store %arg10[%c0_182, %c0_183, %c0_184], %455 {strides = array<i32>} : memref<1x32x128xf32, #tpu.memory_space<vmem>>, vector<1x32x128xf32>,
    return
  }
  func.func @transform_0(%arg0: i32, %arg1: i32) -> (i32, i32, i32) {
    %c0_i32 = arith.constant 0 : i32
    %c0_i32_0 = arith.constant 0 : i32
    %c0_i32_1 = arith.constant 0 : i32
    return %arg0, %c0_i32, %c0_i32_0 : i32, i32, i32
  }
  func.func @transform_1(%arg0: i32, %arg1: i32) -> (i32, i32, i32) {
    %c0_i32 = arith.constant 0 : i32
    %c0_i32_0 = arith.constant 0 : i32
    return %arg0, %c0_i32, %arg1 : i32, i32, i32
  }
  func.func @transform_2(%arg0: i32, %arg1: i32) -> (i32, i32, i32) {
    %c0_i32 = arith.constant 0 : i32
    %c0_i32_0 = arith.constant 0 : i32
    return %arg0, %c0_i32, %arg1 : i32, i32, i32
  }
  func.func @transform_3(%arg0: i32, %arg1: i32) -> (i32, i32) {
    %c0_i32 = arith.constant 0 : i32
    %c0_i32_0 = arith.constant 0 : i32
    %c0_i32_1 = arith.constant 0 : i32
    return %c0_i32, %c0_i32_0 : i32, i32
  }
  func.func @transform_4(%arg0: i32, %arg1: i32) -> (i32, i32) {
    %c0_i32 = arith.constant 0 : i32
    %c0_i32_0 = arith.constant 0 : i32
    %c0_i32_1 = arith.constant 0 : i32
    return %c0_i32, %c0_i32_0 : i32, i32
  }
  func.func @transform_5(%arg0: i32, %arg1: i32) -> (i32, i32) {
    %c0_i32 = arith.constant 0 : i32
    %c0_i32_0 = arith.constant 0 : i32
    %c0_i32_1 = arith.constant 0 : i32
    return %c0_i32, %c0_i32_0 : i32, i32
  }
  func.func @transform_6(%arg0: i32, %arg1: i32) -> (i32, i32) {
    %c0_i32 = arith.constant 0 : i32
    %c0_i32_0 = arith.constant 0 : i32
    %c0_i32_1 = arith.constant 0 : i32
    return %c0_i32, %c0_i32_0 : i32, i32
  }
  func.func @transform_7(%arg0: i32, %arg1: i32) -> (i32, i32) {
    %c0_i32 = arith.constant 0 : i32
    %c0_i32_0 = arith.constant 0 : i32
    %c0_i32_1 = arith.constant 0 : i32
    return %c0_i32, %c0_i32_0 : i32, i32
  }
  func.func @transform_8(%arg0: i32, %arg1: i32) -> (i32, i32, i32) {
    %c0_i32 = arith.constant 0 : i32
    %c0_i32_0 = arith.constant 0 : i32
    return %arg0, %c0_i32, %arg1 : i32, i32, i32
  }
}

</mosaic_0001>

<llo_original>
// kernel: _lambda_.5
$region0: #{_lambda_.5}
  #allocation0 [shape = 'u32[]', space=smem, size = 0x4, offset = 0x4, fixed_abs, tag = 'smem constant byte address 0x4 - core index']
  #allocation1 [shape = 'u32[144,128]{1,0:T(1,128)}', space=vmem, size = 0x12000, scoped, tag = 'internal scratch']
  %s0 = inlined_call_operand.vmem [shape: f32[2,128,2], index: 0, kind: input, shape index: {}]
  %s1 = inlined_call_operand.vmem [shape: f32[2,2,128], index: 1, kind: input, shape index: {}]
  %s2 = inlined_call_operand.vmem [shape: f32[2,128,128], index: 2, kind: output, shape index: {}]
  %s3 = sld [smem:[#allocation0]]
  $region41: #{_lambda_.5} parent=0
    _
  %s5 = ssub.s32 1, %s3
  %s6 = scalar_select 0, %s5, %s3
  loop: start=0, step=1, limit=4
  $region2: #{_lambda_.5} parent=0 // loop_pre_header
    _
  $region3: #{_lambda_.5} parent=0 // loop_header
    %s8 = sphi 0, %s12
    %p9 = scmp.ge.s32.totalorder %s8, 4
    %s15 = sphi 0, %s27
    %s16 = sphi 0, %s23
    %s17 = sphi 0, %s15
    %s18 = sphi 0, %s16
    %s19 = sphi 0, %s17
    %s20 = sphi 0, %s18
    %s32 = sphi 0, %s34
    %s35 = sphi 0, %s32
    %s36 = sphi 0, %s35
    %s52 = sphi 0, %s36
    %s58 = sphi 0, %s60
    %s61 = sphi 0, %s58
    %s62 = sphi 0, %s61
    %s78 = sphi 0, %s62
    %s86 = sphi 0, %s88
    %s89 = sphi 0, %s86
    %s90 = sphi 0, %s89
    %s106 = sphi 0, %s90
  $region4: #{_lambda_.5} parent=0 // loop_header_branch
    %11 = sbr.rel (%p9) target = $region8
  $region5: #{_lambda_.5} parent=0 // loop_body
    %s13 = ssub.s32 %s8, 1
    %s14 = ssub.s32 %s8, 2
    %s21 = sadd.s32 1, %s16
    %p22 = scmp.ge.s32.totalorder %s21, 1
    %s23 = scalar_select %p22, 0, %s21
    %s24 = sadd.s32 1, %s15
    %s25 = scalar_select %p22, %s24, %s15
    %p26 = scmp.ge.s32.totalorder %s25, 2
    %s27 = scalar_select %p26, 0, %s25
    %s28 = ssub.s32 %s15, %s27
    %s29 = ssub.s32 %s16, %s23
    %s30 = sor.u32 %s28, %s29
    %p31 = scmp.eq.s32.totalorder %s30, 0
    %s33 = sadd.s32 %s32, 1
    %s34 = scalar_select %p31, %s32, %s33
    %p37 = pneg %p31
    %p38 = scmp.eq.s32.totalorder %s8, 1
    %p39 = por %p37, %p38
    %p40 = scmp.ne.s32.totalorder %s32, %s35
    %p41 = scmp.eq.s32.totalorder %s8, 0
    %p42 = por %p40, %p41
    %p43 = scmp.ne.s32.totalorder %s32, %s35
    %p44 = scmp.eq.s32.totalorder %s13, 1
    %p45 = por %p43, %p44
    %p46 = scmp.ne.s32.totalorder %s35, %s36
    %p47 = scmp.eq.s32.totalorder %s13, 0
    %p48 = por %p46, %p47
    %p49 = scmp.ne.s32.totalorder %s35, %s36
    %p50 = scmp.eq.s32.totalorder %s14, 1
    %p51 = por %p49, %p50
    %p53 = scmp.ne.s32.totalorder %s36, %s52
    %p54 = scmp.eq.s32.totalorder %s14, 0
    %p55 = por %p53, %p54
    %s56 = ssub.s32 %s15, %s27
    %p57 = scmp.eq.s32.totalorder %s56, 0
    %s59 = sadd.s32 %s58, 1
    %s60 = scalar_select %p57, %s58, %s59
    %p63 = pneg %p57
    %p64 = scmp.eq.s32.totalorder %s8, 1
    %p65 = por %p63, %p64
    %p66 = scmp.ne.s32.totalorder %s58, %s61
    %p67 = scmp.eq.s32.totalorder %s8, 0
    %p68 = por %p66, %p67
    %p69 = scmp.ne.s32.totalorder %s58, %s61
    %p70 = scmp.eq.s32.totalorder %s13, 1
    %p71 = por %p69, %p70
    %p72 = scmp.ne.s32.totalorder %s61, %s62
    %p73 = scmp.eq.s32.totalorder %s13, 0
    %p74 = por %p72, %p73
    %p75 = scmp.ne.s32.totalorder %s61, %s62
    %p76 = scmp.eq.s32.totalorder %s14, 1
    %p77 = por %p75, %p76
    %p79 = scmp.ne.s32.totalorder %s62, %s78
    %p80 = scmp.eq.s32.totalorder %s14, 0
    %p81 = por %p79, %p80
    %s82 = ssub.s32 %s15, %s27
    %s83 = ssub.s32 %s16, %s23
    %s84 = sor.u32 %s82, %s83
    %p85 = scmp.eq.s32.totalorder %s84, 0
    %s87 = sadd.s32 %s86, 1
    %s88 = scalar_select %p85, %s86, %s87
    %p91 = pneg %p85
    %p92 = scmp.eq.s32.totalorder %s8, 1
    %p93 = por %p91, %p92
    %p94 = scmp.ne.s32.totalorder %s86, %s89
    %p95 = scmp.eq.s32.totalorder %s8, 0
    %p96 = por %p94, %p95
    %p97 = scmp.ne.s32.totalorder %s86, %s89
    %p98 = scmp.eq.s32.totalorder %s13, 1
    %p99 = por %p97, %p98
    %p100 = scmp.ne.s32.totalorder %s89, %s90
    %p101 = scmp.eq.s32.totalorder %s13, 0
    %p102 = por %p100, %p101
    %p103 = scmp.ne.s32.totalorder %s89, %s90
    %p104 = scmp.eq.s32.totalorder %s14, 1
    %p105 = por %p103, %p104
    %p107 = scmp.ne.s32.totalorder %s90, %s106
    %p108 = scmp.eq.s32.totalorder %s14, 0
    %p109 = por %p107, %p108
    %p110 = scmp.le.s32.totalorder 1, %s8
    %p111 = scmp.lt.s32.totalorder %s8, 3
    %p112 = pnand %p110, %p111
    %p113 = pneg %p112
    // Predicated region
    $region9: #{_lambda_.5} parent=5 // pred_check
      _
    $region10: #{_lambda_.5} parent=5 // pred_check_branch
      %115 = sbr.rel (%p112) target = $region12
    $region11: #{_lambda_.5} parent=5 // pred_region
      %s116 = ssub.s32 %s8, 1
    $region12: #{_lambda_.5} parent=5 // pred_fallthru
      _
    %p117 = scmp.lt.s32.totalorder %s8, 2
    // Predicated region
    $region13: #{_lambda_.5} parent=5 // pred_check
      %p118 = pneg %p117
    $region14: #{_lambda_.5} parent=5 // pred_check_branch
      %120 = sbr.rel (%p118) target = $region16
    $region15: #{_lambda_.5} parent=5 // pred_region
      // Predicated region
      $region17: #{_lambda_.5} parent=15 // pred_check
        %p121 = pneg %p42
      $region18: #{_lambda_.5} parent=15 // pred_check_branch
        %123 = sbr.rel (%p121) target = $region20
      $region19: #{_lambda_.5} parent=15 // pred_region
        %s124 = smul.u32 16, %s16
        %p125 = scmp.lt.s32.totalorder %s15, 1
        %s126 = scalar_select %p125, %s15, 1
        %p127 = scmp.lt.s32.totalorder %s124, 15
        %s128 = scalar_select %p127, %s124, 15
        %s129 = smul.addr %s126, 16
        %s130 = sadd.s32 %s128, %s129
        %s131 = smul.addr %s130, 8
        %s132 = scalar_lea.vmem %s0, %s131
        %s133 = smul.u32 16, %s16
      $region20: #{_lambda_.5} parent=15 // pred_fallthru
        _
      // Predicated region
      $region21: #{_lambda_.5} parent=15 // pred_check
        %p134 = pneg %p68
      $region22: #{_lambda_.5} parent=15 // pred_check_branch
        %136 = sbr.rel (%p134) target = $region24
      $region23: #{_lambda_.5} parent=15 // pred_region
        %p137 = scmp.lt.s32.totalorder %s15, 1
        %s138 = scalar_select %p137, %s15, 1
        %s139 = smul.addr %s138, 2
        %s140 = scalar_lea.vmem %s1, %s139
      $region24: #{_lambda_.5} parent=15 // pred_fallthru
        _
    $region16: #{_lambda_.5} parent=5 // pred_fallthru
      _
    %p141 = scmp.le.s32.totalorder 1, %s8
    %p142 = scmp.lt.s32.totalorder %s8, 3
    %p143 = pnand %p141, %p142
    %p144 = pneg %p143
    // Predicated region
    $region25: #{_lambda_.5} parent=5 // pred_check
      _
    $region26: #{_lambda_.5} parent=5 // pred_check_branch
      %146 = sbr.rel (%p143) target = $region28
    $region27: #{_lambda_.5} parent=5 // pred_region
      %s147 = ssub.s32 %s8, 1
      %s148 = smul.u32 16, %s18
      %p149 = scmp.lt.s32.totalorder %s17, 1
      %s150 = scalar_select %p149, %s17, 1
      %p151 = scmp.lt.s32.totalorder %s148, 15
      %s152 = scalar_select %p151, %s148, 15
      %s153 = smul.addr %s150, 16
      %s154 = sadd.s32 %s152, %s153
      %s155 = smul.addr %s154, 8
      %s156 = scalar_lea.vmem %s0, %s155
      %p157 = pneg %p48
      %p158 = pneg %p45
      %p159 = scmp.lt.s32.totalorder %s17, 1
      %s160 = scalar_select %p159, %s17, 1
      %s161 = smul.addr %s160, 2
      %s162 = scalar_lea.vmem %s1, %s161
      %p163 = pneg %p74
      %p164 = pneg %p71
      %p165 = pneg %p102
      %p166 = pneg %p99
      %s167 = smul.u32 16, %s18
      %p168 = scmp.lt.s32.totalorder %s17, 1
      %s169 = scalar_select %p168, %s17, 1
      %p170 = scmp.lt.s32.totalorder %s167, 15
      %s171 = scalar_select %p170, %s167, 15
      %s172 = smul.addr %s169, 16
      %s173 = sadd.s32 %s171, %s172
      %s174 = smul.addr %s173, 8
      %s175 = scalar_lea.vmem %s2, %s174
      %s176 = smul.u32 16, %s18
      %p177 = scmp.lt.s32.totalorder %s17, 1
      %s178 = scalar_select %p177, %s17, 1
      %p179 = scmp.lt.s32.totalorder %s176, 15
      %s180 = scalar_select %p179, %s176, 15
      %s181 = smul.addr %s178, 16
      %s182 = sadd.s32 %s180, %s181
      %s183 = smul.addr %s182, 8
      %s184 = scalar_lea.vmem %s0, %s183
      %s185 = smul.u32 16, %s18
      %p186 = scmp.lt.s32.totalorder %s17, 1
      %s187 = scalar_select %p186, %s17, 1
      %s188 = smul.addr %s187, 2
      %s189 = scalar_lea.vmem %s1, %s188
      %s190 = smul.u32 16, %s18
      %p191 = scmp.lt.s32.totalorder %s17, 1
      %s192 = scalar_select %p191, %s17, 1
      %p193 = scmp.lt.s32.totalorder %s190, 15
      %s194 = scalar_select %p193, %s190, 15
      %s195 = smul.addr %s192, 16
      %s196 = sadd.s32 %s194, %s195
      %s197 = smul.addr %s196, 8
      %s198 = scalar_lea.vmem %s2, %s197
      %s199 = smul.u32 16, %s18
      %v200 = vld [vmem:[%s184] sm:$0xff]
      %v201 = vld [vmem:[%s184 + $0x8] sm:$0xff]
      %v202 = vld [vmem:[%s184 + $0x10] sm:$0xff]
      %v203 = vld [vmem:[%s184 + $0x18] sm:$0xff]
      %v204 = vld [vmem:[%s184 + $0x20] sm:$0xff]
      %v205 = vld [vmem:[%s184 + $0x28] sm:$0xff]
      %v206 = vld [vmem:[%s184 + $0x30] sm:$0xff]
      %v207 = vld [vmem:[%s184 + $0x38] sm:$0xff]
      %v208 = vld [vmem:[%s184 + $0x40] sm:$0xff]
      %v209 = vld [vmem:[%s184 + $0x48] sm:$0xff]
      %v210 = vld [vmem:[%s184 + $0x50] sm:$0xff]
      %v211 = vld [vmem:[%s184 + $0x58] sm:$0xff]
      %v212 = vld [vmem:[%s184 + $0x60] sm:$0xff]
      %v213 = vld [vmem:[%s184 + $0x68] sm:$0xff]
      %v214 = vld [vmem:[%s184 + $0x70] sm:$0xff]
      %v215 = vld [vmem:[%s184 + $0x78] sm:$0xff]
      %v216 = vld [vmem:[%s189] sm:$0x3]
      %vm217 = vcmask 15360
      %v219 = vsel %vm217, %v200, 0
      %v222 = vsel %vm217, %v201, 0
      %v225 = vsel %vm217, %v202, 0
      %v228 = vsel %vm217, %v203, 0
      %v231 = vsel %vm217, %v204, 0
      %v234 = vsel %vm217, %v205, 0
      %v237 = vsel %vm217, %v206, 0
      %v240 = vsel %vm217, %v207, 0
      %v243 = vsel %vm217, %v208, 0
      %v246 = vsel %vm217, %v209, 0
      %v249 = vsel %vm217, %v210, 0
      %v252 = vsel %vm217, %v211, 0
      %v255 = vsel %vm217, %v212, 0
      %v258 = vsel %vm217, %v213, 0
      %v261 = vsel %vm217, %v214, 0
      %v264 = vsel %vm217, %v215, 0
      %vm266 = vcmask 1041408
      %v268 = vsel %vm266, %v216, 0
      %270 = vmatprep.subr.mxu0 0.0
      %271 = vmatpush1.msra.mxu0 %v268
      %272 = vmatprep.subr.mxu0 0.0
      %273 = vmatpush1.msra.mxu0 0.0
      %274 = vmatprep.subr.mxu0 0.0
      %275 = vmatpush1.msra.mxu0 0.0
      %276 = vmatprep.subr.mxu0 0.0
      %277 = vmatpush1.msra.mxu0 0.0
      %278 = vmatprep.subr.mxu0 0.0
      %279 = vmatpush1.msra.mxu0 0.0
      %280 = vmatprep.subr.mxu0 0.0
      %281 = vmatpush1.msra.mxu0 0.0
      %282 = vmatprep.subr.mxu0 0.0
      %283 = vmatpush1.msra.mxu0 0.0
      %284 = vmatprep.subr.mxu0 0.0
      %285 = vmatpush1.msra.mxu0 0.0
      %286 = vmatprep.subr.mxu0 0.0
      %287 = vmatpush1.msra.mxu0 0.0
      %288 = vmatprep.subr.mxu0 0.0
      %289 = vmatpush1.msra.mxu0 0.0
      %290 = vmatprep.subr.mxu0 0.0
      %291 = vmatpush1.msra.mxu0 0.0
      %292 = vmatprep.subr.mxu0 0.0
      %293 = vmatpush1.msra.mxu0 0.0
      %294 = vmatprep.subr.mxu0 0.0
      %295 = vmatpush1.msra.mxu0 0.0
      %296 = vmatprep.subr.mxu0 0.0
      %297 = vmatpush1.msra.mxu0 0.0
      %298 = vmatprep.subr.mxu0 0.0
      %299 = vmatpush1.msra.mxu0 0.0
      %300 = vmatprep.subr.mxu0 0.0
      %301 = vmatpush1.msra.mxu0 0.0
      %302 = vmatprep.subr.mxu0 0.0
      %303 = vmatpush1.msra.mxu0 0.0
      %304 = vmatprep.subr.mxu0 0.0
      %305 = vmatpush1.msra.mxu0 0.0
      %306 = vmatprep.subr.mxu0 0.0
      %307 = vmatpush1.msra.mxu0 0.0
      %308 = vmatprep.subr.mxu0 0.0
      %309 = vmatpush1.msra.mxu0 0.0
      %310 = vmatprep.subr.mxu0 0.0
      %311 = vmatpush1.msra.mxu0 0.0
      %312 = vmatprep.subr.mxu0 0.0
      %313 = vmatpush1.msra.mxu0 0.0
      %314 = vmatprep.subr.mxu0 0.0
      %315 = vmatpush1.msra.mxu0 0.0
      %316 = vmatprep.subr.mxu0 0.0
      %317 = vmatpush1.msra.mxu0 0.0
      %318 = vmatprep.subr.mxu0 0.0
      %319 = vmatpush1.msra.mxu0 0.0
      %320 = vmatprep.subr.mxu0 0.0
      %321 = vmatpush1.msra.mxu0 0.0
      %322 = vmatprep.subr.mxu0 0.0
      %323 = vmatpush1.msra.mxu0 0.0
      %324 = vmatprep.subr.mxu0 0.0
      %325 = vmatpush1.msra.mxu0 0.0
      %326 = vmatprep.subr.mxu0 0.0
      %327 = vmatpush1.msra.mxu0 0.0
      %328 = vmatprep.subr.mxu0 0.0
      %329 = vmatpush1.msra.mxu0 0.0
      %330 = vmatprep.subr.mxu0 0.0
      %331 = vmatpush1.msra.mxu0 0.0
      %332 = vmatprep.subr.mxu0 0.0
      %333 = vmatpush1.msra.mxu0 0.0
      %334 = vmatprep.mubr.f32.mxu0 0.0
      %335 = vmatmul.mubr.f32.gmra.mrb[0].mxu0 %v219
      %v336 = vpop.f32.mrb[0].mxu0
      %v337 = vadd.f32 0.0, %v336
      %v338 = vpop.f32.mrb[0].mxu0
      %339 = vmatprep.mubr.f32.mxu0 0.0
      %340 = vmatmul.mubr.f32.gmra.mrb[0].mxu0 %v222
      %v341 = vpop.f32.mrb[0].mxu0
      %v342 = vadd.f32 0.0, %v341
      %v343 = vpop.f32.mrb[0].mxu0
      %344 = vmatprep.mubr.f32.mxu0 0.0
      %345 = vmatmul.mubr.f32.gmra.mrb[0].mxu0 %v225
      %v346 = vpop.f32.mrb[0].mxu0
      %v347 = vadd.f32 0.0, %v346
      %v348 = vpop.f32.mrb[0].mxu0
      %349 = vmatprep.mubr.f32.mxu0 0.0
      %350 = vmatmul.mubr.f32.gmra.mrb[0].mxu0 %v228
      %v351 = vpop.f32.mrb[0].mxu0
      %v352 = vadd.f32 0.0, %v351
      %v353 = vpop.f32.mrb[0].mxu0
      %354 = vmatprep.mubr.f32.mxu0 0.0
      %355 = vmatmul.mubr.f32.gmra.mrb[0].mxu0 %v231
      %v356 = vpop.f32.mrb[0].mxu0
      %v357 = vadd.f32 0.0, %v356
      %v358 = vpop.f32.mrb[0].mxu0
      %359 = vmatprep.mubr.f32.mxu0 0.0
      %360 = vmatmul.mubr.f32.gmra.mrb[0].mxu0 %v234
      %v361 = vpop.f32.mrb[0].mxu0
      %v362 = vadd.f32 0.0, %v361
      %v363 = vpop.f32.mrb[0].mxu0
      %364 = vmatprep.mubr.f32.mxu0 0.0
      %365 = vmatmul.mubr.f32.gmra.mrb[0].mxu0 %v237
      %v366 = vpop.f32.mrb[0].mxu0
      %v367 = vadd.f32 0.0, %v366
      %v368 = vpop.f32.mrb[0].mxu0
      %369 = vmatprep.mubr.f32.mxu0 0.0
      %370 = vmatmul.mubr.f32.gmra.mrb[0].mxu0 %v240
      %v371 = vpop.f32.mrb[0].mxu0
      %v372 = vadd.f32 0.0, %v371
      %v373 = vpop.f32.mrb[0].mxu0
      %374 = vmatprep.mubr.f32.mxu0 0.0
      %375 = vmatmul.mubr.f32.gmra.mrb[0].mxu0 %v243
      %v376 = vpop.f32.mrb[0].mxu0
      %v377 = vadd.f32 0.0, %v376
      %v378 = vpop.f32.mrb[0].mxu0
      %379 = vmatprep.mubr.f32.mxu0 0.0
      %380 = vmatmul.mubr.f32.gmra.mrb[0].mxu0 %v246
      %v381 = vpop.f32.mrb[0].mxu0
      %v382 = vadd.f32 0.0, %v381
      %v383 = vpop.f32.mrb[0].mxu0
      %384 = vmatprep.mubr.f32.mxu0 0.0
      %385 = vmatmul.mubr.f32.gmra.mrb[0].mxu0 %v249
      %v386 = vpop.f32.mrb[0].mxu0
      %v387 = vadd.f32 0.0, %v386
      %v388 = vpop.f32.mrb[0].mxu0
      %389 = vmatprep.mubr.f32.mxu0 0.0
      %390 = vmatmul.mubr.f32.gmra.mrb[0].mxu0 %v252
      %v391 = vpop.f32.mrb[0].mxu0
      %v392 = vadd.f32 0.0, %v391
      %v393 = vpop.f32.mrb[0].mxu0
      %394 = vmatprep.mubr.f32.mxu0 0.0
      %395 = vmatmul.mubr.f32.gmra.mrb[0].mxu0 %v255
      %v396 = vpop.f32.mrb[0].mxu0
      %v397 = vadd.f32 0.0, %v396
      %v398 = vpop.f32.mrb[0].mxu0
      %399 = vmatprep.mubr.f32.mxu0 0.0
      %400 = vmatmul.mubr.f32.gmra.mrb[0].mxu0 %v258
      %v401 = vpop.f32.mrb[0].mxu0
      %v402 = vadd.f32 0.0, %v401
      %v403 = vpop.f32.mrb[0].mxu0
      %404 = vmatprep.mubr.f32.mxu0 0.0
      %405 = vmatmul.mubr.f32.gmra.mrb[0].mxu0 %v261
      %v406 = vpop.f32.mrb[0].mxu0
      %v407 = vadd.f32 0.0, %v406
      %v408 = vpop.f32.mrb[0].mxu0
      %409 = vmatprep.mubr.f32.mxu0 0.0
      %410 = vmatmul.mubr.f32.gmra.mrb[0].mxu0 %v264
      %v411 = vpop.f32.mrb[0].mxu0
      %v412 = vadd.f32 0.0, %v411
      %v413 = vpop.f32.mrb[0].mxu0
      %414 = vdwg.mxu0
      %v415 = vmul.f32 %v216, %v216
      %v416 = vsel %vm266, %v415, 0.0
      %v417 = vrot.slane %v416, 4
      %v418 = vadd.f32 %v416, %v417
      %v419 = vrot.slane %v418, 2
      %v420 = vadd.f32 %v418, %v419
      %v421 = vrot.slane %v420, 1
      %v422 = vadd.f32 %v420, %v421
      %v423 = vmul.f32 %v337, 2.0
      %v424 = vmul.f32 %v342, 2.0
      %v425 = vmul.f32 %v347, 2.0
      %v426 = vmul.f32 %v352, 2.0
      %v427 = vmul.f32 %v357, 2.0
      %v428 = vmul.f32 %v362, 2.0
      %v429 = vmul.f32 %v367, 2.0
      %v430 = vmul.f32 %v372, 2.0
      %v431 = vmul.f32 %v377, 2.0
      %v432 = vmul.f32 %v382, 2.0
      %v433 = vmul.f32 %v387, 2.0
      %v434 = vmul.f32 %v392, 2.0
      %v435 = vmul.f32 %v397, 2.0
      %v436 = vmul.f32 %v402, 2.0
      %v437 = vmul.f32 %v407, 2.0
      %v438 = vmul.f32 %v412, 2.0
      %v439 = vsub.f32 %v423, %v422
      %v440 = vsub.f32 %v424, %v422
      %v441 = vsub.f32 %v425, %v422
      %v442 = vsub.f32 %v426, %v422
      %v443 = vsub.f32 %v427, %v422
      %v444 = vsub.f32 %v428, %v422
      %v445 = vsub.f32 %v429, %v422
      %v446 = vsub.f32 %v430, %v422
      %v447 = vsub.f32 %v431, %v422
      %v448 = vsub.f32 %v432, %v422
      %v449 = vsub.f32 %v433, %v422
      %v450 = vsub.f32 %v434, %v422
      %v451 = vsub.f32 %v435, %v422
      %v452 = vsub.f32 %v436, %v422
      %v453 = vsub.f32 %v437, %v422
      %v454 = vsub.f32 %v438, %v422
      %455 = vst [vmem:[%s198] sm:$0xff] %v439
      %456 = vst [vmem:[%s198 + $0x8] sm:$0xff] %v440
      %457 = vst [vmem:[%s198 + $0x10] sm:$0xff] %v441
      %458 = vst [vmem:[%s198 + $0x18] sm:$0xff] %v442
      %459 = vst [vmem:[%s198 + $0x20] sm:$0xff] %v443
      %460 = vst [vmem:[%s198 + $0x28] sm:$0xff] %v444
      %461 = vst [vmem:[%s198 + $0x30] sm:$0xff] %v445
      %462 = vst [vmem:[%s198 + $0x38] sm:$0xff] %v446
      %463 = vst [vmem:[%s198 + $0x40] sm:$0xff] %v447
      %464 = vst [vmem:[%s198 + $0x48] sm:$0xff] %v448
      %465 = vst [vmem:[%s198 + $0x50] sm:$0xff] %v449
      %466 = vst [vmem:[%s198 + $0x58] sm:$0xff] %v450
      %467 = vst [vmem:[%s198 + $0x60] sm:$0xff] %v451
      %468 = vst [vmem:[%s198 + $0x68] sm:$0xff] %v452
      %469 = vst [vmem:[%s198 + $0x70] sm:$0xff] %v453
      %470 = vst [vmem:[%s198 + $0x78] sm:$0xff] %v454
      %s471 = smul.u32 16, %s18
      %p472 = scmp.lt.s32.totalorder %s17, 1
      %s473 = scalar_select %p472, %s17, 1
      %p474 = scmp.lt.s32.totalorder %s471, 15
      %s475 = scalar_select %p474, %s471, 15
      %s476 = smul.addr %s473, 16
      %s477 = sadd.s32 %s475, %s476
      %s478 = smul.addr %s477, 8
      %s479 = scalar_lea.vmem %s2, %s478
      // Predicated region
      $region29: #{_lambda_.5} parent=27 // pred_check
        %p480 = pneg %p99
      $region30: #{_lambda_.5} parent=27 // pred_check_branch
        %482 = sbr.rel (%p480) target = $region32
      $region31: #{_lambda_.5} parent=27 // pred_region
        %s483 = smul.u32 16, %s18
      $region32: #{_lambda_.5} parent=27 // pred_fallthru
        _
    $region28: #{_lambda_.5} parent=5 // pred_fallthru
      _
    %p484 = scmp.le.s32.totalorder 2, %s8
    // Predicated region
    $region33: #{_lambda_.5} parent=5 // pred_check
      %p485 = pneg %p484
    $region34: #{_lambda_.5} parent=5 // pred_check_branch
      %487 = sbr.rel (%p485) target = $region36
    $region35: #{_lambda_.5} parent=5 // pred_region
      %s488 = ssub.s32 %s8, 2
      // Predicated region
      $region37: #{_lambda_.5} parent=35 // pred_check
        %p489 = pneg %p105
      $region38: #{_lambda_.5} parent=35 // pred_check_branch
        %491 = sbr.rel (%p489) target = $region40
      $region39: #{_lambda_.5} parent=35 // pred_region
        %s492 = smul.u32 16, %s20
        %p493 = scmp.lt.s32.totalorder %s19, 1
        %s494 = scalar_select %p493, %s19, 1
        %p495 = scmp.lt.s32.totalorder %s492, 15
        %s496 = scalar_select %p495, %s492, 15
        %s497 = smul.addr %s494, 16
        %s498 = sadd.s32 %s496, %s497
        %s499 = smul.addr %s498, 8
        %s500 = scalar_lea.vmem %s2, %s499
      $region40: #{_lambda_.5} parent=35 // pred_fallthru
        _
    $region36: #{_lambda_.5} parent=5 // pred_fallthru
      _
  $region6: #{_lambda_.5} parent=0 // loop_footer
    %s12 = sadd.s32 1, %s8
  $region7: #{_lambda_.5} parent=0 // loop_footer_branch
    %7 = sbr.rel target = $region3
  $region8: #{_lambda_.5} parent=0 // loop_exit
    _

// kernel: _lambda_.7
$region0: #{_lambda_.7}
  #allocation0 [shape = 'u32[]', space=smem, size = 0x4, offset = 0x4, fixed_abs, tag = 'smem constant byte address 0x4 - core index']
  #allocation1 [shape = 'u32[144,128]{1,0:T(1,128)}', space=vmem, size = 0x12000, scoped, tag = 'internal scratch']
  %s0 = inlined_call_operand.vmem [shape: f32[2,128,8], index: 0, kind: input, shape index: {}]
  %s1 = inlined_call_operand.vmem [shape: f32[2,8,128], index: 1, kind: input, shape index: {}]
  %s2 = inlined_call_operand.vmem [shape: f32[2,128,128], index: 2, kind: output, shape index: {}]
  %s3 = sld [smem:[#allocation0]]
  $region41: #{_lambda_.7} parent=0
    _
  %s5 = ssub.s32 1, %s3
  %s6 = scalar_select 0, %s5, %s3
  loop: start=0, step=1, limit=4
  $region2: #{_lambda_.7} parent=0 // loop_pre_header
    _
  $region3: #{_lambda_.7} parent=0 // loop_header
    %s8 = sphi 0, %s12
    %p9 = scmp.ge.s32.totalorder %s8, 4
    %s15 = sphi 0, %s27
    %s16 = sphi 0, %s23
    %s17 = sphi 0, %s15
    %s18 = sphi 0, %s16
    %s19 = sphi 0, %s17
    %s20 = sphi 0, %s18
    %s32 = sphi 0, %s34
    %s35 = sphi 0, %s32
    %s36 = sphi 0, %s35
    %s52 = sphi 0, %s36
    %s58 = sphi 0, %s60
    %s61 = sphi 0, %s58
    %s62 = sphi 0, %s61
    %s78 = sphi 0, %s62
    %s86 = sphi 0, %s88
    %s89 = sphi 0, %s86
    %s90 = sphi 0, %s89
    %s106 = sphi 0, %s90
  $region4: #{_lambda_.7} parent=0 // loop_header_branch
    %11 = sbr.rel (%p9) target = $region8
  $region5: #{_lambda_.7} parent=0 // loop_body
    %s13 = ssub.s32 %s8, 1
    %s14 = ssub.s32 %s8, 2
    %s21 = sadd.s32 1, %s16
    %p22 = scmp.ge.s32.totalorder %s21, 1
    %s23 = scalar_select %p22, 0, %s21
    %s24 = sadd.s32 1, %s15
    %s25 = scalar_select %p22, %s24, %s15
    %p26 = scmp.ge.s32.totalorder %s25, 2
    %s27 = scalar_select %p26, 0, %s25
    %s28 = ssub.s32 %s15, %s27
    %s29 = ssub.s32 %s16, %s23
    %s30 = sor.u32 %s28, %s29
    %p31 = scmp.eq.s32.totalorder %s30, 0
    %s33 = sadd.s32 %s32, 1
    %s34 = scalar_select %p31, %s32, %s33
    %p37 = pneg %p31
    %p38 = scmp.eq.s32.totalorder %s8, 1
    %p39 = por %p37, %p38
    %p40 = scmp.ne.s32.totalorder %s32, %s35
    %p41 = scmp.eq.s32.totalorder %s8, 0
    %p42 = por %p40, %p41
    %p43 = scmp.ne.s32.totalorder %s32, %s35
    %p44 = scmp.eq.s32.totalorder %s13, 1
    %p45 = por %p43, %p44
    %p46 = scmp.ne.s32.totalorder %s35, %s36
    %p47 = scmp.eq.s32.totalorder %s13, 0
    %p48 = por %p46, %p47
    %p49 = scmp.ne.s32.totalorder %s35, %s36
    %p50 = scmp.eq.s32.totalorder %s14, 1
    %p51 = por %p49, %p50
    %p53 = scmp.ne.s32.totalorder %s36, %s52
    %p54 = scmp.eq.s32.totalorder %s14, 0
    %p55 = por %p53, %p54
    %s56 = ssub.s32 %s15, %s27
    %p57 = scmp.eq.s32.totalorder %s56, 0
    %s59 = sadd.s32 %s58, 1
    %s60 = scalar_select %p57, %s58, %s59
    %p63 = pneg %p57
    %p64 = scmp.eq.s32.totalorder %s8, 1
    %p65 = por %p63, %p64
    %p66 = scmp.ne.s32.totalorder %s58, %s61
    %p67 = scmp.eq.s32.totalorder %s8, 0
    %p68 = por %p66, %p67
    %p69 = scmp.ne.s32.totalorder %s58, %s61
    %p70 = scmp.eq.s32.totalorder %s13, 1
    %p71 = por %p69, %p70
    %p72 = scmp.ne.s32.totalorder %s61, %s62
    %p73 = scmp.eq.s32.totalorder %s13, 0
    %p74 = por %p72, %p73
    %p75 = scmp.ne.s32.totalorder %s61, %s62
    %p76 = scmp.eq.s32.totalorder %s14, 1
    %p77 = por %p75, %p76
    %p79 = scmp.ne.s32.totalorder %s62, %s78
    %p80 = scmp.eq.s32.totalorder %s14, 0
    %p81 = por %p79, %p80
    %s82 = ssub.s32 %s15, %s27
    %s83 = ssub.s32 %s16, %s23
    %s84 = sor.u32 %s82, %s83
    %p85 = scmp.eq.s32.totalorder %s84, 0
    %s87 = sadd.s32 %s86, 1
    %s88 = scalar_select %p85, %s86, %s87
    %p91 = pneg %p85
    %p92 = scmp.eq.s32.totalorder %s8, 1
    %p93 = por %p91, %p92
    %p94 = scmp.ne.s32.totalorder %s86, %s89
    %p95 = scmp.eq.s32.totalorder %s8, 0
    %p96 = por %p94, %p95
    %p97 = scmp.ne.s32.totalorder %s86, %s89
    %p98 = scmp.eq.s32.totalorder %s13, 1
    %p99 = por %p97, %p98
    %p100 = scmp.ne.s32.totalorder %s89, %s90
    %p101 = scmp.eq.s32.totalorder %s13, 0
    %p102 = por %p100, %p101
    %p103 = scmp.ne.s32.totalorder %s89, %s90
    %p104 = scmp.eq.s32.totalorder %s14, 1
    %p105 = por %p103, %p104
    %p107 = scmp.ne.s32.totalorder %s90, %s106
    %p108 = scmp.eq.s32.totalorder %s14, 0
    %p109 = por %p107, %p108
    %p110 = scmp.le.s32.totalorder 1, %s8
    %p111 = scmp.lt.s32.totalorder %s8, 3
    %p112 = pnand %p110, %p111
    %p113 = pneg %p112
    // Predicated region
    $region9: #{_lambda_.7} parent=5 // pred_check
      _
    $region10: #{_lambda_.7} parent=5 // pred_check_branch
      %115 = sbr.rel (%p112) target = $region12
    $region11: #{_lambda_.7} parent=5 // pred_region
      %s116 = ssub.s32 %s8, 1
    $region12: #{_lambda_.7} parent=5 // pred_fallthru
      _
    %p117 = scmp.lt.s32.totalorder %s8, 2
    // Predicated region
    $region13: #{_lambda_.7} parent=5 // pred_check
      %p118 = pneg %p117
    $region14: #{_lambda_.7} parent=5 // pred_check_branch
      %120 = sbr.rel (%p118) target = $region16
    $region15: #{_lambda_.7} parent=5 // pred_region
      // Predicated region
      $region17: #{_lambda_.7} parent=15 // pred_check
        %p121 = pneg %p42
      $region18: #{_lambda_.7} parent=15 // pred_check_branch
        %123 = sbr.rel (%p121) target = $region20
      $region19: #{_lambda_.7} parent=15 // pred_region
        %s124 = smul.u32 16, %s16
        %p125 = scmp.lt.s32.totalorder %s15, 1
        %s126 = scalar_select %p125, %s15, 1
        %p127 = scmp.lt.s32.totalorder %s124, 15
        %s128 = scalar_select %p127, %s124, 15
        %s129 = smul.addr %s126, 16
        %s130 = sadd.s32 %s128, %s129
        %s131 = smul.addr %s130, 8
        %s132 = scalar_lea.vmem %s0, %s131
        %s133 = smul.u32 16, %s16
      $region20: #{_lambda_.7} parent=15 // pred_fallthru
        _
      // Predicated region
      $region21: #{_lambda_.7} parent=15 // pred_check
        %p134 = pneg %p68
      $region22: #{_lambda_.7} parent=15 // pred_check_branch
        %136 = sbr.rel (%p134) target = $region24
      $region23: #{_lambda_.7} parent=15 // pred_region
        %p137 = scmp.lt.s32.totalorder %s15, 1
        %s138 = scalar_select %p137, %s15, 1
        %s139 = smul.addr %s138, 8
        %s140 = scalar_lea.vmem %s1, %s139
      $region24: #{_lambda_.7} parent=15 // pred_fallthru
        _
    $region16: #{_lambda_.7} parent=5 // pred_fallthru
      _
    %p141 = scmp.le.s32.totalorder 1, %s8
    %p142 = scmp.lt.s32.totalorder %s8, 3
    %p143 = pnand %p141, %p142
    %p144 = pneg %p143
    // Predicated region
    $region25: #{_lambda_.7} parent=5 // pred_check
      _
    $region26: #{_lambda_.7} parent=5 // pred_check_branch
      %146 = sbr.rel (%p143) target = $region28
    $region27: #{_lambda_.7} parent=5 // pred_region
      %s147 = ssub.s32 %s8, 1
      %s148 = smul.u32 16, %s18
      %p149 = scmp.lt.s32.totalorder %s17, 1
      %s150 = scalar_select %p149, %s17, 1
      %p151 = scmp.lt.s32.totalorder %s148, 15
      %s152 = scalar_select %p151, %s148, 15
      %s153 = smul.addr %s150, 16
      %s154 = sadd.s32 %s152, %s153
      %s155 = smul.addr %s154, 8
      %s156 = scalar_lea.vmem %s0, %s155
      %p157 = pneg %p48
      %p158 = pneg %p45
      %p159 = scmp.lt.s32.totalorder %s17, 1
      %s160 = scalar_select %p159, %s17, 1
      %s161 = smul.addr %s160, 8
      %s162 = scalar_lea.vmem %s1, %s161
      %p163 = pneg %p74
      %p164 = pneg %p71
      %p165 = pneg %p102
      %p166 = pneg %p99
      %s167 = smul.u32 16, %s18
      %p168 = scmp.lt.s32.totalorder %s17, 1
      %s169 = scalar_select %p168, %s17, 1
      %p170 = scmp.lt.s32.totalorder %s167, 15
      %s171 = scalar_select %p170, %s167, 15
      %s172 = smul.addr %s169, 16
      %s173 = sadd.s32 %s171, %s172
      %s174 = smul.addr %s173, 8
      %s175 = scalar_lea.vmem %s2, %s174
      %s176 = smul.u32 16, %s18
      %p177 = scmp.lt.s32.totalorder %s17, 1
      %s178 = scalar_select %p177, %s17, 1
      %p179 = scmp.lt.s32.totalorder %s176, 15
      %s180 = scalar_select %p179, %s176, 15
      %s181 = smul.addr %s178, 16
      %s182 = sadd.s32 %s180, %s181
      %s183 = smul.addr %s182, 8
      %s184 = scalar_lea.vmem %s0, %s183
      %s185 = smul.u32 16, %s18
      %p186 = scmp.lt.s32.totalorder %s17, 1
      %s187 = scalar_select %p186, %s17, 1
      %s188 = smul.addr %s187, 8
      %s189 = scalar_lea.vmem %s1, %s188
      %s190 = smul.u32 16, %s18
      %p191 = scmp.lt.s32.totalorder %s17, 1
      %s192 = scalar_select %p191, %s17, 1
      %p193 = scmp.lt.s32.totalorder %s190, 15
      %s194 = scalar_select %p193, %s190, 15
      %s195 = smul.addr %s192, 16
      %s196 = sadd.s32 %s194, %s195
      %s197 = smul.addr %s196, 8
      %s198 = scalar_lea.vmem %s2, %s197
      %s199 = smul.u32 16, %s18
      %v200 = vld [vmem:[%s184] sm:$0xff]
      %v201 = vld [vmem:[%s184 + $0x8] sm:$0xff]
      %v202 = vld [vmem:[%s184 + $0x10] sm:$0xff]
      %v203 = vld [vmem:[%s184 + $0x18] sm:$0xff]
      %v204 = vld [vmem:[%s184 + $0x20] sm:$0xff]
      %v205 = vld [vmem:[%s184 + $0x28] sm:$0xff]
      %v206 = vld [vmem:[%s184 + $0x30] sm:$0xff]
      %v207 = vld [vmem:[%s184 + $0x38] sm:$0xff]
      %v208 = vld [vmem:[%s184 + $0x40] sm:$0xff]
      %v209 = vld [vmem:[%s184 + $0x48] sm:$0xff]
      %v210 = vld [vmem:[%s184 + $0x50] sm:$0xff]
      %v211 = vld [vmem:[%s184 + $0x58] sm:$0xff]
      %v212 = vld [vmem:[%s184 + $0x60] sm:$0xff]
      %v213 = vld [vmem:[%s184 + $0x68] sm:$0xff]
      %v214 = vld [vmem:[%s184 + $0x70] sm:$0xff]
      %v215 = vld [vmem:[%s184 + $0x78] sm:$0xff]
      %v216 = vld [vmem:[%s189] sm:$0xff]
      %vm217 = vcmask 64512
      %v219 = vsel %vm217, %v200, 0
      %v222 = vsel %vm217, %v201, 0
      %v225 = vsel %vm217, %v202, 0
      %v228 = vsel %vm217, %v203, 0
      %v231 = vsel %vm217, %v204, 0
      %v234 = vsel %vm217, %v205, 0
      %v237 = vsel %vm217, %v206, 0
      %v240 = vsel %vm217, %v207, 0
      %v243 = vsel %vm217, %v208, 0
      %v246 = vsel %vm217, %v209, 0
      %v249 = vsel %vm217, %v210, 0
      %v252 = vsel %vm217, %v211, 0
      %v255 = vsel %vm217, %v212, 0
      %v258 = vsel %vm217, %v213, 0
      %v261 = vsel %vm217, %v214, 0
      %v264 = vsel %vm217, %v215, 0
      %266 = vmatprep.subr.mxu0 0.0
      %267 = vmatpush1.msra.mxu0 %v216
      %268 = vmatprep.subr.mxu0 0.0
      %269 = vmatpush1.msra.mxu0 0.0
      %270 = vmatprep.subr.mxu0 0.0
      %271 = vmatpush1.msra.mxu0 0.0
      %272 = vmatprep.subr.mxu0 0.0
      %273 = vmatpush1.msra.mxu0 0.0
      %274 = vmatprep.subr.mxu0 0.0
      %275 = vmatpush1.msra.mxu0 0.0
      %276 = vmatprep.subr.mxu0 0.0
      %277 = vmatpush1.msra.mxu0 0.0
      %278 = vmatprep.subr.mxu0 0.0
      %279 = vmatpush1.msra.mxu0 0.0
      %280 = vmatprep.subr.mxu0 0.0
      %281 = vmatpush1.msra.mxu0 0.0
      %282 = vmatprep.subr.mxu0 0.0
      %283 = vmatpush1.msra.mxu0 0.0
      %284 = vmatprep.subr.mxu0 0.0
      %285 = vmatpush1.msra.mxu0 0.0
      %286 = vmatprep.subr.mxu0 0.0
      %287 = vmatpush1.msra.mxu0 0.0
      %288 = vmatprep.subr.mxu0 0.0
      %289 = vmatpush1.msra.mxu0 0.0
      %290 = vmatprep.subr.mxu0 0.0
      %291 = vmatpush1.msra.mxu0 0.0
      %292 = vmatprep.subr.mxu0 0.0
      %293 = vmatpush1.msra.mxu0 0.0
      %294 = vmatprep.subr.mxu0 0.0
      %295 = vmatpush1.msra.mxu0 0.0
      %296 = vmatprep.subr.mxu0 0.0
      %297 = vmatpush1.msra.mxu0 0.0
      %298 = vmatprep.subr.mxu0 0.0
      %299 = vmatpush1.msra.mxu0 0.0
      %300 = vmatprep.subr.mxu0 0.0
      %301 = vmatpush1.msra.mxu0 0.0
      %302 = vmatprep.subr.mxu0 0.0
      %303 = vmatpush1.msra.mxu0 0.0
      %304 = vmatprep.subr.mxu0 0.0
      %305 = vmatpush1.msra.mxu0 0.0
      %306 = vmatprep.subr.mxu0 0.0
      %307 = vmatpush1.msra.mxu0 0.0
      %308 = vmatprep.subr.mxu0 0.0
      %309 = vmatpush1.msra.mxu0 0.0
      %310 = vmatprep.subr.mxu0 0.0
      %311 = vmatpush1.msra.mxu0 0.0
      %312 = vmatprep.subr.mxu0 0.0
      %313 = vmatpush1.msra.mxu0 0.0
      %314 = vmatprep.subr.mxu0 0.0
      %315 = vmatpush1.msra.mxu0 0.0
      %316 = vmatprep.subr.mxu0 0.0
      %317 = vmatpush1.msra.mxu0 0.0
      %318 = vmatprep.subr.mxu0 0.0
      %319 = vmatpush1.msra.mxu0 0.0
      %320 = vmatprep.subr.mxu0 0.0
      %321 = vmatpush1.msra.mxu0 0.0
      %322 = vmatprep.subr.mxu0 0.0
      %323 = vmatpush1.msra.mxu0 0.0
      %324 = vmatprep.subr.mxu0 0.0
      %325 = vmatpush1.msra.mxu0 0.0
      %326 = vmatprep.subr.mxu0 0.0
      %327 = vmatpush1.msra.mxu0 0.0
      %328 = vmatprep.subr.mxu0 0.0
      %329 = vmatpush1.msra.mxu0 0.0
      %330 = vmatprep.mubr.f32.mxu0 0.0
      %331 = vmatmul.mubr.f32.gmra.mrb[0].mxu0 %v219
      %v332 = vpop.f32.mrb[0].mxu0
      %v333 = vadd.f32 0.0, %v332
      %v334 = vpop.f32.mrb[0].mxu0
      %335 = vmatprep.mubr.f32.mxu0 0.0
      %336 = vmatmul.mubr.f32.gmra.mrb[0].mxu0 %v222
      %v337 = vpop.f32.mrb[0].mxu0
      %v338 = vadd.f32 0.0, %v337
      %v339 = vpop.f32.mrb[0].mxu0
      %340 = vmatprep.mubr.f32.mxu0 0.0
      %341 = vmatmul.mubr.f32.gmra.mrb[0].mxu0 %v225
      %v342 = vpop.f32.mrb[0].mxu0
      %v343 = vadd.f32 0.0, %v342
      %v344 = vpop.f32.mrb[0].mxu0
      %345 = vmatprep.mubr.f32.mxu0 0.0
      %346 = vmatmul.mubr.f32.gmra.mrb[0].mxu0 %v228
      %v347 = vpop.f32.mrb[0].mxu0
      %v348 = vadd.f32 0.0, %v347
      %v349 = vpop.f32.mrb[0].mxu0
      %350 = vmatprep.mubr.f32.mxu0 0.0
      %351 = vmatmul.mubr.f32.gmra.mrb[0].mxu0 %v231
      %v352 = vpop.f32.mrb[0].mxu0
      %v353 = vadd.f32 0.0, %v352
      %v354 = vpop.f32.mrb[0].mxu0
      %355 = vmatprep.mubr.f32.mxu0 0.0
      %356 = vmatmul.mubr.f32.gmra.mrb[0].mxu0 %v234
      %v357 = vpop.f32.mrb[0].mxu0
      %v358 = vadd.f32 0.0, %v357
      %v359 = vpop.f32.mrb[0].mxu0
      %360 = vmatprep.mubr.f32.mxu0 0.0
      %361 = vmatmul.mubr.f32.gmra.mrb[0].mxu0 %v237
      %v362 = vpop.f32.mrb[0].mxu0
      %v363 = vadd.f32 0.0, %v362
      %v364 = vpop.f32.mrb[0].mxu0
      %365 = vmatprep.mubr.f32.mxu0 0.0
      %366 = vmatmul.mubr.f32.gmra.mrb[0].mxu0 %v240
      %v367 = vpop.f32.mrb[0].mxu0
      %v368 = vadd.f32 0.0, %v367
      %v369 = vpop.f32.mrb[0].mxu0
      %370 = vmatprep.mubr.f32.mxu0 0.0
      %371 = vmatmul.mubr.f32.gmra.mrb[0].mxu0 %v243
      %v372 = vpop.f32.mrb[0].mxu0
      %v373 = vadd.f32 0.0, %v372
      %v374 = vpop.f32.mrb[0].mxu0
      %375 = vmatprep.mubr.f32.mxu0 0.0
      %376 = vmatmul.mubr.f32.gmra.mrb[0].mxu0 %v246
      %v377 = vpop.f32.mrb[0].mxu0
      %v378 = vadd.f32 0.0, %v377
      %v379 = vpop.f32.mrb[0].mxu0
      %380 = vmatprep.mubr.f32.mxu0 0.0
      %381 = vmatmul.mubr.f32.gmra.mrb[0].mxu0 %v249
      %v382 = vpop.f32.mrb[0].mxu0
      %v383 = vadd.f32 0.0, %v382
      %v384 = vpop.f32.mrb[0].mxu0
      %385 = vmatprep.mubr.f32.mxu0 0.0
      %386 = vmatmul.mubr.f32.gmra.mrb[0].mxu0 %v252
      %v387 = vpop.f32.mrb[0].mxu0
      %v388 = vadd.f32 0.0, %v387
      %v389 = vpop.f32.mrb[0].mxu0
      %390 = vmatprep.mubr.f32.mxu0 0.0
      %391 = vmatmul.mubr.f32.gmra.mrb[0].mxu0 %v255
      %v392 = vpop.f32.mrb[0].mxu0
      %v393 = vadd.f32 0.0, %v392
      %v394 = vpop.f32.mrb[0].mxu0
      %395 = vmatprep.mubr.f32.mxu0 0.0
      %396 = vmatmul.mubr.f32.gmra.mrb[0].mxu0 %v258
      %v397 = vpop.f32.mrb[0].mxu0
      %v398 = vadd.f32 0.0, %v397
      %v399 = vpop.f32.mrb[0].mxu0
      %400 = vmatprep.mubr.f32.mxu0 0.0
      %401 = vmatmul.mubr.f32.gmra.mrb[0].mxu0 %v261
      %v402 = vpop.f32.mrb[0].mxu0
      %v403 = vadd.f32 0.0, %v402
      %v404 = vpop.f32.mrb[0].mxu0
      %405 = vmatprep.mubr.f32.mxu0 0.0
      %406 = vmatmul.mubr.f32.gmra.mrb[0].mxu0 %v264
      %v407 = vpop.f32.mrb[0].mxu0
      %v408 = vadd.f32 0.0, %v407
      %v409 = vpop.f32.mrb[0].mxu0
      %410 = vdwg.mxu0
      %v411 = vmul.f32 %v216, %v216
      %v412 = vrot.slane %v411, 4
      %v413 = vadd.f32 %v411, %v412
      %v414 = vrot.slane %v413, 2
      %v415 = vadd.f32 %v413, %v414
      %v416 = vrot.slane %v415, 1
      %v417 = vadd.f32 %v415, %v416
      %v418 = vmul.f32 %v333, 2.0
      %v419 = vmul.f32 %v338, 2.0
      %v420 = vmul.f32 %v343, 2.0
      %v421 = vmul.f32 %v348, 2.0
      %v422 = vmul.f32 %v353, 2.0
      %v423 = vmul.f32 %v358, 2.0
      %v424 = vmul.f32 %v363, 2.0
      %v425 = vmul.f32 %v368, 2.0
      %v426 = vmul.f32 %v373, 2.0
      %v427 = vmul.f32 %v378, 2.0
      %v428 = vmul.f32 %v383, 2.0
      %v429 = vmul.f32 %v388, 2.0
      %v430 = vmul.f32 %v393, 2.0
      %v431 = vmul.f32 %v398, 2.0
      %v432 = vmul.f32 %v403, 2.0
      %v433 = vmul.f32 %v408, 2.0
      %v434 = vsub.f32 %v418, %v417
      %v435 = vsub.f32 %v419, %v417
      %v436 = vsub.f32 %v420, %v417
      %v437 = vsub.f32 %v421, %v417
      %v438 = vsub.f32 %v422, %v417
      %v439 = vsub.f32 %v423, %v417
      %v440 = vsub.f32 %v424, %v417
      %v441 = vsub.f32 %v425, %v417
      %v442 = vsub.f32 %v426, %v417
      %v443 = vsub.f32 %v427, %v417
      %v444 = vsub.f32 %v428, %v417
      %v445 = vsub.f32 %v429, %v417
      %v446 = vsub.f32 %v430, %v417
      %v447 = vsub.f32 %v431, %v417
      %v448 = vsub.f32 %v432, %v417
      %v449 = vsub.f32 %v433, %v417
      %450 = vst [vmem:[%s198] sm:$0xff] %v434
      %451 = vst [vmem:[%s198 + $0x8] sm:$0xff] %v435
      %452 = vst [vmem:[%s198 + $0x10] sm:$0xff] %v436
      %453 = vst [vmem:[%s198 + $0x18] sm:$0xff] %v437
      %454 = vst [vmem:[%s198 + $0x20] sm:$0xff] %v438
      %455 = vst [vmem:[%s198 + $0x28] sm:$0xff] %v439
      %456 = vst [vmem:[%s198 + $0x30] sm:$0xff] %v440
      %457 = vst [vmem:[%s198 + $0x38] sm:$0xff] %v441
      %458 = vst [vmem:[%s198 + $0x40] sm:$0xff] %v442
      %459 = vst [vmem:[%s198 + $0x48] sm:$0xff] %v443
      %460 = vst [vmem:[%s198 + $0x50] sm:$0xff] %v444
      %461 = vst [vmem:[%s198 + $0x58] sm:$0xff] %v445
      %462 = vst [vmem:[%s198 + $0x60] sm:$0xff] %v446
      %463 = vst [vmem:[%s198 + $0x68] sm:$0xff] %v447
      %464 = vst [vmem:[%s198 + $0x70] sm:$0xff] %v448
      %465 = vst [vmem:[%s198 + $0x78] sm:$0xff] %v449
      %s466 = smul.u32 16, %s18
      %p467 = scmp.lt.s32.totalorder %s17, 1
      %s468 = scalar_select %p467, %s17, 1
      %p469 = scmp.lt.s32.totalorder %s466, 15
      %s470 = scalar_select %p469, %s466, 15
      %s471 = smul.addr %s468, 16
      %s472 = sadd.s32 %s470, %s471
      %s473 = smul.addr %s472, 8
      %s474 = scalar_lea.vmem %s2, %s473
      // Predicated region
      $region29: #{_lambda_.7} parent=27 // pred_check
        %p475 = pneg %p99
      $region30: #{_lambda_.7} parent=27 // pred_check_branch
        %477 = sbr.rel (%p475) target = $region32
      $region31: #{_lambda_.7} parent=27 // pred_region
        %s478 = smul.u32 16, %s18
      $region32: #{_lambda_.7} parent=27 // pred_fallthru
        _
    $region28: #{_lambda_.7} parent=5 // pred_fallthru
      _
    %p479 = scmp.le.s32.totalorder 2, %s8
    // Predicated region
    $region33: #{_lambda_.7} parent=5 // pred_check
      %p480 = pneg %p479
    $region34: #{_lambda_.7} parent=5 // pred_check_branch
      %482 = sbr.rel (%p480) target = $region36
    $region35: #{_lambda_.7} parent=5 // pred_region
      %s483 = ssub.s32 %s8, 2
      // Predicated region
      $region37: #{_lambda_.7} parent=35 // pred_check
        %p484 = pneg %p105
      $region38: #{_lambda_.7} parent=35 // pred_check_branch
        %486 = sbr.rel (%p484) target = $region40
      $region39: #{_lambda_.7} parent=35 // pred_region
        %s487 = smul.u32 16, %s20
        %p488 = scmp.lt.s32.totalorder %s19, 1
        %s489 = scalar_select %p488, %s19, 1
        %p490 = scmp.lt.s32.totalorder %s487, 15
        %s491 = scalar_select %p490, %s487, 15
        %s492 = smul.addr %s489, 16
        %s493 = sadd.s32 %s491, %s492
        %s494 = smul.addr %s493, 8
        %s495 = scalar_lea.vmem %s2, %s494
      $region40: #{_lambda_.7} parent=35 // pred_fallthru
        _
    $region36: #{_lambda_.7} parent=5 // pred_fallthru
      _
  $region6: #{_lambda_.7} parent=0 // loop_footer
    %s12 = sadd.s32 1, %s8
  $region7: #{_lambda_.7} parent=0 // loop_footer_branch
    %7 = sbr.rel target = $region3
  $region8: #{_lambda_.7} parent=0 // loop_exit
    _

// kernel: _lambda_.9
$region0: #{_lambda_.9}
  #allocation0 [shape = 'u32[]', space=smem, size = 0x4, offset = 0x4, fixed_abs, tag = 'smem constant byte address 0x4 - core index']
  #allocation1 [shape = 'u32[144,128]{1,0:T(1,128)}', space=vmem, size = 0x12000, scoped, tag = 'internal scratch']
  %s0 = inlined_call_operand.vmem [shape: f32[2,40,128], index: 0, kind: input, shape index: {}]
  %s1 = inlined_call_operand.vmem [shape: bf16[35,40], index: 1, kind: input, shape index: {}]
  %s2 = inlined_call_operand.vmem [shape: f32[35,1], index: 2, kind: input, shape index: {}]
  %s3 = inlined_call_operand.vmem [shape: bf16[32,35], index: 3, kind: input, shape index: {}]
  %s4 = inlined_call_operand.vmem [shape: f32[32,1], index: 4, kind: input, shape index: {}]
  %s5 = inlined_call_operand.hbm [shape: f32[2,32,128], index: 5, kind: output, shape index: {}]
  %s6 = sld [smem:[#allocation0]]
  $region53: #{_lambda_.9} parent=0
    _
  %s8 = ssub.s32 1, %s6
  %s9 = scalar_select 0, %s8, %s6
  $region1: #{_lambda_.9} parent=0
    #allocation2 [shape = 'u8[32768]{0}', space=vmem, size = 0x8000, scoped, tag = 'output window, operand 0']
    #allocation3 [shape = 's32[2]{0}', space=sflag, size = 0x8, scoped, tag = 'scoped memory for _lambda_.9']
    %10 = vsyncpa [#allocation3], 0
    %s11 = scalar_lea.sflag [#allocation3], 1
    %12 = vsyncpa %s11, 0
    loop: start=0, step=1, limit=4
    $region2: #{_lambda_.9} parent=1 // loop_pre_header
      _
    $region3: #{_lambda_.9} parent=1 // loop_header
      %s14 = sphi 0, %s18
      %p15 = scmp.ge.s32.totalorder %s14, 4
      %s21 = sphi 0, %s33
      %s22 = sphi 0, %s29
      %s23 = sphi 0, %s21
      %s24 = sphi 0, %s22
      %s25 = sphi 0, %s23
      %s26 = sphi 0, %s24
      %s38 = sphi 0, %s40
      %s41 = sphi 0, %s38
      %s42 = sphi 0, %s41
      %s58 = sphi 0, %s42
      %s62 = sphi 0, %s62
      %s64 = sphi 0, %s62
      %s65 = sphi 0, %s64
      %s79 = sphi 0, %s65
      %s83 = sphi 0, %s83
      %s85 = sphi 0, %s83
      %s86 = sphi 0, %s85
      %s100 = sphi 0, %s86
      %s104 = sphi 0, %s104
      %s106 = sphi 0, %s104
      %s107 = sphi 0, %s106
      %s121 = sphi 0, %s107
      %s125 = sphi 0, %s125
      %s127 = sphi 0, %s125
      %s128 = sphi 0, %s127
      %s142 = sphi 0, %s128
      %s150 = sphi 0, %s152
      %s153 = sphi 0, %s150
      %s154 = sphi 0, %s153
      %s170 = sphi 0, %s154
    $region4: #{_lambda_.9} parent=1 // loop_header_branch
      %17 = sbr.rel (%p15) target = $region8
    $region5: #{_lambda_.9} parent=1 // loop_body
      %s19 = ssub.s32 %s14, 1
      %s20 = ssub.s32 %s14, 2
      %s27 = sadd.s32 1, %s22
      %p28 = scmp.ge.s32.totalorder %s27, 1
      %s29 = scalar_select %p28, 0, %s27
      %s30 = sadd.s32 1, %s21
      %s31 = scalar_select %p28, %s30, %s21
      %p32 = scmp.ge.s32.totalorder %s31, 2
      %s33 = scalar_select %p32, 0, %s31
      %s34 = ssub.s32 %s21, %s33
      %s35 = ssub.s32 %s22, %s29
      %s36 = sor.u32 %s34, %s35
      %p37 = scmp.eq.s32.totalorder %s36, 0
      %s39 = sadd.s32 %s38, 1
      %s40 = scalar_select %p37, %s38, %s39
      %p43 = pneg %p37
      %p44 = scmp.eq.s32.totalorder %s14, 1
      %p45 = por %p43, %p44
      %p46 = scmp.ne.s32.totalorder %s38, %s41
      %p47 = scmp.eq.s32.totalorder %s14, 0
      %p48 = por %p46, %p47
      %p49 = scmp.ne.s32.totalorder %s38, %s41
      %p50 = scmp.eq.s32.totalorder %s19, 1
      %p51 = por %p49, %p50
      %p52 = scmp.ne.s32.totalorder %s41, %s42
      %p53 = scmp.eq.s32.totalorder %s19, 0
      %p54 = por %p52, %p53
      %p55 = scmp.ne.s32.totalorder %s41, %s42
      %p56 = scmp.eq.s32.totalorder %s20, 1
      %p57 = por %p55, %p56
      %p59 = scmp.ne.s32.totalorder %s42, %s58
      %p60 = scmp.eq.s32.totalorder %s20, 0
      %p61 = por %p59, %p60
      %s63 = sadd.s32 %s62, 1
      %p66 = scmp.eq.s32.totalorder %s14, 1
      %p67 = scmp.ne.s32.totalorder %s62, %s64
      %p68 = scmp.eq.s32.totalorder %s14, 0
      %p69 = por %p67, %p68
      %p70 = scmp.ne.s32.totalorder %s62, %s64
      %p71 = scmp.eq.s32.totalorder %s19, 1
      %p72 = por %p70, %p71
      %p73 = scmp.ne.s32.totalorder %s64, %s65
      %p74 = scmp.eq.s32.totalorder %s19, 0
      %p75 = por %p73, %p74
      %p76 = scmp.ne.s32.totalorder %s64, %s65
      %p77 = scmp.eq.s32.totalorder %s20, 1
      %p78 = por %p76, %p77
      %p80 = scmp.ne.s32.totalorder %s65, %s79
      %p81 = scmp.eq.s32.totalorder %s20, 0
      %p82 = por %p80, %p81
      %s84 = sadd.s32 %s83, 1
      %p87 = scmp.eq.s32.totalorder %s14, 1
      %p88 = scmp.ne.s32.totalorder %s83, %s85
      %p89 = scmp.eq.s32.totalorder %s14, 0
      %p90 = por %p88, %p89
      %p91 = scmp.ne.s32.totalorder %s83, %s85
      %p92 = scmp.eq.s32.totalorder %s19, 1
      %p93 = por %p91, %p92
      %p94 = scmp.ne.s32.totalorder %s85, %s86
      %p95 = scmp.eq.s32.totalorder %s19, 0
      %p96 = por %p94, %p95
      %p97 = scmp.ne.s32.totalorder %s85, %s86
      %p98 = scmp.eq.s32.totalorder %s20, 1
      %p99 = por %p97, %p98
      %p101 = scmp.ne.s32.totalorder %s86, %s100
      %p102 = scmp.eq.s32.totalorder %s20, 0
      %p103 = por %p101, %p102
      %s105 = sadd.s32 %s104, 1
      %p108 = scmp.eq.s32.totalorder %s14, 1
      %p109 = scmp.ne.s32.totalorder %s104, %s106
      %p110 = scmp.eq.s32.totalorder %s14, 0
      %p111 = por %p109, %p110
      %p112 = scmp.ne.s32.totalorder %s104, %s106
      %p113 = scmp.eq.s32.totalorder %s19, 1
      %p114 = por %p112, %p113
      %p115 = scmp.ne.s32.totalorder %s106, %s107
      %p116 = scmp.eq.s32.totalorder %s19, 0
      %p117 = por %p115, %p116
      %p118 = scmp.ne.s32.totalorder %s106, %s107
      %p119 = scmp.eq.s32.totalorder %s20, 1
      %p120 = por %p118, %p119
      %p122 = scmp.ne.s32.totalorder %s107, %s121
      %p123 = scmp.eq.s32.totalorder %s20, 0
      %p124 = por %p122, %p123
      %s126 = sadd.s32 %s125, 1
      %p129 = scmp.eq.s32.totalorder %s14, 1
      %p130 = scmp.ne.s32.totalorder %s125, %s127
      %p131 = scmp.eq.s32.totalorder %s14, 0
      %p132 = por %p130, %p131
      %p133 = scmp.ne.s32.totalorder %s125, %s127
      %p134 = scmp.eq.s32.totalorder %s19, 1
      %p135 = por %p133, %p134
      %p136 = scmp.ne.s32.totalorder %s127, %s128
      %p137 = scmp.eq.s32.totalorder %s19, 0
      %p138 = por %p136, %p137
      %p139 = scmp.ne.s32.totalorder %s127, %s128
      %p140 = scmp.eq.s32.totalorder %s20, 1
      %p141 = por %p139, %p140
      %p143 = scmp.ne.s32.totalorder %s128, %s142
      %p144 = scmp.eq.s32.totalorder %s20, 0
      %p145 = por %p143, %p144
      %s146 = ssub.s32 %s21, %s33
      %s147 = ssub.s32 %s22, %s29
      %s148 = sor.u32 %s146, %s147
      %p149 = scmp.eq.s32.totalorder %s148, 0
      %s151 = sadd.s32 %s150, 1
      %s152 = scalar_select %p149, %s150, %s151
      %p155 = pneg %p149
      %p156 = scmp.eq.s32.totalorder %s14, 1
      %p157 = por %p155, %p156
      %p158 = scmp.ne.s32.totalorder %s150, %s153
      %p159 = scmp.eq.s32.totalorder %s14, 0
      %p160 = por %p158, %p159
      %p161 = scmp.ne.s32.totalorder %s150, %s153
      %p162 = scmp.eq.s32.totalorder %s19, 1
      %p163 = por %p161, %p162
      %p164 = scmp.ne.s32.totalorder %s153, %s154
      %p165 = scmp.eq.s32.totalorder %s19, 0
      %p166 = por %p164, %p165
      %p167 = scmp.ne.s32.totalorder %s153, %s154
      %p168 = scmp.eq.s32.totalorder %s20, 1
      %p169 = por %p167, %p168
      %p171 = scmp.ne.s32.totalorder %s154, %s170
      %p172 = scmp.eq.s32.totalorder %s20, 0
      %p173 = por %p171, %p172
      %p174 = scmp.le.s32.totalorder 1, %s14
      %p175 = scmp.lt.s32.totalorder %s14, 3
      %p176 = pnand %p174, %p175
      %p177 = pneg %p176
      // Predicated region
      $region9: #{_lambda_.9} parent=5 // pred_check
        _
      $region10: #{_lambda_.9} parent=5 // pred_check_branch
        %179 = sbr.rel (%p176) target = $region12
      $region11: #{_lambda_.9} parent=5 // pred_region
        %s180 = ssub.s32 %s14, 1
        // Predicated region
        $region13: #{_lambda_.9} parent=11 // pred_check
          %p181 = pneg %p75
        $region14: #{_lambda_.9} parent=11 // pred_check_branch
          %183 = sbr.rel (%p181) target = $region16
        $region15: #{_lambda_.9} parent=11 // pred_region
          _
        $region16: #{_lambda_.9} parent=11 // pred_fallthru
          _
        // Predicated region
        $region17: #{_lambda_.9} parent=11 // pred_check
          %p184 = pneg %p96
        $region18: #{_lambda_.9} parent=11 // pred_check_branch
          %186 = sbr.rel (%p184) target = $region20
        $region19: #{_lambda_.9} parent=11 // pred_region
          _
        $region20: #{_lambda_.9} parent=11 // pred_fallthru
          _
        // Predicated region
        $region21: #{_lambda_.9} parent=11 // pred_check
          %p187 = pneg %p117
        $region22: #{_lambda_.9} parent=11 // pred_check_branch
          %189 = sbr.rel (%p187) target = $region24
        $region23: #{_lambda_.9} parent=11 // pred_region
          _
        $region24: #{_lambda_.9} parent=11 // pred_fallthru
          _
        // Predicated region
        $region25: #{_lambda_.9} parent=11 // pred_check
          %p190 = pneg %p138
        $region26: #{_lambda_.9} parent=11 // pred_check_branch
          %192 = sbr.rel (%p190) target = $region28
        $region27: #{_lambda_.9} parent=11 // pred_region
          _
        $region28: #{_lambda_.9} parent=11 // pred_fallthru
          _
      $region12: #{_lambda_.9} parent=5 // pred_fallthru
        _
      %p193 = scmp.lt.s32.totalorder %s14, 2
      // Predicated region
      $region29: #{_lambda_.9} parent=5 // pred_check
        %p194 = pneg %p193
      $region30: #{_lambda_.9} parent=5 // pred_check_branch
        %196 = sbr.rel (%p194) target = $region32
      $region31: #{_lambda_.9} parent=5 // pred_region
        // Predicated region
        $region33: #{_lambda_.9} parent=31 // pred_check
          %p197 = pneg %p48
        $region34: #{_lambda_.9} parent=31 // pred_check_branch
          %199 = sbr.rel (%p197) target = $region36
        $region35: #{_lambda_.9} parent=31 // pred_region
          %p200 = scmp.lt.s32.totalorder %s21, 1
          %s201 = scalar_select %p200, %s21, 1
          %p202 = scmp.lt.s32.totalorder %s22, 0
          %s203 = scalar_select %p202, %s22, 0
          %s204 = smul.addr %s201, 5
          %s205 = sadd.s32 %s203, %s204
          %s206 = smul.addr %s205, 8
          %s207 = scalar_lea.vmem %s0, %s206
        $region36: #{_lambda_.9} parent=31 // pred_fallthru
          _
      $region32: #{_lambda_.9} parent=5 // pred_fallthru
        _
      %p208 = scmp.le.s32.totalorder 1, %s14
      %p209 = scmp.lt.s32.totalorder %s14, 3
      %p210 = pnand %p208, %p209
      %p211 = pneg %p210
      // Predicated region
      $region37: #{_lambda_.9} parent=5 // pred_check
        _
      $region38: #{_lambda_.9} parent=5 // pred_check_branch
        %213 = sbr.rel (%p210) target = $region40
      $region39: #{_lambda_.9} parent=5 // pred_region
        %s214 = ssub.s32 %s14, 1
        %p215 = scmp.lt.s32.totalorder %s23, 1
        %s216 = scalar_select %p215, %s23, 1
        %p217 = scmp.lt.s32.totalorder %s24, 0
        %s218 = scalar_select %p217, %s24, 0
        %s219 = smul.addr %s216, 5
        %s220 = sadd.s32 %s218, %s219
        %s221 = smul.addr %s220, 8
        %s222 = scalar_lea.vmem %s0, %s221
        %p223 = pneg %p54
        %p224 = pneg %p51
        %p225 = pneg %p75
        %p226 = pneg %p72
        %p227 = pneg %p96
        %p228 = pneg %p93
        %p229 = pneg %p117
        %p230 = pneg %p114
        %p231 = pneg %p138
        %p232 = pneg %p135
        %p233 = pneg %p166
        %p234 = pneg %p163
        %s235 = sand.u32 %s153, 1
        %s236 = scalar_lea.sflag [#allocation3], %s235
        %s237 = sand.u32 %s153, 1
        %s238 = smul.addr %s237, 32
        %s239 = scalar_lea.vmem [#allocation2], %s238
        %p240 = scmp.lt.s32.totalorder %s23, 1
        %s241 = scalar_select %p240, %s23, 1
        %p242 = scmp.lt.s32.totalorder %s24, 0
        %s243 = scalar_select %p242, %s24, 0
        %s244 = smul.addr %s241, 5
        %s245 = sadd.s32 %s243, %s244
        %s246 = smul.addr %s245, 8
        %s247 = scalar_lea.vmem %s0, %s246
        %v249 = vld [vmem:[%s247] sm:$0xff]
        %v250 = vld [vmem:[%s247 + $0x8] sm:$0xff]
        %v251 = vld [vmem:[%s247 + $0x10] sm:$0xff]
        %v252 = vld [vmem:[%s247 + $0x18] sm:$0xff]
        %v253 = vld [vmem:[%s247 + $0x20] sm:$0xff]
        %v254 = vpack.c.bf16 %v250, %v249
        %v255 = vpack.c.bf16 %v252, %v251
        %v256 = vpack.c.bf16 %v253, %v253
        %v257 = vld [vmem:[%s1] sm:$0xf]
        %v258 = vld [vmem:[%s1 + $0x4] sm:$0xf]
        %v259 = vld [vmem:[%s1 + $0x8] sm:$0xf]
        %v260 = vld [vmem:[%s1 + $0xc] sm:$0xf]
        %v261 = vld [vmem:[%s1 + $0x10] sm:$0x3]
        %v262 = vld [vmem:[%s2] sm:$0xff]
        %v263 = vld [vmem:[%s2 + $0x8] sm:$0xff]
        %v264 = vld [vmem:[%s2 + $0x10] sm:$0xff]
        %v265 = vld [vmem:[%s2 + $0x18] sm:$0xff]
        %v266 = vld [vmem:[%s2 + $0x20] sm:$0x7]
        %268 = vset.pattern.permute.xlu0 0
        %269 = vperm.xlu0 %268, %v262
        %v270 = vpop.permute.xlu0 %269
        %273 = vset.pattern.permute.xlu0 0
        %274 = vperm.xlu0 %273, %v263
        %v275 = vpop.permute.xlu0 %274
        %278 = vset.pattern.permute.xlu0 0
        %279 = vperm.xlu0 %278, %v264
        %v280 = vpop.permute.xlu0 %279
        %283 = vset.pattern.permute.xlu0 0
        %284 = vperm.xlu0 %283, %v265
        %v285 = vpop.permute.xlu0 %284
        %288 = vset.pattern.permute.xlu0 0
        %289 = vperm.xlu0 %288, %v266
        %v290 = vpop.permute.xlu0 %289
        %v297 = vunpack.c.l.b16 %v257
        %v298 = vunpack.c.l.b16 %v258
        %v299 = vunpack.c.l.b16 %v259
        %v300 = vunpack.c.l.b16 %v260
        %v301 = vunpack.c.l.b16 %v261
        %v302 = vpack.c.b16 %v298, %v297
        %v303 = vpack.c.b16 %v300, %v299
        %v304 = vpack.c.b16 %v301, %v301
        %vm305 = vcmask 326656
        %v307 = vsel %vm305, %v302, 0
        %v310 = vsel %vm305, %v303, 0
        %v313 = vsel %vm305, %v304, 0
        %vm315 = vcmask 1043456
        %v317 = vsel %vm315, %v256, 0
        %319 = vmatprep.subr.bf16.mxu0 0
        %320 = vmatpush1.bf16.msra.mxu0 %v254
        %321 = vmatprep.subr.bf16.mxu0 0
        %322 = vmatpush1.bf16.msra.mxu0 %v255
        %323 = vmatprep.subr.bf16.mxu0 0
        %324 = vmatpush1.bf16.msra.mxu0 %v317
        %325 = vmatprep.subr.bf16.mxu0 0
        %326 = vmatpush1.bf16.msra.mxu0 0
        %327 = vmatprep.subr.bf16.mxu0 0
        %328 = vmatpush1.bf16.msra.mxu0 0
        %329 = vmatprep.subr.bf16.mxu0 0
        %330 = vmatpush1.bf16.msra.mxu0 0
        %331 = vmatprep.subr.bf16.mxu0 0
        %332 = vmatpush1.bf16.msra.mxu0 0
        %333 = vmatprep.subr.bf16.mxu0 0
        %334 = vmatpush1.bf16.msra.mxu0 0
        %335 = vmatprep.subr.bf16.mxu0 0
        %336 = vmatpush1.bf16.msra.mxu0 0
        %337 = vmatprep.subr.bf16.mxu0 0
        %338 = vmatpush1.bf16.msra.mxu0 0
        %339 = vmatprep.subr.bf16.mxu0 0
        %340 = vmatpush1.bf16.msra.mxu0 0
        %341 = vmatprep.subr.bf16.mxu0 0
        %342 = vmatpush1.bf16.msra.mxu0 0
        %343 = vmatprep.subr.bf16.mxu0 0
        %344 = vmatpush1.bf16.msra.mxu0 0
        %345 = vmatprep.subr.bf16.mxu0 0
        %346 = vmatpush1.bf16.msra.mxu0 0
        %347 = vmatprep.subr.bf16.mxu0 0
        %348 = vmatpush1.bf16.msra.mxu0 0
        %349 = vmatprep.subr.bf16.mxu0 0
        %350 = vmatpush1.bf16.msra.mxu0 0
        %351 = vmatprep.mubr.bf16.mxu0 0
        %352 = vmatmul.mubr.bf16.gmra.mrb[0].mxu0 %v307
        %v353 = vpop.f32.mrb[0].mxu0
        %v354 = vadd.f32 %v270, %v353
        %v355 = vpop.f32.mrb[0].mxu0
        %v356 = vpop.f32.mrb[0].mxu0
        %v357 = vadd.f32 %v275, %v356
        %v358 = vpop.f32.mrb[0].mxu0
        %359 = vmatprep.mubr.bf16.mxu0 0
        %360 = vmatmul.mubr.bf16.gmra.mrb[0].mxu0 %v310
        %v361 = vpop.f32.mrb[0].mxu0
        %v362 = vadd.f32 %v280, %v361
        %v363 = vpop.f32.mrb[0].mxu0
        %v364 = vpop.f32.mrb[0].mxu0
        %v365 = vadd.f32 %v285, %v364
        %v366 = vpop.f32.mrb[0].mxu0
        %367 = vmatprep.mubr.bf16.mxu0 0
        %368 = vmatmul.mubr.bf16.gmra.mrb[0].mxu0 %v313
        %v369 = vpop.f32.mrb[0].mxu0
        %v370 = vadd.f32 %v290, %v369
        %v371 = vpop.f32.mrb[0].mxu0
        %v372 = vpop.f32.mrb[0].mxu0
        %v373 = vpop.f32.mrb[0].mxu0
        %374 = vdwg.mxu0
        %v375 = vmul.f32 %v354, %v354
        %v376 = vmul.f32 %v357, %v357
        %v377 = vmul.f32 %v362, %v362
        %v378 = vmul.f32 %v365, %v365
        %v379 = vmul.f32 %v370, %v370
        %v380 = vmul.f32 %v354, %v375
        %v381 = vmul.f32 %v357, %v376
        %v382 = vmul.f32 %v362, %v377
        %v383 = vmul.f32 %v365, %v378
        %v384 = vmul.f32 %v370, %v379
        %v385 = vmul.f32 %v380, 0.044715
        %v386 = vmul.f32 %v381, 0.044715
        %v387 = vmul.f32 %v382, 0.044715
        %v388 = vmul.f32 %v383, 0.044715
        %v389 = vmul.f32 %v384, 0.044715
        %v390 = vadd.f32 %v354, %v385
        %v391 = vadd.f32 %v357, %v386
        %v392 = vadd.f32 %v362, %v387
        %v393 = vadd.f32 %v365, %v388
        %v394 = vadd.f32 %v370, %v389
        %v395 = vmul.f32 %v390, 0.7978846
        %v396 = vmul.f32 %v391, 0.7978846
        %v397 = vmul.f32 %v392, 0.7978846
        %v398 = vmul.f32 %v393, 0.7978846
        %v399 = vmul.f32 %v394, 0.7978846
        %v400 = vtanh.pop %v395
        %v401 = vtanh.pop %v396
        %v402 = vtanh.pop %v397
        %v403 = vtanh.pop %v398
        %v404 = vtanh.pop %v399
        %v405 = vadd.f32 %v400, 1.0
        %v406 = vadd.f32 %v401, 1.0
        %v407 = vadd.f32 %v402, 1.0
        %v408 = vadd.f32 %v403, 1.0
        %v409 = vadd.f32 %v404, 1.0
        %v410 = vmul.f32 %v405, 0.5
        %v411 = vmul.f32 %v406, 0.5
        %v412 = vmul.f32 %v407, 0.5
        %v413 = vmul.f32 %v408, 0.5
        %v414 = vmul.f32 %v409, 0.5
        %v415 = vmul.f32 %v354, %v410
        %v416 = vmul.f32 %v357, %v411
        %v417 = vmul.f32 %v362, %v412
        %v418 = vmul.f32 %v365, %v413
        %v419 = vmul.f32 %v370, %v414
        %v420 = vld [vmem:[%s3] sm:$0xf]
        %v421 = vld [vmem:[%s3 + $0x4] sm:$0xf]
        %v422 = vld [vmem:[%s3 + $0x8] sm:$0xf]
        %v423 = vld [vmem:[%s3 + $0xc] sm:$0xf]
        %v424 = vpack.c.bf16 %v416, %v415
        %v425 = vpack.c.bf16 %v418, %v417
        %v426 = vpack.c.bf16 %v419, %v419
        %v427 = vld [vmem:[%s4] sm:$0xff]
        %v428 = vld [vmem:[%s4 + $0x8] sm:$0xff]
        %v429 = vld [vmem:[%s4 + $0x10] sm:$0xff]
        %v430 = vld [vmem:[%s4 + $0x18] sm:$0xff]
        %432 = vset.pattern.permute.xlu0 0
        %433 = vperm.xlu0 %432, %v427
        %v434 = vpop.permute.xlu0 %433
        %437 = vset.pattern.permute.xlu0 0
        %438 = vperm.xlu0 %437, %v428
        %v439 = vpop.permute.xlu0 %438
        %442 = vset.pattern.permute.xlu0 0
        %443 = vperm.xlu0 %442, %v429
        %v444 = vpop.permute.xlu0 %443
        %447 = vset.pattern.permute.xlu0 0
        %448 = vperm.xlu0 %447, %v430
        %v449 = vpop.permute.xlu0 %448
        %v455 = vunpack.c.l.b16 %v420
        %v456 = vunpack.c.l.b16 %v421
        %v457 = vunpack.c.l.b16 %v422
        %v458 = vunpack.c.l.b16 %v423
        %v459 = vpack.c.b16 %v456, %v455
        %v460 = vpack.c.b16 %v458, %v457
        %vm461 = vcmask 285696
        %v463 = vsel %vm461, %v459, 0
        %v466 = vsel %vm461, %v460, 0
        %vm468 = vcmask 1040384
        %vm469 = vcmask 1041408
        %v470 = vsel %vm468, 4294967295, 65535
        %v471 = vsel %vm469, %v470, 0
        %v473 = vand.u32 %v426, %v471
        %475 = vmatprep.subr.bf16.mxu0 0
        %476 = vmatpush1.bf16.msra.mxu0 %v424
        %477 = vmatprep.subr.bf16.mxu0 0
        %478 = vmatpush1.bf16.msra.mxu0 %v425
        %479 = vmatprep.subr.bf16.mxu0 0
        %480 = vmatpush1.bf16.msra.mxu0 %v473
        %481 = vmatprep.subr.bf16.mxu0 0
        %482 = vmatpush1.bf16.msra.mxu0 0
        %483 = vmatprep.subr.bf16.mxu0 0
        %484 = vmatpush1.bf16.msra.mxu0 0
        %485 = vmatprep.subr.bf16.mxu0 0
        %486 = vmatpush1.bf16.msra.mxu0 0
        %487 = vmatprep.subr.bf16.mxu0 0
        %488 = vmatpush1.bf16.msra.mxu0 0
        %489 = vmatprep.subr.bf16.mxu0 0
        %490 = vmatpush1.bf16.msra.mxu0 0
        %491 = vmatprep.subr.bf16.mxu0 0
        %492 = vmatpush1.bf16.msra.mxu0 0
        %493 = vmatprep.subr.bf16.mxu0 0
        %494 = vmatpush1.bf16.msra.mxu0 0
        %495 = vmatprep.subr.bf16.mxu0 0
        %496 = vmatpush1.bf16.msra.mxu0 0
        %497 = vmatprep.subr.bf16.mxu0 0
        %498 = vmatpush1.bf16.msra.mxu0 0
        %499 = vmatprep.subr.bf16.mxu0 0
        %500 = vmatpush1.bf16.msra.mxu0 0
        %501 = vmatprep.subr.bf16.mxu0 0
        %502 = vmatpush1.bf16.msra.mxu0 0
        %503 = vmatprep.subr.bf16.mxu0 0
        %504 = vmatpush1.bf16.msra.mxu0 0
        %505 = vmatprep.subr.bf16.mxu0 0
        %506 = vmatpush1.bf16.msra.mxu0 0
        %507 = vmatprep.mubr.bf16.mxu0 0
        %508 = vmatmul.mubr.bf16.gmra.mrb[0].mxu0 %v463
        %v509 = vpop.f32.mrb[0].mxu0
        %v510 = vadd.f32 %v434, %v509
        %v511 = vpop.f32.mrb[0].mxu0
        %v512 = vpop.f32.mrb[0].mxu0
        %v513 = vadd.f32 %v439, %v512
        %v514 = vpop.f32.mrb[0].mxu0
        %515 = vmatprep.mubr.bf16.mxu0 0
        %516 = vmatmul.mubr.bf16.gmra.mrb[0].mxu0 %v466
        %v517 = vpop.f32.mrb[0].mxu0
        %v518 = vadd.f32 %v444, %v517
        %v519 = vpop.f32.mrb[0].mxu0
        %v520 = vpop.f32.mrb[0].mxu0
        %v521 = vadd.f32 %v449, %v520
        %v522 = vpop.f32.mrb[0].mxu0
        %523 = vdwg.mxu0
        %v524 = vmul.f32 %v510, %v510
        %v525 = vmul.f32 %v513, %v513
        %v526 = vmul.f32 %v518, %v518
        %v527 = vmul.f32 %v521, %v521
        %v528 = vmul.f32 %v510, %v524
        %v529 = vmul.f32 %v513, %v525
        %v530 = vmul.f32 %v518, %v526
        %v531 = vmul.f32 %v521, %v527
        %v532 = vmul.f32 %v528, 0.044715
        %v533 = vmul.f32 %v529, 0.044715
        %v534 = vmul.f32 %v530, 0.044715
        %v535 = vmul.f32 %v531, 0.044715
        %v536 = vadd.f32 %v510, %v532
        %v537 = vadd.f32 %v513, %v533
        %v538 = vadd.f32 %v518, %v534
        %v539 = vadd.f32 %v521, %v535
        %v540 = vmul.f32 %v536, 0.7978846
        %v541 = vmul.f32 %v537, 0.7978846
        %v542 = vmul.f32 %v538, 0.7978846
        %v543 = vmul.f32 %v539, 0.7978846
        %v544 = vtanh.pop %v540
        %v545 = vtanh.pop %v541
        %v546 = vtanh.pop %v542
        %v547 = vtanh.pop %v543
        %v548 = vadd.f32 %v544, 1.0
        %v549 = vadd.f32 %v545, 1.0
        %v550 = vadd.f32 %v546, 1.0
        %v551 = vadd.f32 %v547, 1.0
        %v552 = vmul.f32 %v548, 0.5
        %v553 = vmul.f32 %v549, 0.5
        %v554 = vmul.f32 %v550, 0.5
        %v555 = vmul.f32 %v551, 0.5
        %v556 = vmul.f32 %v510, %v552
        %v557 = vmul.f32 %v513, %v553
        %v558 = vmul.f32 %v518, %v554
        %v559 = vmul.f32 %v521, %v555
        %560 = vst [vmem:[%s239] sm:$0xff] %v556
        %561 = vst [vmem:[%s239 + $0x8] sm:$0xff] %v557
        %562 = vst [vmem:[%s239 + $0x10] sm:$0xff] %v558
        %563 = vst [vmem:[%s239 + $0x18] sm:$0xff] %v559
        %s564 = sand.u32 %s153, 1
        %s565 = scalar_lea.sflag [#allocation3], %s564
        %s566 = sand.u32 %s153, 1
        %s567 = smul.addr %s566, 32
        %s568 = scalar_lea.vmem [#allocation2], %s567
        // Predicated region
        $region41: #{_lambda_.9} parent=39 // pred_check
          %p569 = pneg %p163
        $region42: #{_lambda_.9} parent=39 // pred_check_branch
          %571 = sbr.rel (%p569) target = $region44
        $region43: #{_lambda_.9} parent=39 // pred_region
          %s573 = ssub.s32 512, 512
          %574 = vsyncadd %s565, %s573
          %s575 = smul.addr %s23, 4
          %s576 = sadd.s32 %s24, %s575
          %s577 = smul.addr %s576, 128
          %s578 = scalar_lea.hbm %s5, %s577
          %s579 = sshll.u32 %s568, 4
          %s580 = int_to_ptr.vmem [resolvable:$true] %s579
          %585 = dma.vmem_to_hbm [thread:$0]  %s580, 512, %s578, %s565, 128, 128, 8
        $region44: #{_lambda_.9} parent=39 // pred_fallthru
          _
      $region40: #{_lambda_.9} parent=5 // pred_fallthru
        _
      %p586 = scmp.le.s32.totalorder 2, %s14
      // Predicated region
      $region45: #{_lambda_.9} parent=5 // pred_check
        %p587 = pneg %p586
      $region46: #{_lambda_.9} parent=5 // pred_check_branch
        %589 = sbr.rel (%p587) target = $region48
      $region47: #{_lambda_.9} parent=5 // pred_region
        %s590 = ssub.s32 %s14, 2
        // Predicated region
        $region49: #{_lambda_.9} parent=47 // pred_check
          %p591 = pneg %p169
        $region50: #{_lambda_.9} parent=47 // pred_check_branch
          %593 = sbr.rel (%p591) target = $region52
        $region51: #{_lambda_.9} parent=47 // pred_region
          %s594 = sand.u32 %s154, 1
          %s595 = scalar_lea.sflag [#allocation3], %s594
          %s596 = sand.u32 %s154, 1
          %s597 = smul.addr %s596, 32
          %s598 = scalar_lea.vmem [#allocation2], %s597
          %599 = dma.done %s595, 512
        $region52: #{_lambda_.9} parent=47 // pred_fallthru
          _
      $region48: #{_lambda_.9} parent=5 // pred_fallthru
        _
    $region6: #{_lambda_.9} parent=1 // loop_footer
      %s18 = sadd.s32 1, %s14
    $region7: #{_lambda_.9} parent=1 // loop_footer_branch
      %13 = sbr.rel target = $region3
    $region8: #{_lambda_.9} parent=1 // loop_exit
      _
    %600 = vsyncpa [#allocation3], 1
    %s601 = scalar_lea.sflag [#allocation3], 1
    %602 = vsyncpa %s601, 1

// kernel: _lambda_.6
$region0: #{_lambda_.6}
  #allocation0 [shape = 'u32[]', space=smem, size = 0x4, offset = 0x4, fixed_abs, tag = 'smem constant byte address 0x4 - core index']
  #allocation1 [shape = 'u32[144,128]{1,0:T(1,128)}', space=vmem, size = 0x12000, scoped, tag = 'internal scratch']
  %s0 = inlined_call_operand.vmem [shape: f32[2,2,128], index: 0, kind: input, shape index: {}, may-alias: {0,1}]
  %s1 = inlined_call_operand.vmem [shape: f32[2,2,128], index: 1, kind: input, shape index: {}, may-alias: {0,1}]
  %s2 = inlined_call_operand.vmem [shape: s32[2,10,128], index: 2, kind: input, shape index: {}]
  %s3 = inlined_call_operand.vmem [shape: bf16[5,2], index: 3, kind: input, shape index: {}]
  %s4 = inlined_call_operand.vmem [shape: bf16[5,2], index: 4, kind: input, shape index: {}]
  %s5 = inlined_call_operand.vmem [shape: f32[5,1], index: 5, kind: input, shape index: {}]
  %s6 = inlined_call_operand.vmem [shape: bf16[8,5], index: 6, kind: input, shape index: {}]
  %s7 = inlined_call_operand.vmem [shape: f32[8,1], index: 7, kind: input, shape index: {}]
  %s8 = inlined_call_operand.vmem [shape: f32[2,8,128], index: 8, kind: output, shape index: {}]
  %s9 = sld [smem:[#allocation0]]
  $region65: #{_lambda_.6} parent=0
    _
  %s11 = ssub.s32 1, %s9
  %s12 = scalar_select 0, %s11, %s9
  loop: start=0, step=1, limit=4
  $region2: #{_lambda_.6} parent=0 // loop_pre_header
    _
  $region3: #{_lambda_.6} parent=0 // loop_header
    %s14 = sphi 0, %s18
    %p15 = scmp.ge.s32.totalorder %s14, 4
    %s21 = sphi 0, %s33
    %s22 = sphi 0, %s29
    %s23 = sphi 0, %s21
    %s24 = sphi 0, %s22
    %s25 = sphi 0, %s23
    %s26 = sphi 0, %s24
    %s36 = sphi 0, %s38
    %s39 = sphi 0, %s36
    %s40 = sphi 0, %s39
    %s56 = sphi 0, %s40
    %s64 = sphi 0, %s66
    %s67 = sphi 0, %s64
    %s68 = sphi 0, %s67
    %s84 = sphi 0, %s68
    %s92 = sphi 0, %s94
    %s95 = sphi 0, %s92
    %s96 = sphi 0, %s95
    %s112 = sphi 0, %s96
    %s116 = sphi 0, %s116
    %s118 = sphi 0, %s116
    %s119 = sphi 0, %s118
    %s133 = sphi 0, %s119
    %s137 = sphi 0, %s137
    %s139 = sphi 0, %s137
    %s140 = sphi 0, %s139
    %s154 = sphi 0, %s140
    %s158 = sphi 0, %s158
    %s160 = sphi 0, %s158
    %s161 = sphi 0, %s160
    %s175 = sphi 0, %s161
    %s179 = sphi 0, %s179
    %s181 = sphi 0, %s179
    %s182 = sphi 0, %s181
    %s196 = sphi 0, %s182
    %s200 = sphi 0, %s200
    %s202 = sphi 0, %s200
    %s203 = sphi 0, %s202
    %s217 = sphi 0, %s203
    %s225 = sphi 0, %s227
    %s228 = sphi 0, %s225
    %s229 = sphi 0, %s228
    %s245 = sphi 0, %s229
  $region4: #{_lambda_.6} parent=0 // loop_header_branch
    %17 = sbr.rel (%p15) target = $region8
  $region5: #{_lambda_.6} parent=0 // loop_body
    %s19 = ssub.s32 %s14, 1
    %s20 = ssub.s32 %s14, 2
    %s27 = sadd.s32 1, %s22
    %p28 = scmp.ge.s32.totalorder %s27, 1
    %s29 = scalar_select %p28, 0, %s27
    %s30 = sadd.s32 1, %s21
    %s31 = scalar_select %p28, %s30, %s21
    %p32 = scmp.ge.s32.totalorder %s31, 2
    %s33 = scalar_select %p32, 0, %s31
    %s34 = ssub.s32 %s21, %s33
    %p35 = scmp.eq.s32.totalorder %s34, 0
    %s37 = sadd.s32 %s36, 1
    %s38 = scalar_select %p35, %s36, %s37
    %p41 = pneg %p35
    %p42 = scmp.eq.s32.totalorder %s14, 1
    %p43 = por %p41, %p42
    %p44 = scmp.ne.s32.totalorder %s36, %s39
    %p45 = scmp.eq.s32.totalorder %s14, 0
    %p46 = por %p44, %p45
    %p47 = scmp.ne.s32.totalorder %s36, %s39
    %p48 = scmp.eq.s32.totalorder %s19, 1
    %p49 = por %p47, %p48
    %p50 = scmp.ne.s32.totalorder %s39, %s40
    %p51 = scmp.eq.s32.totalorder %s19, 0
    %p52 = por %p50, %p51
    %p53 = scmp.ne.s32.totalorder %s39, %s40
    %p54 = scmp.eq.s32.totalorder %s20, 1
    %p55 = por %p53, %p54
    %p57 = scmp.ne.s32.totalorder %s40, %s56
    %p58 = scmp.eq.s32.totalorder %s20, 0
    %p59 = por %p57, %p58
    %s60 = ssub.s32 %s21, %s33
    %s61 = ssub.s32 %s22, %s29
    %s62 = sor.u32 %s60, %s61
    %p63 = scmp.eq.s32.totalorder %s62, 0
    %s65 = sadd.s32 %s64, 1
    %s66 = scalar_select %p63, %s64, %s65
    %p69 = pneg %p63
    %p70 = scmp.eq.s32.totalorder %s14, 1
    %p71 = por %p69, %p70
    %p72 = scmp.ne.s32.totalorder %s64, %s67
    %p73 = scmp.eq.s32.totalorder %s14, 0
    %p74 = por %p72, %p73
    %p75 = scmp.ne.s32.totalorder %s64, %s67
    %p76 = scmp.eq.s32.totalorder %s19, 1
    %p77 = por %p75, %p76
    %p78 = scmp.ne.s32.totalorder %s67, %s68
    %p79 = scmp.eq.s32.totalorder %s19, 0
    %p80 = por %p78, %p79
    %p81 = scmp.ne.s32.totalorder %s67, %s68
    %p82 = scmp.eq.s32.totalorder %s20, 1
    %p83 = por %p81, %p82
    %p85 = scmp.ne.s32.totalorder %s68, %s84
    %p86 = scmp.eq.s32.totalorder %s20, 0
    %p87 = por %p85, %p86
    %s88 = ssub.s32 %s21, %s33
    %s89 = ssub.s32 %s22, %s29
    %s90 = sor.u32 %s88, %s89
    %p91 = scmp.eq.s32.totalorder %s90, 0
    %s93 = sadd.s32 %s92, 1
    %s94 = scalar_select %p91, %s92, %s93
    %p97 = pneg %p91
    %p98 = scmp.eq.s32.totalorder %s14, 1
    %p99 = por %p97, %p98
    %p100 = scmp.ne.s32.totalorder %s92, %s95
    %p101 = scmp.eq.s32.totalorder %s14, 0
    %p102 = por %p100, %p101
    %p103 = scmp.ne.s32.totalorder %s92, %s95
    %p104 = scmp.eq.s32.totalorder %s19, 1
    %p105 = por %p103, %p104
    %p106 = scmp.ne.s32.totalorder %s95, %s96
    %p107 = scmp.eq.s32.totalorder %s19, 0
    %p108 = por %p106, %p107
    %p109 = scmp.ne.s32.totalorder %s95, %s96
    %p110 = scmp.eq.s32.totalorder %s20, 1
    %p111 = por %p109, %p110
    %p113 = scmp.ne.s32.totalorder %s96, %s112
    %p114 = scmp.eq.s32.totalorder %s20, 0
    %p115 = por %p113, %p114
    %s117 = sadd.s32 %s116, 1
    %p120 = scmp.eq.s32.totalorder %s14, 1
    %p121 = scmp.ne.s32.totalorder %s116, %s118
    %p122 = scmp.eq.s32.totalorder %s14, 0
    %p123 = por %p121, %p122
    %p124 = scmp.ne.s32.totalorder %s116, %s118
    %p125 = scmp.eq.s32.totalorder %s19, 1
    %p126 = por %p124, %p125
    %p127 = scmp.ne.s32.totalorder %s118, %s119
    %p128 = scmp.eq.s32.totalorder %s19, 0
    %p129 = por %p127, %p128
    %p130 = scmp.ne.s32.totalorder %s118, %s119
    %p131 = scmp.eq.s32.totalorder %s20, 1
    %p132 = por %p130, %p131
    %p134 = scmp.ne.s32.totalorder %s119, %s133
    %p135 = scmp.eq.s32.totalorder %s20, 0
    %p136 = por %p134, %p135
    %s138 = sadd.s32 %s137, 1
    %p141 = scmp.eq.s32.totalorder %s14, 1
    %p142 = scmp.ne.s32.totalorder %s137, %s139
    %p143 = scmp.eq.s32.totalorder %s14, 0
    %p144 = por %p142, %p143
    %p145 = scmp.ne.s32.totalorder %s137, %s139
    %p146 = scmp.eq.s32.totalorder %s19, 1
    %p147 = por %p145, %p146
    %p148 = scmp.ne.s32.totalorder %s139, %s140
    %p149 = scmp.eq.s32.totalorder %s19, 0
    %p150 = por %p148, %p149
    %p151 = scmp.ne.s32.totalorder %s139, %s140
    %p152 = scmp.eq.s32.totalorder %s20, 1
    %p153 = por %p151, %p152
    %p155 = scmp.ne.s32.totalorder %s140, %s154
    %p156 = scmp.eq.s32.totalorder %s20, 0
    %p157 = por %p155, %p156
    %s159 = sadd.s32 %s158, 1
    %p162 = scmp.eq.s32.totalorder %s14, 1
    %p163 = scmp.ne.s32.totalorder %s158, %s160
    %p164 = scmp.eq.s32.totalorder %s14, 0
    %p165 = por %p163, %p164
    %p166 = scmp.ne.s32.totalorder %s158, %s160
    %p167 = scmp.eq.s32.totalorder %s19, 1
    %p168 = por %p166, %p167
    %p169 = scmp.ne.s32.totalorder %s160, %s161
    %p170 = scmp.eq.s32.totalorder %s19, 0
    %p171 = por %p169, %p170
    %p172 = scmp.ne.s32.totalorder %s160, %s161
    %p173 = scmp.eq.s32.totalorder %s20, 1
    %p174 = por %p172, %p173
    %p176 = scmp.ne.s32.totalorder %s161, %s175
    %p177 = scmp.eq.s32.totalorder %s20, 0
    %p178 = por %p176, %p177
    %s180 = sadd.s32 %s179, 1
    %p183 = scmp.eq.s32.totalorder %s14, 1
    %p184 = scmp.ne.s32.totalorder %s179, %s181
    %p185 = scmp.eq.s32.totalorder %s14, 0
    %p186 = por %p184, %p185
    %p187 = scmp.ne.s32.totalorder %s179, %s181
    %p188 = scmp.eq.s32.totalorder %s19, 1
    %p189 = por %p187, %p188
    %p190 = scmp.ne.s32.totalorder %s181, %s182
    %p191 = scmp.eq.s32.totalorder %s19, 0
    %p192 = por %p190, %p191
    %p193 = scmp.ne.s32.totalorder %s181, %s182
    %p194 = scmp.eq.s32.totalorder %s20, 1
    %p195 = por %p193, %p194
    %p197 = scmp.ne.s32.totalorder %s182, %s196
    %p198 = scmp.eq.s32.totalorder %s20, 0
    %p199 = por %p197, %p198
    %s201 = sadd.s32 %s200, 1
    %p204 = scmp.eq.s32.totalorder %s14, 1
    %p205 = scmp.ne.s32.totalorder %s200, %s202
    %p206 = scmp.eq.s32.totalorder %s14, 0
    %p207 = por %p205, %p206
    %p208 = scmp.ne.s32.totalorder %s200, %s202
    %p209 = scmp.eq.s32.totalorder %s19, 1
    %p210 = por %p208, %p209
    %p211 = scmp.ne.s32.totalorder %s202, %s203
    %p212 = scmp.eq.s32.totalorder %s19, 0
    %p213 = por %p211, %p212
    %p214 = scmp.ne.s32.totalorder %s202, %s203
    %p215 = scmp.eq.s32.totalorder %s20, 1
    %p216 = por %p214, %p215
    %p218 = scmp.ne.s32.totalorder %s203, %s217
    %p219 = scmp.eq.s32.totalorder %s20, 0
    %p220 = por %p218, %p219
    %s221 = ssub.s32 %s21, %s33
    %s222 = ssub.s32 %s22, %s29
    %s223 = sor.u32 %s221, %s222
    %p224 = scmp.eq.s32.totalorder %s223, 0
    %s226 = sadd.s32 %s225, 1
    %s227 = scalar_select %p224, %s225, %s226
    %p230 = pneg %p224
    %p231 = scmp.eq.s32.totalorder %s14, 1
    %p232 = por %p230, %p231
    %p233 = scmp.ne.s32.totalorder %s225, %s228
    %p234 = scmp.eq.s32.totalorder %s14, 0
    %p235 = por %p233, %p234
    %p236 = scmp.ne.s32.totalorder %s225, %s228
    %p237 = scmp.eq.s32.totalorder %s19, 1
    %p238 = por %p236, %p237
    %p239 = scmp.ne.s32.totalorder %s228, %s229
    %p240 = scmp.eq.s32.totalorder %s19, 0
    %p241 = por %p239, %p240
    %p242 = scmp.ne.s32.totalorder %s228, %s229
    %p243 = scmp.eq.s32.totalorder %s20, 1
    %p244 = por %p242, %p243
    %p246 = scmp.ne.s32.totalorder %s229, %s245
    %p247 = scmp.eq.s32.totalorder %s20, 0
    %p248 = por %p246, %p247
    %p249 = scmp.le.s32.totalorder 1, %s14
    %p250 = scmp.lt.s32.totalorder %s14, 3
    %p251 = pnand %p249, %p250
    %p252 = pneg %p251
    // Predicated region
    $region9: #{_lambda_.6} parent=5 // pred_check
      _
    $region10: #{_lambda_.6} parent=5 // pred_check_branch
      %254 = sbr.rel (%p251) target = $region12
    $region11: #{_lambda_.6} parent=5 // pred_region
      %s255 = ssub.s32 %s14, 1
      // Predicated region
      $region13: #{_lambda_.6} parent=11 // pred_check
        %p256 = pneg %p129
      $region14: #{_lambda_.6} parent=11 // pred_check_branch
        %258 = sbr.rel (%p256) target = $region16
      $region15: #{_lambda_.6} parent=11 // pred_region
        _
      $region16: #{_lambda_.6} parent=11 // pred_fallthru
        _
      // Predicated region
      $region17: #{_lambda_.6} parent=11 // pred_check
        %p259 = pneg %p150
      $region18: #{_lambda_.6} parent=11 // pred_check_branch
        %261 = sbr.rel (%p259) target = $region20
      $region19: #{_lambda_.6} parent=11 // pred_region
        _
      $region20: #{_lambda_.6} parent=11 // pred_fallthru
        _
      // Predicated region
      $region21: #{_lambda_.6} parent=11 // pred_check
        %p262 = pneg %p171
      $region22: #{_lambda_.6} parent=11 // pred_check_branch
        %264 = sbr.rel (%p262) target = $region24
      $region23: #{_lambda_.6} parent=11 // pred_region
        _
      $region24: #{_lambda_.6} parent=11 // pred_fallthru
        _
      // Predicated region
      $region25: #{_lambda_.6} parent=11 // pred_check
        %p265 = pneg %p192
      $region26: #{_lambda_.6} parent=11 // pred_check_branch
        %267 = sbr.rel (%p265) target = $region28
      $region27: #{_lambda_.6} parent=11 // pred_region
        _
      $region28: #{_lambda_.6} parent=11 // pred_fallthru
        _
      // Predicated region
      $region29: #{_lambda_.6} parent=11 // pred_check
        %p268 = pneg %p213
      $region30: #{_lambda_.6} parent=11 // pred_check_branch
        %270 = sbr.rel (%p268) target = $region32
      $region31: #{_lambda_.6} parent=11 // pred_region
        _
      $region32: #{_lambda_.6} parent=11 // pred_fallthru
        _
    $region12: #{_lambda_.6} parent=5 // pred_fallthru
      _
    %p271 = scmp.lt.s32.totalorder %s14, 2
    // Predicated region
    $region33: #{_lambda_.6} parent=5 // pred_check
      %p272 = pneg %p271
    $region34: #{_lambda_.6} parent=5 // pred_check_branch
      %274 = sbr.rel (%p272) target = $region36
    $region35: #{_lambda_.6} parent=5 // pred_region
      // Predicated region
      $region37: #{_lambda_.6} parent=35 // pred_check
        %p275 = pneg %p46
      $region38: #{_lambda_.6} parent=35 // pred_check_branch
        %277 = sbr.rel (%p275) target = $region40
      $region39: #{_lambda_.6} parent=35 // pred_region
        %p278 = scmp.lt.s32.totalorder %s21, 1
        %s279 = scalar_select %p278, %s21, 1
        %s280 = smul.addr %s279, 2
        %s281 = scalar_lea.vmem %s0, %s280
      $region40: #{_lambda_.6} parent=35 // pred_fallthru
        _
      // Predicated region
      $region41: #{_lambda_.6} parent=35 // pred_check
        %p282 = pneg %p74
      $region42: #{_lambda_.6} parent=35 // pred_check_branch
        %284 = sbr.rel (%p282) target = $region44
      $region43: #{_lambda_.6} parent=35 // pred_region
        %p285 = scmp.lt.s32.totalorder %s21, 1
        %s286 = scalar_select %p285, %s21, 1
        %p287 = scmp.lt.s32.totalorder %s22, 0
        %s288 = scalar_select %p287, %s22, 0
        %s289 = sadd.s32 %s288, %s286
        %s290 = smul.addr %s289, 2
        %s291 = scalar_lea.vmem %s1, %s290
      $region44: #{_lambda_.6} parent=35 // pred_fallthru
        _
      // Predicated region
      $region45: #{_lambda_.6} parent=35 // pred_check
        %p292 = pneg %p102
      $region46: #{_lambda_.6} parent=35 // pred_check_branch
        %294 = sbr.rel (%p292) target = $region48
      $region47: #{_lambda_.6} parent=35 // pred_region
        %p295 = scmp.lt.s32.totalorder %s21, 1
        %s296 = scalar_select %p295, %s21, 1
        %p297 = scmp.lt.s32.totalorder %s22, 0
        %s298 = scalar_select %p297, %s22, 0
        %s299 = smul.addr %s296, 2
        %s300 = sadd.s32 %s298, %s299
        %s301 = smul.addr %s300, 8
        %s302 = scalar_lea.vmem %s2, %s301
      $region48: #{_lambda_.6} parent=35 // pred_fallthru
        _
    $region36: #{_lambda_.6} parent=5 // pred_fallthru
      _
    %p303 = scmp.le.s32.totalorder 1, %s14
    %p304 = scmp.lt.s32.totalorder %s14, 3
    %p305 = pnand %p303, %p304
    %p306 = pneg %p305
    // Predicated region
    $region49: #{_lambda_.6} parent=5 // pred_check
      _
    $region50: #{_lambda_.6} parent=5 // pred_check_branch
      %308 = sbr.rel (%p305) target = $region52
    $region51: #{_lambda_.6} parent=5 // pred_region
      %s309 = ssub.s32 %s14, 1
      %p310 = scmp.lt.s32.totalorder %s23, 1
      %s311 = scalar_select %p310, %s23, 1
      %s312 = smul.addr %s311, 2
      %s313 = scalar_lea.vmem %s0, %s312
      %p314 = pneg %p52
      %p315 = pneg %p49
      %p316 = scmp.lt.s32.totalorder %s23, 1
      %s317 = scalar_select %p316, %s23, 1
      %p318 = scmp.lt.s32.totalorder %s24, 0
      %s319 = scalar_select %p318, %s24, 0
      %s320 = sadd.s32 %s319, %s317
      %s321 = smul.addr %s320, 2
      %s322 = scalar_lea.vmem %s1, %s321
      %p323 = pneg %p80
      %p324 = pneg %p77
      %p325 = scmp.lt.s32.totalorder %s23, 1
      %s326 = scalar_select %p325, %s23, 1
      %p327 = scmp.lt.s32.totalorder %s24, 0
      %s328 = scalar_select %p327, %s24, 0
      %s329 = smul.addr %s326, 2
      %s330 = sadd.s32 %s328, %s329
      %s331 = smul.addr %s330, 8
      %s332 = scalar_lea.vmem %s2, %s331
      %p333 = pneg %p108
      %p334 = pneg %p105
      %p335 = pneg %p129
      %p336 = pneg %p126
      %p337 = pneg %p150
      %p338 = pneg %p147
      %p339 = pneg %p171
      %p340 = pneg %p168
      %p341 = pneg %p192
      %p342 = pneg %p189
      %p343 = pneg %p213
      %p344 = pneg %p210
      %p345 = pneg %p241
      %p346 = pneg %p238
      %p347 = scmp.lt.s32.totalorder %s23, 1
      %s348 = scalar_select %p347, %s23, 1
      %p349 = scmp.lt.s32.totalorder %s24, 0
      %s350 = scalar_select %p349, %s24, 0
      %s351 = sadd.s32 %s350, %s348
      %s352 = smul.addr %s351, 8
      %s353 = scalar_lea.vmem %s8, %s352
      %p354 = scmp.lt.s32.totalorder %s23, 1
      %s355 = scalar_select %p354, %s23, 1
      %s356 = smul.addr %s355, 2
      %s357 = scalar_lea.vmem %s0, %s356
      %p358 = scmp.lt.s32.totalorder %s23, 1
      %s359 = scalar_select %p358, %s23, 1
      %p360 = scmp.lt.s32.totalorder %s24, 0
      %s361 = scalar_select %p360, %s24, 0
      %s362 = sadd.s32 %s361, %s359
      %s363 = smul.addr %s362, 2
      %s364 = scalar_lea.vmem %s1, %s363
      %p365 = scmp.lt.s32.totalorder %s23, 1
      %s366 = scalar_select %p365, %s23, 1
      %p367 = scmp.lt.s32.totalorder %s24, 0
      %s368 = scalar_select %p367, %s24, 0
      %s369 = smul.addr %s366, 2
      %s370 = sadd.s32 %s368, %s369
      %s371 = smul.addr %s370, 8
      %s372 = scalar_lea.vmem %s2, %s371
      %p373 = scmp.lt.s32.totalorder %s23, 1
      %s374 = scalar_select %p373, %s23, 1
      %p375 = scmp.lt.s32.totalorder %s24, 0
      %s376 = scalar_select %p375, %s24, 0
      %s377 = sadd.s32 %s376, %s374
      %s378 = smul.addr %s377, 8
      %s379 = scalar_lea.vmem %s8, %s378
      %v381 = vld [vmem:[%s357] sm:$0x3]
      %v382 = vpack.c.bf16 %v381, %v381
      %v383 = vld [vmem:[%s364] sm:$0x3]
      %v384 = vpack.c.bf16 %v383, %v383
      %v385 = vld [vmem:[%s372] sm:$0xff]
      %v386 = vld [vmem:[%s372 + $0x8] sm:$0x3]
      %v387 = vld [vmem:[%s4] sm:$0x7]
      %v388 = vld [vmem:[%s5] sm:$0x1f]
      %390 = vset.pattern.permute.xlu0 0
      %391 = vperm.xlu0 %390, %v388
      %v392 = vpop.permute.xlu0 %391
      %vm394 = vcmask 15360
      %v396 = vsel %vm394, %v387, 0
      %vm398 = vcmask 1040384
      %v400 = vsel %vm398, %v384, 0
      %402 = vmatprep.subr.bf16.mxu0 0
      %403 = vmatpush1.bf16.msra.mxu0 %v400
      %404 = vmatprep.subr.bf16.mxu0 0
      %405 = vmatpush1.bf16.msra.mxu0 0
      %406 = vmatprep.subr.bf16.mxu0 0
      %407 = vmatpush1.bf16.msra.mxu0 0
      %408 = vmatprep.subr.bf16.mxu0 0
      %409 = vmatpush1.bf16.msra.mxu0 0
      %410 = vmatprep.subr.bf16.mxu0 0
      %411 = vmatpush1.bf16.msra.mxu0 0
      %412 = vmatprep.subr.bf16.mxu0 0
      %413 = vmatpush1.bf16.msra.mxu0 0
      %414 = vmatprep.subr.bf16.mxu0 0
      %415 = vmatpush1.bf16.msra.mxu0 0
      %416 = vmatprep.subr.bf16.mxu0 0
      %417 = vmatpush1.bf16.msra.mxu0 0
      %418 = vmatprep.subr.bf16.mxu0 0
      %419 = vmatpush1.bf16.msra.mxu0 0
      %420 = vmatprep.subr.bf16.mxu0 0
      %421 = vmatpush1.bf16.msra.mxu0 0
      %422 = vmatprep.subr.bf16.mxu0 0
      %423 = vmatpush1.bf16.msra.mxu0 0
      %424 = vmatprep.subr.bf16.mxu0 0
      %425 = vmatpush1.bf16.msra.mxu0 0
      %426 = vmatprep.subr.bf16.mxu0 0
      %427 = vmatpush1.bf16.msra.mxu0 0
      %428 = vmatprep.subr.bf16.mxu0 0
      %429 = vmatpush1.bf16.msra.mxu0 0
      %430 = vmatprep.subr.bf16.mxu0 0
      %431 = vmatpush1.bf16.msra.mxu0 0
      %432 = vmatprep.subr.bf16.mxu0 0
      %433 = vmatpush1.bf16.msra.mxu0 0
      %434 = vmatprep.mubr.bf16.mxu0 0
      %435 = vmatmul.mubr.bf16.gmra.mrb[0].mxu0 %v396
      %v436 = vpop.f32.mrb[0].mxu0
      %v437 = vadd.f32 %v392, %v436
      %v438 = vpop.f32.mrb[0].mxu0
      %v439 = vpop.f32.mrb[0].mxu0
      %v440 = vpop.f32.mrb[0].mxu0
      %441 = vdwg.mxu0
      %v442 = vlaneseq
      %v443 = vshrl.u32 %v442, 7
      %v444 = vadd.s32 %v443, 8
      %v445 = vadd.s32 %v443, 16
      %v446 = vadd.s32 %v443, 24
      %v447 = vadd.s32 %v443, 32
      %v448 = vadd.s32 %v443, 40
      %v449 = vadd.s32 %v443, 48
      %v450 = vadd.s32 %v443, 56
      %v451 = vadd.s32 %v443, 64
      %v452 = vadd.s32 %v443, 72
      %v453 = vadd.s32 %v443, 80
      %v454 = vadd.s32 %v443, 88
      %v455 = vadd.s32 %v443, 96
      %v456 = vadd.s32 %v443, 104
      %v457 = vadd.s32 %v443, 112
      %v458 = vadd.s32 %v443, 120
      %v459 = vlaneseq
      %v460 = vshrl.u32 %v459, 7
      %v461 = vsub.s32 0, %v460
      %v462 = vrot.slane %v385, %v461
      %vm463 = vcmp.eq.s32.totalorder %v443, %v462
      %vm464 = vcmp.eq.s32.totalorder %v444, %v462
      %vm465 = vcmp.eq.s32.totalorder %v445, %v462
      %vm466 = vcmp.eq.s32.totalorder %v446, %v462
      %vm467 = vcmp.eq.s32.totalorder %v447, %v462
      %vm468 = vcmp.eq.s32.totalorder %v448, %v462
      %vm469 = vcmp.eq.s32.totalorder %v449, %v462
      %vm470 = vcmp.eq.s32.totalorder %v450, %v462
      %vm471 = vcmp.eq.s32.totalorder %v451, %v462
      %vm472 = vcmp.eq.s32.totalorder %v452, %v462
      %vm473 = vcmp.eq.s32.totalorder %v453, %v462
      %vm474 = vcmp.eq.s32.totalorder %v454, %v462
      %vm475 = vcmp.eq.s32.totalorder %v455, %v462
      %vm476 = vcmp.eq.s32.totalorder %v456, %v462
      %vm477 = vcmp.eq.s32.totalorder %v457, %v462
      %vm478 = vcmp.eq.s32.totalorder %v458, %v462
      %v479 = vsel %vm463, 1, 0
      %v480 = vsel %vm464, 1, 0
      %v481 = vsel %vm465, 1, 0
      %v482 = vsel %vm466, 1, 0
      %v483 = vsel %vm467, 1, 0
      %v484 = vsel %vm468, 1, 0
      %v485 = vsel %vm469, 1, 0
      %v486 = vsel %vm470, 1, 0
      %v487 = vsel %vm471, 1, 0
      %v488 = vsel %vm472, 1, 0
      %v489 = vsel %vm473, 1, 0
      %v490 = vsel %vm474, 1, 0
      %v491 = vsel %vm475, 1, 0
      %v492 = vsel %vm476, 1, 0
      %v493 = vsel %vm477, 1, 0
      %v494 = vsel %vm478, 1, 0
      %v495 = vcvt.s32.f32 %v479
      %v496 = vcvt.s32.f32 %v480
      %v497 = vcvt.s32.f32 %v481
      %v498 = vcvt.s32.f32 %v482
      %v499 = vcvt.s32.f32 %v483
      %v500 = vcvt.s32.f32 %v484
      %v501 = vcvt.s32.f32 %v485
      %v502 = vcvt.s32.f32 %v486
      %v503 = vcvt.s32.f32 %v487
      %v504 = vcvt.s32.f32 %v488
      %v505 = vcvt.s32.f32 %v489
      %v506 = vcvt.s32.f32 %v490
      %v507 = vcvt.s32.f32 %v491
      %v508 = vcvt.s32.f32 %v492
      %v509 = vcvt.s32.f32 %v493
      %v510 = vcvt.s32.f32 %v494
      %v511 = vpack.c.bf16 %v496, %v495
      %v512 = vpack.c.bf16 %v498, %v497
      %v513 = vpack.c.bf16 %v500, %v499
      %v514 = vpack.c.bf16 %v502, %v501
      %v515 = vpack.c.bf16 %v504, %v503
      %v516 = vpack.c.bf16 %v506, %v505
      %v517 = vpack.c.bf16 %v508, %v507
      %v518 = vpack.c.bf16 %v510, %v509
      %519 = vmatprep.subr.bf16.mxu0 0
      %520 = vmatpush1.bf16.msra.mxu0 %v511
      %521 = vmatprep.subr.bf16.mxu0 0
      %522 = vmatpush1.bf16.msra.mxu0 %v512
      %523 = vmatprep.subr.bf16.mxu0 0
      %524 = vmatpush1.bf16.msra.mxu0 %v513
      %525 = vmatprep.subr.bf16.mxu0 0
      %526 = vmatpush1.bf16.msra.mxu0 %v514
      %527 = vmatprep.subr.bf16.mxu0 0
      %528 = vmatpush1.bf16.msra.mxu0 %v515
      %529 = vmatprep.subr.bf16.mxu0 0
      %530 = vmatpush1.bf16.msra.mxu0 %v516
      %531 = vmatprep.subr.bf16.mxu0 0
      %532 = vmatpush1.bf16.msra.mxu0 %v517
      %533 = vmatprep.subr.bf16.mxu0 0
      %534 = vmatpush1.bf16.msra.mxu0 %v518
      %535 = vmatprep.subr.bf16.mxu0 0
      %536 = vmatpush1.bf16.msra.mxu0 0
      %537 = vmatprep.subr.bf16.mxu0 0
      %538 = vmatpush1.bf16.msra.mxu0 0
      %539 = vmatprep.subr.bf16.mxu0 0
      %540 = vmatpush1.bf16.msra.mxu0 0
      %541 = vmatprep.subr.bf16.mxu0 0
      %542 = vmatpush1.bf16.msra.mxu0 0
      %543 = vmatprep.subr.bf16.mxu0 0
      %544 = vmatpush1.bf16.msra.mxu0 0
      %545 = vmatprep.subr.bf16.mxu0 0
      %546 = vmatpush1.bf16.msra.mxu0 0
      %547 = vmatprep.subr.bf16.mxu0 0
      %548 = vmatpush1.bf16.msra.mxu0 0
      %549 = vmatprep.subr.bf16.mxu0 0
      %550 = vmatpush1.bf16.msra.mxu0 0
      %551 = vmatprep.mubr.bf16.mxu0 0
      %552 = vmatmul.mubr.bf16.gmra.mrb[0].mxu0 %v382
      %v553 = vpop.f32.mrb[0].mxu0
      %v554 = vadd.f32 0.0, %v553
      %v555 = vpop.f32.mrb[0].mxu0
      %v556 = vpop.f32.mrb[0].mxu0
      %v557 = vpop.f32.mrb[0].mxu0
      %558 = vdwg.mxu0
      %v559 = vld [vmem:[%s3] sm:$0x7]
      %v560 = vpack.c.bf16 %v554, %v554
      %v562 = vsel %vm394, %v559, 0
      %v565 = vsel %vm398, %v560, 0
      %567 = vmatprep.subr.bf16.mxu0 0
      %568 = vmatpush1.bf16.msra.mxu0 %v565
      %569 = vmatprep.subr.bf16.mxu0 0
      %570 = vmatpush1.bf16.msra.mxu0 0
      %571 = vmatprep.subr.bf16.mxu0 0
      %572 = vmatpush1.bf16.msra.mxu0 0
      %573 = vmatprep.subr.bf16.mxu0 0
      %574 = vmatpush1.bf16.msra.mxu0 0
      %575 = vmatprep.subr.bf16.mxu0 0
      %576 = vmatpush1.bf16.msra.mxu0 0
      %577 = vmatprep.subr.bf16.mxu0 0
      %578 = vmatpush1.bf16.msra.mxu0 0
      %579 = vmatprep.subr.bf16.mxu0 0
      %580 = vmatpush1.bf16.msra.mxu0 0
      %581 = vmatprep.subr.bf16.mxu0 0
      %582 = vmatpush1.bf16.msra.mxu0 0
      %583 = vmatprep.subr.bf16.mxu0 0
      %584 = vmatpush1.bf16.msra.mxu0 0
      %585 = vmatprep.subr.bf16.mxu0 0
      %586 = vmatpush1.bf16.msra.mxu0 0
      %587 = vmatprep.subr.bf16.mxu0 0
      %588 = vmatpush1.bf16.msra.mxu0 0
      %589 = vmatprep.subr.bf16.mxu0 0
      %590 = vmatpush1.bf16.msra.mxu0 0
      %591 = vmatprep.subr.bf16.mxu0 0
      %592 = vmatpush1.bf16.msra.mxu0 0
      %593 = vmatprep.subr.bf16.mxu0 0
      %594 = vmatpush1.bf16.msra.mxu0 0
      %595 = vmatprep.subr.bf16.mxu0 0
      %596 = vmatpush1.bf16.msra.mxu0 0
      %597 = vmatprep.subr.bf16.mxu0 0
      %598 = vmatpush1.bf16.msra.mxu0 0
      %599 = vmatprep.mubr.bf16.mxu0 0
      %600 = vmatmul.mubr.bf16.gmra.mrb[0].mxu0 %v562
      %v601 = vpop.f32.mrb[0].mxu0
      %v602 = vadd.f32 %v437, %v601
      %v603 = vpop.f32.mrb[0].mxu0
      %v604 = vpop.f32.mrb[0].mxu0
      %v605 = vpop.f32.mrb[0].mxu0
      %606 = vdwg.mxu0
      %v607 = vmul.f32 %v602, %v602
      %v608 = vmul.f32 %v602, %v607
      %v609 = vmul.f32 %v608, 0.044715
      %v610 = vadd.f32 %v602, %v609
      %v611 = vmul.f32 %v610, 0.7978846
      %v612 = vtanh.pop %v611
      %v613 = vadd.f32 %v612, 1.0
      %v614 = vmul.f32 %v613, 0.5
      %v615 = vmul.f32 %v602, %v614
      %v616 = vld [vmem:[%s6] sm:$0xf]
      %v617 = vpack.c.bf16 %v615, %v615
      %v618 = vld [vmem:[%s7] sm:$0xff]
      %620 = vset.pattern.permute.xlu0 0
      %621 = vperm.xlu0 %620, %v618
      %v622 = vpop.permute.xlu0 %621
      %vm624 = vcmask 39936
      %v626 = vsel %vm624, %v616, 0
      %vm628 = vcmask 1041408
      %vm629 = vcmask 1042432
      %v630 = vsel %vm628, 4294967295, 65535
      %v631 = vsel %vm629, %v630, 0
      %v633 = vand.u32 %v617, %v631
      %635 = vmatprep.subr.bf16.mxu0 0
      %636 = vmatpush1.bf16.msra.mxu0 %v633
      %637 = vmatprep.subr.bf16.mxu0 0
      %638 = vmatpush1.bf16.msra.mxu0 0
      %639 = vmatprep.subr.bf16.mxu0 0
      %640 = vmatpush1.bf16.msra.mxu0 0
      %641 = vmatprep.subr.bf16.mxu0 0
      %642 = vmatpush1.bf16.msra.mxu0 0
      %643 = vmatprep.subr.bf16.mxu0 0
      %644 = vmatpush1.bf16.msra.mxu0 0
      %645 = vmatprep.subr.bf16.mxu0 0
      %646 = vmatpush1.bf16.msra.mxu0 0
      %647 = vmatprep.subr.bf16.mxu0 0
      %648 = vmatpush1.bf16.msra.mxu0 0
      %649 = vmatprep.subr.bf16.mxu0 0
      %650 = vmatpush1.bf16.msra.mxu0 0
      %651 = vmatprep.subr.bf16.mxu0 0
      %652 = vmatpush1.bf16.msra.mxu0 0
      %653 = vmatprep.subr.bf16.mxu0 0
      %654 = vmatpush1.bf16.msra.mxu0 0
      %655 = vmatprep.subr.bf16.mxu0 0
      %656 = vmatpush1.bf16.msra.mxu0 0
      %657 = vmatprep.subr.bf16.mxu0 0
      %658 = vmatpush1.bf16.msra.mxu0 0
      %659 = vmatprep.subr.bf16.mxu0 0
      %660 = vmatpush1.bf16.msra.mxu0 0
      %661 = vmatprep.subr.bf16.mxu0 0
      %662 = vmatpush1.bf16.msra.mxu0 0
      %663 = vmatprep.subr.bf16.mxu0 0
      %664 = vmatpush1.bf16.msra.mxu0 0
      %665 = vmatprep.subr.bf16.mxu0 0
      %666 = vmatpush1.bf16.msra.mxu0 0
      %667 = vmatprep.mubr.bf16.mxu0 0
      %668 = vmatmul.mubr.bf16.gmra.mrb[0].mxu0 %v626
      %v669 = vpop.f32.mrb[0].mxu0
      %v670 = vadd.f32 %v622, %v669
      %v671 = vpop.f32.mrb[0].mxu0
      %v672 = vpop.f32.mrb[0].mxu0
      %v673 = vpop.f32.mrb[0].mxu0
      %674 = vdwg.mxu0
      %v675 = vmul.f32 %v670, %v670
      %v676 = vmul.f32 %v670, %v675
      %v677 = vmul.f32 %v676, 0.044715
      %v678 = vadd.f32 %v670, %v677
      %v679 = vmul.f32 %v678, 0.7978846
      %v680 = vtanh.pop %v679
      %v681 = vadd.f32 %v680, 1.0
      %v682 = vmul.f32 %v681, 0.5
      %v683 = vmul.f32 %v670, %v682
      %v684 = vlaneseq
      %v685 = vshrl.u32 %v684, 7
      %v686 = vsub.s32 1, %v685
      %v687 = vrot.slane %v385, %v686
      %vm688 = vcmp.eq.s32.totalorder %v443, %v687
      %vm689 = vcmp.eq.s32.totalorder %v444, %v687
      %vm690 = vcmp.eq.s32.totalorder %v445, %v687
      %vm691 = vcmp.eq.s32.totalorder %v446, %v687
      %vm692 = vcmp.eq.s32.totalorder %v447, %v687
      %vm693 = vcmp.eq.s32.totalorder %v448, %v687
      %vm694 = vcmp.eq.s32.totalorder %v449, %v687
      %vm695 = vcmp.eq.s32.totalorder %v450, %v687
      %vm696 = vcmp.eq.s32.totalorder %v451, %v687
      %vm697 = vcmp.eq.s32.totalorder %v452, %v687
      %vm698 = vcmp.eq.s32.totalorder %v453, %v687
      %vm699 = vcmp.eq.s32.totalorder %v454, %v687
      %vm700 = vcmp.eq.s32.totalorder %v455, %v687
      %vm701 = vcmp.eq.s32.totalorder %v456, %v687
      %vm702 = vcmp.eq.s32.totalorder %v457, %v687
      %vm703 = vcmp.eq.s32.totalorder %v458, %v687
      %v704 = vsel %vm688, 1, 0
      %v705 = vsel %vm689, 1, 0
      %v706 = vsel %vm690, 1, 0
      %v707 = vsel %vm691, 1, 0
      %v708 = vsel %vm692, 1, 0
      %v709 = vsel %vm693, 1, 0
      %v710 = vsel %vm694, 1, 0
      %v711 = vsel %vm695, 1, 0
      %v712 = vsel %vm696, 1, 0
      %v713 = vsel %vm697, 1, 0
      %v714 = vsel %vm698, 1, 0
      %v715 = vsel %vm699, 1, 0
      %v716 = vsel %vm700, 1, 0
      %v717 = vsel %vm701, 1, 0
      %v718 = vsel %vm702, 1, 0
      %v719 = vsel %vm703, 1, 0
      %v720 = vcvt.s32.f32 %v704
      %v721 = vcvt.s32.f32 %v705
      %v722 = vcvt.s32.f32 %v706
      %v723 = vcvt.s32.f32 %v707
      %v724 = vcvt.s32.f32 %v708
      %v725 = vcvt.s32.f32 %v709
      %v726 = vcvt.s32.f32 %v710
      %v727 = vcvt.s32.f32 %v711
      %v728 = vcvt.s32.f32 %v712
      %v729 = vcvt.s32.f32 %v713
      %v730 = vcvt.s32.f32 %v714
      %v731 = vcvt.s32.f32 %v715
      %v732 = vcvt.s32.f32 %v716
      %v733 = vcvt.s32.f32 %v717
      %v734 = vcvt.s32.f32 %v718
      %v735 = vcvt.s32.f32 %v719
      %v736 = vpack.c.bf16 %v721, %v720
      %v737 = vpack.c.bf16 %v723, %v722
      %v738 = vpack.c.bf16 %v725, %v724
      %v739 = vpack.c.bf16 %v727, %v726
      %v740 = vpack.c.bf16 %v729, %v728
      %v741 = vpack.c.bf16 %v731, %v730
      %v742 = vpack.c.bf16 %v733, %v732
      %v743 = vpack.c.bf16 %v735, %v734
      %744 = vmatprep.subr.bf16.mxu0 0
      %745 = vmatpush1.bf16.msra.mxu0 %v736
      %746 = vmatprep.subr.bf16.mxu0 0
      %747 = vmatpush1.bf16.msra.mxu0 %v737
      %748 = vmatprep.subr.bf16.mxu0 0
      %749 = vmatpush1.bf16.msra.mxu0 %v738
      %750 = vmatprep.subr.bf16.mxu0 0
      %751 = vmatpush1.bf16.msra.mxu0 %v739
      %752 = vmatprep.subr.bf16.mxu0 0
      %753 = vmatpush1.bf16.msra.mxu0 %v740
      %754 = vmatprep.subr.bf16.mxu0 0
      %755 = vmatpush1.bf16.msra.mxu0 %v741
      %756 = vmatprep.subr.bf16.mxu0 0
      %757 = vmatpush1.bf16.msra.mxu0 %v742
      %758 = vmatprep.subr.bf16.mxu0 0
      %759 = vmatpush1.bf16.msra.mxu0 %v743
      %760 = vmatprep.subr.bf16.mxu0 0
      %761 = vmatpush1.bf16.msra.mxu0 0
      %762 = vmatprep.subr.bf16.mxu0 0
      %763 = vmatpush1.bf16.msra.mxu0 0
      %764 = vmatprep.subr.bf16.mxu0 0
      %765 = vmatpush1.bf16.msra.mxu0 0
      %766 = vmatprep.subr.bf16.mxu0 0
      %767 = vmatpush1.bf16.msra.mxu0 0
      %768 = vmatprep.subr.bf16.mxu0 0
      %769 = vmatpush1.bf16.msra.mxu0 0
      %770 = vmatprep.subr.bf16.mxu0 0
      %771 = vmatpush1.bf16.msra.mxu0 0
      %772 = vmatprep.subr.bf16.mxu0 0
      %773 = vmatpush1.bf16.msra.mxu0 0
      %774 = vmatprep.subr.bf16.mxu0 0
      %775 = vmatpush1.bf16.msra.mxu0 0
      %776 = vmatprep.mubr.bf16.mxu0 0
      %777 = vmatmul.mubr.bf16.gmra.mrb[0].mxu0 %v382
      %v778 = vpop.f32.mrb[0].mxu0
      %v779 = vadd.f32 0.0, %v778
      %v780 = vpop.f32.mrb[0].mxu0
      %v781 = vpop.f32.mrb[0].mxu0
      %v782 = vpop.f32.mrb[0].mxu0
      %783 = vdwg.mxu0
      %v784 = vpack.c.bf16 %v779, %v779
      %v786 = vsel %vm398, %v784, 0
      %788 = vmatprep.subr.bf16.mxu0 0
      %789 = vmatpush1.bf16.msra.mxu0 %v786
      %790 = vmatprep.subr.bf16.mxu0 0
      %791 = vmatpush1.bf16.msra.mxu0 0
      %792 = vmatprep.subr.bf16.mxu0 0
      %793 = vmatpush1.bf16.msra.mxu0 0
      %794 = vmatprep.subr.bf16.mxu0 0
      %795 = vmatpush1.bf16.msra.mxu0 0
      %796 = vmatprep.subr.bf16.mxu0 0
      %797 = vmatpush1.bf16.msra.mxu0 0
      %798 = vmatprep.subr.bf16.mxu0 0
      %799 = vmatpush1.bf16.msra.mxu0 0
      %800 = vmatprep.subr.bf16.mxu0 0
      %801 = vmatpush1.bf16.msra.mxu0 0
      %802 = vmatprep.subr.bf16.mxu0 0
      %803 = vmatpush1.bf16.msra.mxu0 0
      %804 = vmatprep.subr.bf16.mxu0 0
      %805 = vmatpush1.bf16.msra.mxu0 0
      %806 = vmatprep.subr.bf16.mxu0 0
      %807 = vmatpush1.bf16.msra.mxu0 0
      %808 = vmatprep.subr.bf16.mxu0 0
      %809 = vmatpush1.bf16.msra.mxu0 0
      %810 = vmatprep.subr.bf16.mxu0 0
      %811 = vmatpush1.bf16.msra.mxu0 0
      %812 = vmatprep.subr.bf16.mxu0 0
      %813 = vmatpush1.bf16.msra.mxu0 0
      %814 = vmatprep.subr.bf16.mxu0 0
      %815 = vmatpush1.bf16.msra.mxu0 0
      %816 = vmatprep.subr.bf16.mxu0 0
      %817 = vmatpush1.bf16.msra.mxu0 0
      %818 = vmatprep.subr.bf16.mxu0 0
      %819 = vmatpush1.bf16.msra.mxu0 0
      %820 = vmatprep.mubr.bf16.mxu0 0
      %821 = vmatmul.mubr.bf16.gmra.mrb[0].mxu0 %v562
      %v822 = vpop.f32.mrb[0].mxu0
      %v823 = vadd.f32 %v437, %v822
      %v824 = vpop.f32.mrb[0].mxu0
      %v825 = vpop.f32.mrb[0].mxu0
      %v826 = vpop.f32.mrb[0].mxu0
      %827 = vdwg.mxu0
      %v828 = vmul.f32 %v823, %v823
      %v829 = vmul.f32 %v823, %v828
      %v830 = vmul.f32 %v829, 0.044715
      %v831 = vadd.f32 %v823, %v830
      %v832 = vmul.f32 %v831, 0.7978846
      %v833 = vtanh.pop %v832
      %v834 = vadd.f32 %v833, 1.0
      %v835 = vmul.f32 %v834, 0.5
      %v836 = vmul.f32 %v823, %v835
      %v837 = vpack.c.bf16 %v836, %v836
      %v839 = vand.u32 %v837, %v631
      %841 = vmatprep.subr.bf16.mxu0 0
      %842 = vmatpush1.bf16.msra.mxu0 %v839
      %843 = vmatprep.subr.bf16.mxu0 0
      %844 = vmatpush1.bf16.msra.mxu0 0
      %845 = vmatprep.subr.bf16.mxu0 0
      %846 = vmatpush1.bf16.msra.mxu0 0
      %847 = vmatprep.subr.bf16.mxu0 0
      %848 = vmatpush1.bf16.msra.mxu0 0
      %849 = vmatprep.subr.bf16.mxu0 0
      %850 = vmatpush1.bf16.msra.mxu0 0
      %851 = vmatprep.subr.bf16.mxu0 0
      %852 = vmatpush1.bf16.msra.mxu0 0
      %853 = vmatprep.subr.bf16.mxu0 0
      %854 = vmatpush1.bf16.msra.mxu0 0
      %855 = vmatprep.subr.bf16.mxu0 0
      %856 = vmatpush1.bf16.msra.mxu0 0
      %857 = vmatprep.subr.bf16.mxu0 0
      %858 = vmatpush1.bf16.msra.mxu0 0
      %859 = vmatprep.subr.bf16.mxu0 0
      %860 = vmatpush1.bf16.msra.mxu0 0
      %861 = vmatprep.subr.bf16.mxu0 0
      %862 = vmatpush1.bf16.msra.mxu0 0
      %863 = vmatprep.subr.bf16.mxu0 0
      %864 = vmatpush1.bf16.msra.mxu0 0
      %865 = vmatprep.subr.bf16.mxu0 0
      %866 = vmatpush1.bf16.msra.mxu0 0
      %867 = vmatprep.subr.bf16.mxu0 0
      %868 = vmatpush1.bf16.msra.mxu0 0
      %869 = vmatprep.subr.bf16.mxu0 0
      %870 = vmatpush1.bf16.msra.mxu0 0
      %871 = vmatprep.subr.bf16.mxu0 0
      %872 = vmatpush1.bf16.msra.mxu0 0
      %873 = vmatprep.mubr.bf16.mxu0 0
      %874 = vmatmul.mubr.bf16.gmra.mrb[0].mxu0 %v626
      %v875 = vpop.f32.mrb[0].mxu0
      %v876 = vadd.f32 %v622, %v875
      %v877 = vpop.f32.mrb[0].mxu0
      %v878 = vpop.f32.mrb[0].mxu0
      %v879 = vpop.f32.mrb[0].mxu0
      %880 = vdwg.mxu0
      %v881 = vmul.f32 %v876, %v876
      %v882 = vmul.f32 %v876, %v881
      %v883 = vmul.f32 %v882, 0.044715
      %v884 = vadd.f32 %v876, %v883
      %v885 = vmul.f32 %v884, 0.7978846
      %v886 = vtanh.pop %v885
      %v887 = vadd.f32 %v886, 1.0
      %v888 = vmul.f32 %v887, 0.5
      %v889 = vmul.f32 %v876, %v888
      %v890 = vmax.f32 %v683, %v889
      %v891 = vlaneseq
      %v892 = vshrl.u32 %v891, 7
      %v893 = vsub.s32 2, %v892
      %v894 = vrot.slane %v385, %v893
      %vm895 = vcmp.eq.s32.totalorder %v443, %v894
      %vm896 = vcmp.eq.s32.totalorder %v444, %v894
      %vm897 = vcmp.eq.s32.totalorder %v445, %v894
      %vm898 = vcmp.eq.s32.totalorder %v446, %v894
      %vm899 = vcmp.eq.s32.totalorder %v447, %v894
      %vm900 = vcmp.eq.s32.totalorder %v448, %v894
      %vm901 = vcmp.eq.s32.totalorder %v449, %v894
      %vm902 = vcmp.eq.s32.totalorder %v450, %v894
      %vm903 = vcmp.eq.s32.totalorder %v451, %v894
      %vm904 = vcmp.eq.s32.totalorder %v452, %v894
      %vm905 = vcmp.eq.s32.totalorder %v453, %v894
      %vm906 = vcmp.eq.s32.totalorder %v454, %v894
      %vm907 = vcmp.eq.s32.totalorder %v455, %v894
      %vm908 = vcmp.eq.s32.totalorder %v456, %v894
      %vm909 = vcmp.eq.s32.totalorder %v457, %v894
      %vm910 = vcmp.eq.s32.totalorder %v458, %v894
      %v911 = vsel %vm895, 1, 0
      %v912 = vsel %vm896, 1, 0
      %v913 = vsel %vm897, 1, 0
      %v914 = vsel %vm898, 1, 0
      %v915 = vsel %vm899, 1, 0
      %v916 = vsel %vm900, 1, 0
      %v917 = vsel %vm901, 1, 0
      %v918 = vsel %vm902, 1, 0
      %v919 = vsel %vm903, 1, 0
      %v920 = vsel %vm904, 1, 0
      %v921 = vsel %vm905, 1, 0
      %v922 = vsel %vm906, 1, 0
      %v923 = vsel %vm907, 1, 0
      %v924 = vsel %vm908, 1, 0
      %v925 = vsel %vm909, 1, 0
      %v926 = vsel %vm910, 1, 0
      %v927 = vcvt.s32.f32 %v911
      %v928 = vcvt.s32.f32 %v912
      %v929 = vcvt.s32.f32 %v913
      %v930 = vcvt.s32.f32 %v914
      %v931 = vcvt.s32.f32 %v915
      %v932 = vcvt.s32.f32 %v916
      %v933 = vcvt.s32.f32 %v917
      %v934 = vcvt.s32.f32 %v918
      %v935 = vcvt.s32.f32 %v919
      %v936 = vcvt.s32.f32 %v920
      %v937 = vcvt.s32.f32 %v921
      %v938 = vcvt.s32.f32 %v922
      %v939 = vcvt.s32.f32 %v923
      %v940 = vcvt.s32.f32 %v924
      %v941 = vcvt.s32.f32 %v925
      %v942 = vcvt.s32.f32 %v926
      %v943 = vpack.c.bf16 %v928, %v927
      %v944 = vpack.c.bf16 %v930, %v929
      %v945 = vpack.c.bf16 %v932, %v931
      %v946 = vpack.c.bf16 %v934, %v933
      %v947 = vpack.c.bf16 %v936, %v935
      %v948 = vpack.c.bf16 %v938, %v937
      %v949 = vpack.c.bf16 %v940, %v939
      %v950 = vpack.c.bf16 %v942, %v941
      %951 = vmatprep.subr.bf16.mxu0 0
      %952 = vmatpush1.bf16.msra.mxu0 %v943
      %953 = vmatprep.subr.bf16.mxu0 0
      %954 = vmatpush1.bf16.msra.mxu0 %v944
      %955 = vmatprep.subr.bf16.mxu0 0
      %956 = vmatpush1.bf16.msra.mxu0 %v945
      %957 = vmatprep.subr.bf16.mxu0 0
      %958 = vmatpush1.bf16.msra.mxu0 %v946
      %959 = vmatprep.subr.bf16.mxu0 0
      %960 = vmatpush1.bf16.msra.mxu0 %v947
      %961 = vmatprep.subr.bf16.mxu0 0
      %962 = vmatpush1.bf16.msra.mxu0 %v948
      %963 = vmatprep.subr.bf16.mxu0 0
      %964 = vmatpush1.bf16.msra.mxu0 %v949
      %965 = vmatprep.subr.bf16.mxu0 0
      %966 = vmatpush1.bf16.msra.mxu0 %v950
      %967 = vmatprep.subr.bf16.mxu0 0
      %968 = vmatpush1.bf16.msra.mxu0 0
      %969 = vmatprep.subr.bf16.mxu0 0
      %970 = vmatpush1.bf16.msra.mxu0 0
      %971 = vmatprep.subr.bf16.mxu0 0
      %972 = vmatpush1.bf16.msra.mxu0 0
      %973 = vmatprep.subr.bf16.mxu0 0
      %974 = vmatpush1.bf16.msra.mxu0 0
      %975 = vmatprep.subr.bf16.mxu0 0
      %976 = vmatpush1.bf16.msra.mxu0 0
      %977 = vmatprep.subr.bf16.mxu0 0
      %978 = vmatpush1.bf16.msra.mxu0 0
      %979 = vmatprep.subr.bf16.mxu0 0
      %980 = vmatpush1.bf16.msra.mxu0 0
      %981 = vmatprep.subr.bf16.mxu0 0
      %982 = vmatpush1.bf16.msra.mxu0 0
      %983 = vmatprep.mubr.bf16.mxu0 0
      %984 = vmatmul.mubr.bf16.gmra.mrb[0].mxu0 %v382
      %v985 = vpop.f32.mrb[0].mxu0
      %v986 = vadd.f32 0.0, %v985
      %v987 = vpop.f32.mrb[0].mxu0
      %v988 = vpop.f32.mrb[0].mxu0
      %v989 = vpop.f32.mrb[0].mxu0
      %990 = vdwg.mxu0
      %v991 = vpack.c.bf16 %v986, %v986
      %v993 = vsel %vm398, %v991, 0
      %995 = vmatprep.subr.bf16.mxu0 0
      %996 = vmatpush1.bf16.msra.mxu0 %v993
      %997 = vmatprep.subr.bf16.mxu0 0
      %998 = vmatpush1.bf16.msra.mxu0 0
      %999 = vmatprep.subr.bf16.mxu0 0
      %1000 = vmatpush1.bf16.msra.mxu0 0
      %1001 = vmatprep.subr.bf16.mxu0 0
      %1002 = vmatpush1.bf16.msra.mxu0 0
      %1003 = vmatprep.subr.bf16.mxu0 0
      %1004 = vmatpush1.bf16.msra.mxu0 0
      %1005 = vmatprep.subr.bf16.mxu0 0
      %1006 = vmatpush1.bf16.msra.mxu0 0
      %1007 = vmatprep.subr.bf16.mxu0 0
      %1008 = vmatpush1.bf16.msra.mxu0 0
      %1009 = vmatprep.subr.bf16.mxu0 0
      %1010 = vmatpush1.bf16.msra.mxu0 0
      %1011 = vmatprep.subr.bf16.mxu0 0
      %1012 = vmatpush1.bf16.msra.mxu0 0
      %1013 = vmatprep.subr.bf16.mxu0 0
      %1014 = vmatpush1.bf16.msra.mxu0 0
      %1015 = vmatprep.subr.bf16.mxu0 0
      %1016 = vmatpush1.bf16.msra.mxu0 0
      %1017 = vmatprep.subr.bf16.mxu0 0
      %1018 = vmatpush1.bf16.msra.mxu0 0
      %1019 = vmatprep.subr.bf16.mxu0 0
      %1020 = vmatpush1.bf16.msra.mxu0 0
      %1021 = vmatprep.subr.bf16.mxu0 0
      %1022 = vmatpush1.bf16.msra.mxu0 0
      %1023 = vmatprep.subr.bf16.mxu0 0
      %1024 = vmatpush1.bf16.msra.mxu0 0
      %1025 = vmatprep.subr.bf16.mxu0 0
      %1026 = vmatpush1.bf16.msra.mxu0 0
      %1027 = vmatprep.mubr.bf16.mxu0 0
      %1028 = vmatmul.mubr.bf16.gmra.mrb[0].mxu0 %v562
      %v1029 = vpop.f32.mrb[0].mxu0
      %v1030 = vadd.f32 %v437, %v1029
      %v1031 = vpop.f32.mrb[0].mxu0
      %v1032 = vpop.f32.mrb[0].mxu0
      %v1033 = vpop.f32.mrb[0].mxu0
      %1034 = vdwg.mxu0
      %v1035 = vmul.f32 %v1030, %v1030
      %v1036 = vmul.f32 %v1030, %v1035
      %v1037 = vmul.f32 %v1036, 0.044715
      %v1038 = vadd.f32 %v1030, %v1037
      %v1039 = vmul.f32 %v1038, 0.7978846
      %v1040 = vtanh.pop %v1039
      %v1041 = vadd.f32 %v1040, 1.0
      %v1042 = vmul.f32 %v1041, 0.5
      %v1043 = vmul.f32 %v1030, %v1042
      %v1044 = vpack.c.bf16 %v1043, %v1043
      %v1046 = vand.u32 %v1044, %v631
      %1048 = vmatprep.subr.bf16.mxu0 0
      %1049 = vmatpush1.bf16.msra.mxu0 %v1046
      %1050 = vmatprep.subr.bf16.mxu0 0
      %1051 = vmatpush1.bf16.msra.mxu0 0
      %1052 = vmatprep.subr.bf16.mxu0 0
      %1053 = vmatpush1.bf16.msra.mxu0 0
      %1054 = vmatprep.subr.bf16.mxu0 0
      %1055 = vmatpush1.bf16.msra.mxu0 0
      %1056 = vmatprep.subr.bf16.mxu0 0
      %1057 = vmatpush1.bf16.msra.mxu0 0
      %1058 = vmatprep.subr.bf16.mxu0 0
      %1059 = vmatpush1.bf16.msra.mxu0 0
      %1060 = vmatprep.subr.bf16.mxu0 0
      %1061 = vmatpush1.bf16.msra.mxu0 0
      %1062 = vmatprep.subr.bf16.mxu0 0
      %1063 = vmatpush1.bf16.msra.mxu0 0
      %1064 = vmatprep.subr.bf16.mxu0 0
      %1065 = vmatpush1.bf16.msra.mxu0 0
      %1066 = vmatprep.subr.bf16.mxu0 0
      %1067 = vmatpush1.bf16.msra.mxu0 0
      %1068 = vmatprep.subr.bf16.mxu0 0
      %1069 = vmatpush1.bf16.msra.mxu0 0
      %1070 = vmatprep.subr.bf16.mxu0 0
      %1071 = vmatpush1.bf16.msra.mxu0 0
      %1072 = vmatprep.subr.bf16.mxu0 0
      %1073 = vmatpush1.bf16.msra.mxu0 0
      %1074 = vmatprep.subr.bf16.mxu0 0
      %1075 = vmatpush1.bf16.msra.mxu0 0
      %1076 = vmatprep.subr.bf16.mxu0 0
      %1077 = vmatpush1.bf16.msra.mxu0 0
      %1078 = vmatprep.subr.bf16.mxu0 0
      %1079 = vmatpush1.bf16.msra.mxu0 0
      %1080 = vmatprep.mubr.bf16.mxu0 0
      %1081 = vmatmul.mubr.bf16.gmra.mrb[0].mxu0 %v626
      %v1082 = vpop.f32.mrb[0].mxu0
      %v1083 = vadd.f32 %v622, %v1082
      %v1084 = vpop.f32.mrb[0].mxu0
      %v1085 = vpop.f32.mrb[0].mxu0
      %v1086 = vpop.f32.mrb[0].mxu0
      %1087 = vdwg.mxu0
      %v1088 = vmul.f32 %v1083, %v1083
      %v1089 = vmul.f32 %v1083, %v1088
      %v1090 = vmul.f32 %v1089, 0.044715
      %v1091 = vadd.f32 %v1083, %v1090
      %v1092 = vmul.f32 %v1091, 0.7978846
      %v1093 = vtanh.pop %v1092
      %v1094 = vadd.f32 %v1093, 1.0
      %v1095 = vmul.f32 %v1094, 0.5
      %v1096 = vmul.f32 %v1083, %v1095
      %v1097 = vmax.f32 %v890, %v1096
      %v1098 = vlaneseq
      %v1099 = vshrl.u32 %v1098, 7
      %v1100 = vsub.s32 3, %v1099
      %v1101 = vrot.slane %v385, %v1100
      %vm1102 = vcmp.eq.s32.totalorder %v443, %v1101
      %vm1103 = vcmp.eq.s32.totalorder %v444, %v1101
      %vm1104 = vcmp.eq.s32.totalorder %v445, %v1101
      %vm1105 = vcmp.eq.s32.totalorder %v446, %v1101
      %vm1106 = vcmp.eq.s32.totalorder %v447, %v1101
      %vm1107 = vcmp.eq.s32.totalorder %v448, %v1101
      %vm1108 = vcmp.eq.s32.totalorder %v449, %v1101
      %vm1109 = vcmp.eq.s32.totalorder %v450, %v1101
      %vm1110 = vcmp.eq.s32.totalorder %v451, %v1101
      %vm1111 = vcmp.eq.s32.totalorder %v452, %v1101
      %vm1112 = vcmp.eq.s32.totalorder %v453, %v1101
      %vm1113 = vcmp.eq.s32.totalorder %v454, %v1101
      %vm1114 = vcmp.eq.s32.totalorder %v455, %v1101
      %vm1115 = vcmp.eq.s32.totalorder %v456, %v1101
      %vm1116 = vcmp.eq.s32.totalorder %v457, %v1101
      %vm1117 = vcmp.eq.s32.totalorder %v458, %v1101
      %v1118 = vsel %vm1102, 1, 0
      %v1119 = vsel %vm1103, 1, 0
      %v1120 = vsel %vm1104, 1, 0
      %v1121 = vsel %vm1105, 1, 0
      %v1122 = vsel %vm1106, 1, 0
      %v1123 = vsel %vm1107, 1, 0
      %v1124 = vsel %vm1108, 1, 0
      %v1125 = vsel %vm1109, 1, 0
      %v1126 = vsel %vm1110, 1, 0
      %v1127 = vsel %vm1111, 1, 0
      %v1128 = vsel %vm1112, 1, 0
      %v1129 = vsel %vm1113, 1, 0
      %v1130 = vsel %vm1114, 1, 0
      %v1131 = vsel %vm1115, 1, 0
      %v1132 = vsel %vm1116, 1, 0
      %v1133 = vsel %vm1117, 1, 0
      %v1134 = vcvt.s32.f32 %v1118
      %v1135 = vcvt.s32.f32 %v1119
      %v1136 = vcvt.s32.f32 %v1120
      %v1137 = vcvt.s32.f32 %v1121
      %v1138 = vcvt.s32.f32 %v1122
      %v1139 = vcvt.s32.f32 %v1123
      %v1140 = vcvt.s32.f32 %v1124
      %v1141 = vcvt.s32.f32 %v1125
      %v1142 = vcvt.s32.f32 %v1126
      %v1143 = vcvt.s32.f32 %v1127
      %v1144 = vcvt.s32.f32 %v1128
      %v1145 = vcvt.s32.f32 %v1129
      %v1146 = vcvt.s32.f32 %v1130
      %v1147 = vcvt.s32.f32 %v1131
      %v1148 = vcvt.s32.f32 %v1132
      %v1149 = vcvt.s32.f32 %v1133
      %v1150 = vpack.c.bf16 %v1135, %v1134
      %v1151 = vpack.c.bf16 %v1137, %v1136
      %v1152 = vpack.c.bf16 %v1139, %v1138
      %v1153 = vpack.c.bf16 %v1141, %v1140
      %v1154 = vpack.c.bf16 %v1143, %v1142
      %v1155 = vpack.c.bf16 %v1145, %v1144
      %v1156 = vpack.c.bf16 %v1147, %v1146
      %v1157 = vpack.c.bf16 %v1149, %v1148
      %1158 = vmatprep.subr.bf16.mxu0 0
      %1159 = vmatpush1.bf16.msra.mxu0 %v1150
      %1160 = vmatprep.subr.bf16.mxu0 0
      %1161 = vmatpush1.bf16.msra.mxu0 %v1151
      %1162 = vmatprep.subr.bf16.mxu0 0
      %1163 = vmatpush1.bf16.msra.mxu0 %v1152
      %1164 = vmatprep.subr.bf16.mxu0 0
      %1165 = vmatpush1.bf16.msra.mxu0 %v1153
      %1166 = vmatprep.subr.bf16.mxu0 0
      %1167 = vmatpush1.bf16.msra.mxu0 %v1154
      %1168 = vmatprep.subr.bf16.mxu0 0
      %1169 = vmatpush1.bf16.msra.mxu0 %v1155
      %1170 = vmatprep.subr.bf16.mxu0 0
      %1171 = vmatpush1.bf16.msra.mxu0 %v1156
      %1172 = vmatprep.subr.bf16.mxu0 0
      %1173 = vmatpush1.bf16.msra.mxu0 %v1157
      %1174 = vmatprep.subr.bf16.mxu0 0
      %1175 = vmatpush1.bf16.msra.mxu0 0
      %1176 = vmatprep.subr.bf16.mxu0 0
      %1177 = vmatpush1.bf16.msra.mxu0 0
      %1178 = vmatprep.subr.bf16.mxu0 0
      %1179 = vmatpush1.bf16.msra.mxu0 0
      %1180 = vmatprep.subr.bf16.mxu0 0
      %1181 = vmatpush1.bf16.msra.mxu0 0
      %1182 = vmatprep.subr.bf16.mxu0 0
      %1183 = vmatpush1.bf16.msra.mxu0 0
      %1184 = vmatprep.subr.bf16.mxu0 0
      %1185 = vmatpush1.bf16.msra.mxu0 0
      %1186 = vmatprep.subr.bf16.mxu0 0
      %1187 = vmatpush1.bf16.msra.mxu0 0
      %1188 = vmatprep.subr.bf16.mxu0 0
      %1189 = vmatpush1.bf16.msra.mxu0 0
      %1190 = vmatprep.mubr.bf16.mxu0 0
      %1191 = vmatmul.mubr.bf16.gmra.mrb[0].mxu0 %v382
      %v1192 = vpop.f32.mrb[0].mxu0
      %v1193 = vadd.f32 0.0, %v1192
      %v1194 = vpop.f32.mrb[0].mxu0
      %v1195 = vpop.f32.mrb[0].mxu0
      %v1196 = vpop.f32.mrb[0].mxu0
      %1197 = vdwg.mxu0
      %v1198 = vpack.c.bf16 %v1193, %v1193
      %v1200 = vsel %vm398, %v1198, 0
      %1202 = vmatprep.subr.bf16.mxu0 0
      %1203 = vmatpush1.bf16.msra.mxu0 %v1200
      %1204 = vmatprep.subr.bf16.mxu0 0
      %1205 = vmatpush1.bf16.msra.mxu0 0
      %1206 = vmatprep.subr.bf16.mxu0 0
      %1207 = vmatpush1.bf16.msra.mxu0 0
      %1208 = vmatprep.subr.bf16.mxu0 0
      %1209 = vmatpush1.bf16.msra.mxu0 0
      %1210 = vmatprep.subr.bf16.mxu0 0
      %1211 = vmatpush1.bf16.msra.mxu0 0
      %1212 = vmatprep.subr.bf16.mxu0 0
      %1213 = vmatpush1.bf16.msra.mxu0 0
      %1214 = vmatprep.subr.bf16.mxu0 0
      %1215 = vmatpush1.bf16.msra.mxu0 0
      %1216 = vmatprep.subr.bf16.mxu0 0
      %1217 = vmatpush1.bf16.msra.mxu0 0
      %1218 = vmatprep.subr.bf16.mxu0 0
      %1219 = vmatpush1.bf16.msra.mxu0 0
      %1220 = vmatprep.subr.bf16.mxu0 0
      %1221 = vmatpush1.bf16.msra.mxu0 0
      %1222 = vmatprep.subr.bf16.mxu0 0
      %1223 = vmatpush1.bf16.msra.mxu0 0
      %1224 = vmatprep.subr.bf16.mxu0 0
      %1225 = vmatpush1.bf16.msra.mxu0 0
      %1226 = vmatprep.subr.bf16.mxu0 0
      %1227 = vmatpush1.bf16.msra.mxu0 0
      %1228 = vmatprep.subr.bf16.mxu0 0
      %1229 = vmatpush1.bf16.msra.mxu0 0
      %1230 = vmatprep.subr.bf16.mxu0 0
      %1231 = vmatpush1.bf16.msra.mxu0 0
      %1232 = vmatprep.subr.bf16.mxu0 0
      %1233 = vmatpush1.bf16.msra.mxu0 0
      %1234 = vmatprep.mubr.bf16.mxu0 0
      %1235 = vmatmul.mubr.bf16.gmra.mrb[0].mxu0 %v562
      %v1236 = vpop.f32.mrb[0].mxu0
      %v1237 = vadd.f32 %v437, %v1236
      %v1238 = vpop.f32.mrb[0].mxu0
      %v1239 = vpop.f32.mrb[0].mxu0
      %v1240 = vpop.f32.mrb[0].mxu0
      %1241 = vdwg.mxu0
      %v1242 = vmul.f32 %v1237, %v1237
      %v1243 = vmul.f32 %v1237, %v1242
      %v1244 = vmul.f32 %v1243, 0.044715
      %v1245 = vadd.f32 %v1237, %v1244
      %v1246 = vmul.f32 %v1245, 0.7978846
      %v1247 = vtanh.pop %v1246
      %v1248 = vadd.f32 %v1247, 1.0
      %v1249 = vmul.f32 %v1248, 0.5
      %v1250 = vmul.f32 %v1237, %v1249
      %v1251 = vpack.c.bf16 %v1250, %v1250
      %v1253 = vand.u32 %v1251, %v631
      %1255 = vmatprep.subr.bf16.mxu0 0
      %1256 = vmatpush1.bf16.msra.mxu0 %v1253
      %1257 = vmatprep.subr.bf16.mxu0 0
      %1258 = vmatpush1.bf16.msra.mxu0 0
      %1259 = vmatprep.subr.bf16.mxu0 0
      %1260 = vmatpush1.bf16.msra.mxu0 0
      %1261 = vmatprep.subr.bf16.mxu0 0
      %1262 = vmatpush1.bf16.msra.mxu0 0
      %1263 = vmatprep.subr.bf16.mxu0 0
      %1264 = vmatpush1.bf16.msra.mxu0 0
      %1265 = vmatprep.subr.bf16.mxu0 0
      %1266 = vmatpush1.bf16.msra.mxu0 0
      %1267 = vmatprep.subr.bf16.mxu0 0
      %1268 = vmatpush1.bf16.msra.mxu0 0
      %1269 = vmatprep.subr.bf16.mxu0 0
      %1270 = vmatpush1.bf16.msra.mxu0 0
      %1271 = vmatprep.subr.bf16.mxu0 0
      %1272 = vmatpush1.bf16.msra.mxu0 0
      %1273 = vmatprep.subr.bf16.mxu0 0
      %1274 = vmatpush1.bf16.msra.mxu0 0
      %1275 = vmatprep.subr.bf16.mxu0 0
      %1276 = vmatpush1.bf16.msra.mxu0 0
      %1277 = vmatprep.subr.bf16.mxu0 0
      %1278 = vmatpush1.bf16.msra.mxu0 0
      %1279 = vmatprep.subr.bf16.mxu0 0
      %1280 = vmatpush1.bf16.msra.mxu0 0
      %1281 = vmatprep.subr.bf16.mxu0 0
      %1282 = vmatpush1.bf16.msra.mxu0 0
      %1283 = vmatprep.subr.bf16.mxu0 0
      %1284 = vmatpush1.bf16.msra.mxu0 0
      %1285 = vmatprep.subr.bf16.mxu0 0
      %1286 = vmatpush1.bf16.msra.mxu0 0
      %1287 = vmatprep.mubr.bf16.mxu0 0
      %1288 = vmatmul.mubr.bf16.gmra.mrb[0].mxu0 %v626
      %v1289 = vpop.f32.mrb[0].mxu0
      %v1290 = vadd.f32 %v622, %v1289
      %v1291 = vpop.f32.mrb[0].mxu0
      %v1292 = vpop.f32.mrb[0].mxu0
      %v1293 = vpop.f32.mrb[0].mxu0
      %1294 = vdwg.mxu0
      %v1295 = vmul.f32 %v1290, %v1290
      %v1296 = vmul.f32 %v1290, %v1295
      %v1297 = vmul.f32 %v1296, 0.044715
      %v1298 = vadd.f32 %v1290, %v1297
      %v1299 = vmul.f32 %v1298, 0.7978846
      %v1300 = vtanh.pop %v1299
      %v1301 = vadd.f32 %v1300, 1.0
      %v1302 = vmul.f32 %v1301, 0.5
      %v1303 = vmul.f32 %v1290, %v1302
      %v1304 = vmax.f32 %v1097, %v1303
      %v1305 = vlaneseq
      %v1306 = vshrl.u32 %v1305, 7
      %v1307 = vsub.s32 4, %v1306
      %v1308 = vrot.slane %v385, %v1307
      %vm1309 = vcmp.eq.s32.totalorder %v443, %v1308
      %vm1310 = vcmp.eq.s32.totalorder %v444, %v1308
      %vm1311 = vcmp.eq.s32.totalorder %v445, %v1308
      %vm1312 = vcmp.eq.s32.totalorder %v446, %v1308
      %vm1313 = vcmp.eq.s32.totalorder %v447, %v1308
      %vm1314 = vcmp.eq.s32.totalorder %v448, %v1308
      %vm1315 = vcmp.eq.s32.totalorder %v449, %v1308
      %vm1316 = vcmp.eq.s32.totalorder %v450, %v1308
      %vm1317 = vcmp.eq.s32.totalorder %v451, %v1308
      %vm1318 = vcmp.eq.s32.totalorder %v452, %v1308
      %vm1319 = vcmp.eq.s32.totalorder %v453, %v1308
      %vm1320 = vcmp.eq.s32.totalorder %v454, %v1308
      %vm1321 = vcmp.eq.s32.totalorder %v455, %v1308
      %vm1322 = vcmp.eq.s32.totalorder %v456, %v1308
      %vm1323 = vcmp.eq.s32.totalorder %v457, %v1308
      %vm1324 = vcmp.eq.s32.totalorder %v458, %v1308
      %v1325 = vsel %vm1309, 1, 0
      %v1326 = vsel %vm1310, 1, 0
      %v1327 = vsel %vm1311, 1, 0
      %v1328 = vsel %vm1312, 1, 0
      %v1329 = vsel %vm1313, 1, 0
      %v1330 = vsel %vm1314, 1, 0
      %v1331 = vsel %vm1315, 1, 0
      %v1332 = vsel %vm1316, 1, 0
      %v1333 = vsel %vm1317, 1, 0
      %v1334 = vsel %vm1318, 1, 0
      %v1335 = vsel %vm1319, 1, 0
      %v1336 = vsel %vm1320, 1, 0
      %v1337 = vsel %vm1321, 1, 0
      %v1338 = vsel %vm1322, 1, 0
      %v1339 = vsel %vm1323, 1, 0
      %v1340 = vsel %vm1324, 1, 0
      %v1341 = vcvt.s32.f32 %v1325
      %v1342 = vcvt.s32.f32 %v1326
      %v1343 = vcvt.s32.f32 %v1327
      %v1344 = vcvt.s32.f32 %v1328
      %v1345 = vcvt.s32.f32 %v1329
      %v1346 = vcvt.s32.f32 %v1330
      %v1347 = vcvt.s32.f32 %v1331
      %v1348 = vcvt.s32.f32 %v1332
      %v1349 = vcvt.s32.f32 %v1333
      %v1350 = vcvt.s32.f32 %v1334
      %v1351 = vcvt.s32.f32 %v1335
      %v1352 = vcvt.s32.f32 %v1336
      %v1353 = vcvt.s32.f32 %v1337
      %v1354 = vcvt.s32.f32 %v1338
      %v1355 = vcvt.s32.f32 %v1339
      %v1356 = vcvt.s32.f32 %v1340
      %v1357 = vpack.c.bf16 %v1342, %v1341
      %v1358 = vpack.c.bf16 %v1344, %v1343
      %v1359 = vpack.c.bf16 %v1346, %v1345
      %v1360 = vpack.c.bf16 %v1348, %v1347
      %v1361 = vpack.c.bf16 %v1350, %v1349
      %v1362 = vpack.c.bf16 %v1352, %v1351
      %v1363 = vpack.c.bf16 %v1354, %v1353
      %v1364 = vpack.c.bf16 %v1356, %v1355
      %1365 = vmatprep.subr.bf16.mxu0 0
      %1366 = vmatpush1.bf16.msra.mxu0 %v1357
      %1367 = vmatprep.subr.bf16.mxu0 0
      %1368 = vmatpush1.bf16.msra.mxu0 %v1358
      %1369 = vmatprep.subr.bf16.mxu0 0
      %1370 = vmatpush1.bf16.msra.mxu0 %v1359
      %1371 = vmatprep.subr.bf16.mxu0 0
      %1372 = vmatpush1.bf16.msra.mxu0 %v1360
      %1373 = vmatprep.subr.bf16.mxu0 0
      %1374 = vmatpush1.bf16.msra.mxu0 %v1361
      %1375 = vmatprep.subr.bf16.mxu0 0
      %1376 = vmatpush1.bf16.msra.mxu0 %v1362
      %1377 = vmatprep.subr.bf16.mxu0 0
      %1378 = vmatpush1.bf16.msra.mxu0 %v1363
      %1379 = vmatprep.subr.bf16.mxu0 0
      %1380 = vmatpush1.bf16.msra.mxu0 %v1364
      %1381 = vmatprep.subr.bf16.mxu0 0
      %1382 = vmatpush1.bf16.msra.mxu0 0
      %1383 = vmatprep.subr.bf16.mxu0 0
      %1384 = vmatpush1.bf16.msra.mxu0 0
      %1385 = vmatprep.subr.bf16.mxu0 0
      %1386 = vmatpush1.bf16.msra.mxu0 0
      %1387 = vmatprep.subr.bf16.mxu0 0
      %1388 = vmatpush1.bf16.msra.mxu0 0
      %1389 = vmatprep.subr.bf16.mxu0 0
      %1390 = vmatpush1.bf16.msra.mxu0 0
      %1391 = vmatprep.subr.bf16.mxu0 0
      %1392 = vmatpush1.bf16.msra.mxu0 0
      %1393 = vmatprep.subr.bf16.mxu0 0
      %1394 = vmatpush1.bf16.msra.mxu0 0
      %1395 = vmatprep.subr.bf16.mxu0 0
      %1396 = vmatpush1.bf16.msra.mxu0 0
      %1397 = vmatprep.mubr.bf16.mxu0 0
      %1398 = vmatmul.mubr.bf16.gmra.mrb[0].mxu0 %v382
      %v1399 = vpop.f32.mrb[0].mxu0
      %v1400 = vadd.f32 0.0, %v1399
      %v1401 = vpop.f32.mrb[0].mxu0
      %v1402 = vpop.f32.mrb[0].mxu0
      %v1403 = vpop.f32.mrb[0].mxu0
      %1404 = vdwg.mxu0
      %v1405 = vpack.c.bf16 %v1400, %v1400
      %v1407 = vsel %vm398, %v1405, 0
      %1409 = vmatprep.subr.bf16.mxu0 0
      %1410 = vmatpush1.bf16.msra.mxu0 %v1407
      %1411 = vmatprep.subr.bf16.mxu0 0
      %1412 = vmatpush1.bf16.msra.mxu0 0
      %1413 = vmatprep.subr.bf16.mxu0 0
      %1414 = vmatpush1.bf16.msra.mxu0 0
      %1415 = vmatprep.subr.bf16.mxu0 0
      %1416 = vmatpush1.bf16.msra.mxu0 0
      %1417 = vmatprep.subr.bf16.mxu0 0
      %1418 = vmatpush1.bf16.msra.mxu0 0
      %1419 = vmatprep.subr.bf16.mxu0 0
      %1420 = vmatpush1.bf16.msra.mxu0 0
      %1421 = vmatprep.subr.bf16.mxu0 0
      %1422 = vmatpush1.bf16.msra.mxu0 0
      %1423 = vmatprep.subr.bf16.mxu0 0
      %1424 = vmatpush1.bf16.msra.mxu0 0
      %1425 = vmatprep.subr.bf16.mxu0 0
      %1426 = vmatpush1.bf16.msra.mxu0 0
      %1427 = vmatprep.subr.bf16.mxu0 0
      %1428 = vmatpush1.bf16.msra.mxu0 0
      %1429 = vmatprep.subr.bf16.mxu0 0
      %1430 = vmatpush1.bf16.msra.mxu0 0
      %1431 = vmatprep.subr.bf16.mxu0 0
      %1432 = vmatpush1.bf16.msra.mxu0 0
      %1433 = vmatprep.subr.bf16.mxu0 0
      %1434 = vmatpush1.bf16.msra.mxu0 0
      %1435 = vmatprep.subr.bf16.mxu0 0
      %1436 = vmatpush1.bf16.msra.mxu0 0
      %1437 = vmatprep.subr.bf16.mxu0 0
      %1438 = vmatpush1.bf16.msra.mxu0 0
      %1439 = vmatprep.subr.bf16.mxu0 0
      %1440 = vmatpush1.bf16.msra.mxu0 0
      %1441 = vmatprep.mubr.bf16.mxu0 0
      %1442 = vmatmul.mubr.bf16.gmra.mrb[0].mxu0 %v562
      %v1443 = vpop.f32.mrb[0].mxu0
      %v1444 = vadd.f32 %v437, %v1443
      %v1445 = vpop.f32.mrb[0].mxu0
      %v1446 = vpop.f32.mrb[0].mxu0
      %v1447 = vpop.f32.mrb[0].mxu0
      %1448 = vdwg.mxu0
      %v1449 = vmul.f32 %v1444, %v1444
      %v1450 = vmul.f32 %v1444, %v1449
      %v1451 = vmul.f32 %v1450, 0.044715
      %v1452 = vadd.f32 %v1444, %v1451
      %v1453 = vmul.f32 %v1452, 0.7978846
      %v1454 = vtanh.pop %v1453
      %v1455 = vadd.f32 %v1454, 1.0
      %v1456 = vmul.f32 %v1455, 0.5
      %v1457 = vmul.f32 %v1444, %v1456
      %v1458 = vpack.c.bf16 %v1457, %v1457
      %v1460 = vand.u32 %v1458, %v631
      %1462 = vmatprep.subr.bf16.mxu0 0
      %1463 = vmatpush1.bf16.msra.mxu0 %v1460
      %1464 = vmatprep.subr.bf16.mxu0 0
      %1465 = vmatpush1.bf16.msra.mxu0 0
      %1466 = vmatprep.subr.bf16.mxu0 0
      %1467 = vmatpush1.bf16.msra.mxu0 0
      %1468 = vmatprep.subr.bf16.mxu0 0
      %1469 = vmatpush1.bf16.msra.mxu0 0
      %1470 = vmatprep.subr.bf16.mxu0 0
      %1471 = vmatpush1.bf16.msra.mxu0 0
      %1472 = vmatprep.subr.bf16.mxu0 0
      %1473 = vmatpush1.bf16.msra.mxu0 0
      %1474 = vmatprep.subr.bf16.mxu0 0
      %1475 = vmatpush1.bf16.msra.mxu0 0
      %1476 = vmatprep.subr.bf16.mxu0 0
      %1477 = vmatpush1.bf16.msra.mxu0 0
      %1478 = vmatprep.subr.bf16.mxu0 0
      %1479 = vmatpush1.bf16.msra.mxu0 0
      %1480 = vmatprep.subr.bf16.mxu0 0
      %1481 = vmatpush1.bf16.msra.mxu0 0
      %1482 = vmatprep.subr.bf16.mxu0 0
      %1483 = vmatpush1.bf16.msra.mxu0 0
      %1484 = vmatprep.subr.bf16.mxu0 0
      %1485 = vmatpush1.bf16.msra.mxu0 0
      %1486 = vmatprep.subr.bf16.mxu0 0
      %1487 = vmatpush1.bf16.msra.mxu0 0
      %1488 = vmatprep.subr.bf16.mxu0 0
      %1489 = vmatpush1.bf16.msra.mxu0 0
      %1490 = vmatprep.subr.bf16.mxu0 0
      %1491 = vmatpush1.bf16.msra.mxu0 0
      %1492 = vmatprep.subr.bf16.mxu0 0
      %1493 = vmatpush1.bf16.msra.mxu0 0
      %1494 = vmatprep.mubr.bf16.mxu0 0
      %1495 = vmatmul.mubr.bf16.gmra.mrb[0].mxu0 %v626
      %v1496 = vpop.f32.mrb[0].mxu0
      %v1497 = vadd.f32 %v622, %v1496
      %v1498 = vpop.f32.mrb[0].mxu0
      %v1499 = vpop.f32.mrb[0].mxu0
      %v1500 = vpop.f32.mrb[0].mxu0
      %1501 = vdwg.mxu0
      %v1502 = vmul.f32 %v1497, %v1497
      %v1503 = vmul.f32 %v1497, %v1502
      %v1504 = vmul.f32 %v1503, 0.044715
      %v1505 = vadd.f32 %v1497, %v1504
      %v1506 = vmul.f32 %v1505, 0.7978846
      %v1507 = vtanh.pop %v1506
      %v1508 = vadd.f32 %v1507, 1.0
      %v1509 = vmul.f32 %v1508, 0.5
      %v1510 = vmul.f32 %v1497, %v1509
      %v1511 = vmax.f32 %v1304, %v1510
      %v1512 = vlaneseq
      %v1513 = vshrl.u32 %v1512, 7
      %v1514 = vsub.s32 5, %v1513
      %v1515 = vrot.slane %v385, %v1514
      %vm1516 = vcmp.eq.s32.totalorder %v443, %v1515
      %vm1517 = vcmp.eq.s32.totalorder %v444, %v1515
      %vm1518 = vcmp.eq.s32.totalorder %v445, %v1515
      %vm1519 = vcmp.eq.s32.totalorder %v446, %v1515
      %vm1520 = vcmp.eq.s32.totalorder %v447, %v1515
      %vm1521 = vcmp.eq.s32.totalorder %v448, %v1515
      %vm1522 = vcmp.eq.s32.totalorder %v449, %v1515
      %vm1523 = vcmp.eq.s32.totalorder %v450, %v1515
      %vm1524 = vcmp.eq.s32.totalorder %v451, %v1515
      %vm1525 = vcmp.eq.s32.totalorder %v452, %v1515
      %vm1526 = vcmp.eq.s32.totalorder %v453, %v1515
      %vm1527 = vcmp.eq.s32.totalorder %v454, %v1515
      %vm1528 = vcmp.eq.s32.totalorder %v455, %v1515
      %vm1529 = vcmp.eq.s32.totalorder %v456, %v1515
      %vm1530 = vcmp.eq.s32.totalorder %v457, %v1515
      %vm1531 = vcmp.eq.s32.totalorder %v458, %v1515
      %v1532 = vsel %vm1516, 1, 0
      %v1533 = vsel %vm1517, 1, 0
      %v1534 = vsel %vm1518, 1, 0
      %v1535 = vsel %vm1519, 1, 0
      %v1536 = vsel %vm1520, 1, 0
      %v1537 = vsel %vm1521, 1, 0
      %v1538 = vsel %vm1522, 1, 0
      %v1539 = vsel %vm1523, 1, 0
      %v1540 = vsel %vm1524, 1, 0
      %v1541 = vsel %vm1525, 1, 0
      %v1542 = vsel %vm1526, 1, 0
      %v1543 = vsel %vm1527, 1, 0
      %v1544 = vsel %vm1528, 1, 0
      %v1545 = vsel %vm1529, 1, 0
      %v1546 = vsel %vm1530, 1, 0
      %v1547 = vsel %vm1531, 1, 0
      %v1548 = vcvt.s32.f32 %v1532
      %v1549 = vcvt.s32.f32 %v1533
      %v1550 = vcvt.s32.f32 %v1534
      %v1551 = vcvt.s32.f32 %v1535
      %v1552 = vcvt.s32.f32 %v1536
      %v1553 = vcvt.s32.f32 %v1537
      %v1554 = vcvt.s32.f32 %v1538
      %v1555 = vcvt.s32.f32 %v1539
      %v1556 = vcvt.s32.f32 %v1540
      %v1557 = vcvt.s32.f32 %v1541
      %v1558 = vcvt.s32.f32 %v1542
      %v1559 = vcvt.s32.f32 %v1543
      %v1560 = vcvt.s32.f32 %v1544
      %v1561 = vcvt.s32.f32 %v1545
      %v1562 = vcvt.s32.f32 %v1546
      %v1563 = vcvt.s32.f32 %v1547
      %v1564 = vpack.c.bf16 %v1549, %v1548
      %v1565 = vpack.c.bf16 %v1551, %v1550
      %v1566 = vpack.c.bf16 %v1553, %v1552
      %v1567 = vpack.c.bf16 %v1555, %v1554
      %v1568 = vpack.c.bf16 %v1557, %v1556
      %v1569 = vpack.c.bf16 %v1559, %v1558
      %v1570 = vpack.c.bf16 %v1561, %v1560
      %v1571 = vpack.c.bf16 %v1563, %v1562
      %1572 = vmatprep.subr.bf16.mxu0 0
      %1573 = vmatpush1.bf16.msra.mxu0 %v1564
      %1574 = vmatprep.subr.bf16.mxu0 0
      %1575 = vmatpush1.bf16.msra.mxu0 %v1565
      %1576 = vmatprep.subr.bf16.mxu0 0
      %1577 = vmatpush1.bf16.msra.mxu0 %v1566
      %1578 = vmatprep.subr.bf16.mxu0 0
      %1579 = vmatpush1.bf16.msra.mxu0 %v1567
      %1580 = vmatprep.subr.bf16.mxu0 0
      %1581 = vmatpush1.bf16.msra.mxu0 %v1568
      %1582 = vmatprep.subr.bf16.mxu0 0
      %1583 = vmatpush1.bf16.msra.mxu0 %v1569
      %1584 = vmatprep.subr.bf16.mxu0 0
      %1585 = vmatpush1.bf16.msra.mxu0 %v1570
      %1586 = vmatprep.subr.bf16.mxu0 0
      %1587 = vmatpush1.bf16.msra.mxu0 %v1571
      %1588 = vmatprep.subr.bf16.mxu0 0
      %1589 = vmatpush1.bf16.msra.mxu0 0
      %1590 = vmatprep.subr.bf16.mxu0 0
      %1591 = vmatpush1.bf16.msra.mxu0 0
      %1592 = vmatprep.subr.bf16.mxu0 0
      %1593 = vmatpush1.bf16.msra.mxu0 0
      %1594 = vmatprep.subr.bf16.mxu0 0
      %1595 = vmatpush1.bf16.msra.mxu0 0
      %1596 = vmatprep.subr.bf16.mxu0 0
      %1597 = vmatpush1.bf16.msra.mxu0 0
      %1598 = vmatprep.subr.bf16.mxu0 0
      %1599 = vmatpush1.bf16.msra.mxu0 0
      %1600 = vmatprep.subr.bf16.mxu0 0
      %1601 = vmatpush1.bf16.msra.mxu0 0
      %1602 = vmatprep.subr.bf16.mxu0 0
      %1603 = vmatpush1.bf16.msra.mxu0 0
      %1604 = vmatprep.mubr.bf16.mxu0 0
      %1605 = vmatmul.mubr.bf16.gmra.mrb[0].mxu0 %v382
      %v1606 = vpop.f32.mrb[0].mxu0
      %v1607 = vadd.f32 0.0, %v1606
      %v1608 = vpop.f32.mrb[0].mxu0
      %v1609 = vpop.f32.mrb[0].mxu0
      %v1610 = vpop.f32.mrb[0].mxu0
      %1611 = vdwg.mxu0
      %v1612 = vpack.c.bf16 %v1607, %v1607
      %v1614 = vsel %vm398, %v1612, 0
      %1616 = vmatprep.subr.bf16.mxu0 0
      %1617 = vmatpush1.bf16.msra.mxu0 %v1614
      %1618 = vmatprep.subr.bf16.mxu0 0
      %1619 = vmatpush1.bf16.msra.mxu0 0
      %1620 = vmatprep.subr.bf16.mxu0 0
      %1621 = vmatpush1.bf16.msra.mxu0 0
      %1622 = vmatprep.subr.bf16.mxu0 0
      %1623 = vmatpush1.bf16.msra.mxu0 0
      %1624 = vmatprep.subr.bf16.mxu0 0
      %1625 = vmatpush1.bf16.msra.mxu0 0
      %1626 = vmatprep.subr.bf16.mxu0 0
      %1627 = vmatpush1.bf16.msra.mxu0 0
      %1628 = vmatprep.subr.bf16.mxu0 0
      %1629 = vmatpush1.bf16.msra.mxu0 0
      %1630 = vmatprep.subr.bf16.mxu0 0
      %1631 = vmatpush1.bf16.msra.mxu0 0
      %1632 = vmatprep.subr.bf16.mxu0 0
      %1633 = vmatpush1.bf16.msra.mxu0 0
      %1634 = vmatprep.subr.bf16.mxu0 0
      %1635 = vmatpush1.bf16.msra.mxu0 0
      %1636 = vmatprep.subr.bf16.mxu0 0
      %1637 = vmatpush1.bf16.msra.mxu0 0
      %1638 = vmatprep.subr.bf16.mxu0 0
      %1639 = vmatpush1.bf16.msra.mxu0 0
      %1640 = vmatprep.subr.bf16.mxu0 0
      %1641 = vmatpush1.bf16.msra.mxu0 0
      %1642 = vmatprep.subr.bf16.mxu0 0
      %1643 = vmatpush1.bf16.msra.mxu0 0
      %1644 = vmatprep.subr.bf16.mxu0 0
      %1645 = vmatpush1.bf16.msra.mxu0 0
      %1646 = vmatprep.subr.bf16.mxu0 0
      %1647 = vmatpush1.bf16.msra.mxu0 0
      %1648 = vmatprep.mubr.bf16.mxu0 0
      %1649 = vmatmul.mubr.bf16.gmra.mrb[0].mxu0 %v562
      %v1650 = vpop.f32.mrb[0].mxu0
      %v1651 = vadd.f32 %v437, %v1650
      %v1652 = vpop.f32.mrb[0].mxu0
      %v1653 = vpop.f32.mrb[0].mxu0
      %v1654 = vpop.f32.mrb[0].mxu0
      %1655 = vdwg.mxu0
      %v1656 = vmul.f32 %v1651, %v1651
      %v1657 = vmul.f32 %v1651, %v1656
      %v1658 = vmul.f32 %v1657, 0.044715
      %v1659 = vadd.f32 %v1651, %v1658
      %v1660 = vmul.f32 %v1659, 0.7978846
      %v1661 = vtanh.pop %v1660
      %v1662 = vadd.f32 %v1661, 1.0
      %v1663 = vmul.f32 %v1662, 0.5
      %v1664 = vmul.f32 %v1651, %v1663
      %v1665 = vpack.c.bf16 %v1664, %v1664
      %v1667 = vand.u32 %v1665, %v631
      %1669 = vmatprep.subr.bf16.mxu0 0
      %1670 = vmatpush1.bf16.msra.mxu0 %v1667
      %1671 = vmatprep.subr.bf16.mxu0 0
      %1672 = vmatpush1.bf16.msra.mxu0 0
      %1673 = vmatprep.subr.bf16.mxu0 0
      %1674 = vmatpush1.bf16.msra.mxu0 0
      %1675 = vmatprep.subr.bf16.mxu0 0
      %1676 = vmatpush1.bf16.msra.mxu0 0
      %1677 = vmatprep.subr.bf16.mxu0 0
      %1678 = vmatpush1.bf16.msra.mxu0 0
      %1679 = vmatprep.subr.bf16.mxu0 0
      %1680 = vmatpush1.bf16.msra.mxu0 0
      %1681 = vmatprep.subr.bf16.mxu0 0
      %1682 = vmatpush1.bf16.msra.mxu0 0
      %1683 = vmatprep.subr.bf16.mxu0 0
      %1684 = vmatpush1.bf16.msra.mxu0 0
      %1685 = vmatprep.subr.bf16.mxu0 0
      %1686 = vmatpush1.bf16.msra.mxu0 0
      %1687 = vmatprep.subr.bf16.mxu0 0
      %1688 = vmatpush1.bf16.msra.mxu0 0
      %1689 = vmatprep.subr.bf16.mxu0 0
      %1690 = vmatpush1.bf16.msra.mxu0 0
      %1691 = vmatprep.subr.bf16.mxu0 0
      %1692 = vmatpush1.bf16.msra.mxu0 0
      %1693 = vmatprep.subr.bf16.mxu0 0
      %1694 = vmatpush1.bf16.msra.mxu0 0
      %1695 = vmatprep.subr.bf16.mxu0 0
      %1696 = vmatpush1.bf16.msra.mxu0 0
      %1697 = vmatprep.subr.bf16.mxu0 0
      %1698 = vmatpush1.bf16.msra.mxu0 0
      %1699 = vmatprep.subr.bf16.mxu0 0
      %1700 = vmatpush1.bf16.msra.mxu0 0
      %1701 = vmatprep.mubr.bf16.mxu0 0
      %1702 = vmatmul.mubr.bf16.gmra.mrb[0].mxu0 %v626
      %v1703 = vpop.f32.mrb[0].mxu0
      %v1704 = vadd.f32 %v622, %v1703
      %v1705 = vpop.f32.mrb[0].mxu0
      %v1706 = vpop.f32.mrb[0].mxu0
      %v1707 = vpop.f32.mrb[0].mxu0
      %1708 = vdwg.mxu0
      %v1709 = vmul.f32 %v1704, %v1704
      %v1710 = vmul.f32 %v1704, %v1709
      %v1711 = vmul.f32 %v1710, 0.044715
      %v1712 = vadd.f32 %v1704, %v1711
      %v1713 = vmul.f32 %v1712, 0.7978846
      %v1714 = vtanh.pop %v1713
      %v1715 = vadd.f32 %v1714, 1.0
      %v1716 = vmul.f32 %v1715, 0.5
      %v1717 = vmul.f32 %v1704, %v1716
      %v1718 = vmax.f32 %v1511, %v1717
      %v1719 = vlaneseq
      %v1720 = vshrl.u32 %v1719, 7
      %v1721 = vsub.s32 6, %v1720
      %v1722 = vrot.slane %v385, %v1721
      %vm1723 = vcmp.eq.s32.totalorder %v443, %v1722
      %vm1724 = vcmp.eq.s32.totalorder %v444, %v1722
      %vm1725 = vcmp.eq.s32.totalorder %v445, %v1722
      %vm1726 = vcmp.eq.s32.totalorder %v446, %v1722
      %vm1727 = vcmp.eq.s32.totalorder %v447, %v1722
      %vm1728 = vcmp.eq.s32.totalorder %v448, %v1722
      %vm1729 = vcmp.eq.s32.totalorder %v449, %v1722
      %vm1730 = vcmp.eq.s32.totalorder %v450, %v1722
      %vm1731 = vcmp.eq.s32.totalorder %v451, %v1722
      %vm1732 = vcmp.eq.s32.totalorder %v452, %v1722
      %vm1733 = vcmp.eq.s32.totalorder %v453, %v1722
      %vm1734 = vcmp.eq.s32.totalorder %v454, %v1722
      %vm1735 = vcmp.eq.s32.totalorder %v455, %v1722
      %vm1736 = vcmp.eq.s32.totalorder %v456, %v1722
      %vm1737 = vcmp.eq.s32.totalorder %v457, %v1722
      %vm1738 = vcmp.eq.s32.totalorder %v458, %v1722
      %v1739 = vsel %vm1723, 1, 0
      %v1740 = vsel %vm1724, 1, 0
      %v1741 = vsel %vm1725, 1, 0
      %v1742 = vsel %vm1726, 1, 0
      %v1743 = vsel %vm1727, 1, 0
      %v1744 = vsel %vm1728, 1, 0
      %v1745 = vsel %vm1729, 1, 0
      %v1746 = vsel %vm1730, 1, 0
      %v1747 = vsel %vm1731, 1, 0
      %v1748 = vsel %vm1732, 1, 0
      %v1749 = vsel %vm1733, 1, 0
      %v1750 = vsel %vm1734, 1, 0
      %v1751 = vsel %vm1735, 1, 0
      %v1752 = vsel %vm1736, 1, 0
      %v1753 = vsel %vm1737, 1, 0
      %v1754 = vsel %vm1738, 1, 0
      %v1755 = vcvt.s32.f32 %v1739
      %v1756 = vcvt.s32.f32 %v1740
      %v1757 = vcvt.s32.f32 %v1741
      %v1758 = vcvt.s32.f32 %v1742
      %v1759 = vcvt.s32.f32 %v1743
      %v1760 = vcvt.s32.f32 %v1744
      %v1761 = vcvt.s32.f32 %v1745
      %v1762 = vcvt.s32.f32 %v1746
      %v1763 = vcvt.s32.f32 %v1747
      %v1764 = vcvt.s32.f32 %v1748
      %v1765 = vcvt.s32.f32 %v1749
      %v1766 = vcvt.s32.f32 %v1750
      %v1767 = vcvt.s32.f32 %v1751
      %v1768 = vcvt.s32.f32 %v1752
      %v1769 = vcvt.s32.f32 %v1753
      %v1770 = vcvt.s32.f32 %v1754
      %v1771 = vpack.c.bf16 %v1756, %v1755
      %v1772 = vpack.c.bf16 %v1758, %v1757
      %v1773 = vpack.c.bf16 %v1760, %v1759
      %v1774 = vpack.c.bf16 %v1762, %v1761
      %v1775 = vpack.c.bf16 %v1764, %v1763
      %v1776 = vpack.c.bf16 %v1766, %v1765
      %v1777 = vpack.c.bf16 %v1768, %v1767
      %v1778 = vpack.c.bf16 %v1770, %v1769
      %1779 = vmatprep.subr.bf16.mxu0 0
      %1780 = vmatpush1.bf16.msra.mxu0 %v1771
      %1781 = vmatprep.subr.bf16.mxu0 0
      %1782 = vmatpush1.bf16.msra.mxu0 %v1772
      %1783 = vmatprep.subr.bf16.mxu0 0
      %1784 = vmatpush1.bf16.msra.mxu0 %v1773
      %1785 = vmatprep.subr.bf16.mxu0 0
      %1786 = vmatpush1.bf16.msra.mxu0 %v1774
      %1787 = vmatprep.subr.bf16.mxu0 0
      %1788 = vmatpush1.bf16.msra.mxu0 %v1775
      %1789 = vmatprep.subr.bf16.mxu0 0
      %1790 = vmatpush1.bf16.msra.mxu0 %v1776
      %1791 = vmatprep.subr.bf16.mxu0 0
      %1792 = vmatpush1.bf16.msra.mxu0 %v1777
      %1793 = vmatprep.subr.bf16.mxu0 0
      %1794 = vmatpush1.bf16.msra.mxu0 %v1778
      %1795 = vmatprep.subr.bf16.mxu0 0
      %1796 = vmatpush1.bf16.msra.mxu0 0
      %1797 = vmatprep.subr.bf16.mxu0 0
      %1798 = vmatpush1.bf16.msra.mxu0 0
      %1799 = vmatprep.subr.bf16.mxu0 0
      %1800 = vmatpush1.bf16.msra.mxu0 0
      %1801 = vmatprep.subr.bf16.mxu0 0
      %1802 = vmatpush1.bf16.msra.mxu0 0
      %1803 = vmatprep.subr.bf16.mxu0 0
      %1804 = vmatpush1.bf16.msra.mxu0 0
      %1805 = vmatprep.subr.bf16.mxu0 0
      %1806 = vmatpush1.bf16.msra.mxu0 0
      %1807 = vmatprep.subr.bf16.mxu0 0
      %1808 = vmatpush1.bf16.msra.mxu0 0
      %1809 = vmatprep.subr.bf16.mxu0 0
      %1810 = vmatpush1.bf16.msra.mxu0 0
      %1811 = vmatprep.mubr.bf16.mxu0 0
      %1812 = vmatmul.mubr.bf16.gmra.mrb[0].mxu0 %v382
      %v1813 = vpop.f32.mrb[0].mxu0
      %v1814 = vadd.f32 0.0, %v1813
      %v1815 = vpop.f32.mrb[0].mxu0
      %v1816 = vpop.f32.mrb[0].mxu0
      %v1817 = vpop.f32.mrb[0].mxu0
      %1818 = vdwg.mxu0
      %v1819 = vpack.c.bf16 %v1814, %v1814
      %v1821 = vsel %vm398, %v1819, 0
      %1823 = vmatprep.subr.bf16.mxu0 0
      %1824 = vmatpush1.bf16.msra.mxu0 %v1821
      %1825 = vmatprep.subr.bf16.mxu0 0
      %1826 = vmatpush1.bf16.msra.mxu0 0
      %1827 = vmatprep.subr.bf16.mxu0 0
      %1828 = vmatpush1.bf16.msra.mxu0 0
      %1829 = vmatprep.subr.bf16.mxu0 0
      %1830 = vmatpush1.bf16.msra.mxu0 0
      %1831 = vmatprep.subr.bf16.mxu0 0
      %1832 = vmatpush1.bf16.msra.mxu0 0
      %1833 = vmatprep.subr.bf16.mxu0 0
      %1834 = vmatpush1.bf16.msra.mxu0 0
      %1835 = vmatprep.subr.bf16.mxu0 0
      %1836 = vmatpush1.bf16.msra.mxu0 0
      %1837 = vmatprep.subr.bf16.mxu0 0
      %1838 = vmatpush1.bf16.msra.mxu0 0
      %1839 = vmatprep.subr.bf16.mxu0 0
      %1840 = vmatpush1.bf16.msra.mxu0 0
      %1841 = vmatprep.subr.bf16.mxu0 0
      %1842 = vmatpush1.bf16.msra.mxu0 0
      %1843 = vmatprep.subr.bf16.mxu0 0
      %1844 = vmatpush1.bf16.msra.mxu0 0
      %1845 = vmatprep.subr.bf16.mxu0 0
      %1846 = vmatpush1.bf16.msra.mxu0 0
      %1847 = vmatprep.subr.bf16.mxu0 0
      %1848 = vmatpush1.bf16.msra.mxu0 0
      %1849 = vmatprep.subr.bf16.mxu0 0
      %1850 = vmatpush1.bf16.msra.mxu0 0
      %1851 = vmatprep.subr.bf16.mxu0 0
      %1852 = vmatpush1.bf16.msra.mxu0 0
      %1853 = vmatprep.subr.bf16.mxu0 0
      %1854 = vmatpush1.bf16.msra.mxu0 0
      %1855 = vmatprep.mubr.bf16.mxu0 0
      %1856 = vmatmul.mubr.bf16.gmra.mrb[0].mxu0 %v562
      %v1857 = vpop.f32.mrb[0].mxu0
      %v1858 = vadd.f32 %v437, %v1857
      %v1859 = vpop.f32.mrb[0].mxu0
      %v1860 = vpop.f32.mrb[0].mxu0
      %v1861 = vpop.f32.mrb[0].mxu0
      %1862 = vdwg.mxu0
      %v1863 = vmul.f32 %v1858, %v1858
      %v1864 = vmul.f32 %v1858, %v1863
      %v1865 = vmul.f32 %v1864, 0.044715
      %v1866 = vadd.f32 %v1858, %v1865
      %v1867 = vmul.f32 %v1866, 0.7978846
      %v1868 = vtanh.pop %v1867
      %v1869 = vadd.f32 %v1868, 1.0
      %v1870 = vmul.f32 %v1869, 0.5
      %v1871 = vmul.f32 %v1858, %v1870
      %v1872 = vpack.c.bf16 %v1871, %v1871
      %v1874 = vand.u32 %v1872, %v631
      %1876 = vmatprep.subr.bf16.mxu0 0
      %1877 = vmatpush1.bf16.msra.mxu0 %v1874
      %1878 = vmatprep.subr.bf16.mxu0 0
      %1879 = vmatpush1.bf16.msra.mxu0 0
      %1880 = vmatprep.subr.bf16.mxu0 0
      %1881 = vmatpush1.bf16.msra.mxu0 0
      %1882 = vmatprep.subr.bf16.mxu0 0
      %1883 = vmatpush1.bf16.msra.mxu0 0
      %1884 = vmatprep.subr.bf16.mxu0 0
      %1885 = vmatpush1.bf16.msra.mxu0 0
      %1886 = vmatprep.subr.bf16.mxu0 0
      %1887 = vmatpush1.bf16.msra.mxu0 0
      %1888 = vmatprep.subr.bf16.mxu0 0
      %1889 = vmatpush1.bf16.msra.mxu0 0
      %1890 = vmatprep.subr.bf16.mxu0 0
      %1891 = vmatpush1.bf16.msra.mxu0 0
      %1892 = vmatprep.subr.bf16.mxu0 0
      %1893 = vmatpush1.bf16.msra.mxu0 0
      %1894 = vmatprep.subr.bf16.mxu0 0
      %1895 = vmatpush1.bf16.msra.mxu0 0
      %1896 = vmatprep.subr.bf16.mxu0 0
      %1897 = vmatpush1.bf16.msra.mxu0 0
      %1898 = vmatprep.subr.bf16.mxu0 0
      %1899 = vmatpush1.bf16.msra.mxu0 0
      %1900 = vmatprep.subr.bf16.mxu0 0
      %1901 = vmatpush1.bf16.msra.mxu0 0
      %1902 = vmatprep.subr.bf16.mxu0 0
      %1903 = vmatpush1.bf16.msra.mxu0 0
      %1904 = vmatprep.subr.bf16.mxu0 0
      %1905 = vmatpush1.bf16.msra.mxu0 0
      %1906 = vmatprep.subr.bf16.mxu0 0
      %1907 = vmatpush1.bf16.msra.mxu0 0
      %1908 = vmatprep.mubr.bf16.mxu0 0
      %1909 = vmatmul.mubr.bf16.gmra.mrb[0].mxu0 %v626
      %v1910 = vpop.f32.mrb[0].mxu0
      %v1911 = vadd.f32 %v622, %v1910
      %v1912 = vpop.f32.mrb[0].mxu0
      %v1913 = vpop.f32.mrb[0].mxu0
      %v1914 = vpop.f32.mrb[0].mxu0
      %1915 = vdwg.mxu0
      %v1916 = vmul.f32 %v1911, %v1911
      %v1917 = vmul.f32 %v1911, %v1916
      %v1918 = vmul.f32 %v1917, 0.044715
      %v1919 = vadd.f32 %v1911, %v1918
      %v1920 = vmul.f32 %v1919, 0.7978846
      %v1921 = vtanh.pop %v1920
      %v1922 = vadd.f32 %v1921, 1.0
      %v1923 = vmul.f32 %v1922, 0.5
      %v1924 = vmul.f32 %v1911, %v1923
      %v1925 = vmax.f32 %v1718, %v1924
      %v1926 = vlaneseq
      %v1927 = vshrl.u32 %v1926, 7
      %v1928 = vsub.s32 7, %v1927
      %v1929 = vrot.slane %v385, %v1928
      %vm1930 = vcmp.eq.s32.totalorder %v443, %v1929
      %vm1931 = vcmp.eq.s32.totalorder %v444, %v1929
      %vm1932 = vcmp.eq.s32.totalorder %v445, %v1929
      %vm1933 = vcmp.eq.s32.totalorder %v446, %v1929
      %vm1934 = vcmp.eq.s32.totalorder %v447, %v1929
      %vm1935 = vcmp.eq.s32.totalorder %v448, %v1929
      %vm1936 = vcmp.eq.s32.totalorder %v449, %v1929
      %vm1937 = vcmp.eq.s32.totalorder %v450, %v1929
      %vm1938 = vcmp.eq.s32.totalorder %v451, %v1929
      %vm1939 = vcmp.eq.s32.totalorder %v452, %v1929
      %vm1940 = vcmp.eq.s32.totalorder %v453, %v1929
      %vm1941 = vcmp.eq.s32.totalorder %v454, %v1929
      %vm1942 = vcmp.eq.s32.totalorder %v455, %v1929
      %vm1943 = vcmp.eq.s32.totalorder %v456, %v1929
      %vm1944 = vcmp.eq.s32.totalorder %v457, %v1929
      %vm1945 = vcmp.eq.s32.totalorder %v458, %v1929
      %v1946 = vsel %vm1930, 1, 0
      %v1947 = vsel %vm1931, 1, 0
      %v1948 = vsel %vm1932, 1, 0
      %v1949 = vsel %vm1933, 1, 0
      %v1950 = vsel %vm1934, 1, 0
      %v1951 = vsel %vm1935, 1, 0
      %v1952 = vsel %vm1936, 1, 0
      %v1953 = vsel %vm1937, 1, 0
      %v1954 = vsel %vm1938, 1, 0
      %v1955 = vsel %vm1939, 1, 0
      %v1956 = vsel %vm1940, 1, 0
      %v1957 = vsel %vm1941, 1, 0
      %v1958 = vsel %vm1942, 1, 0
      %v1959 = vsel %vm1943, 1, 0
      %v1960 = vsel %vm1944, 1, 0
      %v1961 = vsel %vm1945, 1, 0
      %v1962 = vcvt.s32.f32 %v1946
      %v1963 = vcvt.s32.f32 %v1947
      %v1964 = vcvt.s32.f32 %v1948
      %v1965 = vcvt.s32.f32 %v1949
      %v1966 = vcvt.s32.f32 %v1950
      %v1967 = vcvt.s32.f32 %v1951
      %v1968 = vcvt.s32.f32 %v1952
      %v1969 = vcvt.s32.f32 %v1953
      %v1970 = vcvt.s32.f32 %v1954
      %v1971 = vcvt.s32.f32 %v1955
      %v1972 = vcvt.s32.f32 %v1956
      %v1973 = vcvt.s32.f32 %v1957
      %v1974 = vcvt.s32.f32 %v1958
      %v1975 = vcvt.s32.f32 %v1959
      %v1976 = vcvt.s32.f32 %v1960
      %v1977 = vcvt.s32.f32 %v1961
      %v1978 = vpack.c.bf16 %v1963, %v1962
      %v1979 = vpack.c.bf16 %v1965, %v1964
      %v1980 = vpack.c.bf16 %v1967, %v1966
      %v1981 = vpack.c.bf16 %v1969, %v1968
      %v1982 = vpack.c.bf16 %v1971, %v1970
      %v1983 = vpack.c.bf16 %v1973, %v1972
      %v1984 = vpack.c.bf16 %v1975, %v1974
      %v1985 = vpack.c.bf16 %v1977, %v1976
      %1986 = vmatprep.subr.bf16.mxu0 0
      %1987 = vmatpush1.bf16.msra.mxu0 %v1978
      %1988 = vmatprep.subr.bf16.mxu0 0
      %1989 = vmatpush1.bf16.msra.mxu0 %v1979
      %1990 = vmatprep.subr.bf16.mxu0 0
      %1991 = vmatpush1.bf16.msra.mxu0 %v1980
      %1992 = vmatprep.subr.bf16.mxu0 0
      %1993 = vmatpush1.bf16.msra.mxu0 %v1981
      %1994 = vmatprep.subr.bf16.mxu0 0
      %1995 = vmatpush1.bf16.msra.mxu0 %v1982
      %1996 = vmatprep.subr.bf16.mxu0 0
      %1997 = vmatpush1.bf16.msra.mxu0 %v1983
      %1998 = vmatprep.subr.bf16.mxu0 0
      %1999 = vmatpush1.bf16.msra.mxu0 %v1984
      %2000 = vmatprep.subr.bf16.mxu0 0
      %2001 = vmatpush1.bf16.msra.mxu0 %v1985
      %2002 = vmatprep.subr.bf16.mxu0 0
      %2003 = vmatpush1.bf16.msra.mxu0 0
      %2004 = vmatprep.subr.bf16.mxu0 0
      %2005 = vmatpush1.bf16.msra.mxu0 0
      %2006 = vmatprep.subr.bf16.mxu0 0
      %2007 = vmatpush1.bf16.msra.mxu0 0
      %2008 = vmatprep.subr.bf16.mxu0 0
      %2009 = vmatpush1.bf16.msra.mxu0 0
      %2010 = vmatprep.subr.bf16.mxu0 0
      %2011 = vmatpush1.bf16.msra.mxu0 0
      %2012 = vmatprep.subr.bf16.mxu0 0
      %2013 = vmatpush1.bf16.msra.mxu0 0
      %2014 = vmatprep.subr.bf16.mxu0 0
      %2015 = vmatpush1.bf16.msra.mxu0 0
      %2016 = vmatprep.subr.bf16.mxu0 0
      %2017 = vmatpush1.bf16.msra.mxu0 0
      %2018 = vmatprep.mubr.bf16.mxu0 0
      %2019 = vmatmul.mubr.bf16.gmra.mrb[0].mxu0 %v382
      %v2020 = vpop.f32.mrb[0].mxu0
      %v2021 = vadd.f32 0.0, %v2020
      %v2022 = vpop.f32.mrb[0].mxu0
      %v2023 = vpop.f32.mrb[0].mxu0
      %v2024 = vpop.f32.mrb[0].mxu0
      %2025 = vdwg.mxu0
      %v2026 = vpack.c.bf16 %v2021, %v2021
      %v2028 = vsel %vm398, %v2026, 0
      %2030 = vmatprep.subr.bf16.mxu0 0
      %2031 = vmatpush1.bf16.msra.mxu0 %v2028
      %2032 = vmatprep.subr.bf16.mxu0 0
      %2033 = vmatpush1.bf16.msra.mxu0 0
      %2034 = vmatprep.subr.bf16.mxu0 0
      %2035 = vmatpush1.bf16.msra.mxu0 0
      %2036 = vmatprep.subr.bf16.mxu0 0
      %2037 = vmatpush1.bf16.msra.mxu0 0
      %2038 = vmatprep.subr.bf16.mxu0 0
      %2039 = vmatpush1.bf16.msra.mxu0 0
      %2040 = vmatprep.subr.bf16.mxu0 0
      %2041 = vmatpush1.bf16.msra.mxu0 0
      %2042 = vmatprep.subr.bf16.mxu0 0
      %2043 = vmatpush1.bf16.msra.mxu0 0
      %2044 = vmatprep.subr.bf16.mxu0 0
      %2045 = vmatpush1.bf16.msra.mxu0 0
      %2046 = vmatprep.subr.bf16.mxu0 0
      %2047 = vmatpush1.bf16.msra.mxu0 0
      %2048 = vmatprep.subr.bf16.mxu0 0
      %2049 = vmatpush1.bf16.msra.mxu0 0
      %2050 = vmatprep.subr.bf16.mxu0 0
      %2051 = vmatpush1.bf16.msra.mxu0 0
      %2052 = vmatprep.subr.bf16.mxu0 0
      %2053 = vmatpush1.bf16.msra.mxu0 0
      %2054 = vmatprep.subr.bf16.mxu0 0
      %2055 = vmatpush1.bf16.msra.mxu0 0
      %2056 = vmatprep.subr.bf16.mxu0 0
      %2057 = vmatpush1.bf16.msra.mxu0 0
      %2058 = vmatprep.subr.bf16.mxu0 0
      %2059 = vmatpush1.bf16.msra.mxu0 0
      %2060 = vmatprep.subr.bf16.mxu0 0
      %2061 = vmatpush1.bf16.msra.mxu0 0
      %2062 = vmatprep.mubr.bf16.mxu0 0
      %2063 = vmatmul.mubr.bf16.gmra.mrb[0].mxu0 %v562
      %v2064 = vpop.f32.mrb[0].mxu0
      %v2065 = vadd.f32 %v437, %v2064
      %v2066 = vpop.f32.mrb[0].mxu0
      %v2067 = vpop.f32.mrb[0].mxu0
      %v2068 = vpop.f32.mrb[0].mxu0
      %2069 = vdwg.mxu0
      %v2070 = vmul.f32 %v2065, %v2065
      %v2071 = vmul.f32 %v2065, %v2070
      %v2072 = vmul.f32 %v2071, 0.044715
      %v2073 = vadd.f32 %v2065, %v2072
      %v2074 = vmul.f32 %v2073, 0.7978846
      %v2075 = vtanh.pop %v2074
      %v2076 = vadd.f32 %v2075, 1.0
      %v2077 = vmul.f32 %v2076, 0.5
      %v2078 = vmul.f32 %v2065, %v2077
      %v2079 = vpack.c.bf16 %v2078, %v2078
      %v2081 = vand.u32 %v2079, %v631
      %2083 = vmatprep.subr.bf16.mxu0 0
      %2084 = vmatpush1.bf16.msra.mxu0 %v2081
      %2085 = vmatprep.subr.bf16.mxu0 0
      %2086 = vmatpush1.bf16.msra.mxu0 0
      %2087 = vmatprep.subr.bf16.mxu0 0
      %2088 = vmatpush1.bf16.msra.mxu0 0
      %2089 = vmatprep.subr.bf16.mxu0 0
      %2090 = vmatpush1.bf16.msra.mxu0 0
      %2091 = vmatprep.subr.bf16.mxu0 0
      %2092 = vmatpush1.bf16.msra.mxu0 0
      %2093 = vmatprep.subr.bf16.mxu0 0
      %2094 = vmatpush1.bf16.msra.mxu0 0
      %2095 = vmatprep.subr.bf16.mxu0 0
      %2096 = vmatpush1.bf16.msra.mxu0 0
      %2097 = vmatprep.subr.bf16.mxu0 0
      %2098 = vmatpush1.bf16.msra.mxu0 0
      %2099 = vmatprep.subr.bf16.mxu0 0
      %2100 = vmatpush1.bf16.msra.mxu0 0
      %2101 = vmatprep.subr.bf16.mxu0 0
      %2102 = vmatpush1.bf16.msra.mxu0 0
      %2103 = vmatprep.subr.bf16.mxu0 0
      %2104 = vmatpush1.bf16.msra.mxu0 0
      %2105 = vmatprep.subr.bf16.mxu0 0
      %2106 = vmatpush1.bf16.msra.mxu0 0
      %2107 = vmatprep.subr.bf16.mxu0 0
      %2108 = vmatpush1.bf16.msra.mxu0 0
      %2109 = vmatprep.subr.bf16.mxu0 0
      %2110 = vmatpush1.bf16.msra.mxu0 0
      %2111 = vmatprep.subr.bf16.mxu0 0
      %2112 = vmatpush1.bf16.msra.mxu0 0
      %2113 = vmatprep.subr.bf16.mxu0 0
      %2114 = vmatpush1.bf16.msra.mxu0 0
      %2115 = vmatprep.mubr.bf16.mxu0 0
      %2116 = vmatmul.mubr.bf16.gmra.mrb[0].mxu0 %v626
      %v2117 = vpop.f32.mrb[0].mxu0
      %v2118 = vadd.f32 %v622, %v2117
      %v2119 = vpop.f32.mrb[0].mxu0
      %v2120 = vpop.f32.mrb[0].mxu0
      %v2121 = vpop.f32.mrb[0].mxu0
      %2122 = vdwg.mxu0
      %v2123 = vmul.f32 %v2118, %v2118
      %v2124 = vmul.f32 %v2118, %v2123
      %v2125 = vmul.f32 %v2124, 0.044715
      %v2126 = vadd.f32 %v2118, %v2125
      %v2127 = vmul.f32 %v2126, 0.7978846
      %v2128 = vtanh.pop %v2127
      %v2129 = vadd.f32 %v2128, 1.0
      %v2130 = vmul.f32 %v2129, 0.5
      %v2131 = vmul.f32 %v2118, %v2130
      %v2132 = vmax.f32 %v1925, %v2131
      %v2133 = vlaneseq
      %v2134 = vshrl.u32 %v2133, 7
      %v2135 = vsub.s32 0, %v2134
      %v2136 = vrot.slane %v386, %v2135
      %vm2137 = vcmp.eq.s32.totalorder %v443, %v2136
      %vm2138 = vcmp.eq.s32.totalorder %v444, %v2136
      %vm2139 = vcmp.eq.s32.totalorder %v445, %v2136
      %vm2140 = vcmp.eq.s32.totalorder %v446, %v2136
      %vm2141 = vcmp.eq.s32.totalorder %v447, %v2136
      %vm2142 = vcmp.eq.s32.totalorder %v448, %v2136
      %vm2143 = vcmp.eq.s32.totalorder %v449, %v2136
      %vm2144 = vcmp.eq.s32.totalorder %v450, %v2136
      %vm2145 = vcmp.eq.s32.totalorder %v451, %v2136
      %vm2146 = vcmp.eq.s32.totalorder %v452, %v2136
      %vm2147 = vcmp.eq.s32.totalorder %v453, %v2136
      %vm2148 = vcmp.eq.s32.totalorder %v454, %v2136
      %vm2149 = vcmp.eq.s32.totalorder %v455, %v2136
      %vm2150 = vcmp.eq.s32.totalorder %v456, %v2136
      %vm2151 = vcmp.eq.s32.totalorder %v457, %v2136
      %vm2152 = vcmp.eq.s32.totalorder %v458, %v2136
      %v2153 = vsel %vm2137, 1, 0
      %v2154 = vsel %vm2138, 1, 0
      %v2155 = vsel %vm2139, 1, 0
      %v2156 = vsel %vm2140, 1, 0
      %v2157 = vsel %vm2141, 1, 0
      %v2158 = vsel %vm2142, 1, 0
      %v2159 = vsel %vm2143, 1, 0
      %v2160 = vsel %vm2144, 1, 0
      %v2161 = vsel %vm2145, 1, 0
      %v2162 = vsel %vm2146, 1, 0
      %v2163 = vsel %vm2147, 1, 0
      %v2164 = vsel %vm2148, 1, 0
      %v2165 = vsel %vm2149, 1, 0
      %v2166 = vsel %vm2150, 1, 0
      %v2167 = vsel %vm2151, 1, 0
      %v2168 = vsel %vm2152, 1, 0
      %v2169 = vcvt.s32.f32 %v2153
      %v2170 = vcvt.s32.f32 %v2154
      %v2171 = vcvt.s32.f32 %v2155
      %v2172 = vcvt.s32.f32 %v2156
      %v2173 = vcvt.s32.f32 %v2157
      %v2174 = vcvt.s32.f32 %v2158
      %v2175 = vcvt.s32.f32 %v2159
      %v2176 = vcvt.s32.f32 %v2160
      %v2177 = vcvt.s32.f32 %v2161
      %v2178 = vcvt.s32.f32 %v2162
      %v2179 = vcvt.s32.f32 %v2163
      %v2180 = vcvt.s32.f32 %v2164
      %v2181 = vcvt.s32.f32 %v2165
      %v2182 = vcvt.s32.f32 %v2166
      %v2183 = vcvt.s32.f32 %v2167
      %v2184 = vcvt.s32.f32 %v2168
      %v2185 = vpack.c.bf16 %v2170, %v2169
      %v2186 = vpack.c.bf16 %v2172, %v2171
      %v2187 = vpack.c.bf16 %v2174, %v2173
      %v2188 = vpack.c.bf16 %v2176, %v2175
      %v2189 = vpack.c.bf16 %v2178, %v2177
      %v2190 = vpack.c.bf16 %v2180, %v2179
      %v2191 = vpack.c.bf16 %v2182, %v2181
      %v2192 = vpack.c.bf16 %v2184, %v2183
      %2193 = vmatprep.subr.bf16.mxu0 0
      %2194 = vmatpush1.bf16.msra.mxu0 %v2185
      %2195 = vmatprep.subr.bf16.mxu0 0
      %2196 = vmatpush1.bf16.msra.mxu0 %v2186
      %2197 = vmatprep.subr.bf16.mxu0 0
      %2198 = vmatpush1.bf16.msra.mxu0 %v2187
      %2199 = vmatprep.subr.bf16.mxu0 0
      %2200 = vmatpush1.bf16.msra.mxu0 %v2188
      %2201 = vmatprep.subr.bf16.mxu0 0
      %2202 = vmatpush1.bf16.msra.mxu0 %v2189
      %2203 = vmatprep.subr.bf16.mxu0 0
      %2204 = vmatpush1.bf16.msra.mxu0 %v2190
      %2205 = vmatprep.subr.bf16.mxu0 0
      %2206 = vmatpush1.bf16.msra.mxu0 %v2191
      %2207 = vmatprep.subr.bf16.mxu0 0
      %2208 = vmatpush1.bf16.msra.mxu0 %v2192
      %2209 = vmatprep.subr.bf16.mxu0 0
      %2210 = vmatpush1.bf16.msra.mxu0 0
      %2211 = vmatprep.subr.bf16.mxu0 0
      %2212 = vmatpush1.bf16.msra.mxu0 0
      %2213 = vmatprep.subr.bf16.mxu0 0
      %2214 = vmatpush1.bf16.msra.mxu0 0
      %2215 = vmatprep.subr.bf16.mxu0 0
      %2216 = vmatpush1.bf16.msra.mxu0 0
      %2217 = vmatprep.subr.bf16.mxu0 0
      %2218 = vmatpush1.bf16.msra.mxu0 0
      %2219 = vmatprep.subr.bf16.mxu0 0
      %2220 = vmatpush1.bf16.msra.mxu0 0
      %2221 = vmatprep.subr.bf16.mxu0 0
      %2222 = vmatpush1.bf16.msra.mxu0 0
      %2223 = vmatprep.subr.bf16.mxu0 0
      %2224 = vmatpush1.bf16.msra.mxu0 0
      %2225 = vmatprep.mubr.bf16.mxu0 0
      %2226 = vmatmul.mubr.bf16.gmra.mrb[0].mxu0 %v382
      %v2227 = vpop.f32.mrb[0].mxu0
      %v2228 = vadd.f32 0.0, %v2227
      %v2229 = vpop.f32.mrb[0].mxu0
      %v2230 = vpop.f32.mrb[0].mxu0
      %v2231 = vpop.f32.mrb[0].mxu0
      %2232 = vdwg.mxu0
      %v2233 = vpack.c.bf16 %v2228, %v2228
      %v2235 = vsel %vm398, %v2233, 0
      %2237 = vmatprep.subr.bf16.mxu0 0
      %2238 = vmatpush1.bf16.msra.mxu0 %v2235
      %2239 = vmatprep.subr.bf16.mxu0 0
      %2240 = vmatpush1.bf16.msra.mxu0 0
      %2241 = vmatprep.subr.bf16.mxu0 0
      %2242 = vmatpush1.bf16.msra.mxu0 0
      %2243 = vmatprep.subr.bf16.mxu0 0
      %2244 = vmatpush1.bf16.msra.mxu0 0
      %2245 = vmatprep.subr.bf16.mxu0 0
      %2246 = vmatpush1.bf16.msra.mxu0 0
      %2247 = vmatprep.subr.bf16.mxu0 0
      %2248 = vmatpush1.bf16.msra.mxu0 0
      %2249 = vmatprep.subr.bf16.mxu0 0
      %2250 = vmatpush1.bf16.msra.mxu0 0
      %2251 = vmatprep.subr.bf16.mxu0 0
      %2252 = vmatpush1.bf16.msra.mxu0 0
      %2253 = vmatprep.subr.bf16.mxu0 0
      %2254 = vmatpush1.bf16.msra.mxu0 0
      %2255 = vmatprep.subr.bf16.mxu0 0
      %2256 = vmatpush1.bf16.msra.mxu0 0
      %2257 = vmatprep.subr.bf16.mxu0 0
      %2258 = vmatpush1.bf16.msra.mxu0 0
      %2259 = vmatprep.subr.bf16.mxu0 0
      %2260 = vmatpush1.bf16.msra.mxu0 0
      %2261 = vmatprep.subr.bf16.mxu0 0
      %2262 = vmatpush1.bf16.msra.mxu0 0
      %2263 = vmatprep.subr.bf16.mxu0 0
      %2264 = vmatpush1.bf16.msra.mxu0 0
      %2265 = vmatprep.subr.bf16.mxu0 0
      %2266 = vmatpush1.bf16.msra.mxu0 0
      %2267 = vmatprep.subr.bf16.mxu0 0
      %2268 = vmatpush1.bf16.msra.mxu0 0
      %2269 = vmatprep.mubr.bf16.mxu0 0
      %2270 = vmatmul.mubr.bf16.gmra.mrb[0].mxu0 %v562
      %v2271 = vpop.f32.mrb[0].mxu0
      %v2272 = vadd.f32 %v437, %v2271
      %v2273 = vpop.f32.mrb[0].mxu0
      %v2274 = vpop.f32.mrb[0].mxu0
      %v2275 = vpop.f32.mrb[0].mxu0
      %2276 = vdwg.mxu0
      %v2277 = vmul.f32 %v2272, %v2272
      %v2278 = vmul.f32 %v2272, %v2277
      %v2279 = vmul.f32 %v2278, 0.044715
      %v2280 = vadd.f32 %v2272, %v2279
      %v2281 = vmul.f32 %v2280, 0.7978846
      %v2282 = vtanh.pop %v2281
      %v2283 = vadd.f32 %v2282, 1.0
      %v2284 = vmul.f32 %v2283, 0.5
      %v2285 = vmul.f32 %v2272, %v2284
      %v2286 = vpack.c.bf16 %v2285, %v2285
      %v2288 = vand.u32 %v2286, %v631
      %2290 = vmatprep.subr.bf16.mxu0 0
      %2291 = vmatpush1.bf16.msra.mxu0 %v2288
      %2292 = vmatprep.subr.bf16.mxu0 0
      %2293 = vmatpush1.bf16.msra.mxu0 0
      %2294 = vmatprep.subr.bf16.mxu0 0
      %2295 = vmatpush1.bf16.msra.mxu0 0
      %2296 = vmatprep.subr.bf16.mxu0 0
      %2297 = vmatpush1.bf16.msra.mxu0 0
      %2298 = vmatprep.subr.bf16.mxu0 0
      %2299 = vmatpush1.bf16.msra.mxu0 0
      %2300 = vmatprep.subr.bf16.mxu0 0
      %2301 = vmatpush1.bf16.msra.mxu0 0
      %2302 = vmatprep.subr.bf16.mxu0 0
      %2303 = vmatpush1.bf16.msra.mxu0 0
      %2304 = vmatprep.subr.bf16.mxu0 0
      %2305 = vmatpush1.bf16.msra.mxu0 0
      %2306 = vmatprep.subr.bf16.mxu0 0
      %2307 = vmatpush1.bf16.msra.mxu0 0
      %2308 = vmatprep.subr.bf16.mxu0 0
      %2309 = vmatpush1.bf16.msra.mxu0 0
      %2310 = vmatprep.subr.bf16.mxu0 0
      %2311 = vmatpush1.bf16.msra.mxu0 0
      %2312 = vmatprep.subr.bf16.mxu0 0
      %2313 = vmatpush1.bf16.msra.mxu0 0
      %2314 = vmatprep.subr.bf16.mxu0 0
      %2315 = vmatpush1.bf16.msra.mxu0 0
      %2316 = vmatprep.subr.bf16.mxu0 0
      %2317 = vmatpush1.bf16.msra.mxu0 0
      %2318 = vmatprep.subr.bf16.mxu0 0
      %2319 = vmatpush1.bf16.msra.mxu0 0
      %2320 = vmatprep.subr.bf16.mxu0 0
      %2321 = vmatpush1.bf16.msra.mxu0 0
      %2322 = vmatprep.mubr.bf16.mxu0 0
      %2323 = vmatmul.mubr.bf16.gmra.mrb[0].mxu0 %v626
      %v2324 = vpop.f32.mrb[0].mxu0
      %v2325 = vadd.f32 %v622, %v2324
      %v2326 = vpop.f32.mrb[0].mxu0
      %v2327 = vpop.f32.mrb[0].mxu0
      %v2328 = vpop.f32.mrb[0].mxu0
      %2329 = vdwg.mxu0
      %v2330 = vmul.f32 %v2325, %v2325
      %v2331 = vmul.f32 %v2325, %v2330
      %v2332 = vmul.f32 %v2331, 0.044715
      %v2333 = vadd.f32 %v2325, %v2332
      %v2334 = vmul.f32 %v2333, 0.7978846
      %v2335 = vtanh.pop %v2334
      %v2336 = vadd.f32 %v2335, 1.0
      %v2337 = vmul.f32 %v2336, 0.5
      %v2338 = vmul.f32 %v2325, %v2337
      %v2339 = vmax.f32 %v2132, %v2338
      %v2340 = vlaneseq
      %v2341 = vshrl.u32 %v2340, 7
      %v2342 = vsub.s32 1, %v2341
      %v2343 = vrot.slane %v386, %v2342
      %vm2344 = vcmp.eq.s32.totalorder %v443, %v2343
      %vm2345 = vcmp.eq.s32.totalorder %v444, %v2343
      %vm2346 = vcmp.eq.s32.totalorder %v445, %v2343
      %vm2347 = vcmp.eq.s32.totalorder %v446, %v2343
      %vm2348 = vcmp.eq.s32.totalorder %v447, %v2343
      %vm2349 = vcmp.eq.s32.totalorder %v448, %v2343
      %vm2350 = vcmp.eq.s32.totalorder %v449, %v2343
      %vm2351 = vcmp.eq.s32.totalorder %v450, %v2343
      %vm2352 = vcmp.eq.s32.totalorder %v451, %v2343
      %vm2353 = vcmp.eq.s32.totalorder %v452, %v2343
      %vm2354 = vcmp.eq.s32.totalorder %v453, %v2343
      %vm2355 = vcmp.eq.s32.totalorder %v454, %v2343
      %vm2356 = vcmp.eq.s32.totalorder %v455, %v2343
      %vm2357 = vcmp.eq.s32.totalorder %v456, %v2343
      %vm2358 = vcmp.eq.s32.totalorder %v457, %v2343
      %vm2359 = vcmp.eq.s32.totalorder %v458, %v2343
      %v2360 = vsel %vm2344, 1, 0
      %v2361 = vsel %vm2345, 1, 0
      %v2362 = vsel %vm2346, 1, 0
      %v2363 = vsel %vm2347, 1, 0
      %v2364 = vsel %vm2348, 1, 0
      %v2365 = vsel %vm2349, 1, 0
      %v2366 = vsel %vm2350, 1, 0
      %v2367 = vsel %vm2351, 1, 0
      %v2368 = vsel %vm2352, 1, 0
      %v2369 = vsel %vm2353, 1, 0
      %v2370 = vsel %vm2354, 1, 0
      %v2371 = vsel %vm2355, 1, 0
      %v2372 = vsel %vm2356, 1, 0
      %v2373 = vsel %vm2357, 1, 0
      %v2374 = vsel %vm2358, 1, 0
      %v2375 = vsel %vm2359, 1, 0
      %v2376 = vcvt.s32.f32 %v2360
      %v2377 = vcvt.s32.f32 %v2361
      %v2378 = vcvt.s32.f32 %v2362
      %v2379 = vcvt.s32.f32 %v2363
      %v2380 = vcvt.s32.f32 %v2364
      %v2381 = vcvt.s32.f32 %v2365
      %v2382 = vcvt.s32.f32 %v2366
      %v2383 = vcvt.s32.f32 %v2367
      %v2384 = vcvt.s32.f32 %v2368
      %v2385 = vcvt.s32.f32 %v2369
      %v2386 = vcvt.s32.f32 %v2370
      %v2387 = vcvt.s32.f32 %v2371
      %v2388 = vcvt.s32.f32 %v2372
      %v2389 = vcvt.s32.f32 %v2373
      %v2390 = vcvt.s32.f32 %v2374
      %v2391 = vcvt.s32.f32 %v2375
      %v2392 = vpack.c.bf16 %v2377, %v2376
      %v2393 = vpack.c.bf16 %v2379, %v2378
      %v2394 = vpack.c.bf16 %v2381, %v2380
      %v2395 = vpack.c.bf16 %v2383, %v2382
      %v2396 = vpack.c.bf16 %v2385, %v2384
      %v2397 = vpack.c.bf16 %v2387, %v2386
      %v2398 = vpack.c.bf16 %v2389, %v2388
      %v2399 = vpack.c.bf16 %v2391, %v2390
      %2400 = vmatprep.subr.bf16.mxu0 0
      %2401 = vmatpush1.bf16.msra.mxu0 %v2392
      %2402 = vmatprep.subr.bf16.mxu0 0
      %2403 = vmatpush1.bf16.msra.mxu0 %v2393
      %2404 = vmatprep.subr.bf16.mxu0 0
      %2405 = vmatpush1.bf16.msra.mxu0 %v2394
      %2406 = vmatprep.subr.bf16.mxu0 0
      %2407 = vmatpush1.bf16.msra.mxu0 %v2395
      %2408 = vmatprep.subr.bf16.mxu0 0
      %2409 = vmatpush1.bf16.msra.mxu0 %v2396
      %2410 = vmatprep.subr.bf16.mxu0 0
      %2411 = vmatpush1.bf16.msra.mxu0 %v2397
      %2412 = vmatprep.subr.bf16.mxu0 0
      %2413 = vmatpush1.bf16.msra.mxu0 %v2398
      %2414 = vmatprep.subr.bf16.mxu0 0
      %2415 = vmatpush1.bf16.msra.mxu0 %v2399
      %2416 = vmatprep.subr.bf16.mxu0 0
      %2417 = vmatpush1.bf16.msra.mxu0 0
      %2418 = vmatprep.subr.bf16.mxu0 0
      %2419 = vmatpush1.bf16.msra.mxu0 0
      %2420 = vmatprep.subr.bf16.mxu0 0
      %2421 = vmatpush1.bf16.msra.mxu0 0
      %2422 = vmatprep.subr.bf16.mxu0 0
      %2423 = vmatpush1.bf16.msra.mxu0 0
      %2424 = vmatprep.subr.bf16.mxu0 0
      %2425 = vmatpush1.bf16.msra.mxu0 0
      %2426 = vmatprep.subr.bf16.mxu0 0
      %2427 = vmatpush1.bf16.msra.mxu0 0
      %2428 = vmatprep.subr.bf16.mxu0 0
      %2429 = vmatpush1.bf16.msra.mxu0 0
      %2430 = vmatprep.subr.bf16.mxu0 0
      %2431 = vmatpush1.bf16.msra.mxu0 0
      %2432 = vmatprep.mubr.bf16.mxu0 0
      %2433 = vmatmul.mubr.bf16.gmra.mrb[0].mxu0 %v382
      %v2434 = vpop.f32.mrb[0].mxu0
      %v2435 = vadd.f32 0.0, %v2434
      %v2436 = vpop.f32.mrb[0].mxu0
      %v2437 = vpop.f32.mrb[0].mxu0
      %v2438 = vpop.f32.mrb[0].mxu0
      %2439 = vdwg.mxu0
      %v2440 = vpack.c.bf16 %v2435, %v2435
      %v2442 = vsel %vm398, %v2440, 0
      %2444 = vmatprep.subr.bf16.mxu0 0
      %2445 = vmatpush1.bf16.msra.mxu0 %v2442
      %2446 = vmatprep.subr.bf16.mxu0 0
      %2447 = vmatpush1.bf16.msra.mxu0 0
      %2448 = vmatprep.subr.bf16.mxu0 0
      %2449 = vmatpush1.bf16.msra.mxu0 0
      %2450 = vmatprep.subr.bf16.mxu0 0
      %2451 = vmatpush1.bf16.msra.mxu0 0
      %2452 = vmatprep.subr.bf16.mxu0 0
      %2453 = vmatpush1.bf16.msra.mxu0 0
      %2454 = vmatprep.subr.bf16.mxu0 0
      %2455 = vmatpush1.bf16.msra.mxu0 0
      %2456 = vmatprep.subr.bf16.mxu0 0
      %2457 = vmatpush1.bf16.msra.mxu0 0
      %2458 = vmatprep.subr.bf16.mxu0 0
      %2459 = vmatpush1.bf16.msra.mxu0 0
      %2460 = vmatprep.subr.bf16.mxu0 0
      %2461 = vmatpush1.bf16.msra.mxu0 0
      %2462 = vmatprep.subr.bf16.mxu0 0
      %2463 = vmatpush1.bf16.msra.mxu0 0
      %2464 = vmatprep.subr.bf16.mxu0 0
      %2465 = vmatpush1.bf16.msra.mxu0 0
      %2466 = vmatprep.subr.bf16.mxu0 0
      %2467 = vmatpush1.bf16.msra.mxu0 0
      %2468 = vmatprep.subr.bf16.mxu0 0
      %2469 = vmatpush1.bf16.msra.mxu0 0
      %2470 = vmatprep.subr.bf16.mxu0 0
      %2471 = vmatpush1.bf16.msra.mxu0 0
      %2472 = vmatprep.subr.bf16.mxu0 0
      %2473 = vmatpush1.bf16.msra.mxu0 0
      %2474 = vmatprep.subr.bf16.mxu0 0
      %2475 = vmatpush1.bf16.msra.mxu0 0
      %2476 = vmatprep.mubr.bf16.mxu0 0
      %2477 = vmatmul.mubr.bf16.gmra.mrb[0].mxu0 %v562
      %v2478 = vpop.f32.mrb[0].mxu0
      %v2479 = vadd.f32 %v437, %v2478
      %v2480 = vpop.f32.mrb[0].mxu0
      %v2481 = vpop.f32.mrb[0].mxu0
      %v2482 = vpop.f32.mrb[0].mxu0
      %2483 = vdwg.mxu0
      %v2484 = vmul.f32 %v2479, %v2479
      %v2485 = vmul.f32 %v2479, %v2484
      %v2486 = vmul.f32 %v2485, 0.044715
      %v2487 = vadd.f32 %v2479, %v2486
      %v2488 = vmul.f32 %v2487, 0.7978846
      %v2489 = vtanh.pop %v2488
      %v2490 = vadd.f32 %v2489, 1.0
      %v2491 = vmul.f32 %v2490, 0.5
      %v2492 = vmul.f32 %v2479, %v2491
      %v2493 = vpack.c.bf16 %v2492, %v2492
      %v2495 = vand.u32 %v2493, %v631
      %2497 = vmatprep.subr.bf16.mxu0 0
      %2498 = vmatpush1.bf16.msra.mxu0 %v2495
      %2499 = vmatprep.subr.bf16.mxu0 0
      %2500 = vmatpush1.bf16.msra.mxu0 0
      %2501 = vmatprep.subr.bf16.mxu0 0
      %2502 = vmatpush1.bf16.msra.mxu0 0
      %2503 = vmatprep.subr.bf16.mxu0 0
      %2504 = vmatpush1.bf16.msra.mxu0 0
      %2505 = vmatprep.subr.bf16.mxu0 0
      %2506 = vmatpush1.bf16.msra.mxu0 0
      %2507 = vmatprep.subr.bf16.mxu0 0
      %2508 = vmatpush1.bf16.msra.mxu0 0
      %2509 = vmatprep.subr.bf16.mxu0 0
      %2510 = vmatpush1.bf16.msra.mxu0 0
      %2511 = vmatprep.subr.bf16.mxu0 0
      %2512 = vmatpush1.bf16.msra.mxu0 0
      %2513 = vmatprep.subr.bf16.mxu0 0
      %2514 = vmatpush1.bf16.msra.mxu0 0
      %2515 = vmatprep.subr.bf16.mxu0 0
      %2516 = vmatpush1.bf16.msra.mxu0 0
      %2517 = vmatprep.subr.bf16.mxu0 0
      %2518 = vmatpush1.bf16.msra.mxu0 0
      %2519 = vmatprep.subr.bf16.mxu0 0
      %2520 = vmatpush1.bf16.msra.mxu0 0
      %2521 = vmatprep.subr.bf16.mxu0 0
      %2522 = vmatpush1.bf16.msra.mxu0 0
      %2523 = vmatprep.subr.bf16.mxu0 0
      %2524 = vmatpush1.bf16.msra.mxu0 0
      %2525 = vmatprep.subr.bf16.mxu0 0
      %2526 = vmatpush1.bf16.msra.mxu0 0
      %2527 = vmatprep.subr.bf16.mxu0 0
      %2528 = vmatpush1.bf16.msra.mxu0 0
      %2529 = vmatprep.mubr.bf16.mxu0 0
      %2530 = vmatmul.mubr.bf16.gmra.mrb[0].mxu0 %v626
      %v2531 = vpop.f32.mrb[0].mxu0
      %v2532 = vadd.f32 %v622, %v2531
      %v2533 = vpop.f32.mrb[0].mxu0
      %v2534 = vpop.f32.mrb[0].mxu0
      %v2535 = vpop.f32.mrb[0].mxu0
      %2536 = vdwg.mxu0
      %v2537 = vmul.f32 %v2532, %v2532
      %v2538 = vmul.f32 %v2532, %v2537
      %v2539 = vmul.f32 %v2538, 0.044715
      %v2540 = vadd.f32 %v2532, %v2539
      %v2541 = vmul.f32 %v2540, 0.7978846
      %v2542 = vtanh.pop %v2541
      %v2543 = vadd.f32 %v2542, 1.0
      %v2544 = vmul.f32 %v2543, 0.5
      %v2545 = vmul.f32 %v2532, %v2544
      %v2546 = vmax.f32 %v2339, %v2545
      %2547 = vst [vmem:[%s379] sm:$0xff] %v2546
      %p2548 = scmp.lt.s32.totalorder %s23, 1
      %s2549 = scalar_select %p2548, %s23, 1
      %p2550 = scmp.lt.s32.totalorder %s24, 0
      %s2551 = scalar_select %p2550, %s24, 0
      %s2552 = sadd.s32 %s2551, %s2549
      %s2553 = smul.addr %s2552, 8
      %s2554 = scalar_lea.vmem %s8, %s2553
      // Predicated region
      $region53: #{_lambda_.6} parent=51 // pred_check
        %p2555 = pneg %p238
      $region54: #{_lambda_.6} parent=51 // pred_check_branch
        %2557 = sbr.rel (%p2555) target = $region56
      $region55: #{_lambda_.6} parent=51 // pred_region
        _
      $region56: #{_lambda_.6} parent=51 // pred_fallthru
        _
    $region52: #{_lambda_.6} parent=5 // pred_fallthru
      _
    %p2558 = scmp.le.s32.totalorder 2, %s14
    // Predicated region
    $region57: #{_lambda_.6} parent=5 // pred_check
      %p2559 = pneg %p2558
    $region58: #{_lambda_.6} parent=5 // pred_check_branch
      %2561 = sbr.rel (%p2559) target = $region60
    $region59: #{_lambda_.6} parent=5 // pred_region
      %s2562 = ssub.s32 %s14, 2
      // Predicated region
      $region61: #{_lambda_.6} parent=59 // pred_check
        %p2563 = pneg %p244
      $region62: #{_lambda_.6} parent=59 // pred_check_branch
        %2565 = sbr.rel (%p2563) target = $region64
      $region63: #{_lambda_.6} parent=59 // pred_region
        %p2566 = scmp.lt.s32.totalorder %s25, 1
        %s2567 = scalar_select %p2566, %s25, 1
        %p2568 = scmp.lt.s32.totalorder %s26, 0
        %s2569 = scalar_select %p2568, %s26, 0
        %s2570 = sadd.s32 %s2569, %s2567
        %s2571 = smul.addr %s2570, 8
        %s2572 = scalar_lea.vmem %s8, %s2571
      $region64: #{_lambda_.6} parent=59 // pred_fallthru
        _
    $region60: #{_lambda_.6} parent=5 // pred_fallthru
      _
  $region6: #{_lambda_.6} parent=0 // loop_footer
    %s18 = sadd.s32 1, %s14
  $region7: #{_lambda_.6} parent=0 // loop_footer_branch
    %13 = sbr.rel target = $region3
  $region8: #{_lambda_.6} parent=0 // loop_exit
    _

// kernel: _lambda_.8
$region0: #{_lambda_.8}
  #allocation0 [shape = 'u32[]', space=smem, size = 0x4, offset = 0x4, fixed_abs, tag = 'smem constant byte address 0x4 - core index']
  #allocation1 [shape = 'u32[144,128]{1,0:T(1,128)}', space=vmem, size = 0x12000, scoped, tag = 'internal scratch']
  %s0 = inlined_call_operand.vmem [shape: f32[2,8,128], index: 0, kind: input, shape index: {}, may-alias: {0,1}]
  %s1 = inlined_call_operand.vmem [shape: f32[2,8,128], index: 1, kind: input, shape index: {}, may-alias: {0,1}]
  %s2 = inlined_call_operand.vmem [shape: s32[2,10,128], index: 2, kind: input, shape index: {}]
  %s3 = inlined_call_operand.vmem [shape: bf16[22,8], index: 3, kind: input, shape index: {}]
  %s4 = inlined_call_operand.vmem [shape: bf16[22,8], index: 4, kind: input, shape index: {}]
  %s5 = inlined_call_operand.vmem [shape: f32[22,1], index: 5, kind: input, shape index: {}]
  %s6 = inlined_call_operand.vmem [shape: bf16[32,22], index: 6, kind: input, shape index: {}]
  %s7 = inlined_call_operand.vmem [shape: f32[32,1], index: 7, kind: input, shape index: {}]
  %s8 = inlined_call_operand.vmem [shape: f32[2,32,128], index: 8, kind: output, shape index: {}]
  %s9 = sld [smem:[#allocation0]]
  $region65: #{_lambda_.8} parent=0
    _
  %s11 = ssub.s32 1, %s9
  %s12 = scalar_select 0, %s11, %s9
  loop: start=0, step=1, limit=4
  $region2: #{_lambda_.8} parent=0 // loop_pre_header
    _
  $region3: #{_lambda_.8} parent=0 // loop_header
    %s14 = sphi 0, %s18
    %p15 = scmp.ge.s32.totalorder %s14, 4
    %s21 = sphi 0, %s33
    %s22 = sphi 0, %s29
    %s23 = sphi 0, %s21
    %s24 = sphi 0, %s22
    %s25 = sphi 0, %s23
    %s26 = sphi 0, %s24
    %s36 = sphi 0, %s38
    %s39 = sphi 0, %s36
    %s40 = sphi 0, %s39
    %s56 = sphi 0, %s40
    %s64 = sphi 0, %s66
    %s67 = sphi 0, %s64
    %s68 = sphi 0, %s67
    %s84 = sphi 0, %s68
    %s92 = sphi 0, %s94
    %s95 = sphi 0, %s92
    %s96 = sphi 0, %s95
    %s112 = sphi 0, %s96
    %s116 = sphi 0, %s116
    %s118 = sphi 0, %s116
    %s119 = sphi 0, %s118
    %s133 = sphi 0, %s119
    %s137 = sphi 0, %s137
    %s139 = sphi 0, %s137
    %s140 = sphi 0, %s139
    %s154 = sphi 0, %s140
    %s158 = sphi 0, %s158
    %s160 = sphi 0, %s158
    %s161 = sphi 0, %s160
    %s175 = sphi 0, %s161
    %s179 = sphi 0, %s179
    %s181 = sphi 0, %s179
    %s182 = sphi 0, %s181
    %s196 = sphi 0, %s182
    %s200 = sphi 0, %s200
    %s202 = sphi 0, %s200
    %s203 = sphi 0, %s202
    %s217 = sphi 0, %s203
    %s225 = sphi 0, %s227
    %s228 = sphi 0, %s225
    %s229 = sphi 0, %s228
    %s245 = sphi 0, %s229
  $region4: #{_lambda_.8} parent=0 // loop_header_branch
    %17 = sbr.rel (%p15) target = $region8
  $region5: #{_lambda_.8} parent=0 // loop_body
    %s19 = ssub.s32 %s14, 1
    %s20 = ssub.s32 %s14, 2
    %s27 = sadd.s32 1, %s22
    %p28 = scmp.ge.s32.totalorder %s27, 1
    %s29 = scalar_select %p28, 0, %s27
    %s30 = sadd.s32 1, %s21
    %s31 = scalar_select %p28, %s30, %s21
    %p32 = scmp.ge.s32.totalorder %s31, 2
    %s33 = scalar_select %p32, 0, %s31
    %s34 = ssub.s32 %s21, %s33
    %p35 = scmp.eq.s32.totalorder %s34, 0
    %s37 = sadd.s32 %s36, 1
    %s38 = scalar_select %p35, %s36, %s37
    %p41 = pneg %p35
    %p42 = scmp.eq.s32.totalorder %s14, 1
    %p43 = por %p41, %p42
    %p44 = scmp.ne.s32.totalorder %s36, %s39
    %p45 = scmp.eq.s32.totalorder %s14, 0
    %p46 = por %p44, %p45
    %p47 = scmp.ne.s32.totalorder %s36, %s39
    %p48 = scmp.eq.s32.totalorder %s19, 1
    %p49 = por %p47, %p48
    %p50 = scmp.ne.s32.totalorder %s39, %s40
    %p51 = scmp.eq.s32.totalorder %s19, 0
    %p52 = por %p50, %p51
    %p53 = scmp.ne.s32.totalorder %s39, %s40
    %p54 = scmp.eq.s32.totalorder %s20, 1
    %p55 = por %p53, %p54
    %p57 = scmp.ne.s32.totalorder %s40, %s56
    %p58 = scmp.eq.s32.totalorder %s20, 0
    %p59 = por %p57, %p58
    %s60 = ssub.s32 %s21, %s33
    %s61 = ssub.s32 %s22, %s29
    %s62 = sor.u32 %s60, %s61
    %p63 = scmp.eq.s32.totalorder %s62, 0
    %s65 = sadd.s32 %s64, 1
    %s66 = scalar_select %p63, %s64, %s65
    %p69 = pneg %p63
    %p70 = scmp.eq.s32.totalorder %s14, 1
    %p71 = por %p69, %p70
    %p72 = scmp.ne.s32.totalorder %s64, %s67
    %p73 = scmp.eq.s32.totalorder %s14, 0
    %p74 = por %p72, %p73
    %p75 = scmp.ne.s32.totalorder %s64, %s67
    %p76 = scmp.eq.s32.totalorder %s19, 1
    %p77 = por %p75, %p76
    %p78 = scmp.ne.s32.totalorder %s67, %s68
    %p79 = scmp.eq.s32.totalorder %s19, 0
    %p80 = por %p78, %p79
    %p81 = scmp.ne.s32.totalorder %s67, %s68
    %p82 = scmp.eq.s32.totalorder %s20, 1
    %p83 = por %p81, %p82
    %p85 = scmp.ne.s32.totalorder %s68, %s84
    %p86 = scmp.eq.s32.totalorder %s20, 0
    %p87 = por %p85, %p86
    %s88 = ssub.s32 %s21, %s33
    %s89 = ssub.s32 %s22, %s29
    %s90 = sor.u32 %s88, %s89
    %p91 = scmp.eq.s32.totalorder %s90, 0
    %s93 = sadd.s32 %s92, 1
    %s94 = scalar_select %p91, %s92, %s93
    %p97 = pneg %p91
    %p98 = scmp.eq.s32.totalorder %s14, 1
    %p99 = por %p97, %p98
    %p100 = scmp.ne.s32.totalorder %s92, %s95
    %p101 = scmp.eq.s32.totalorder %s14, 0
    %p102 = por %p100, %p101
    %p103 = scmp.ne.s32.totalorder %s92, %s95
    %p104 = scmp.eq.s32.totalorder %s19, 1
    %p105 = por %p103, %p104
    %p106 = scmp.ne.s32.totalorder %s95, %s96
    %p107 = scmp.eq.s32.totalorder %s19, 0
    %p108 = por %p106, %p107
    %p109 = scmp.ne.s32.totalorder %s95, %s96
    %p110 = scmp.eq.s32.totalorder %s20, 1
    %p111 = por %p109, %p110
    %p113 = scmp.ne.s32.totalorder %s96, %s112
    %p114 = scmp.eq.s32.totalorder %s20, 0
    %p115 = por %p113, %p114
    %s117 = sadd.s32 %s116, 1
    %p120 = scmp.eq.s32.totalorder %s14, 1
    %p121 = scmp.ne.s32.totalorder %s116, %s118
    %p122 = scmp.eq.s32.totalorder %s14, 0
    %p123 = por %p121, %p122
    %p124 = scmp.ne.s32.totalorder %s116, %s118
    %p125 = scmp.eq.s32.totalorder %s19, 1
    %p126 = por %p124, %p125
    %p127 = scmp.ne.s32.totalorder %s118, %s119
    %p128 = scmp.eq.s32.totalorder %s19, 0
    %p129 = por %p127, %p128
    %p130 = scmp.ne.s32.totalorder %s118, %s119
    %p131 = scmp.eq.s32.totalorder %s20, 1
    %p132 = por %p130, %p131
    %p134 = scmp.ne.s32.totalorder %s119, %s133
    %p135 = scmp.eq.s32.totalorder %s20, 0
    %p136 = por %p134, %p135
    %s138 = sadd.s32 %s137, 1
    %p141 = scmp.eq.s32.totalorder %s14, 1
    %p142 = scmp.ne.s32.totalorder %s137, %s139
    %p143 = scmp.eq.s32.totalorder %s14, 0
    %p144 = por %p142, %p143
    %p145 = scmp.ne.s32.totalorder %s137, %s139
    %p146 = scmp.eq.s32.totalorder %s19, 1
    %p147 = por %p145, %p146
    %p148 = scmp.ne.s32.totalorder %s139, %s140
    %p149 = scmp.eq.s32.totalorder %s19, 0
    %p150 = por %p148, %p149
    %p151 = scmp.ne.s32.totalorder %s139, %s140
    %p152 = scmp.eq.s32.totalorder %s20, 1
    %p153 = por %p151, %p152
    %p155 = scmp.ne.s32.totalorder %s140, %s154
    %p156 = scmp.eq.s32.totalorder %s20, 0
    %p157 = por %p155, %p156
    %s159 = sadd.s32 %s158, 1
    %p162 = scmp.eq.s32.totalorder %s14, 1
    %p163 = scmp.ne.s32.totalorder %s158, %s160
    %p164 = scmp.eq.s32.totalorder %s14, 0
    %p165 = por %p163, %p164
    %p166 = scmp.ne.s32.totalorder %s158, %s160
    %p167 = scmp.eq.s32.totalorder %s19, 1
    %p168 = por %p166, %p167
    %p169 = scmp.ne.s32.totalorder %s160, %s161
    %p170 = scmp.eq.s32.totalorder %s19, 0
    %p171 = por %p169, %p170
    %p172 = scmp.ne.s32.totalorder %s160, %s161
    %p173 = scmp.eq.s32.totalorder %s20, 1
    %p174 = por %p172, %p173
    %p176 = scmp.ne.s32.totalorder %s161, %s175
    %p177 = scmp.eq.s32.totalorder %s20, 0
    %p178 = por %p176, %p177
    %s180 = sadd.s32 %s179, 1
    %p183 = scmp.eq.s32.totalorder %s14, 1
    %p184 = scmp.ne.s32.totalorder %s179, %s181
    %p185 = scmp.eq.s32.totalorder %s14, 0
    %p186 = por %p184, %p185
    %p187 = scmp.ne.s32.totalorder %s179, %s181
    %p188 = scmp.eq.s32.totalorder %s19, 1
    %p189 = por %p187, %p188
    %p190 = scmp.ne.s32.totalorder %s181, %s182
    %p191 = scmp.eq.s32.totalorder %s19, 0
    %p192 = por %p190, %p191
    %p193 = scmp.ne.s32.totalorder %s181, %s182
    %p194 = scmp.eq.s32.totalorder %s20, 1
    %p195 = por %p193, %p194
    %p197 = scmp.ne.s32.totalorder %s182, %s196
    %p198 = scmp.eq.s32.totalorder %s20, 0
    %p199 = por %p197, %p198
    %s201 = sadd.s32 %s200, 1
    %p204 = scmp.eq.s32.totalorder %s14, 1
    %p205 = scmp.ne.s32.totalorder %s200, %s202
    %p206 = scmp.eq.s32.totalorder %s14, 0
    %p207 = por %p205, %p206
    %p208 = scmp.ne.s32.totalorder %s200, %s202
    %p209 = scmp.eq.s32.totalorder %s19, 1
    %p210 = por %p208, %p209
    %p211 = scmp.ne.s32.totalorder %s202, %s203
    %p212 = scmp.eq.s32.totalorder %s19, 0
    %p213 = por %p211, %p212
    %p214 = scmp.ne.s32.totalorder %s202, %s203
    %p215 = scmp.eq.s32.totalorder %s20, 1
    %p216 = por %p214, %p215
    %p218 = scmp.ne.s32.totalorder %s203, %s217
    %p219 = scmp.eq.s32.totalorder %s20, 0
    %p220 = por %p218, %p219
    %s221 = ssub.s32 %s21, %s33
    %s222 = ssub.s32 %s22, %s29
    %s223 = sor.u32 %s221, %s222
    %p224 = scmp.eq.s32.totalorder %s223, 0
    %s226 = sadd.s32 %s225, 1
    %s227 = scalar_select %p224, %s225, %s226
    %p230 = pneg %p224
    %p231 = scmp.eq.s32.totalorder %s14, 1
    %p232 = por %p230, %p231
    %p233 = scmp.ne.s32.totalorder %s225, %s228
    %p234 = scmp.eq.s32.totalorder %s14, 0
    %p235 = por %p233, %p234
    %p236 = scmp.ne.s32.totalorder %s225, %s228
    %p237 = scmp.eq.s32.totalorder %s19, 1
    %p238 = por %p236, %p237
    %p239 = scmp.ne.s32.totalorder %s228, %s229
    %p240 = scmp.eq.s32.totalorder %s19, 0
    %p241 = por %p239, %p240
    %p242 = scmp.ne.s32.totalorder %s228, %s229
    %p243 = scmp.eq.s32.totalorder %s20, 1
    %p244 = por %p242, %p243
    %p246 = scmp.ne.s32.totalorder %s229, %s245
    %p247 = scmp.eq.s32.totalorder %s20, 0
    %p248 = por %p246, %p247
    %p249 = scmp.le.s32.totalorder 1, %s14
    %p250 = scmp.lt.s32.totalorder %s14, 3
    %p251 = pnand %p249, %p250
    %p252 = pneg %p251
    // Predicated region
    $region9: #{_lambda_.8} parent=5 // pred_check
      _
    $region10: #{_lambda_.8} parent=5 // pred_check_branch
      %254 = sbr.rel (%p251) target = $region12
    $region11: #{_lambda_.8} parent=5 // pred_region
      %s255 = ssub.s32 %s14, 1
      // Predicated region
      $region13: #{_lambda_.8} parent=11 // pred_check
        %p256 = pneg %p129
      $region14: #{_lambda_.8} parent=11 // pred_check_branch
        %258 = sbr.rel (%p256) target = $region16
      $region15: #{_lambda_.8} parent=11 // pred_region
        _
      $region16: #{_lambda_.8} parent=11 // pred_fallthru
        _
      // Predicated region
      $region17: #{_lambda_.8} parent=11 // pred_check
        %p259 = pneg %p150
      $region18: #{_lambda_.8} parent=11 // pred_check_branch
        %261 = sbr.rel (%p259) target = $region20
      $region19: #{_lambda_.8} parent=11 // pred_region
        _
      $region20: #{_lambda_.8} parent=11 // pred_fallthru
        _
      // Predicated region
      $region21: #{_lambda_.8} parent=11 // pred_check
        %p262 = pneg %p171
      $region22: #{_lambda_.8} parent=11 // pred_check_branch
        %264 = sbr.rel (%p262) target = $region24
      $region23: #{_lambda_.8} parent=11 // pred_region
        _
      $region24: #{_lambda_.8} parent=11 // pred_fallthru
        _
      // Predicated region
      $region25: #{_lambda_.8} parent=11 // pred_check
        %p265 = pneg %p192
      $region26: #{_lambda_.8} parent=11 // pred_check_branch
        %267 = sbr.rel (%p265) target = $region28
      $region27: #{_lambda_.8} parent=11 // pred_region
        _
      $region28: #{_lambda_.8} parent=11 // pred_fallthru
        _
      // Predicated region
      $region29: #{_lambda_.8} parent=11 // pred_check
        %p268 = pneg %p213
      $region30: #{_lambda_.8} parent=11 // pred_check_branch
        %270 = sbr.rel (%p268) target = $region32
      $region31: #{_lambda_.8} parent=11 // pred_region
        _
      $region32: #{_lambda_.8} parent=11 // pred_fallthru
        _
    $region12: #{_lambda_.8} parent=5 // pred_fallthru
      _
    %p271 = scmp.lt.s32.totalorder %s14, 2
    // Predicated region
    $region33: #{_lambda_.8} parent=5 // pred_check
      %p272 = pneg %p271
    $region34: #{_lambda_.8} parent=5 // pred_check_branch
      %274 = sbr.rel (%p272) target = $region36
    $region35: #{_lambda_.8} parent=5 // pred_region
      // Predicated region
      $region37: #{_lambda_.8} parent=35 // pred_check
        %p275 = pneg %p46
      $region38: #{_lambda_.8} parent=35 // pred_check_branch
        %277 = sbr.rel (%p275) target = $region40
      $region39: #{_lambda_.8} parent=35 // pred_region
        %p278 = scmp.lt.s32.totalorder %s21, 1
        %s279 = scalar_select %p278, %s21, 1
        %s280 = smul.addr %s279, 8
        %s281 = scalar_lea.vmem %s0, %s280
      $region40: #{_lambda_.8} parent=35 // pred_fallthru
        _
      // Predicated region
      $region41: #{_lambda_.8} parent=35 // pred_check
        %p282 = pneg %p74
      $region42: #{_lambda_.8} parent=35 // pred_check_branch
        %284 = sbr.rel (%p282) target = $region44
      $region43: #{_lambda_.8} parent=35 // pred_region
        %p285 = scmp.lt.s32.totalorder %s21, 1
        %s286 = scalar_select %p285, %s21, 1
        %p287 = scmp.lt.s32.totalorder %s22, 0
        %s288 = scalar_select %p287, %s22, 0
        %s289 = sadd.s32 %s288, %s286
        %s290 = smul.addr %s289, 8
        %s291 = scalar_lea.vmem %s1, %s290
      $region44: #{_lambda_.8} parent=35 // pred_fallthru
        _
      // Predicated region
      $region45: #{_lambda_.8} parent=35 // pred_check
        %p292 = pneg %p102
      $region46: #{_lambda_.8} parent=35 // pred_check_branch
        %294 = sbr.rel (%p292) target = $region48
      $region47: #{_lambda_.8} parent=35 // pred_region
        %p295 = scmp.lt.s32.totalorder %s21, 1
        %s296 = scalar_select %p295, %s21, 1
        %p297 = scmp.lt.s32.totalorder %s22, 0
        %s298 = scalar_select %p297, %s22, 0
        %s299 = smul.addr %s296, 2
        %s300 = sadd.s32 %s298, %s299
        %s301 = smul.addr %s300, 8
        %s302 = scalar_lea.vmem %s2, %s301
      $region48: #{_lambda_.8} parent=35 // pred_fallthru
        _
    $region36: #{_lambda_.8} parent=5 // pred_fallthru
      _
    %p303 = scmp.le.s32.totalorder 1, %s14
    %p304 = scmp.lt.s32.totalorder %s14, 3
    %p305 = pnand %p303, %p304
    %p306 = pneg %p305
    // Predicated region
    $region49: #{_lambda_.8} parent=5 // pred_check
      _
    $region50: #{_lambda_.8} parent=5 // pred_check_branch
      %308 = sbr.rel (%p305) target = $region52
    $region51: #{_lambda_.8} parent=5 // pred_region
      %s309 = ssub.s32 %s14, 1
      %p310 = scmp.lt.s32.totalorder %s23, 1
      %s311 = scalar_select %p310, %s23, 1
      %s312 = smul.addr %s311, 8
      %s313 = scalar_lea.vmem %s0, %s312
      %p314 = pneg %p52
      %p315 = pneg %p49
      %p316 = scmp.lt.s32.totalorder %s23, 1
      %s317 = scalar_select %p316, %s23, 1
      %p318 = scmp.lt.s32.totalorder %s24, 0
      %s319 = scalar_select %p318, %s24, 0
      %s320 = sadd.s32 %s319, %s317
      %s321 = smul.addr %s320, 8
      %s322 = scalar_lea.vmem %s1, %s321
      %p323 = pneg %p80
      %p324 = pneg %p77
      %p325 = scmp.lt.s32.totalorder %s23, 1
      %s326 = scalar_select %p325, %s23, 1
      %p327 = scmp.lt.s32.totalorder %s24, 0
      %s328 = scalar_select %p327, %s24, 0
      %s329 = smul.addr %s326, 2
      %s330 = sadd.s32 %s328, %s329
      %s331 = smul.addr %s330, 8
      %s332 = scalar_lea.vmem %s2, %s331
      %p333 = pneg %p108
      %p334 = pneg %p105
      %p335 = pneg %p129
      %p336 = pneg %p126
      %p337 = pneg %p150
      %p338 = pneg %p147
      %p339 = pneg %p171
      %p340 = pneg %p168
      %p341 = pneg %p192
      %p342 = pneg %p189
      %p343 = pneg %p213
      %p344 = pneg %p210
      %p345 = pneg %p241
      %p346 = pneg %p238
      %p347 = scmp.lt.s32.totalorder %s23, 1
      %s348 = scalar_select %p347, %s23, 1
      %p349 = scmp.lt.s32.totalorder %s24, 0
      %s350 = scalar_select %p349, %s24, 0
      %s351 = smul.addr %s348, 4
      %s352 = sadd.s32 %s350, %s351
      %s353 = smul.addr %s352, 8
      %s354 = scalar_lea.vmem %s8, %s353
      %p355 = scmp.lt.s32.totalorder %s23, 1
      %s356 = scalar_select %p355, %s23, 1
      %s357 = smul.addr %s356, 8
      %s358 = scalar_lea.vmem %s0, %s357
      %p359 = scmp.lt.s32.totalorder %s23, 1
      %s360 = scalar_select %p359, %s23, 1
      %p361 = scmp.lt.s32.totalorder %s24, 0
      %s362 = scalar_select %p361, %s24, 0
      %s363 = sadd.s32 %s362, %s360
      %s364 = smul.addr %s363, 8
      %s365 = scalar_lea.vmem %s1, %s364
      %p366 = scmp.lt.s32.totalorder %s23, 1
      %s367 = scalar_select %p366, %s23, 1
      %p368 = scmp.lt.s32.totalorder %s24, 0
      %s369 = scalar_select %p368, %s24, 0
      %s370 = smul.addr %s367, 2
      %s371 = sadd.s32 %s369, %s370
      %s372 = smul.addr %s371, 8
      %s373 = scalar_lea.vmem %s2, %s372
      %p374 = scmp.lt.s32.totalorder %s23, 1
      %s375 = scalar_select %p374, %s23, 1
      %p376 = scmp.lt.s32.totalorder %s24, 0
      %s377 = scalar_select %p376, %s24, 0
      %s378 = smul.addr %s375, 4
      %s379 = sadd.s32 %s377, %s378
      %s380 = smul.addr %s379, 8
      %s381 = scalar_lea.vmem %s8, %s380
      %v383 = vld [vmem:[%s358] sm:$0xff]
      %v384 = vpack.c.bf16 %v383, %v383
      %v385 = vld [vmem:[%s365] sm:$0xff]
      %v386 = vpack.c.bf16 %v385, %v385
      %v387 = vld [vmem:[%s373] sm:$0xff]
      %v388 = vld [vmem:[%s373 + $0x8] sm:$0x3]
      %v389 = vld [vmem:[%s4] sm:$0xf]
      %v390 = vld [vmem:[%s4 + $0x4] sm:$0xf]
      %v391 = vld [vmem:[%s4 + $0x8] sm:$0x7]
      %v392 = vld [vmem:[%s5] sm:$0xff]
      %v393 = vld [vmem:[%s5 + $0x8] sm:$0xff]
      %v394 = vld [vmem:[%s5 + $0x10] sm:$0x3f]
      %396 = vset.pattern.permute.xlu0 0
      %397 = vperm.xlu0 %396, %v392
      %v398 = vpop.permute.xlu0 %397
      %401 = vset.pattern.permute.xlu0 0
      %402 = vperm.xlu0 %401, %v393
      %v403 = vpop.permute.xlu0 %402
      %406 = vset.pattern.permute.xlu0 0
      %407 = vperm.xlu0 %406, %v394
      %v408 = vpop.permute.xlu0 %407
      %v413 = vunpack.c.l.b16 %v389
      %v414 = vunpack.c.l.b16 %v390
      %v415 = vunpack.c.l.b16 %v391
      %v416 = vpack.c.b16 %v414, %v413
      %v417 = vpack.c.b16 %v415, %v415
      %vm418 = vcmask 64512
      %v420 = vsel %vm418, %v416, 0
      %v423 = vsel %vm418, %v417, 0
      %vm425 = vcmask 1043456
      %v427 = vsel %vm425, %v386, 0
      %429 = vmatprep.subr.bf16.mxu0 0
      %430 = vmatpush1.bf16.msra.mxu0 %v427
      %431 = vmatprep.subr.bf16.mxu0 0
      %432 = vmatpush1.bf16.msra.mxu0 0
      %433 = vmatprep.subr.bf16.mxu0 0
      %434 = vmatpush1.bf16.msra.mxu0 0
      %435 = vmatprep.subr.bf16.mxu0 0
      %436 = vmatpush1.bf16.msra.mxu0 0
      %437 = vmatprep.subr.bf16.mxu0 0
      %438 = vmatpush1.bf16.msra.mxu0 0
      %439 = vmatprep.subr.bf16.mxu0 0
      %440 = vmatpush1.bf16.msra.mxu0 0
      %441 = vmatprep.subr.bf16.mxu0 0
      %442 = vmatpush1.bf16.msra.mxu0 0
      %443 = vmatprep.subr.bf16.mxu0 0
      %444 = vmatpush1.bf16.msra.mxu0 0
      %445 = vmatprep.subr.bf16.mxu0 0
      %446 = vmatpush1.bf16.msra.mxu0 0
      %447 = vmatprep.subr.bf16.mxu0 0
      %448 = vmatpush1.bf16.msra.mxu0 0
      %449 = vmatprep.subr.bf16.mxu0 0
      %450 = vmatpush1.bf16.msra.mxu0 0
      %451 = vmatprep.subr.bf16.mxu0 0
      %452 = vmatpush1.bf16.msra.mxu0 0
      %453 = vmatprep.subr.bf16.mxu0 0
      %454 = vmatpush1.bf16.msra.mxu0 0
      %455 = vmatprep.subr.bf16.mxu0 0
      %456 = vmatpush1.bf16.msra.mxu0 0
      %457 = vmatprep.subr.bf16.mxu0 0
      %458 = vmatpush1.bf16.msra.mxu0 0
      %459 = vmatprep.subr.bf16.mxu0 0
      %460 = vmatpush1.bf16.msra.mxu0 0
      %461 = vmatprep.mubr.bf16.mxu0 0
      %462 = vmatmul.mubr.bf16.gmra.mrb[0].mxu0 %v420
      %v463 = vpop.f32.mrb[0].mxu0
      %v464 = vadd.f32 %v398, %v463
      %v465 = vpop.f32.mrb[0].mxu0
      %v466 = vpop.f32.mrb[0].mxu0
      %v467 = vadd.f32 %v403, %v466
      %v468 = vpop.f32.mrb[0].mxu0
      %469 = vmatprep.mubr.bf16.mxu0 0
      %470 = vmatmul.mubr.bf16.gmra.mrb[0].mxu0 %v423
      %v471 = vpop.f32.mrb[0].mxu0
      %v472 = vadd.f32 %v408, %v471
      %v473 = vpop.f32.mrb[0].mxu0
      %v474 = vpop.f32.mrb[0].mxu0
      %v475 = vpop.f32.mrb[0].mxu0
      %476 = vdwg.mxu0
      %v477 = vlaneseq
      %v478 = vshrl.u32 %v477, 7
      %v479 = vadd.s32 %v478, 8
      %v480 = vadd.s32 %v478, 16
      %v481 = vadd.s32 %v478, 24
      %v482 = vadd.s32 %v478, 32
      %v483 = vadd.s32 %v478, 40
      %v484 = vadd.s32 %v478, 48
      %v485 = vadd.s32 %v478, 56
      %v486 = vadd.s32 %v478, 64
      %v487 = vadd.s32 %v478, 72
      %v488 = vadd.s32 %v478, 80
      %v489 = vadd.s32 %v478, 88
      %v490 = vadd.s32 %v478, 96
      %v491 = vadd.s32 %v478, 104
      %v492 = vadd.s32 %v478, 112
      %v493 = vadd.s32 %v478, 120
      %v494 = vlaneseq
      %v495 = vshrl.u32 %v494, 7
      %v496 = vsub.s32 0, %v495
      %v497 = vrot.slane %v387, %v496
      %vm498 = vcmp.eq.s32.totalorder %v478, %v497
      %vm499 = vcmp.eq.s32.totalorder %v479, %v497
      %vm500 = vcmp.eq.s32.totalorder %v480, %v497
      %vm501 = vcmp.eq.s32.totalorder %v481, %v497
      %vm502 = vcmp.eq.s32.totalorder %v482, %v497
      %vm503 = vcmp.eq.s32.totalorder %v483, %v497
      %vm504 = vcmp.eq.s32.totalorder %v484, %v497
      %vm505 = vcmp.eq.s32.totalorder %v485, %v497
      %vm506 = vcmp.eq.s32.totalorder %v486, %v497
      %vm507 = vcmp.eq.s32.totalorder %v487, %v497
      %vm508 = vcmp.eq.s32.totalorder %v488, %v497
      %vm509 = vcmp.eq.s32.totalorder %v489, %v497
      %vm510 = vcmp.eq.s32.totalorder %v490, %v497
      %vm511 = vcmp.eq.s32.totalorder %v491, %v497
      %vm512 = vcmp.eq.s32.totalorder %v492, %v497
      %vm513 = vcmp.eq.s32.totalorder %v493, %v497
      %v514 = vsel %vm498, 1, 0
      %v515 = vsel %vm499, 1, 0
      %v516 = vsel %vm500, 1, 0
      %v517 = vsel %vm501, 1, 0
      %v518 = vsel %vm502, 1, 0
      %v519 = vsel %vm503, 1, 0
      %v520 = vsel %vm504, 1, 0
      %v521 = vsel %vm505, 1, 0
      %v522 = vsel %vm506, 1, 0
      %v523 = vsel %vm507, 1, 0
      %v524 = vsel %vm508, 1, 0
      %v525 = vsel %vm509, 1, 0
      %v526 = vsel %vm510, 1, 0
      %v527 = vsel %vm511, 1, 0
      %v528 = vsel %vm512, 1, 0
      %v529 = vsel %vm513, 1, 0
      %v530 = vcvt.s32.f32 %v514
      %v531 = vcvt.s32.f32 %v515
      %v532 = vcvt.s32.f32 %v516
      %v533 = vcvt.s32.f32 %v517
      %v534 = vcvt.s32.f32 %v518
      %v535 = vcvt.s32.f32 %v519
      %v536 = vcvt.s32.f32 %v520
      %v537 = vcvt.s32.f32 %v521
      %v538 = vcvt.s32.f32 %v522
      %v539 = vcvt.s32.f32 %v523
      %v540 = vcvt.s32.f32 %v524
      %v541 = vcvt.s32.f32 %v525
      %v542 = vcvt.s32.f32 %v526
      %v543 = vcvt.s32.f32 %v527
      %v544 = vcvt.s32.f32 %v528
      %v545 = vcvt.s32.f32 %v529
      %v546 = vpack.c.bf16 %v531, %v530
      %v547 = vpack.c.bf16 %v533, %v532
      %v548 = vpack.c.bf16 %v535, %v534
      %v549 = vpack.c.bf16 %v537, %v536
      %v550 = vpack.c.bf16 %v539, %v538
      %v551 = vpack.c.bf16 %v541, %v540
      %v552 = vpack.c.bf16 %v543, %v542
      %v553 = vpack.c.bf16 %v545, %v544
      %554 = vmatprep.subr.bf16.mxu0 0
      %555 = vmatpush1.bf16.msra.mxu0 %v546
      %556 = vmatprep.subr.bf16.mxu0 0
      %557 = vmatpush1.bf16.msra.mxu0 %v547
      %558 = vmatprep.subr.bf16.mxu0 0
      %559 = vmatpush1.bf16.msra.mxu0 %v548
      %560 = vmatprep.subr.bf16.mxu0 0
      %561 = vmatpush1.bf16.msra.mxu0 %v549
      %562 = vmatprep.subr.bf16.mxu0 0
      %563 = vmatpush1.bf16.msra.mxu0 %v550
      %564 = vmatprep.subr.bf16.mxu0 0
      %565 = vmatpush1.bf16.msra.mxu0 %v551
      %566 = vmatprep.subr.bf16.mxu0 0
      %567 = vmatpush1.bf16.msra.mxu0 %v552
      %568 = vmatprep.subr.bf16.mxu0 0
      %569 = vmatpush1.bf16.msra.mxu0 %v553
      %570 = vmatprep.subr.bf16.mxu0 0
      %571 = vmatpush1.bf16.msra.mxu0 0
      %572 = vmatprep.subr.bf16.mxu0 0
      %573 = vmatpush1.bf16.msra.mxu0 0
      %574 = vmatprep.subr.bf16.mxu0 0
      %575 = vmatpush1.bf16.msra.mxu0 0
      %576 = vmatprep.subr.bf16.mxu0 0
      %577 = vmatpush1.bf16.msra.mxu0 0
      %578 = vmatprep.subr.bf16.mxu0 0
      %579 = vmatpush1.bf16.msra.mxu0 0
      %580 = vmatprep.subr.bf16.mxu0 0
      %581 = vmatpush1.bf16.msra.mxu0 0
      %582 = vmatprep.subr.bf16.mxu0 0
      %583 = vmatpush1.bf16.msra.mxu0 0
      %584 = vmatprep.subr.bf16.mxu0 0
      %585 = vmatpush1.bf16.msra.mxu0 0
      %586 = vmatprep.mubr.bf16.mxu0 0
      %587 = vmatmul.mubr.bf16.gmra.mrb[0].mxu0 %v384
      %v588 = vpop.f32.mrb[0].mxu0
      %v589 = vadd.f32 0.0, %v588
      %v590 = vpop.f32.mrb[0].mxu0
      %v591 = vpop.f32.mrb[0].mxu0
      %v592 = vpop.f32.mrb[0].mxu0
      %593 = vdwg.mxu0
      %v594 = vld [vmem:[%s3] sm:$0xf]
      %v595 = vld [vmem:[%s3 + $0x4] sm:$0xf]
      %v596 = vld [vmem:[%s3 + $0x8] sm:$0x7]
      %v597 = vpack.c.bf16 %v589, %v589
      %v601 = vunpack.c.l.b16 %v594
      %v602 = vunpack.c.l.b16 %v595
      %v603 = vunpack.c.l.b16 %v596
      %v604 = vpack.c.b16 %v602, %v601
      %v605 = vpack.c.b16 %v603, %v603
      %v607 = vsel %vm418, %v604, 0
      %v610 = vsel %vm418, %v605, 0
      %v613 = vsel %vm425, %v597, 0
      %615 = vmatprep.subr.bf16.mxu0 0
      %616 = vmatpush1.bf16.msra.mxu0 %v613
      %617 = vmatprep.subr.bf16.mxu0 0
      %618 = vmatpush1.bf16.msra.mxu0 0
      %619 = vmatprep.subr.bf16.mxu0 0
      %620 = vmatpush1.bf16.msra.mxu0 0
      %621 = vmatprep.subr.bf16.mxu0 0
      %622 = vmatpush1.bf16.msra.mxu0 0
      %623 = vmatprep.subr.bf16.mxu0 0
      %624 = vmatpush1.bf16.msra.mxu0 0
      %625 = vmatprep.subr.bf16.mxu0 0
      %626 = vmatpush1.bf16.msra.mxu0 0
      %627 = vmatprep.subr.bf16.mxu0 0
      %628 = vmatpush1.bf16.msra.mxu0 0
      %629 = vmatprep.subr.bf16.mxu0 0
      %630 = vmatpush1.bf16.msra.mxu0 0
      %631 = vmatprep.subr.bf16.mxu0 0
      %632 = vmatpush1.bf16.msra.mxu0 0
      %633 = vmatprep.subr.bf16.mxu0 0
      %634 = vmatpush1.bf16.msra.mxu0 0
      %635 = vmatprep.subr.bf16.mxu0 0
      %636 = vmatpush1.bf16.msra.mxu0 0
      %637 = vmatprep.subr.bf16.mxu0 0
      %638 = vmatpush1.bf16.msra.mxu0 0
      %639 = vmatprep.subr.bf16.mxu0 0
      %640 = vmatpush1.bf16.msra.mxu0 0
      %641 = vmatprep.subr.bf16.mxu0 0
      %642 = vmatpush1.bf16.msra.mxu0 0
      %643 = vmatprep.subr.bf16.mxu0 0
      %644 = vmatpush1.bf16.msra.mxu0 0
      %645 = vmatprep.subr.bf16.mxu0 0
      %646 = vmatpush1.bf16.msra.mxu0 0
      %647 = vmatprep.mubr.bf16.mxu0 0
      %648 = vmatmul.mubr.bf16.gmra.mrb[0].mxu0 %v607
      %v649 = vpop.f32.mrb[0].mxu0
      %v650 = vadd.f32 %v464, %v649
      %v651 = vpop.f32.mrb[0].mxu0
      %v652 = vpop.f32.mrb[0].mxu0
      %v653 = vadd.f32 %v467, %v652
      %v654 = vpop.f32.mrb[0].mxu0
      %655 = vmatprep.mubr.bf16.mxu0 0
      %656 = vmatmul.mubr.bf16.gmra.mrb[0].mxu0 %v610
      %v657 = vpop.f32.mrb[0].mxu0
      %v658 = vadd.f32 %v472, %v657
      %v659 = vpop.f32.mrb[0].mxu0
      %v660 = vpop.f32.mrb[0].mxu0
      %v661 = vpop.f32.mrb[0].mxu0
      %662 = vdwg.mxu0
      %v663 = vmul.f32 %v650, %v650
      %v664 = vmul.f32 %v653, %v653
      %v665 = vmul.f32 %v658, %v658
      %v666 = vmul.f32 %v650, %v663
      %v667 = vmul.f32 %v653, %v664
      %v668 = vmul.f32 %v658, %v665
      %v669 = vmul.f32 %v666, 0.044715
      %v670 = vmul.f32 %v667, 0.044715
      %v671 = vmul.f32 %v668, 0.044715
      %v672 = vadd.f32 %v650, %v669
      %v673 = vadd.f32 %v653, %v670
      %v674 = vadd.f32 %v658, %v671
      %v675 = vmul.f32 %v672, 0.7978846
      %v676 = vmul.f32 %v673, 0.7978846
      %v677 = vmul.f32 %v674, 0.7978846
      %v678 = vtanh.pop %v675
      %v679 = vtanh.pop %v676
      %v680 = vtanh.pop %v677
      %v681 = vadd.f32 %v678, 1.0
      %v682 = vadd.f32 %v679, 1.0
      %v683 = vadd.f32 %v680, 1.0
      %v684 = vmul.f32 %v681, 0.5
      %v685 = vmul.f32 %v682, 0.5
      %v686 = vmul.f32 %v683, 0.5
      %v687 = vmul.f32 %v650, %v684
      %v688 = vmul.f32 %v653, %v685
      %v689 = vmul.f32 %v658, %v686
      %v690 = vld [vmem:[%s6] sm:$0xf]
      %v691 = vld [vmem:[%s6 + $0x4] sm:$0xf]
      %v692 = vld [vmem:[%s6 + $0x8] sm:$0xf]
      %v693 = vld [vmem:[%s6 + $0xc] sm:$0xf]
      %v694 = vpack.c.bf16 %v688, %v687
      %v695 = vpack.c.bf16 %v689, %v689
      %v696 = vld [vmem:[%s7] sm:$0xff]
      %v697 = vld [vmem:[%s7 + $0x8] sm:$0xff]
      %v698 = vld [vmem:[%s7 + $0x10] sm:$0xff]
      %v699 = vld [vmem:[%s7 + $0x18] sm:$0xff]
      %701 = vset.pattern.permute.xlu0 0
      %702 = vperm.xlu0 %701, %v696
      %v703 = vpop.permute.xlu0 %702
      %706 = vset.pattern.permute.xlu0 0
      %707 = vperm.xlu0 %706, %v697
      %v708 = vpop.permute.xlu0 %707
      %711 = vset.pattern.permute.xlu0 0
      %712 = vperm.xlu0 %711, %v698
      %v713 = vpop.permute.xlu0 %712
      %716 = vset.pattern.permute.xlu0 0
      %717 = vperm.xlu0 %716, %v699
      %v718 = vpop.permute.xlu0 %717
      %v724 = vunpack.c.l.b16 %v690
      %v725 = vunpack.c.l.b16 %v691
      %v726 = vunpack.c.l.b16 %v692
      %v727 = vunpack.c.l.b16 %v693
      %v728 = vpack.c.b16 %v725, %v724
      %v729 = vpack.c.b16 %v727, %v726
      %vm730 = vcmask 179200
      %v732 = vsel %vm730, %v728, 0
      %v735 = vsel %vm730, %v729, 0
      %vm737 = vcmask 1042432
      %v739 = vsel %vm737, %v695, 0
      %741 = vmatprep.subr.bf16.mxu0 0
      %742 = vmatpush1.bf16.msra.mxu0 %v694
      %743 = vmatprep.subr.bf16.mxu0 0
      %744 = vmatpush1.bf16.msra.mxu0 %v739
      %745 = vmatprep.subr.bf16.mxu0 0
      %746 = vmatpush1.bf16.msra.mxu0 0
      %747 = vmatprep.subr.bf16.mxu0 0
      %748 = vmatpush1.bf16.msra.mxu0 0
      %749 = vmatprep.subr.bf16.mxu0 0
      %750 = vmatpush1.bf16.msra.mxu0 0
      %751 = vmatprep.subr.bf16.mxu0 0
      %752 = vmatpush1.bf16.msra.mxu0 0
      %753 = vmatprep.subr.bf16.mxu0 0
      %754 = vmatpush1.bf16.msra.mxu0 0
      %755 = vmatprep.subr.bf16.mxu0 0
      %756 = vmatpush1.bf16.msra.mxu0 0
      %757 = vmatprep.subr.bf16.mxu0 0
      %758 = vmatpush1.bf16.msra.mxu0 0
      %759 = vmatprep.subr.bf16.mxu0 0
      %760 = vmatpush1.bf16.msra.mxu0 0
      %761 = vmatprep.subr.bf16.mxu0 0
      %762 = vmatpush1.bf16.msra.mxu0 0
      %763 = vmatprep.subr.bf16.mxu0 0
      %764 = vmatpush1.bf16.msra.mxu0 0
      %765 = vmatprep.subr.bf16.mxu0 0
      %766 = vmatpush1.bf16.msra.mxu0 0
      %767 = vmatprep.subr.bf16.mxu0 0
      %768 = vmatpush1.bf16.msra.mxu0 0
      %769 = vmatprep.subr.bf16.mxu0 0
      %770 = vmatpush1.bf16.msra.mxu0 0
      %771 = vmatprep.subr.bf16.mxu0 0
      %772 = vmatpush1.bf16.msra.mxu0 0
      %773 = vmatprep.mubr.bf16.mxu0 0
      %774 = vmatmul.mubr.bf16.gmra.mrb[0].mxu0 %v732
      %v775 = vpop.f32.mrb[0].mxu0
      %v776 = vadd.f32 %v703, %v775
      %v777 = vpop.f32.mrb[0].mxu0
      %v778 = vpop.f32.mrb[0].mxu0
      %v779 = vadd.f32 %v708, %v778
      %v780 = vpop.f32.mrb[0].mxu0
      %781 = vmatprep.mubr.bf16.mxu0 0
      %782 = vmatmul.mubr.bf16.gmra.mrb[0].mxu0 %v735
      %v783 = vpop.f32.mrb[0].mxu0
      %v784 = vadd.f32 %v713, %v783
      %v785 = vpop.f32.mrb[0].mxu0
      %v786 = vpop.f32.mrb[0].mxu0
      %v787 = vadd.f32 %v718, %v786
      %v788 = vpop.f32.mrb[0].mxu0
      %789 = vdwg.mxu0
      %v790 = vmul.f32 %v776, %v776
      %v791 = vmul.f32 %v779, %v779
      %v792 = vmul.f32 %v784, %v784
      %v793 = vmul.f32 %v787, %v787
      %v794 = vmul.f32 %v776, %v790
      %v795 = vmul.f32 %v779, %v791
      %v796 = vmul.f32 %v784, %v792
      %v797 = vmul.f32 %v787, %v793
      %v798 = vmul.f32 %v794, 0.044715
      %v799 = vmul.f32 %v795, 0.044715
      %v800 = vmul.f32 %v796, 0.044715
      %v801 = vmul.f32 %v797, 0.044715
      %v802 = vadd.f32 %v776, %v798
      %v803 = vadd.f32 %v779, %v799
      %v804 = vadd.f32 %v784, %v800
      %v805 = vadd.f32 %v787, %v801
      %v806 = vmul.f32 %v802, 0.7978846
      %v807 = vmul.f32 %v803, 0.7978846
      %v808 = vmul.f32 %v804, 0.7978846
      %v809 = vmul.f32 %v805, 0.7978846
      %v810 = vtanh.pop %v806
      %v811 = vtanh.pop %v807
      %v812 = vtanh.pop %v808
      %v813 = vtanh.pop %v809
      %v814 = vadd.f32 %v810, 1.0
      %v815 = vadd.f32 %v811, 1.0
      %v816 = vadd.f32 %v812, 1.0
      %v817 = vadd.f32 %v813, 1.0
      %v818 = vmul.f32 %v814, 0.5
      %v819 = vmul.f32 %v815, 0.5
      %v820 = vmul.f32 %v816, 0.5
      %v821 = vmul.f32 %v817, 0.5
      %v822 = vmul.f32 %v776, %v818
      %v823 = vmul.f32 %v779, %v819
      %v824 = vmul.f32 %v784, %v820
      %v825 = vmul.f32 %v787, %v821
      %v826 = vlaneseq
      %v827 = vshrl.u32 %v826, 7
      %v828 = vsub.s32 1, %v827
      %v829 = vrot.slane %v387, %v828
      %vm830 = vcmp.eq.s32.totalorder %v478, %v829
      %vm831 = vcmp.eq.s32.totalorder %v479, %v829
      %vm832 = vcmp.eq.s32.totalorder %v480, %v829
      %vm833 = vcmp.eq.s32.totalorder %v481, %v829
      %vm834 = vcmp.eq.s32.totalorder %v482, %v829
      %vm835 = vcmp.eq.s32.totalorder %v483, %v829
      %vm836 = vcmp.eq.s32.totalorder %v484, %v829
      %vm837 = vcmp.eq.s32.totalorder %v485, %v829
      %vm838 = vcmp.eq.s32.totalorder %v486, %v829
      %vm839 = vcmp.eq.s32.totalorder %v487, %v829
      %vm840 = vcmp.eq.s32.totalorder %v488, %v829
      %vm841 = vcmp.eq.s32.totalorder %v489, %v829
      %vm842 = vcmp.eq.s32.totalorder %v490, %v829
      %vm843 = vcmp.eq.s32.totalorder %v491, %v829
      %vm844 = vcmp.eq.s32.totalorder %v492, %v829
      %vm845 = vcmp.eq.s32.totalorder %v493, %v829
      %v846 = vsel %vm830, 1, 0
      %v847 = vsel %vm831, 1, 0
      %v848 = vsel %vm832, 1, 0
      %v849 = vsel %vm833, 1, 0
      %v850 = vsel %vm834, 1, 0
      %v851 = vsel %vm835, 1, 0
      %v852 = vsel %vm836, 1, 0
      %v853 = vsel %vm837, 1, 0
      %v854 = vsel %vm838, 1, 0
      %v855 = vsel %vm839, 1, 0
      %v856 = vsel %vm840, 1, 0
      %v857 = vsel %vm841, 1, 0
      %v858 = vsel %vm842, 1, 0
      %v859 = vsel %vm843, 1, 0
      %v860 = vsel %vm844, 1, 0
      %v861 = vsel %vm845, 1, 0
      %v862 = vcvt.s32.f32 %v846
      %v863 = vcvt.s32.f32 %v847
      %v864 = vcvt.s32.f32 %v848
      %v865 = vcvt.s32.f32 %v849
      %v866 = vcvt.s32.f32 %v850
      %v867 = vcvt.s32.f32 %v851
      %v868 = vcvt.s32.f32 %v852
      %v869 = vcvt.s32.f32 %v853
      %v870 = vcvt.s32.f32 %v854
      %v871 = vcvt.s32.f32 %v855
      %v872 = vcvt.s32.f32 %v856
      %v873 = vcvt.s32.f32 %v857
      %v874 = vcvt.s32.f32 %v858
      %v875 = vcvt.s32.f32 %v859
      %v876 = vcvt.s32.f32 %v860
      %v877 = vcvt.s32.f32 %v861
      %v878 = vpack.c.bf16 %v863, %v862
      %v879 = vpack.c.bf16 %v865, %v864
      %v880 = vpack.c.bf16 %v867, %v866
      %v881 = vpack.c.bf16 %v869, %v868
      %v882 = vpack.c.bf16 %v871, %v870
      %v883 = vpack.c.bf16 %v873, %v872
      %v884 = vpack.c.bf16 %v875, %v874
      %v885 = vpack.c.bf16 %v877, %v876
      %886 = vmatprep.subr.bf16.mxu0 0
      %887 = vmatpush1.bf16.msra.mxu0 %v878
      %888 = vmatprep.subr.bf16.mxu0 0
      %889 = vmatpush1.bf16.msra.mxu0 %v879
      %890 = vmatprep.subr.bf16.mxu0 0
      %891 = vmatpush1.bf16.msra.mxu0 %v880
      %892 = vmatprep.subr.bf16.mxu0 0
      %893 = vmatpush1.bf16.msra.mxu0 %v881
      %894 = vmatprep.subr.bf16.mxu0 0
      %895 = vmatpush1.bf16.msra.mxu0 %v882
      %896 = vmatprep.subr.bf16.mxu0 0
      %897 = vmatpush1.bf16.msra.mxu0 %v883
      %898 = vmatprep.subr.bf16.mxu0 0
      %899 = vmatpush1.bf16.msra.mxu0 %v884
      %900 = vmatprep.subr.bf16.mxu0 0
      %901 = vmatpush1.bf16.msra.mxu0 %v885
      %902 = vmatprep.subr.bf16.mxu0 0
      %903 = vmatpush1.bf16.msra.mxu0 0
      %904 = vmatprep.subr.bf16.mxu0 0
      %905 = vmatpush1.bf16.msra.mxu0 0
      %906 = vmatprep.subr.bf16.mxu0 0
      %907 = vmatpush1.bf16.msra.mxu0 0
      %908 = vmatprep.subr.bf16.mxu0 0
      %909 = vmatpush1.bf16.msra.mxu0 0
      %910 = vmatprep.subr.bf16.mxu0 0
      %911 = vmatpush1.bf16.msra.mxu0 0
      %912 = vmatprep.subr.bf16.mxu0 0
      %913 = vmatpush1.bf16.msra.mxu0 0
      %914 = vmatprep.subr.bf16.mxu0 0
      %915 = vmatpush1.bf16.msra.mxu0 0
      %916 = vmatprep.subr.bf16.mxu0 0
      %917 = vmatpush1.bf16.msra.mxu0 0
      %918 = vmatprep.mubr.bf16.mxu0 0
      %919 = vmatmul.mubr.bf16.gmra.mrb[0].mxu0 %v384
      %v920 = vpop.f32.mrb[0].mxu0
      %v921 = vadd.f32 0.0, %v920
      %v922 = vpop.f32.mrb[0].mxu0
      %v923 = vpop.f32.mrb[0].mxu0
      %v924 = vpop.f32.mrb[0].mxu0
      %925 = vdwg.mxu0
      %v926 = vpack.c.bf16 %v921, %v921
      %v928 = vsel %vm425, %v926, 0
      %930 = vmatprep.subr.bf16.mxu0 0
      %931 = vmatpush1.bf16.msra.mxu0 %v928
      %932 = vmatprep.subr.bf16.mxu0 0
      %933 = vmatpush1.bf16.msra.mxu0 0
      %934 = vmatprep.subr.bf16.mxu0 0
      %935 = vmatpush1.bf16.msra.mxu0 0
      %936 = vmatprep.subr.bf16.mxu0 0
      %937 = vmatpush1.bf16.msra.mxu0 0
      %938 = vmatprep.subr.bf16.mxu0 0
      %939 = vmatpush1.bf16.msra.mxu0 0
      %940 = vmatprep.subr.bf16.mxu0 0
      %941 = vmatpush1.bf16.msra.mxu0 0
      %942 = vmatprep.subr.bf16.mxu0 0
      %943 = vmatpush1.bf16.msra.mxu0 0
      %944 = vmatprep.subr.bf16.mxu0 0
      %945 = vmatpush1.bf16.msra.mxu0 0
      %946 = vmatprep.subr.bf16.mxu0 0
      %947 = vmatpush1.bf16.msra.mxu0 0
      %948 = vmatprep.subr.bf16.mxu0 0
      %949 = vmatpush1.bf16.msra.mxu0 0
      %950 = vmatprep.subr.bf16.mxu0 0
      %951 = vmatpush1.bf16.msra.mxu0 0
      %952 = vmatprep.subr.bf16.mxu0 0
      %953 = vmatpush1.bf16.msra.mxu0 0
      %954 = vmatprep.subr.bf16.mxu0 0
      %955 = vmatpush1.bf16.msra.mxu0 0
      %956 = vmatprep.subr.bf16.mxu0 0
      %957 = vmatpush1.bf16.msra.mxu0 0
      %958 = vmatprep.subr.bf16.mxu0 0
      %959 = vmatpush1.bf16.msra.mxu0 0
      %960 = vmatprep.subr.bf16.mxu0 0
      %961 = vmatpush1.bf16.msra.mxu0 0
      %962 = vmatprep.mubr.bf16.mxu0 0
      %963 = vmatmul.mubr.bf16.gmra.mrb[0].mxu0 %v607
      %v964 = vpop.f32.mrb[0].mxu0
      %v965 = vadd.f32 %v464, %v964
      %v966 = vpop.f32.mrb[0].mxu0
      %v967 = vpop.f32.mrb[0].mxu0
      %v968 = vadd.f32 %v467, %v967
      %v969 = vpop.f32.mrb[0].mxu0
      %970 = vmatprep.mubr.bf16.mxu0 0
      %971 = vmatmul.mubr.bf16.gmra.mrb[0].mxu0 %v610
      %v972 = vpop.f32.mrb[0].mxu0
      %v973 = vadd.f32 %v472, %v972
      %v974 = vpop.f32.mrb[0].mxu0
      %v975 = vpop.f32.mrb[0].mxu0
      %v976 = vpop.f32.mrb[0].mxu0
      %977 = vdwg.mxu0
      %v978 = vmul.f32 %v965, %v965
      %v979 = vmul.f32 %v968, %v968
      %v980 = vmul.f32 %v973, %v973
      %v981 = vmul.f32 %v965, %v978
      %v982 = vmul.f32 %v968, %v979
      %v983 = vmul.f32 %v973, %v980
      %v984 = vmul.f32 %v981, 0.044715
      %v985 = vmul.f32 %v982, 0.044715
      %v986 = vmul.f32 %v983, 0.044715
      %v987 = vadd.f32 %v965, %v984
      %v988 = vadd.f32 %v968, %v985
      %v989 = vadd.f32 %v973, %v986
      %v990 = vmul.f32 %v987, 0.7978846
      %v991 = vmul.f32 %v988, 0.7978846
      %v992 = vmul.f32 %v989, 0.7978846
      %v993 = vtanh.pop %v990
      %v994 = vtanh.pop %v991
      %v995 = vtanh.pop %v992
      %v996 = vadd.f32 %v993, 1.0
      %v997 = vadd.f32 %v994, 1.0
      %v998 = vadd.f32 %v995, 1.0
      %v999 = vmul.f32 %v996, 0.5
      %v1000 = vmul.f32 %v997, 0.5
      %v1001 = vmul.f32 %v998, 0.5
      %v1002 = vmul.f32 %v965, %v999
      %v1003 = vmul.f32 %v968, %v1000
      %v1004 = vmul.f32 %v973, %v1001
      %v1005 = vpack.c.bf16 %v1003, %v1002
      %v1006 = vpack.c.bf16 %v1004, %v1004
      %v1008 = vsel %vm737, %v1006, 0
      %1010 = vmatprep.subr.bf16.mxu0 0
      %1011 = vmatpush1.bf16.msra.mxu0 %v1005
      %1012 = vmatprep.subr.bf16.mxu0 0
      %1013 = vmatpush1.bf16.msra.mxu0 %v1008
      %1014 = vmatprep.subr.bf16.mxu0 0
      %1015 = vmatpush1.bf16.msra.mxu0 0
      %1016 = vmatprep.subr.bf16.mxu0 0
      %1017 = vmatpush1.bf16.msra.mxu0 0
      %1018 = vmatprep.subr.bf16.mxu0 0
      %1019 = vmatpush1.bf16.msra.mxu0 0
      %1020 = vmatprep.subr.bf16.mxu0 0
      %1021 = vmatpush1.bf16.msra.mxu0 0
      %1022 = vmatprep.subr.bf16.mxu0 0
      %1023 = vmatpush1.bf16.msra.mxu0 0
      %1024 = vmatprep.subr.bf16.mxu0 0
      %1025 = vmatpush1.bf16.msra.mxu0 0
      %1026 = vmatprep.subr.bf16.mxu0 0
      %1027 = vmatpush1.bf16.msra.mxu0 0
      %1028 = vmatprep.subr.bf16.mxu0 0
      %1029 = vmatpush1.bf16.msra.mxu0 0
      %1030 = vmatprep.subr.bf16.mxu0 0
      %1031 = vmatpush1.bf16.msra.mxu0 0
      %1032 = vmatprep.subr.bf16.mxu0 0
      %1033 = vmatpush1.bf16.msra.mxu0 0
      %1034 = vmatprep.subr.bf16.mxu0 0
      %1035 = vmatpush1.bf16.msra.mxu0 0
      %1036 = vmatprep.subr.bf16.mxu0 0
      %1037 = vmatpush1.bf16.msra.mxu0 0
      %1038 = vmatprep.subr.bf16.mxu0 0
      %1039 = vmatpush1.bf16.msra.mxu0 0
      %1040 = vmatprep.subr.bf16.mxu0 0
      %1041 = vmatpush1.bf16.msra.mxu0 0
      %1042 = vmatprep.mubr.bf16.mxu0 0
      %1043 = vmatmul.mubr.bf16.gmra.mrb[0].mxu0 %v732
      %v1044 = vpop.f32.mrb[0].mxu0
      %v1045 = vadd.f32 %v703, %v1044
      %v1046 = vpop.f32.mrb[0].mxu0
      %v1047 = vpop.f32.mrb[0].mxu0
      %v1048 = vadd.f32 %v708, %v1047
      %v1049 = vpop.f32.mrb[0].mxu0
      %1050 = vmatprep.mubr.bf16.mxu0 0
      %1051 = vmatmul.mubr.bf16.gmra.mrb[0].mxu0 %v735
      %v1052 = vpop.f32.mrb[0].mxu0
      %v1053 = vadd.f32 %v713, %v1052
      %v1054 = vpop.f32.mrb[0].mxu0
      %v1055 = vpop.f32.mrb[0].mxu0
      %v1056 = vadd.f32 %v718, %v1055
      %v1057 = vpop.f32.mrb[0].mxu0
      %1058 = vdwg.mxu0
      %v1059 = vmul.f32 %v1045, %v1045
      %v1060 = vmul.f32 %v1048, %v1048
      %v1061 = vmul.f32 %v1053, %v1053
      %v1062 = vmul.f32 %v1056, %v1056
      %v1063 = vmul.f32 %v1045, %v1059
      %v1064 = vmul.f32 %v1048, %v1060
      %v1065 = vmul.f32 %v1053, %v1061
      %v1066 = vmul.f32 %v1056, %v1062
      %v1067 = vmul.f32 %v1063, 0.044715
      %v1068 = vmul.f32 %v1064, 0.044715
      %v1069 = vmul.f32 %v1065, 0.044715
      %v1070 = vmul.f32 %v1066, 0.044715
      %v1071 = vadd.f32 %v1045, %v1067
      %v1072 = vadd.f32 %v1048, %v1068
      %v1073 = vadd.f32 %v1053, %v1069
      %v1074 = vadd.f32 %v1056, %v1070
      %v1075 = vmul.f32 %v1071, 0.7978846
      %v1076 = vmul.f32 %v1072, 0.7978846
      %v1077 = vmul.f32 %v1073, 0.7978846
      %v1078 = vmul.f32 %v1074, 0.7978846
      %v1079 = vtanh.pop %v1075
      %v1080 = vtanh.pop %v1076
      %v1081 = vtanh.pop %v1077
      %v1082 = vtanh.pop %v1078
      %v1083 = vadd.f32 %v1079, 1.0
      %v1084 = vadd.f32 %v1080, 1.0
      %v1085 = vadd.f32 %v1081, 1.0
      %v1086 = vadd.f32 %v1082, 1.0
      %v1087 = vmul.f32 %v1083, 0.5
      %v1088 = vmul.f32 %v1084, 0.5
      %v1089 = vmul.f32 %v1085, 0.5
      %v1090 = vmul.f32 %v1086, 0.5
      %v1091 = vmul.f32 %v1045, %v1087
      %v1092 = vmul.f32 %v1048, %v1088
      %v1093 = vmul.f32 %v1053, %v1089
      %v1094 = vmul.f32 %v1056, %v1090
      %v1095 = vmax.f32 %v822, %v1091
      %v1096 = vmax.f32 %v823, %v1092
      %v1097 = vmax.f32 %v824, %v1093
      %v1098 = vmax.f32 %v825, %v1094
      %v1099 = vlaneseq
      %v1100 = vshrl.u32 %v1099, 7
      %v1101 = vsub.s32 2, %v1100
      %v1102 = vrot.slane %v387, %v1101
      %vm1103 = vcmp.eq.s32.totalorder %v478, %v1102
      %vm1104 = vcmp.eq.s32.totalorder %v479, %v1102
      %vm1105 = vcmp.eq.s32.totalorder %v480, %v1102
      %vm1106 = vcmp.eq.s32.totalorder %v481, %v1102
      %vm1107 = vcmp.eq.s32.totalorder %v482, %v1102
      %vm1108 = vcmp.eq.s32.totalorder %v483, %v1102
      %vm1109 = vcmp.eq.s32.totalorder %v484, %v1102
      %vm1110 = vcmp.eq.s32.totalorder %v485, %v1102
      %vm1111 = vcmp.eq.s32.totalorder %v486, %v1102
      %vm1112 = vcmp.eq.s32.totalorder %v487, %v1102
      %vm1113 = vcmp.eq.s32.totalorder %v488, %v1102
      %vm1114 = vcmp.eq.s32.totalorder %v489, %v1102
      %vm1115 = vcmp.eq.s32.totalorder %v490, %v1102
      %vm1116 = vcmp.eq.s32.totalorder %v491, %v1102
      %vm1117 = vcmp.eq.s32.totalorder %v492, %v1102
      %vm1118 = vcmp.eq.s32.totalorder %v493, %v1102
      %v1119 = vsel %vm1103, 1, 0
      %v1120 = vsel %vm1104, 1, 0
      %v1121 = vsel %vm1105, 1, 0
      %v1122 = vsel %vm1106, 1, 0
      %v1123 = vsel %vm1107, 1, 0
      %v1124 = vsel %vm1108, 1, 0
      %v1125 = vsel %vm1109, 1, 0
      %v1126 = vsel %vm1110, 1, 0
      %v1127 = vsel %vm1111, 1, 0
      %v1128 = vsel %vm1112, 1, 0
      %v1129 = vsel %vm1113, 1, 0
      %v1130 = vsel %vm1114, 1, 0
      %v1131 = vsel %vm1115, 1, 0
      %v1132 = vsel %vm1116, 1, 0
      %v1133 = vsel %vm1117, 1, 0
      %v1134 = vsel %vm1118, 1, 0
      %v1135 = vcvt.s32.f32 %v1119
      %v1136 = vcvt.s32.f32 %v1120
      %v1137 = vcvt.s32.f32 %v1121
      %v1138 = vcvt.s32.f32 %v1122
      %v1139 = vcvt.s32.f32 %v1123
      %v1140 = vcvt.s32.f32 %v1124
      %v1141 = vcvt.s32.f32 %v1125
      %v1142 = vcvt.s32.f32 %v1126
      %v1143 = vcvt.s32.f32 %v1127
      %v1144 = vcvt.s32.f32 %v1128
      %v1145 = vcvt.s32.f32 %v1129
      %v1146 = vcvt.s32.f32 %v1130
      %v1147 = vcvt.s32.f32 %v1131
      %v1148 = vcvt.s32.f32 %v1132
      %v1149 = vcvt.s32.f32 %v1133
      %v1150 = vcvt.s32.f32 %v1134
      %v1151 = vpack.c.bf16 %v1136, %v1135
      %v1152 = vpack.c.bf16 %v1138, %v1137
      %v1153 = vpack.c.bf16 %v1140, %v1139
      %v1154 = vpack.c.bf16 %v1142, %v1141
      %v1155 = vpack.c.bf16 %v1144, %v1143
      %v1156 = vpack.c.bf16 %v1146, %v1145
      %v1157 = vpack.c.bf16 %v1148, %v1147
      %v1158 = vpack.c.bf16 %v1150, %v1149
      %1159 = vmatprep.subr.bf16.mxu0 0
      %1160 = vmatpush1.bf16.msra.mxu0 %v1151
      %1161 = vmatprep.subr.bf16.mxu0 0
      %1162 = vmatpush1.bf16.msra.mxu0 %v1152
      %1163 = vmatprep.subr.bf16.mxu0 0
      %1164 = vmatpush1.bf16.msra.mxu0 %v1153
      %1165 = vmatprep.subr.bf16.mxu0 0
      %1166 = vmatpush1.bf16.msra.mxu0 %v1154
      %1167 = vmatprep.subr.bf16.mxu0 0
      %1168 = vmatpush1.bf16.msra.mxu0 %v1155
      %1169 = vmatprep.subr.bf16.mxu0 0
      %1170 = vmatpush1.bf16.msra.mxu0 %v1156
      %1171 = vmatprep.subr.bf16.mxu0 0
      %1172 = vmatpush1.bf16.msra.mxu0 %v1157
      %1173 = vmatprep.subr.bf16.mxu0 0
      %1174 = vmatpush1.bf16.msra.mxu0 %v1158
      %1175 = vmatprep.subr.bf16.mxu0 0
      %1176 = vmatpush1.bf16.msra.mxu0 0
      %1177 = vmatprep.subr.bf16.mxu0 0
      %1178 = vmatpush1.bf16.msra.mxu0 0
      %1179 = vmatprep.subr.bf16.mxu0 0
      %1180 = vmatpush1.bf16.msra.mxu0 0
      %1181 = vmatprep.subr.bf16.mxu0 0
      %1182 = vmatpush1.bf16.msra.mxu0 0
      %1183 = vmatprep.subr.bf16.mxu0 0
      %1184 = vmatpush1.bf16.msra.mxu0 0
      %1185 = vmatprep.subr.bf16.mxu0 0
      %1186 = vmatpush1.bf16.msra.mxu0 0
      %1187 = vmatprep.subr.bf16.mxu0 0
      %1188 = vmatpush1.bf16.msra.mxu0 0
      %1189 = vmatprep.subr.bf16.mxu0 0
      %1190 = vmatpush1.bf16.msra.mxu0 0
      %1191 = vmatprep.mubr.bf16.mxu0 0
      %1192 = vmatmul.mubr.bf16.gmra.mrb[0].mxu0 %v384
      %v1193 = vpop.f32.mrb[0].mxu0
      %v1194 = vadd.f32 0.0, %v1193
      %v1195 = vpop.f32.mrb[0].mxu0
      %v1196 = vpop.f32.mrb[0].mxu0
      %v1197 = vpop.f32.mrb[0].mxu0
      %1198 = vdwg.mxu0
      %v1199 = vpack.c.bf16 %v1194, %v1194
      %v1201 = vsel %vm425, %v1199, 0
      %1203 = vmatprep.subr.bf16.mxu0 0
      %1204 = vmatpush1.bf16.msra.mxu0 %v1201
      %1205 = vmatprep.subr.bf16.mxu0 0
      %1206 = vmatpush1.bf16.msra.mxu0 0
      %1207 = vmatprep.subr.bf16.mxu0 0
      %1208 = vmatpush1.bf16.msra.mxu0 0
      %1209 = vmatprep.subr.bf16.mxu0 0
      %1210 = vmatpush1.bf16.msra.mxu0 0
      %1211 = vmatprep.subr.bf16.mxu0 0
      %1212 = vmatpush1.bf16.msra.mxu0 0
      %1213 = vmatprep.subr.bf16.mxu0 0
      %1214 = vmatpush1.bf16.msra.mxu0 0
      %1215 = vmatprep.subr.bf16.mxu0 0
      %1216 = vmatpush1.bf16.msra.mxu0 0
      %1217 = vmatprep.subr.bf16.mxu0 0
      %1218 = vmatpush1.bf16.msra.mxu0 0
      %1219 = vmatprep.subr.bf16.mxu0 0
      %1220 = vmatpush1.bf16.msra.mxu0 0
      %1221 = vmatprep.subr.bf16.mxu0 0
      %1222 = vmatpush1.bf16.msra.mxu0 0
      %1223 = vmatprep.subr.bf16.mxu0 0
      %1224 = vmatpush1.bf16.msra.mxu0 0
      %1225 = vmatprep.subr.bf16.mxu0 0
      %1226 = vmatpush1.bf16.msra.mxu0 0
      %1227 = vmatprep.subr.bf16.mxu0 0
      %1228 = vmatpush1.bf16.msra.mxu0 0
      %1229 = vmatprep.subr.bf16.mxu0 0
      %1230 = vmatpush1.bf16.msra.mxu0 0
      %1231 = vmatprep.subr.bf16.mxu0 0
      %1232 = vmatpush1.bf16.msra.mxu0 0
      %1233 = vmatprep.subr.bf16.mxu0 0
      %1234 = vmatpush1.bf16.msra.mxu0 0
      %1235 = vmatprep.mubr.bf16.mxu0 0
      %1236 = vmatmul.mubr.bf16.gmra.mrb[0].mxu0 %v607
      %v1237 = vpop.f32.mrb[0].mxu0
      %v1238 = vadd.f32 %v464, %v1237
      %v1239 = vpop.f32.mrb[0].mxu0
      %v1240 = vpop.f32.mrb[0].mxu0
      %v1241 = vadd.f32 %v467, %v1240
      %v1242 = vpop.f32.mrb[0].mxu0
      %1243 = vmatprep.mubr.bf16.mxu0 0
      %1244 = vmatmul.mubr.bf16.gmra.mrb[0].mxu0 %v610
      %v1245 = vpop.f32.mrb[0].mxu0
      %v1246 = vadd.f32 %v472, %v1245
      %v1247 = vpop.f32.mrb[0].mxu0
      %v1248 = vpop.f32.mrb[0].mxu0
      %v1249 = vpop.f32.mrb[0].mxu0
      %1250 = vdwg.mxu0
      %v1251 = vmul.f32 %v1238, %v1238
      %v1252 = vmul.f32 %v1241, %v1241
      %v1253 = vmul.f32 %v1246, %v1246
      %v1254 = vmul.f32 %v1238, %v1251
      %v1255 = vmul.f32 %v1241, %v1252
      %v1256 = vmul.f32 %v1246, %v1253
      %v1257 = vmul.f32 %v1254, 0.044715
      %v1258 = vmul.f32 %v1255, 0.044715
      %v1259 = vmul.f32 %v1256, 0.044715
      %v1260 = vadd.f32 %v1238, %v1257
      %v1261 = vadd.f32 %v1241, %v1258
      %v1262 = vadd.f32 %v1246, %v1259
      %v1263 = vmul.f32 %v1260, 0.7978846
      %v1264 = vmul.f32 %v1261, 0.7978846
      %v1265 = vmul.f32 %v1262, 0.7978846
      %v1266 = vtanh.pop %v1263
      %v1267 = vtanh.pop %v1264
      %v1268 = vtanh.pop %v1265
      %v1269 = vadd.f32 %v1266, 1.0
      %v1270 = vadd.f32 %v1267, 1.0
      %v1271 = vadd.f32 %v1268, 1.0
      %v1272 = vmul.f32 %v1269, 0.5
      %v1273 = vmul.f32 %v1270, 0.5
      %v1274 = vmul.f32 %v1271, 0.5
      %v1275 = vmul.f32 %v1238, %v1272
      %v1276 = vmul.f32 %v1241, %v1273
      %v1277 = vmul.f32 %v1246, %v1274
      %v1278 = vpack.c.bf16 %v1276, %v1275
      %v1279 = vpack.c.bf16 %v1277, %v1277
      %v1281 = vsel %vm737, %v1279, 0
      %1283 = vmatprep.subr.bf16.mxu0 0
      %1284 = vmatpush1.bf16.msra.mxu0 %v1278
      %1285 = vmatprep.subr.bf16.mxu0 0
      %1286 = vmatpush1.bf16.msra.mxu0 %v1281
      %1287 = vmatprep.subr.bf16.mxu0 0
      %1288 = vmatpush1.bf16.msra.mxu0 0
      %1289 = vmatprep.subr.bf16.mxu0 0
      %1290 = vmatpush1.bf16.msra.mxu0 0
      %1291 = vmatprep.subr.bf16.mxu0 0
      %1292 = vmatpush1.bf16.msra.mxu0 0
      %1293 = vmatprep.subr.bf16.mxu0 0
      %1294 = vmatpush1.bf16.msra.mxu0 0
      %1295 = vmatprep.subr.bf16.mxu0 0
      %1296 = vmatpush1.bf16.msra.mxu0 0
      %1297 = vmatprep.subr.bf16.mxu0 0
      %1298 = vmatpush1.bf16.msra.mxu0 0
      %1299 = vmatprep.subr.bf16.mxu0 0
      %1300 = vmatpush1.bf16.msra.mxu0 0
      %1301 = vmatprep.subr.bf16.mxu0 0
      %1302 = vmatpush1.bf16.msra.mxu0 0
      %1303 = vmatprep.subr.bf16.mxu0 0
      %1304 = vmatpush1.bf16.msra.mxu0 0
      %1305 = vmatprep.subr.bf16.mxu0 0
      %1306 = vmatpush1.bf16.msra.mxu0 0
      %1307 = vmatprep.subr.bf16.mxu0 0
      %1308 = vmatpush1.bf16.msra.mxu0 0
      %1309 = vmatprep.subr.bf16.mxu0 0
      %1310 = vmatpush1.bf16.msra.mxu0 0
      %1311 = vmatprep.subr.bf16.mxu0 0
      %1312 = vmatpush1.bf16.msra.mxu0 0
      %1313 = vmatprep.subr.bf16.mxu0 0
      %1314 = vmatpush1.bf16.msra.mxu0 0
      %1315 = vmatprep.mubr.bf16.mxu0 0
      %1316 = vmatmul.mubr.bf16.gmra.mrb[0].mxu0 %v732
      %v1317 = vpop.f32.mrb[0].mxu0
      %v1318 = vadd.f32 %v703, %v1317
      %v1319 = vpop.f32.mrb[0].mxu0
      %v1320 = vpop.f32.mrb[0].mxu0
      %v1321 = vadd.f32 %v708, %v1320
      %v1322 = vpop.f32.mrb[0].mxu0
      %1323 = vmatprep.mubr.bf16.mxu0 0
      %1324 = vmatmul.mubr.bf16.gmra.mrb[0].mxu0 %v735
      %v1325 = vpop.f32.mrb[0].mxu0
      %v1326 = vadd.f32 %v713, %v1325
      %v1327 = vpop.f32.mrb[0].mxu0
      %v1328 = vpop.f32.mrb[0].mxu0
      %v1329 = vadd.f32 %v718, %v1328
      %v1330 = vpop.f32.mrb[0].mxu0
      %1331 = vdwg.mxu0
      %v1332 = vmul.f32 %v1318, %v1318
      %v1333 = vmul.f32 %v1321, %v1321
      %v1334 = vmul.f32 %v1326, %v1326
      %v1335 = vmul.f32 %v1329, %v1329
      %v1336 = vmul.f32 %v1318, %v1332
      %v1337 = vmul.f32 %v1321, %v1333
      %v1338 = vmul.f32 %v1326, %v1334
      %v1339 = vmul.f32 %v1329, %v1335
      %v1340 = vmul.f32 %v1336, 0.044715
      %v1341 = vmul.f32 %v1337, 0.044715
      %v1342 = vmul.f32 %v1338, 0.044715
      %v1343 = vmul.f32 %v1339, 0.044715
      %v1344 = vadd.f32 %v1318, %v1340
      %v1345 = vadd.f32 %v1321, %v1341
      %v1346 = vadd.f32 %v1326, %v1342
      %v1347 = vadd.f32 %v1329, %v1343
      %v1348 = vmul.f32 %v1344, 0.7978846
      %v1349 = vmul.f32 %v1345, 0.7978846
      %v1350 = vmul.f32 %v1346, 0.7978846
      %v1351 = vmul.f32 %v1347, 0.7978846
      %v1352 = vtanh.pop %v1348
      %v1353 = vtanh.pop %v1349
      %v1354 = vtanh.pop %v1350
      %v1355 = vtanh.pop %v1351
      %v1356 = vadd.f32 %v1352, 1.0
      %v1357 = vadd.f32 %v1353, 1.0
      %v1358 = vadd.f32 %v1354, 1.0
      %v1359 = vadd.f32 %v1355, 1.0
      %v1360 = vmul.f32 %v1356, 0.5
      %v1361 = vmul.f32 %v1357, 0.5
      %v1362 = vmul.f32 %v1358, 0.5
      %v1363 = vmul.f32 %v1359, 0.5
      %v1364 = vmul.f32 %v1318, %v1360
      %v1365 = vmul.f32 %v1321, %v1361
      %v1366 = vmul.f32 %v1326, %v1362
      %v1367 = vmul.f32 %v1329, %v1363
      %v1368 = vmax.f32 %v1095, %v1364
      %v1369 = vmax.f32 %v1096, %v1365
      %v1370 = vmax.f32 %v1097, %v1366
      %v1371 = vmax.f32 %v1098, %v1367
      %v1372 = vlaneseq
      %v1373 = vshrl.u32 %v1372, 7
      %v1374 = vsub.s32 3, %v1373
      %v1375 = vrot.slane %v387, %v1374
      %vm1376 = vcmp.eq.s32.totalorder %v478, %v1375
      %vm1377 = vcmp.eq.s32.totalorder %v479, %v1375
      %vm1378 = vcmp.eq.s32.totalorder %v480, %v1375
      %vm1379 = vcmp.eq.s32.totalorder %v481, %v1375
      %vm1380 = vcmp.eq.s32.totalorder %v482, %v1375
      %vm1381 = vcmp.eq.s32.totalorder %v483, %v1375
      %vm1382 = vcmp.eq.s32.totalorder %v484, %v1375
      %vm1383 = vcmp.eq.s32.totalorder %v485, %v1375
      %vm1384 = vcmp.eq.s32.totalorder %v486, %v1375
      %vm1385 = vcmp.eq.s32.totalorder %v487, %v1375
      %vm1386 = vcmp.eq.s32.totalorder %v488, %v1375
      %vm1387 = vcmp.eq.s32.totalorder %v489, %v1375
      %vm1388 = vcmp.eq.s32.totalorder %v490, %v1375
      %vm1389 = vcmp.eq.s32.totalorder %v491, %v1375
      %vm1390 = vcmp.eq.s32.totalorder %v492, %v1375
      %vm1391 = vcmp.eq.s32.totalorder %v493, %v1375
      %v1392 = vsel %vm1376, 1, 0
      %v1393 = vsel %vm1377, 1, 0
      %v1394 = vsel %vm1378, 1, 0
      %v1395 = vsel %vm1379, 1, 0
      %v1396 = vsel %vm1380, 1, 0
      %v1397 = vsel %vm1381, 1, 0
      %v1398 = vsel %vm1382, 1, 0
      %v1399 = vsel %vm1383, 1, 0
      %v1400 = vsel %vm1384, 1, 0
      %v1401 = vsel %vm1385, 1, 0
      %v1402 = vsel %vm1386, 1, 0
      %v1403 = vsel %vm1387, 1, 0
      %v1404 = vsel %vm1388, 1, 0
      %v1405 = vsel %vm1389, 1, 0
      %v1406 = vsel %vm1390, 1, 0
      %v1407 = vsel %vm1391, 1, 0
      %v1408 = vcvt.s32.f32 %v1392
      %v1409 = vcvt.s32.f32 %v1393
      %v1410 = vcvt.s32.f32 %v1394
      %v1411 = vcvt.s32.f32 %v1395
      %v1412 = vcvt.s32.f32 %v1396
      %v1413 = vcvt.s32.f32 %v1397
      %v1414 = vcvt.s32.f32 %v1398
      %v1415 = vcvt.s32.f32 %v1399
      %v1416 = vcvt.s32.f32 %v1400
      %v1417 = vcvt.s32.f32 %v1401
      %v1418 = vcvt.s32.f32 %v1402
      %v1419 = vcvt.s32.f32 %v1403
      %v1420 = vcvt.s32.f32 %v1404
      %v1421 = vcvt.s32.f32 %v1405
      %v1422 = vcvt.s32.f32 %v1406
      %v1423 = vcvt.s32.f32 %v1407
      %v1424 = vpack.c.bf16 %v1409, %v1408
      %v1425 = vpack.c.bf16 %v1411, %v1410
      %v1426 = vpack.c.bf16 %v1413, %v1412
      %v1427 = vpack.c.bf16 %v1415, %v1414
      %v1428 = vpack.c.bf16 %v1417, %v1416
      %v1429 = vpack.c.bf16 %v1419, %v1418
      %v1430 = vpack.c.bf16 %v1421, %v1420
      %v1431 = vpack.c.bf16 %v1423, %v1422
      %1432 = vmatprep.subr.bf16.mxu0 0
      %1433 = vmatpush1.bf16.msra.mxu0 %v1424
      %1434 = vmatprep.subr.bf16.mxu0 0
      %1435 = vmatpush1.bf16.msra.mxu0 %v1425
      %1436 = vmatprep.subr.bf16.mxu0 0
      %1437 = vmatpush1.bf16.msra.mxu0 %v1426
      %1438 = vmatprep.subr.bf16.mxu0 0
      %1439 = vmatpush1.bf16.msra.mxu0 %v1427
      %1440 = vmatprep.subr.bf16.mxu0 0
      %1441 = vmatpush1.bf16.msra.mxu0 %v1428
      %1442 = vmatprep.subr.bf16.mxu0 0
      %1443 = vmatpush1.bf16.msra.mxu0 %v1429
      %1444 = vmatprep.subr.bf16.mxu0 0
      %1445 = vmatpush1.bf16.msra.mxu0 %v1430
      %1446 = vmatprep.subr.bf16.mxu0 0
      %1447 = vmatpush1.bf16.msra.mxu0 %v1431
      %1448 = vmatprep.subr.bf16.mxu0 0
      %1449 = vmatpush1.bf16.msra.mxu0 0
      %1450 = vmatprep.subr.bf16.mxu0 0
      %1451 = vmatpush1.bf16.msra.mxu0 0
      %1452 = vmatprep.subr.bf16.mxu0 0
      %1453 = vmatpush1.bf16.msra.mxu0 0
      %1454 = vmatprep.subr.bf16.mxu0 0
      %1455 = vmatpush1.bf16.msra.mxu0 0
      %1456 = vmatprep.subr.bf16.mxu0 0
      %1457 = vmatpush1.bf16.msra.mxu0 0
      %1458 = vmatprep.subr.bf16.mxu0 0
      %1459 = vmatpush1.bf16.msra.mxu0 0
      %1460 = vmatprep.subr.bf16.mxu0 0
      %1461 = vmatpush1.bf16.msra.mxu0 0
      %1462 = vmatprep.subr.bf16.mxu0 0
      %1463 = vmatpush1.bf16.msra.mxu0 0
      %1464 = vmatprep.mubr.bf16.mxu0 0
      %1465 = vmatmul.mubr.bf16.gmra.mrb[0].mxu0 %v384
      %v1466 = vpop.f32.mrb[0].mxu0
      %v1467 = vadd.f32 0.0, %v1466
      %v1468 = vpop.f32.mrb[0].mxu0
      %v1469 = vpop.f32.mrb[0].mxu0
      %v1470 = vpop.f32.mrb[0].mxu0
      %1471 = vdwg.mxu0
      %v1472 = vpack.c.bf16 %v1467, %v1467
      %v1474 = vsel %vm425, %v1472, 0
      %1476 = vmatprep.subr.bf16.mxu0 0
      %1477 = vmatpush1.bf16.msra.mxu0 %v1474
      %1478 = vmatprep.subr.bf16.mxu0 0
      %1479 = vmatpush1.bf16.msra.mxu0 0
      %1480 = vmatprep.subr.bf16.mxu0 0
      %1481 = vmatpush1.bf16.msra.mxu0 0
      %1482 = vmatprep.subr.bf16.mxu0 0
      %1483 = vmatpush1.bf16.msra.mxu0 0
      %1484 = vmatprep.subr.bf16.mxu0 0
      %1485 = vmatpush1.bf16.msra.mxu0 0
      %1486 = vmatprep.subr.bf16.mxu0 0
      %1487 = vmatpush1.bf16.msra.mxu0 0
      %1488 = vmatprep.subr.bf16.mxu0 0
      %1489 = vmatpush1.bf16.msra.mxu0 0
      %1490 = vmatprep.subr.bf16.mxu0 0
      %1491 = vmatpush1.bf16.msra.mxu0 0
      %1492 = vmatprep.subr.bf16.mxu0 0
      %1493 = vmatpush1.bf16.msra.mxu0 0
      %1494 = vmatprep.subr.bf16.mxu0 0
      %1495 = vmatpush1.bf16.msra.mxu0 0
      %1496 = vmatprep.subr.bf16.mxu0 0
      %1497 = vmatpush1.bf16.msra.mxu0 0
      %1498 = vmatprep.subr.bf16.mxu0 0
      %1499 = vmatpush1.bf16.msra.mxu0 0
      %1500 = vmatprep.subr.bf16.mxu0 0
      %1501 = vmatpush1.bf16.msra.mxu0 0
      %1502 = vmatprep.subr.bf16.mxu0 0
      %1503 = vmatpush1.bf16.msra.mxu0 0
      %1504 = vmatprep.subr.bf16.mxu0 0
      %1505 = vmatpush1.bf16.msra.mxu0 0
      %1506 = vmatprep.subr.bf16.mxu0 0
      %1507 = vmatpush1.bf16.msra.mxu0 0
      %1508 = vmatprep.mubr.bf16.mxu0 0
      %1509 = vmatmul.mubr.bf16.gmra.mrb[0].mxu0 %v607
      %v1510 = vpop.f32.mrb[0].mxu0
      %v1511 = vadd.f32 %v464, %v1510
      %v1512 = vpop.f32.mrb[0].mxu0
      %v1513 = vpop.f32.mrb[0].mxu0
      %v1514 = vadd.f32 %v467, %v1513
      %v1515 = vpop.f32.mrb[0].mxu0
      %1516 = vmatprep.mubr.bf16.mxu0 0
      %1517 = vmatmul.mubr.bf16.gmra.mrb[0].mxu0 %v610
      %v1518 = vpop.f32.mrb[0].mxu0
      %v1519 = vadd.f32 %v472, %v1518
      %v1520 = vpop.f32.mrb[0].mxu0
      %v1521 = vpop.f32.mrb[0].mxu0
      %v1522 = vpop.f32.mrb[0].mxu0
      %1523 = vdwg.mxu0
      %v1524 = vmul.f32 %v1511, %v1511
      %v1525 = vmul.f32 %v1514, %v1514
      %v1526 = vmul.f32 %v1519, %v1519
      %v1527 = vmul.f32 %v1511, %v1524
      %v1528 = vmul.f32 %v1514, %v1525
      %v1529 = vmul.f32 %v1519, %v1526
      %v1530 = vmul.f32 %v1527, 0.044715
      %v1531 = vmul.f32 %v1528, 0.044715
      %v1532 = vmul.f32 %v1529, 0.044715
      %v1533 = vadd.f32 %v1511, %v1530
      %v1534 = vadd.f32 %v1514, %v1531
      %v1535 = vadd.f32 %v1519, %v1532
      %v1536 = vmul.f32 %v1533, 0.7978846
      %v1537 = vmul.f32 %v1534, 0.7978846
      %v1538 = vmul.f32 %v1535, 0.7978846
      %v1539 = vtanh.pop %v1536
      %v1540 = vtanh.pop %v1537
      %v1541 = vtanh.pop %v1538
      %v1542 = vadd.f32 %v1539, 1.0
      %v1543 = vadd.f32 %v1540, 1.0
      %v1544 = vadd.f32 %v1541, 1.0
      %v1545 = vmul.f32 %v1542, 0.5
      %v1546 = vmul.f32 %v1543, 0.5
      %v1547 = vmul.f32 %v1544, 0.5
      %v1548 = vmul.f32 %v1511, %v1545
      %v1549 = vmul.f32 %v1514, %v1546
      %v1550 = vmul.f32 %v1519, %v1547
      %v1551 = vpack.c.bf16 %v1549, %v1548
      %v1552 = vpack.c.bf16 %v1550, %v1550
      %v1554 = vsel %vm737, %v1552, 0
      %1556 = vmatprep.subr.bf16.mxu0 0
      %1557 = vmatpush1.bf16.msra.mxu0 %v1551
      %1558 = vmatprep.subr.bf16.mxu0 0
      %1559 = vmatpush1.bf16.msra.mxu0 %v1554
      %1560 = vmatprep.subr.bf16.mxu0 0
      %1561 = vmatpush1.bf16.msra.mxu0 0
      %1562 = vmatprep.subr.bf16.mxu0 0
      %1563 = vmatpush1.bf16.msra.mxu0 0
      %1564 = vmatprep.subr.bf16.mxu0 0
      %1565 = vmatpush1.bf16.msra.mxu0 0
      %1566 = vmatprep.subr.bf16.mxu0 0
      %1567 = vmatpush1.bf16.msra.mxu0 0
      %1568 = vmatprep.subr.bf16.mxu0 0
      %1569 = vmatpush1.bf16.msra.mxu0 0
      %1570 = vmatprep.subr.bf16.mxu0 0
      %1571 = vmatpush1.bf16.msra.mxu0 0
      %1572 = vmatprep.subr.bf16.mxu0 0
      %1573 = vmatpush1.bf16.msra.mxu0 0
      %1574 = vmatprep.subr.bf16.mxu0 0
      %1575 = vmatpush1.bf16.msra.mxu0 0
      %1576 = vmatprep.subr.bf16.mxu0 0
      %1577 = vmatpush1.bf16.msra.mxu0 0
      %1578 = vmatprep.subr.bf16.mxu0 0
      %1579 = vmatpush1.bf16.msra.mxu0 0
      %1580 = vmatprep.subr.bf16.mxu0 0
      %1581 = vmatpush1.bf16.msra.mxu0 0
      %1582 = vmatprep.subr.bf16.mxu0 0
      %1583 = vmatpush1.bf16.msra.mxu0 0
      %1584 = vmatprep.subr.bf16.mxu0 0
      %1585 = vmatpush1.bf16.msra.mxu0 0
      %1586 = vmatprep.subr.bf16.mxu0 0
      %1587 = vmatpush1.bf16.msra.mxu0 0
      %1588 = vmatprep.mubr.bf16.mxu0 0
      %1589 = vmatmul.mubr.bf16.gmra.mrb[0].mxu0 %v732
      %v1590 = vpop.f32.mrb[0].mxu0
      %v1591 = vadd.f32 %v703, %v1590
      %v1592 = vpop.f32.mrb[0].mxu0
      %v1593 = vpop.f32.mrb[0].mxu0
      %v1594 = vadd.f32 %v708, %v1593
      %v1595 = vpop.f32.mrb[0].mxu0
      %1596 = vmatprep.mubr.bf16.mxu0 0
      %1597 = vmatmul.mubr.bf16.gmra.mrb[0].mxu0 %v735
      %v1598 = vpop.f32.mrb[0].mxu0
      %v1599 = vadd.f32 %v713, %v1598
      %v1600 = vpop.f32.mrb[0].mxu0
      %v1601 = vpop.f32.mrb[0].mxu0
      %v1602 = vadd.f32 %v718, %v1601
      %v1603 = vpop.f32.mrb[0].mxu0
      %1604 = vdwg.mxu0
      %v1605 = vmul.f32 %v1591, %v1591
      %v1606 = vmul.f32 %v1594, %v1594
      %v1607 = vmul.f32 %v1599, %v1599
      %v1608 = vmul.f32 %v1602, %v1602
      %v1609 = vmul.f32 %v1591, %v1605
      %v1610 = vmul.f32 %v1594, %v1606
      %v1611 = vmul.f32 %v1599, %v1607
      %v1612 = vmul.f32 %v1602, %v1608
      %v1613 = vmul.f32 %v1609, 0.044715
      %v1614 = vmul.f32 %v1610, 0.044715
      %v1615 = vmul.f32 %v1611, 0.044715
      %v1616 = vmul.f32 %v1612, 0.044715
      %v1617 = vadd.f32 %v1591, %v1613
      %v1618 = vadd.f32 %v1594, %v1614
      %v1619 = vadd.f32 %v1599, %v1615
      %v1620 = vadd.f32 %v1602, %v1616
      %v1621 = vmul.f32 %v1617, 0.7978846
      %v1622 = vmul.f32 %v1618, 0.7978846
      %v1623 = vmul.f32 %v1619, 0.7978846
      %v1624 = vmul.f32 %v1620, 0.7978846
      %v1625 = vtanh.pop %v1621
      %v1626 = vtanh.pop %v1622
      %v1627 = vtanh.pop %v1623
      %v1628 = vtanh.pop %v1624
      %v1629 = vadd.f32 %v1625, 1.0
      %v1630 = vadd.f32 %v1626, 1.0
      %v1631 = vadd.f32 %v1627, 1.0
      %v1632 = vadd.f32 %v1628, 1.0
      %v1633 = vmul.f32 %v1629, 0.5
      %v1634 = vmul.f32 %v1630, 0.5
      %v1635 = vmul.f32 %v1631, 0.5
      %v1636 = vmul.f32 %v1632, 0.5
      %v1637 = vmul.f32 %v1591, %v1633
      %v1638 = vmul.f32 %v1594, %v1634
      %v1639 = vmul.f32 %v1599, %v1635
      %v1640 = vmul.f32 %v1602, %v1636
      %v1641 = vmax.f32 %v1368, %v1637
      %v1642 = vmax.f32 %v1369, %v1638
      %v1643 = vmax.f32 %v1370, %v1639
      %v1644 = vmax.f32 %v1371, %v1640
      %v1645 = vlaneseq
      %v1646 = vshrl.u32 %v1645, 7
      %v1647 = vsub.s32 4, %v1646
      %v1648 = vrot.slane %v387, %v1647
      %vm1649 = vcmp.eq.s32.totalorder %v478, %v1648
      %vm1650 = vcmp.eq.s32.totalorder %v479, %v1648
      %vm1651 = vcmp.eq.s32.totalorder %v480, %v1648
      %vm1652 = vcmp.eq.s32.totalorder %v481, %v1648
      %vm1653 = vcmp.eq.s32.totalorder %v482, %v1648
      %vm1654 = vcmp.eq.s32.totalorder %v483, %v1648
      %vm1655 = vcmp.eq.s32.totalorder %v484, %v1648
      %vm1656 = vcmp.eq.s32.totalorder %v485, %v1648
      %vm1657 = vcmp.eq.s32.totalorder %v486, %v1648
      %vm1658 = vcmp.eq.s32.totalorder %v487, %v1648
      %vm1659 = vcmp.eq.s32.totalorder %v488, %v1648
      %vm1660 = vcmp.eq.s32.totalorder %v489, %v1648
      %vm1661 = vcmp.eq.s32.totalorder %v490, %v1648
      %vm1662 = vcmp.eq.s32.totalorder %v491, %v1648
      %vm1663 = vcmp.eq.s32.totalorder %v492, %v1648
      %vm1664 = vcmp.eq.s32.totalorder %v493, %v1648
      %v1665 = vsel %vm1649, 1, 0
      %v1666 = vsel %vm1650, 1, 0
      %v1667 = vsel %vm1651, 1, 0
      %v1668 = vsel %vm1652, 1, 0
      %v1669 = vsel %vm1653, 1, 0
      %v1670 = vsel %vm1654, 1, 0
      %v1671 = vsel %vm1655, 1, 0
      %v1672 = vsel %vm1656, 1, 0
      %v1673 = vsel %vm1657, 1, 0
      %v1674 = vsel %vm1658, 1, 0
      %v1675 = vsel %vm1659, 1, 0
      %v1676 = vsel %vm1660, 1, 0
      %v1677 = vsel %vm1661, 1, 0
      %v1678 = vsel %vm1662, 1, 0
      %v1679 = vsel %vm1663, 1, 0
      %v1680 = vsel %vm1664, 1, 0
      %v1681 = vcvt.s32.f32 %v1665
      %v1682 = vcvt.s32.f32 %v1666
      %v1683 = vcvt.s32.f32 %v1667
      %v1684 = vcvt.s32.f32 %v1668
      %v1685 = vcvt.s32.f32 %v1669
      %v1686 = vcvt.s32.f32 %v1670
      %v1687 = vcvt.s32.f32 %v1671
      %v1688 = vcvt.s32.f32 %v1672
      %v1689 = vcvt.s32.f32 %v1673
      %v1690 = vcvt.s32.f32 %v1674
      %v1691 = vcvt.s32.f32 %v1675
      %v1692 = vcvt.s32.f32 %v1676
      %v1693 = vcvt.s32.f32 %v1677
      %v1694 = vcvt.s32.f32 %v1678
      %v1695 = vcvt.s32.f32 %v1679
      %v1696 = vcvt.s32.f32 %v1680
      %v1697 = vpack.c.bf16 %v1682, %v1681
      %v1698 = vpack.c.bf16 %v1684, %v1683
      %v1699 = vpack.c.bf16 %v1686, %v1685
      %v1700 = vpack.c.bf16 %v1688, %v1687
      %v1701 = vpack.c.bf16 %v1690, %v1689
      %v1702 = vpack.c.bf16 %v1692, %v1691
      %v1703 = vpack.c.bf16 %v1694, %v1693
      %v1704 = vpack.c.bf16 %v1696, %v1695
      %1705 = vmatprep.subr.bf16.mxu0 0
      %1706 = vmatpush1.bf16.msra.mxu0 %v1697
      %1707 = vmatprep.subr.bf16.mxu0 0
      %1708 = vmatpush1.bf16.msra.mxu0 %v1698
      %1709 = vmatprep.subr.bf16.mxu0 0
      %1710 = vmatpush1.bf16.msra.mxu0 %v1699
      %1711 = vmatprep.subr.bf16.mxu0 0
      %1712 = vmatpush1.bf16.msra.mxu0 %v1700
      %1713 = vmatprep.subr.bf16.mxu0 0
      %1714 = vmatpush1.bf16.msra.mxu0 %v1701
      %1715 = vmatprep.subr.bf16.mxu0 0
      %1716 = vmatpush1.bf16.msra.mxu0 %v1702
      %1717 = vmatprep.subr.bf16.mxu0 0
      %1718 = vmatpush1.bf16.msra.mxu0 %v1703
      %1719 = vmatprep.subr.bf16.mxu0 0
      %1720 = vmatpush1.bf16.msra.mxu0 %v1704
      %1721 = vmatprep.subr.bf16.mxu0 0
      %1722 = vmatpush1.bf16.msra.mxu0 0
      %1723 = vmatprep.subr.bf16.mxu0 0
      %1724 = vmatpush1.bf16.msra.mxu0 0
      %1725 = vmatprep.subr.bf16.mxu0 0
      %1726 = vmatpush1.bf16.msra.mxu0 0
      %1727 = vmatprep.subr.bf16.mxu0 0
      %1728 = vmatpush1.bf16.msra.mxu0 0
      %1729 = vmatprep.subr.bf16.mxu0 0
      %1730 = vmatpush1.bf16.msra.mxu0 0
      %1731 = vmatprep.subr.bf16.mxu0 0
      %1732 = vmatpush1.bf16.msra.mxu0 0
      %1733 = vmatprep.subr.bf16.mxu0 0
      %1734 = vmatpush1.bf16.msra.mxu0 0
      %1735 = vmatprep.subr.bf16.mxu0 0
      %1736 = vmatpush1.bf16.msra.mxu0 0
      %1737 = vmatprep.mubr.bf16.mxu0 0
      %1738 = vmatmul.mubr.bf16.gmra.mrb[0].mxu0 %v384
      %v1739 = vpop.f32.mrb[0].mxu0
      %v1740 = vadd.f32 0.0, %v1739
      %v1741 = vpop.f32.mrb[0].mxu0
      %v1742 = vpop.f32.mrb[0].mxu0
      %v1743 = vpop.f32.mrb[0].mxu0
      %1744 = vdwg.mxu0
      %v1745 = vpack.c.bf16 %v1740, %v1740
      %v1747 = vsel %vm425, %v1745, 0
      %1749 = vmatprep.subr.bf16.mxu0 0
      %1750 = vmatpush1.bf16.msra.mxu0 %v1747
      %1751 = vmatprep.subr.bf16.mxu0 0
      %1752 = vmatpush1.bf16.msra.mxu0 0
      %1753 = vmatprep.subr.bf16.mxu0 0
      %1754 = vmatpush1.bf16.msra.mxu0 0
      %1755 = vmatprep.subr.bf16.mxu0 0
      %1756 = vmatpush1.bf16.msra.mxu0 0
      %1757 = vmatprep.subr.bf16.mxu0 0
      %1758 = vmatpush1.bf16.msra.mxu0 0
      %1759 = vmatprep.subr.bf16.mxu0 0
      %1760 = vmatpush1.bf16.msra.mxu0 0
      %1761 = vmatprep.subr.bf16.mxu0 0
      %1762 = vmatpush1.bf16.msra.mxu0 0
      %1763 = vmatprep.subr.bf16.mxu0 0
      %1764 = vmatpush1.bf16.msra.mxu0 0
      %1765 = vmatprep.subr.bf16.mxu0 0
      %1766 = vmatpush1.bf16.msra.mxu0 0
      %1767 = vmatprep.subr.bf16.mxu0 0
      %1768 = vmatpush1.bf16.msra.mxu0 0
      %1769 = vmatprep.subr.bf16.mxu0 0
      %1770 = vmatpush1.bf16.msra.mxu0 0
      %1771 = vmatprep.subr.bf16.mxu0 0
      %1772 = vmatpush1.bf16.msra.mxu0 0
      %1773 = vmatprep.subr.bf16.mxu0 0
      %1774 = vmatpush1.bf16.msra.mxu0 0
      %1775 = vmatprep.subr.bf16.mxu0 0
      %1776 = vmatpush1.bf16.msra.mxu0 0
      %1777 = vmatprep.subr.bf16.mxu0 0
      %1778 = vmatpush1.bf16.msra.mxu0 0
      %1779 = vmatprep.subr.bf16.mxu0 0
      %1780 = vmatpush1.bf16.msra.mxu0 0
      %1781 = vmatprep.mubr.bf16.mxu0 0
      %1782 = vmatmul.mubr.bf16.gmra.mrb[0].mxu0 %v607
      %v1783 = vpop.f32.mrb[0].mxu0
      %v1784 = vadd.f32 %v464, %v1783
      %v1785 = vpop.f32.mrb[0].mxu0
      %v1786 = vpop.f32.mrb[0].mxu0
      %v1787 = vadd.f32 %v467, %v1786
      %v1788 = vpop.f32.mrb[0].mxu0
      %1789 = vmatprep.mubr.bf16.mxu0 0
      %1790 = vmatmul.mubr.bf16.gmra.mrb[0].mxu0 %v610
      %v1791 = vpop.f32.mrb[0].mxu0
      %v1792 = vadd.f32 %v472, %v1791
      %v1793 = vpop.f32.mrb[0].mxu0
      %v1794 = vpop.f32.mrb[0].mxu0
      %v1795 = vpop.f32.mrb[0].mxu0
      %1796 = vdwg.mxu0
      %v1797 = vmul.f32 %v1784, %v1784
      %v1798 = vmul.f32 %v1787, %v1787
      %v1799 = vmul.f32 %v1792, %v1792
      %v1800 = vmul.f32 %v1784, %v1797
      %v1801 = vmul.f32 %v1787, %v1798
      %v1802 = vmul.f32 %v1792, %v1799
      %v1803 = vmul.f32 %v1800, 0.044715
      %v1804 = vmul.f32 %v1801, 0.044715
      %v1805 = vmul.f32 %v1802, 0.044715
      %v1806 = vadd.f32 %v1784, %v1803
      %v1807 = vadd.f32 %v1787, %v1804
      %v1808 = vadd.f32 %v1792, %v1805
      %v1809 = vmul.f32 %v1806, 0.7978846
      %v1810 = vmul.f32 %v1807, 0.7978846
      %v1811 = vmul.f32 %v1808, 0.7978846
      %v1812 = vtanh.pop %v1809
      %v1813 = vtanh.pop %v1810
      %v1814 = vtanh.pop %v1811
      %v1815 = vadd.f32 %v1812, 1.0
      %v1816 = vadd.f32 %v1813, 1.0
      %v1817 = vadd.f32 %v1814, 1.0
      %v1818 = vmul.f32 %v1815, 0.5
      %v1819 = vmul.f32 %v1816, 0.5
      %v1820 = vmul.f32 %v1817, 0.5
      %v1821 = vmul.f32 %v1784, %v1818
      %v1822 = vmul.f32 %v1787, %v1819
      %v1823 = vmul.f32 %v1792, %v1820
      %v1824 = vpack.c.bf16 %v1822, %v1821
      %v1825 = vpack.c.bf16 %v1823, %v1823
      %v1827 = vsel %vm737, %v1825, 0
      %1829 = vmatprep.subr.bf16.mxu0 0
      %1830 = vmatpush1.bf16.msra.mxu0 %v1824
      %1831 = vmatprep.subr.bf16.mxu0 0
      %1832 = vmatpush1.bf16.msra.mxu0 %v1827
      %1833 = vmatprep.subr.bf16.mxu0 0
      %1834 = vmatpush1.bf16.msra.mxu0 0
      %1835 = vmatprep.subr.bf16.mxu0 0
      %1836 = vmatpush1.bf16.msra.mxu0 0
      %1837 = vmatprep.subr.bf16.mxu0 0
      %1838 = vmatpush1.bf16.msra.mxu0 0
      %1839 = vmatprep.subr.bf16.mxu0 0
      %1840 = vmatpush1.bf16.msra.mxu0 0
      %1841 = vmatprep.subr.bf16.mxu0 0
      %1842 = vmatpush1.bf16.msra.mxu0 0
      %1843 = vmatprep.subr.bf16.mxu0 0
      %1844 = vmatpush1.bf16.msra.mxu0 0
      %1845 = vmatprep.subr.bf16.mxu0 0
      %1846 = vmatpush1.bf16.msra.mxu0 0
      %1847 = vmatprep.subr.bf16.mxu0 0
      %1848 = vmatpush1.bf16.msra.mxu0 0
      %1849 = vmatprep.subr.bf16.mxu0 0
      %1850 = vmatpush1.bf16.msra.mxu0 0
      %1851 = vmatprep.subr.bf16.mxu0 0
      %1852 = vmatpush1.bf16.msra.mxu0 0
      %1853 = vmatprep.subr.bf16.mxu0 0
      %1854 = vmatpush1.bf16.msra.mxu0 0
      %1855 = vmatprep.subr.bf16.mxu0 0
      %1856 = vmatpush1.bf16.msra.mxu0 0
      %1857 = vmatprep.subr.bf16.mxu0 0
      %1858 = vmatpush1.bf16.msra.mxu0 0
      %1859 = vmatprep.subr.bf16.mxu0 0
      %1860 = vmatpush1.bf16.msra.mxu0 0
      %1861 = vmatprep.mubr.bf16.mxu0 0
      %1862 = vmatmul.mubr.bf16.gmra.mrb[0].mxu0 %v732
      %v1863 = vpop.f32.mrb[0].mxu0
      %v1864 = vadd.f32 %v703, %v1863
      %v1865 = vpop.f32.mrb[0].mxu0
      %v1866 = vpop.f32.mrb[0].mxu0
      %v1867 = vadd.f32 %v708, %v1866
      %v1868 = vpop.f32.mrb[0].mxu0
      %1869 = vmatprep.mubr.bf16.mxu0 0
      %1870 = vmatmul.mubr.bf16.gmra.mrb[0].mxu0 %v735
      %v1871 = vpop.f32.mrb[0].mxu0
      %v1872 = vadd.f32 %v713, %v1871
      %v1873 = vpop.f32.mrb[0].mxu0
      %v1874 = vpop.f32.mrb[0].mxu0
      %v1875 = vadd.f32 %v718, %v1874
      %v1876 = vpop.f32.mrb[0].mxu0
      %1877 = vdwg.mxu0
      %v1878 = vmul.f32 %v1864, %v1864
      %v1879 = vmul.f32 %v1867, %v1867
      %v1880 = vmul.f32 %v1872, %v1872
      %v1881 = vmul.f32 %v1875, %v1875
      %v1882 = vmul.f32 %v1864, %v1878
      %v1883 = vmul.f32 %v1867, %v1879
      %v1884 = vmul.f32 %v1872, %v1880
      %v1885 = vmul.f32 %v1875, %v1881
      %v1886 = vmul.f32 %v1882, 0.044715
      %v1887 = vmul.f32 %v1883, 0.044715
      %v1888 = vmul.f32 %v1884, 0.044715
      %v1889 = vmul.f32 %v1885, 0.044715
      %v1890 = vadd.f32 %v1864, %v1886
      %v1891 = vadd.f32 %v1867, %v1887
      %v1892 = vadd.f32 %v1872, %v1888
      %v1893 = vadd.f32 %v1875, %v1889
      %v1894 = vmul.f32 %v1890, 0.7978846
      %v1895 = vmul.f32 %v1891, 0.7978846
      %v1896 = vmul.f32 %v1892, 0.7978846
      %v1897 = vmul.f32 %v1893, 0.7978846
      %v1898 = vtanh.pop %v1894
      %v1899 = vtanh.pop %v1895
      %v1900 = vtanh.pop %v1896
      %v1901 = vtanh.pop %v1897
      %v1902 = vadd.f32 %v1898, 1.0
      %v1903 = vadd.f32 %v1899, 1.0
      %v1904 = vadd.f32 %v1900, 1.0
      %v1905 = vadd.f32 %v1901, 1.0
      %v1906 = vmul.f32 %v1902, 0.5
      %v1907 = vmul.f32 %v1903, 0.5
      %v1908 = vmul.f32 %v1904, 0.5
      %v1909 = vmul.f32 %v1905, 0.5
      %v1910 = vmul.f32 %v1864, %v1906
      %v1911 = vmul.f32 %v1867, %v1907
      %v1912 = vmul.f32 %v1872, %v1908
      %v1913 = vmul.f32 %v1875, %v1909
      %v1914 = vmax.f32 %v1641, %v1910
      %v1915 = vmax.f32 %v1642, %v1911
      %v1916 = vmax.f32 %v1643, %v1912
      %v1917 = vmax.f32 %v1644, %v1913
      %v1918 = vlaneseq
      %v1919 = vshrl.u32 %v1918, 7
      %v1920 = vsub.s32 5, %v1919
      %v1921 = vrot.slane %v387, %v1920
      %vm1922 = vcmp.eq.s32.totalorder %v478, %v1921
      %vm1923 = vcmp.eq.s32.totalorder %v479, %v1921
      %vm1924 = vcmp.eq.s32.totalorder %v480, %v1921
      %vm1925 = vcmp.eq.s32.totalorder %v481, %v1921
      %vm1926 = vcmp.eq.s32.totalorder %v482, %v1921
      %vm1927 = vcmp.eq.s32.totalorder %v483, %v1921
      %vm1928 = vcmp.eq.s32.totalorder %v484, %v1921
      %vm1929 = vcmp.eq.s32.totalorder %v485, %v1921
      %vm1930 = vcmp.eq.s32.totalorder %v486, %v1921
      %vm1931 = vcmp.eq.s32.totalorder %v487, %v1921
      %vm1932 = vcmp.eq.s32.totalorder %v488, %v1921
      %vm1933 = vcmp.eq.s32.totalorder %v489, %v1921
      %vm1934 = vcmp.eq.s32.totalorder %v490, %v1921
      %vm1935 = vcmp.eq.s32.totalorder %v491, %v1921
      %vm1936 = vcmp.eq.s32.totalorder %v492, %v1921
      %vm1937 = vcmp.eq.s32.totalorder %v493, %v1921
      %v1938 = vsel %vm1922, 1, 0
      %v1939 = vsel %vm1923, 1, 0
      %v1940 = vsel %vm1924, 1, 0
      %v1941 = vsel %vm1925, 1, 0
      %v1942 = vsel %vm1926, 1, 0
      %v1943 = vsel %vm1927, 1, 0
      %v1944 = vsel %vm1928, 1, 0
      %v1945 = vsel %vm1929, 1, 0
      %v1946 = vsel %vm1930, 1, 0
      %v1947 = vsel %vm1931, 1, 0
      %v1948 = vsel %vm1932, 1, 0
      %v1949 = vsel %vm1933, 1, 0
      %v1950 = vsel %vm1934, 1, 0
      %v1951 = vsel %vm1935, 1, 0
      %v1952 = vsel %vm1936, 1, 0
      %v1953 = vsel %vm1937, 1, 0
      %v1954 = vcvt.s32.f32 %v1938
      %v1955 = vcvt.s32.f32 %v1939
      %v1956 = vcvt.s32.f32 %v1940
      %v1957 = vcvt.s32.f32 %v1941
      %v1958 = vcvt.s32.f32 %v1942
      %v1959 = vcvt.s32.f32 %v1943
      %v1960 = vcvt.s32.f32 %v1944
      %v1961 = vcvt.s32.f32 %v1945
      %v1962 = vcvt.s32.f32 %v1946
      %v1963 = vcvt.s32.f32 %v1947
      %v1964 = vcvt.s32.f32 %v1948
      %v1965 = vcvt.s32.f32 %v1949
      %v1966 = vcvt.s32.f32 %v1950
      %v1967 = vcvt.s32.f32 %v1951
      %v1968 = vcvt.s32.f32 %v1952
      %v1969 = vcvt.s32.f32 %v1953
      %v1970 = vpack.c.bf16 %v1955, %v1954
      %v1971 = vpack.c.bf16 %v1957, %v1956
      %v1972 = vpack.c.bf16 %v1959, %v1958
      %v1973 = vpack.c.bf16 %v1961, %v1960
      %v1974 = vpack.c.bf16 %v1963, %v1962
      %v1975 = vpack.c.bf16 %v1965, %v1964
      %v1976 = vpack.c.bf16 %v1967, %v1966
      %v1977 = vpack.c.bf16 %v1969, %v1968
      %1978 = vmatprep.subr.bf16.mxu0 0
      %1979 = vmatpush1.bf16.msra.mxu0 %v1970
      %1980 = vmatprep.subr.bf16.mxu0 0
      %1981 = vmatpush1.bf16.msra.mxu0 %v1971
      %1982 = vmatprep.subr.bf16.mxu0 0
      %1983 = vmatpush1.bf16.msra.mxu0 %v1972
      %1984 = vmatprep.subr.bf16.mxu0 0
      %1985 = vmatpush1.bf16.msra.mxu0 %v1973
      %1986 = vmatprep.subr.bf16.mxu0 0
      %1987 = vmatpush1.bf16.msra.mxu0 %v1974
      %1988 = vmatprep.subr.bf16.mxu0 0
      %1989 = vmatpush1.bf16.msra.mxu0 %v1975
      %1990 = vmatprep.subr.bf16.mxu0 0
      %1991 = vmatpush1.bf16.msra.mxu0 %v1976
      %1992 = vmatprep.subr.bf16.mxu0 0
      %1993 = vmatpush1.bf16.msra.mxu0 %v1977
      %1994 = vmatprep.subr.bf16.mxu0 0
      %1995 = vmatpush1.bf16.msra.mxu0 0
      %1996 = vmatprep.subr.bf16.mxu0 0
      %1997 = vmatpush1.bf16.msra.mxu0 0
      %1998 = vmatprep.subr.bf16.mxu0 0
      %1999 = vmatpush1.bf16.msra.mxu0 0
      %2000 = vmatprep.subr.bf16.mxu0 0
      %2001 = vmatpush1.bf16.msra.mxu0 0
      %2002 = vmatprep.subr.bf16.mxu0 0
      %2003 = vmatpush1.bf16.msra.mxu0 0
      %2004 = vmatprep.subr.bf16.mxu0 0
      %2005 = vmatpush1.bf16.msra.mxu0 0
      %2006 = vmatprep.subr.bf16.mxu0 0
      %2007 = vmatpush1.bf16.msra.mxu0 0
      %2008 = vmatprep.subr.bf16.mxu0 0
      %2009 = vmatpush1.bf16.msra.mxu0 0
      %2010 = vmatprep.mubr.bf16.mxu0 0
      %2011 = vmatmul.mubr.bf16.gmra.mrb[0].mxu0 %v384
      %v2012 = vpop.f32.mrb[0].mxu0
      %v2013 = vadd.f32 0.0, %v2012
      %v2014 = vpop.f32.mrb[0].mxu0
      %v2015 = vpop.f32.mrb[0].mxu0
      %v2016 = vpop.f32.mrb[0].mxu0
      %2017 = vdwg.mxu0
      %v2018 = vpack.c.bf16 %v2013, %v2013
      %v2020 = vsel %vm425, %v2018, 0
      %2022 = vmatprep.subr.bf16.mxu0 0
      %2023 = vmatpush1.bf16.msra.mxu0 %v2020
      %2024 = vmatprep.subr.bf16.mxu0 0
      %2025 = vmatpush1.bf16.msra.mxu0 0
      %2026 = vmatprep.subr.bf16.mxu0 0
      %2027 = vmatpush1.bf16.msra.mxu0 0
      %2028 = vmatprep.subr.bf16.mxu0 0
      %2029 = vmatpush1.bf16.msra.mxu0 0
      %2030 = vmatprep.subr.bf16.mxu0 0
      %2031 = vmatpush1.bf16.msra.mxu0 0
      %2032 = vmatprep.subr.bf16.mxu0 0
      %2033 = vmatpush1.bf16.msra.mxu0 0
      %2034 = vmatprep.subr.bf16.mxu0 0
      %2035 = vmatpush1.bf16.msra.mxu0 0
      %2036 = vmatprep.subr.bf16.mxu0 0
      %2037 = vmatpush1.bf16.msra.mxu0 0
      %2038 = vmatprep.subr.bf16.mxu0 0
      %2039 = vmatpush1.bf16.msra.mxu0 0
      %2040 = vmatprep.subr.bf16.mxu0 0
      %2041 = vmatpush1.bf16.msra.mxu0 0
      %2042 = vmatprep.subr.bf16.mxu0 0
      %2043 = vmatpush1.bf16.msra.mxu0 0
      %2044 = vmatprep.subr.bf16.mxu0 0
      %2045 = vmatpush1.bf16.msra.mxu0 0
      %2046 = vmatprep.subr.bf16.mxu0 0
      %2047 = vmatpush1.bf16.msra.mxu0 0
      %2048 = vmatprep.subr.bf16.mxu0 0
      %2049 = vmatpush1.bf16.msra.mxu0 0
      %2050 = vmatprep.subr.bf16.mxu0 0
      %2051 = vmatpush1.bf16.msra.mxu0 0
      %2052 = vmatprep.subr.bf16.mxu0 0
      %2053 = vmatpush1.bf16.msra.mxu0 0
      %2054 = vmatprep.mubr.bf16.mxu0 0
      %2055 = vmatmul.mubr.bf16.gmra.mrb[0].mxu0 %v607
      %v2056 = vpop.f32.mrb[0].mxu0
      %v2057 = vadd.f32 %v464, %v2056
      %v2058 = vpop.f32.mrb[0].mxu0
      %v2059 = vpop.f32.mrb[0].mxu0
      %v2060 = vadd.f32 %v467, %v2059
      %v2061 = vpop.f32.mrb[0].mxu0
      %2062 = vmatprep.mubr.bf16.mxu0 0
      %2063 = vmatmul.mubr.bf16.gmra.mrb[0].mxu0 %v610
      %v2064 = vpop.f32.mrb[0].mxu0
      %v2065 = vadd.f32 %v472, %v2064
      %v2066 = vpop.f32.mrb[0].mxu0
      %v2067 = vpop.f32.mrb[0].mxu0
      %v2068 = vpop.f32.mrb[0].mxu0
      %2069 = vdwg.mxu0
      %v2070 = vmul.f32 %v2057, %v2057
      %v2071 = vmul.f32 %v2060, %v2060
      %v2072 = vmul.f32 %v2065, %v2065
      %v2073 = vmul.f32 %v2057, %v2070
      %v2074 = vmul.f32 %v2060, %v2071
      %v2075 = vmul.f32 %v2065, %v2072
      %v2076 = vmul.f32 %v2073, 0.044715
      %v2077 = vmul.f32 %v2074, 0.044715
      %v2078 = vmul.f32 %v2075, 0.044715
      %v2079 = vadd.f32 %v2057, %v2076
      %v2080 = vadd.f32 %v2060, %v2077
      %v2081 = vadd.f32 %v2065, %v2078
      %v2082 = vmul.f32 %v2079, 0.7978846
      %v2083 = vmul.f32 %v2080, 0.7978846
      %v2084 = vmul.f32 %v2081, 0.7978846
      %v2085 = vtanh.pop %v2082
      %v2086 = vtanh.pop %v2083
      %v2087 = vtanh.pop %v2084
      %v2088 = vadd.f32 %v2085, 1.0
      %v2089 = vadd.f32 %v2086, 1.0
      %v2090 = vadd.f32 %v2087, 1.0
      %v2091 = vmul.f32 %v2088, 0.5
      %v2092 = vmul.f32 %v2089, 0.5
      %v2093 = vmul.f32 %v2090, 0.5
      %v2094 = vmul.f32 %v2057, %v2091
      %v2095 = vmul.f32 %v2060, %v2092
      %v2096 = vmul.f32 %v2065, %v2093
      %v2097 = vpack.c.bf16 %v2095, %v2094
      %v2098 = vpack.c.bf16 %v2096, %v2096
      %v2100 = vsel %vm737, %v2098, 0
      %2102 = vmatprep.subr.bf16.mxu0 0
      %2103 = vmatpush1.bf16.msra.mxu0 %v2097
      %2104 = vmatprep.subr.bf16.mxu0 0
      %2105 = vmatpush1.bf16.msra.mxu0 %v2100
      %2106 = vmatprep.subr.bf16.mxu0 0
      %2107 = vmatpush1.bf16.msra.mxu0 0
      %2108 = vmatprep.subr.bf16.mxu0 0
      %2109 = vmatpush1.bf16.msra.mxu0 0
      %2110 = vmatprep.subr.bf16.mxu0 0
      %2111 = vmatpush1.bf16.msra.mxu0 0
      %2112 = vmatprep.subr.bf16.mxu0 0
      %2113 = vmatpush1.bf16.msra.mxu0 0
      %2114 = vmatprep.subr.bf16.mxu0 0
      %2115 = vmatpush1.bf16.msra.mxu0 0
      %2116 = vmatprep.subr.bf16.mxu0 0
      %2117 = vmatpush1.bf16.msra.mxu0 0
      %2118 = vmatprep.subr.bf16.mxu0 0
      %2119 = vmatpush1.bf16.msra.mxu0 0
      %2120 = vmatprep.subr.bf16.mxu0 0
      %2121 = vmatpush1.bf16.msra.mxu0 0
      %2122 = vmatprep.subr.bf16.mxu0 0
      %2123 = vmatpush1.bf16.msra.mxu0 0
      %2124 = vmatprep.subr.bf16.mxu0 0
      %2125 = vmatpush1.bf16.msra.mxu0 0
      %2126 = vmatprep.subr.bf16.mxu0 0
      %2127 = vmatpush1.bf16.msra.mxu0 0
      %2128 = vmatprep.subr.bf16.mxu0 0
      %2129 = vmatpush1.bf16.msra.mxu0 0
      %2130 = vmatprep.subr.bf16.mxu0 0
      %2131 = vmatpush1.bf16.msra.mxu0 0
      %2132 = vmatprep.subr.bf16.mxu0 0
      %2133 = vmatpush1.bf16.msra.mxu0 0
      %2134 = vmatprep.mubr.bf16.mxu0 0
      %2135 = vmatmul.mubr.bf16.gmra.mrb[0].mxu0 %v732
      %v2136 = vpop.f32.mrb[0].mxu0
      %v2137 = vadd.f32 %v703, %v2136
      %v2138 = vpop.f32.mrb[0].mxu0
      %v2139 = vpop.f32.mrb[0].mxu0
      %v2140 = vadd.f32 %v708, %v2139
      %v2141 = vpop.f32.mrb[0].mxu0
      %2142 = vmatprep.mubr.bf16.mxu0 0
      %2143 = vmatmul.mubr.bf16.gmra.mrb[0].mxu0 %v735
      %v2144 = vpop.f32.mrb[0].mxu0
      %v2145 = vadd.f32 %v713, %v2144
      %v2146 = vpop.f32.mrb[0].mxu0
      %v2147 = vpop.f32.mrb[0].mxu0
      %v2148 = vadd.f32 %v718, %v2147
      %v2149 = vpop.f32.mrb[0].mxu0
      %2150 = vdwg.mxu0
      %v2151 = vmul.f32 %v2137, %v2137
      %v2152 = vmul.f32 %v2140, %v2140
      %v2153 = vmul.f32 %v2145, %v2145
      %v2154 = vmul.f32 %v2148, %v2148
      %v2155 = vmul.f32 %v2137, %v2151
      %v2156 = vmul.f32 %v2140, %v2152
      %v2157 = vmul.f32 %v2145, %v2153
      %v2158 = vmul.f32 %v2148, %v2154
      %v2159 = vmul.f32 %v2155, 0.044715
      %v2160 = vmul.f32 %v2156, 0.044715
      %v2161 = vmul.f32 %v2157, 0.044715
      %v2162 = vmul.f32 %v2158, 0.044715
      %v2163 = vadd.f32 %v2137, %v2159
      %v2164 = vadd.f32 %v2140, %v2160
      %v2165 = vadd.f32 %v2145, %v2161
      %v2166 = vadd.f32 %v2148, %v2162
      %v2167 = vmul.f32 %v2163, 0.7978846
      %v2168 = vmul.f32 %v2164, 0.7978846
      %v2169 = vmul.f32 %v2165, 0.7978846
      %v2170 = vmul.f32 %v2166, 0.7978846
      %v2171 = vtanh.pop %v2167
      %v2172 = vtanh.pop %v2168
      %v2173 = vtanh.pop %v2169
      %v2174 = vtanh.pop %v2170
      %v2175 = vadd.f32 %v2171, 1.0
      %v2176 = vadd.f32 %v2172, 1.0
      %v2177 = vadd.f32 %v2173, 1.0
      %v2178 = vadd.f32 %v2174, 1.0
      %v2179 = vmul.f32 %v2175, 0.5
      %v2180 = vmul.f32 %v2176, 0.5
      %v2181 = vmul.f32 %v2177, 0.5
      %v2182 = vmul.f32 %v2178, 0.5
      %v2183 = vmul.f32 %v2137, %v2179
      %v2184 = vmul.f32 %v2140, %v2180
      %v2185 = vmul.f32 %v2145, %v2181
      %v2186 = vmul.f32 %v2148, %v2182
      %v2187 = vmax.f32 %v1914, %v2183
      %v2188 = vmax.f32 %v1915, %v2184
      %v2189 = vmax.f32 %v1916, %v2185
      %v2190 = vmax.f32 %v1917, %v2186
      %v2191 = vlaneseq
      %v2192 = vshrl.u32 %v2191, 7
      %v2193 = vsub.s32 6, %v2192
      %v2194 = vrot.slane %v387, %v2193
      %vm2195 = vcmp.eq.s32.totalorder %v478, %v2194
      %vm2196 = vcmp.eq.s32.totalorder %v479, %v2194
      %vm2197 = vcmp.eq.s32.totalorder %v480, %v2194
      %vm2198 = vcmp.eq.s32.totalorder %v481, %v2194
      %vm2199 = vcmp.eq.s32.totalorder %v482, %v2194
      %vm2200 = vcmp.eq.s32.totalorder %v483, %v2194
      %vm2201 = vcmp.eq.s32.totalorder %v484, %v2194
      %vm2202 = vcmp.eq.s32.totalorder %v485, %v2194
      %vm2203 = vcmp.eq.s32.totalorder %v486, %v2194
      %vm2204 = vcmp.eq.s32.totalorder %v487, %v2194
      %vm2205 = vcmp.eq.s32.totalorder %v488, %v2194
      %vm2206 = vcmp.eq.s32.totalorder %v489, %v2194
      %vm2207 = vcmp.eq.s32.totalorder %v490, %v2194
      %vm2208 = vcmp.eq.s32.totalorder %v491, %v2194
      %vm2209 = vcmp.eq.s32.totalorder %v492, %v2194
      %vm2210 = vcmp.eq.s32.totalorder %v493, %v2194
      %v2211 = vsel %vm2195, 1, 0
      %v2212 = vsel %vm2196, 1, 0
      %v2213 = vsel %vm2197, 1, 0
      %v2214 = vsel %vm2198, 1, 0
      %v2215 = vsel %vm2199, 1, 0
      %v2216 = vsel %vm2200, 1, 0
      %v2217 = vsel %vm2201, 1, 0
      %v2218 = vsel %vm2202, 1, 0
      %v2219 = vsel %vm2203, 1, 0
      %v2220 = vsel %vm2204, 1, 0
      %v2221 = vsel %vm2205, 1, 0
      %v2222 = vsel %vm2206, 1, 0
      %v2223 = vsel %vm2207, 1, 0
      %v2224 = vsel %vm2208, 1, 0
      %v2225 = vsel %vm2209, 1, 0
      %v2226 = vsel %vm2210, 1, 0
      %v2227 = vcvt.s32.f32 %v2211
      %v2228 = vcvt.s32.f32 %v2212
      %v2229 = vcvt.s32.f32 %v2213
      %v2230 = vcvt.s32.f32 %v2214
      %v2231 = vcvt.s32.f32 %v2215
      %v2232 = vcvt.s32.f32 %v2216
      %v2233 = vcvt.s32.f32 %v2217
      %v2234 = vcvt.s32.f32 %v2218
      %v2235 = vcvt.s32.f32 %v2219
      %v2236 = vcvt.s32.f32 %v2220
      %v2237 = vcvt.s32.f32 %v2221
      %v2238 = vcvt.s32.f32 %v2222
      %v2239 = vcvt.s32.f32 %v2223
      %v2240 = vcvt.s32.f32 %v2224
      %v2241 = vcvt.s32.f32 %v2225
      %v2242 = vcvt.s32.f32 %v2226
      %v2243 = vpack.c.bf16 %v2228, %v2227
      %v2244 = vpack.c.bf16 %v2230, %v2229
      %v2245 = vpack.c.bf16 %v2232, %v2231
      %v2246 = vpack.c.bf16 %v2234, %v2233
      %v2247 = vpack.c.bf16 %v2236, %v2235
      %v2248 = vpack.c.bf16 %v2238, %v2237
      %v2249 = vpack.c.bf16 %v2240, %v2239
      %v2250 = vpack.c.bf16 %v2242, %v2241
      %2251 = vmatprep.subr.bf16.mxu0 0
      %2252 = vmatpush1.bf16.msra.mxu0 %v2243
      %2253 = vmatprep.subr.bf16.mxu0 0
      %2254 = vmatpush1.bf16.msra.mxu0 %v2244
      %2255 = vmatprep.subr.bf16.mxu0 0
      %2256 = vmatpush1.bf16.msra.mxu0 %v2245
      %2257 = vmatprep.subr.bf16.mxu0 0
      %2258 = vmatpush1.bf16.msra.mxu0 %v2246
      %2259 = vmatprep.subr.bf16.mxu0 0
      %2260 = vmatpush1.bf16.msra.mxu0 %v2247
      %2261 = vmatprep.subr.bf16.mxu0 0
      %2262 = vmatpush1.bf16.msra.mxu0 %v2248
      %2263 = vmatprep.subr.bf16.mxu0 0
      %2264 = vmatpush1.bf16.msra.mxu0 %v2249
      %2265 = vmatprep.subr.bf16.mxu0 0
      %2266 = vmatpush1.bf16.msra.mxu0 %v2250
      %2267 = vmatprep.subr.bf16.mxu0 0
      %2268 = vmatpush1.bf16.msra.mxu0 0
      %2269 = vmatprep.subr.bf16.mxu0 0
      %2270 = vmatpush1.bf16.msra.mxu0 0
      %2271 = vmatprep.subr.bf16.mxu0 0
      %2272 = vmatpush1.bf16.msra.mxu0 0
      %2273 = vmatprep.subr.bf16.mxu0 0
      %2274 = vmatpush1.bf16.msra.mxu0 0
      %2275 = vmatprep.subr.bf16.mxu0 0
      %2276 = vmatpush1.bf16.msra.mxu0 0
      %2277 = vmatprep.subr.bf16.mxu0 0
      %2278 = vmatpush1.bf16.msra.mxu0 0
      %2279 = vmatprep.subr.bf16.mxu0 0
      %2280 = vmatpush1.bf16.msra.mxu0 0
      %2281 = vmatprep.subr.bf16.mxu0 0
      %2282 = vmatpush1.bf16.msra.mxu0 0
      %2283 = vmatprep.mubr.bf16.mxu0 0
      %2284 = vmatmul.mubr.bf16.gmra.mrb[0].mxu0 %v384
      %v2285 = vpop.f32.mrb[0].mxu0
      %v2286 = vadd.f32 0.0, %v2285
      %v2287 = vpop.f32.mrb[0].mxu0
      %v2288 = vpop.f32.mrb[0].mxu0
      %v2289 = vpop.f32.mrb[0].mxu0
      %2290 = vdwg.mxu0
      %v2291 = vpack.c.bf16 %v2286, %v2286
      %v2293 = vsel %vm425, %v2291, 0
      %2295 = vmatprep.subr.bf16.mxu0 0
      %2296 = vmatpush1.bf16.msra.mxu0 %v2293
      %2297 = vmatprep.subr.bf16.mxu0 0
      %2298 = vmatpush1.bf16.msra.mxu0 0
      %2299 = vmatprep.subr.bf16.mxu0 0
      %2300 = vmatpush1.bf16.msra.mxu0 0
      %2301 = vmatprep.subr.bf16.mxu0 0
      %2302 = vmatpush1.bf16.msra.mxu0 0
      %2303 = vmatprep.subr.bf16.mxu0 0
      %2304 = vmatpush1.bf16.msra.mxu0 0
      %2305 = vmatprep.subr.bf16.mxu0 0
      %2306 = vmatpush1.bf16.msra.mxu0 0
      %2307 = vmatprep.subr.bf16.mxu0 0
      %2308 = vmatpush1.bf16.msra.mxu0 0
      %2309 = vmatprep.subr.bf16.mxu0 0
      %2310 = vmatpush1.bf16.msra.mxu0 0
      %2311 = vmatprep.subr.bf16.mxu0 0
      %2312 = vmatpush1.bf16.msra.mxu0 0
      %2313 = vmatprep.subr.bf16.mxu0 0
      %2314 = vmatpush1.bf16.msra.mxu0 0
      %2315 = vmatprep.subr.bf16.mxu0 0
      %2316 = vmatpush1.bf16.msra.mxu0 0
      %2317 = vmatprep.subr.bf16.mxu0 0
      %2318 = vmatpush1.bf16.msra.mxu0 0
      %2319 = vmatprep.subr.bf16.mxu0 0
      %2320 = vmatpush1.bf16.msra.mxu0 0
      %2321 = vmatprep.subr.bf16.mxu0 0
      %2322 = vmatpush1.bf16.msra.mxu0 0
      %2323 = vmatprep.subr.bf16.mxu0 0
      %2324 = vmatpush1.bf16.msra.mxu0 0
      %2325 = vmatprep.subr.bf16.mxu0 0
      %2326 = vmatpush1.bf16.msra.mxu0 0
      %2327 = vmatprep.mubr.bf16.mxu0 0
      %2328 = vmatmul.mubr.bf16.gmra.mrb[0].mxu0 %v607
      %v2329 = vpop.f32.mrb[0].mxu0
      %v2330 = vadd.f32 %v464, %v2329
      %v2331 = vpop.f32.mrb[0].mxu0
      %v2332 = vpop.f32.mrb[0].mxu0
      %v2333 = vadd.f32 %v467, %v2332
      %v2334 = vpop.f32.mrb[0].mxu0
      %2335 = vmatprep.mubr.bf16.mxu0 0
      %2336 = vmatmul.mubr.bf16.gmra.mrb[0].mxu0 %v610
      %v2337 = vpop.f32.mrb[0].mxu0
      %v2338 = vadd.f32 %v472, %v2337
      %v2339 = vpop.f32.mrb[0].mxu0
      %v2340 = vpop.f32.mrb[0].mxu0
      %v2341 = vpop.f32.mrb[0].mxu0
      %2342 = vdwg.mxu0
      %v2343 = vmul.f32 %v2330, %v2330
      %v2344 = vmul.f32 %v2333, %v2333
      %v2345 = vmul.f32 %v2338, %v2338
      %v2346 = vmul.f32 %v2330, %v2343
      %v2347 = vmul.f32 %v2333, %v2344
      %v2348 = vmul.f32 %v2338, %v2345
      %v2349 = vmul.f32 %v2346, 0.044715
      %v2350 = vmul.f32 %v2347, 0.044715
      %v2351 = vmul.f32 %v2348, 0.044715
      %v2352 = vadd.f32 %v2330, %v2349
      %v2353 = vadd.f32 %v2333, %v2350
      %v2354 = vadd.f32 %v2338, %v2351
      %v2355 = vmul.f32 %v2352, 0.7978846
      %v2356 = vmul.f32 %v2353, 0.7978846
      %v2357 = vmul.f32 %v2354, 0.7978846
      %v2358 = vtanh.pop %v2355
      %v2359 = vtanh.pop %v2356
      %v2360 = vtanh.pop %v2357
      %v2361 = vadd.f32 %v2358, 1.0
      %v2362 = vadd.f32 %v2359, 1.0
      %v2363 = vadd.f32 %v2360, 1.0
      %v2364 = vmul.f32 %v2361, 0.5
      %v2365 = vmul.f32 %v2362, 0.5
      %v2366 = vmul.f32 %v2363, 0.5
      %v2367 = vmul.f32 %v2330, %v2364
      %v2368 = vmul.f32 %v2333, %v2365
      %v2369 = vmul.f32 %v2338, %v2366
      %v2370 = vpack.c.bf16 %v2368, %v2367
      %v2371 = vpack.c.bf16 %v2369, %v2369
      %v2373 = vsel %vm737, %v2371, 0
      %2375 = vmatprep.subr.bf16.mxu0 0
      %2376 = vmatpush1.bf16.msra.mxu0 %v2370
      %2377 = vmatprep.subr.bf16.mxu0 0
      %2378 = vmatpush1.bf16.msra.mxu0 %v2373
      %2379 = vmatprep.subr.bf16.mxu0 0
      %2380 = vmatpush1.bf16.msra.mxu0 0
      %2381 = vmatprep.subr.bf16.mxu0 0
      %2382 = vmatpush1.bf16.msra.mxu0 0
      %2383 = vmatprep.subr.bf16.mxu0 0
      %2384 = vmatpush1.bf16.msra.mxu0 0
      %2385 = vmatprep.subr.bf16.mxu0 0
      %2386 = vmatpush1.bf16.msra.mxu0 0
      %2387 = vmatprep.subr.bf16.mxu0 0
      %2388 = vmatpush1.bf16.msra.mxu0 0
      %2389 = vmatprep.subr.bf16.mxu0 0
      %2390 = vmatpush1.bf16.msra.mxu0 0
      %2391 = vmatprep.subr.bf16.mxu0 0
      %2392 = vmatpush1.bf16.msra.mxu0 0
      %2393 = vmatprep.subr.bf16.mxu0 0
      %2394 = vmatpush1.bf16.msra.mxu0 0
      %2395 = vmatprep.subr.bf16.mxu0 0
      %2396 = vmatpush1.bf16.msra.mxu0 0
      %2397 = vmatprep.subr.bf16.mxu0 0
      %2398 = vmatpush1.bf16.msra.mxu0 0
      %2399 = vmatprep.subr.bf16.mxu0 0
      %2400 = vmatpush1.bf16.msra.mxu0 0
      %2401 = vmatprep.subr.bf16.mxu0 0
      %2402 = vmatpush1.bf16.msra.mxu0 0
      %2403 = vmatprep.subr.bf16.mxu0 0
      %2404 = vmatpush1.bf16.msra.mxu0 0
      %2405 = vmatprep.subr.bf16.mxu0 0
      %2406 = vmatpush1.bf16.msra.mxu0 0
      %2407 = vmatprep.mubr.bf16.mxu0 0
      %2408 = vmatmul.mubr.bf16.gmra.mrb[0].mxu0 %v732
      %v2409 = vpop.f32.mrb[0].mxu0
      %v2410 = vadd.f32 %v703, %v2409
      %v2411 = vpop.f32.mrb[0].mxu0
      %v2412 = vpop.f32.mrb[0].mxu0
      %v2413 = vadd.f32 %v708, %v2412
      %v2414 = vpop.f32.mrb[0].mxu0
      %2415 = vmatprep.mubr.bf16.mxu0 0
      %2416 = vmatmul.mubr.bf16.gmra.mrb[0].mxu0 %v735
      %v2417 = vpop.f32.mrb[0].mxu0
      %v2418 = vadd.f32 %v713, %v2417
      %v2419 = vpop.f32.mrb[0].mxu0
      %v2420 = vpop.f32.mrb[0].mxu0
      %v2421 = vadd.f32 %v718, %v2420
      %v2422 = vpop.f32.mrb[0].mxu0
      %2423 = vdwg.mxu0
      %v2424 = vmul.f32 %v2410, %v2410
      %v2425 = vmul.f32 %v2413, %v2413
      %v2426 = vmul.f32 %v2418, %v2418
      %v2427 = vmul.f32 %v2421, %v2421
      %v2428 = vmul.f32 %v2410, %v2424
      %v2429 = vmul.f32 %v2413, %v2425
      %v2430 = vmul.f32 %v2418, %v2426
      %v2431 = vmul.f32 %v2421, %v2427
      %v2432 = vmul.f32 %v2428, 0.044715
      %v2433 = vmul.f32 %v2429, 0.044715
      %v2434 = vmul.f32 %v2430, 0.044715
      %v2435 = vmul.f32 %v2431, 0.044715
      %v2436 = vadd.f32 %v2410, %v2432
      %v2437 = vadd.f32 %v2413, %v2433
      %v2438 = vadd.f32 %v2418, %v2434
      %v2439 = vadd.f32 %v2421, %v2435
      %v2440 = vmul.f32 %v2436, 0.7978846
      %v2441 = vmul.f32 %v2437, 0.7978846
      %v2442 = vmul.f32 %v2438, 0.7978846
      %v2443 = vmul.f32 %v2439, 0.7978846
      %v2444 = vtanh.pop %v2440
      %v2445 = vtanh.pop %v2441
      %v2446 = vtanh.pop %v2442
      %v2447 = vtanh.pop %v2443
      %v2448 = vadd.f32 %v2444, 1.0
      %v2449 = vadd.f32 %v2445, 1.0
      %v2450 = vadd.f32 %v2446, 1.0
      %v2451 = vadd.f32 %v2447, 1.0
      %v2452 = vmul.f32 %v2448, 0.5
      %v2453 = vmul.f32 %v2449, 0.5
      %v2454 = vmul.f32 %v2450, 0.5
      %v2455 = vmul.f32 %v2451, 0.5
      %v2456 = vmul.f32 %v2410, %v2452
      %v2457 = vmul.f32 %v2413, %v2453
      %v2458 = vmul.f32 %v2418, %v2454
      %v2459 = vmul.f32 %v2421, %v2455
      %v2460 = vmax.f32 %v2187, %v2456
      %v2461 = vmax.f32 %v2188, %v2457
      %v2462 = vmax.f32 %v2189, %v2458
      %v2463 = vmax.f32 %v2190, %v2459
      %v2464 = vlaneseq
      %v2465 = vshrl.u32 %v2464, 7
      %v2466 = vsub.s32 7, %v2465
      %v2467 = vrot.slane %v387, %v2466
      %vm2468 = vcmp.eq.s32.totalorder %v478, %v2467
      %vm2469 = vcmp.eq.s32.totalorder %v479, %v2467
      %vm2470 = vcmp.eq.s32.totalorder %v480, %v2467
      %vm2471 = vcmp.eq.s32.totalorder %v481, %v2467
      %vm2472 = vcmp.eq.s32.totalorder %v482, %v2467
      %vm2473 = vcmp.eq.s32.totalorder %v483, %v2467
      %vm2474 = vcmp.eq.s32.totalorder %v484, %v2467
      %vm2475 = vcmp.eq.s32.totalorder %v485, %v2467
      %vm2476 = vcmp.eq.s32.totalorder %v486, %v2467
      %vm2477 = vcmp.eq.s32.totalorder %v487, %v2467
      %vm2478 = vcmp.eq.s32.totalorder %v488, %v2467
      %vm2479 = vcmp.eq.s32.totalorder %v489, %v2467
      %vm2480 = vcmp.eq.s32.totalorder %v490, %v2467
      %vm2481 = vcmp.eq.s32.totalorder %v491, %v2467
      %vm2482 = vcmp.eq.s32.totalorder %v492, %v2467
      %vm2483 = vcmp.eq.s32.totalorder %v493, %v2467
      %v2484 = vsel %vm2468, 1, 0
      %v2485 = vsel %vm2469, 1, 0
      %v2486 = vsel %vm2470, 1, 0
      %v2487 = vsel %vm2471, 1, 0
      %v2488 = vsel %vm2472, 1, 0
      %v2489 = vsel %vm2473, 1, 0
      %v2490 = vsel %vm2474, 1, 0
      %v2491 = vsel %vm2475, 1, 0
      %v2492 = vsel %vm2476, 1, 0
      %v2493 = vsel %vm2477, 1, 0
      %v2494 = vsel %vm2478, 1, 0
      %v2495 = vsel %vm2479, 1, 0
      %v2496 = vsel %vm2480, 1, 0
      %v2497 = vsel %vm2481, 1, 0
      %v2498 = vsel %vm2482, 1, 0
      %v2499 = vsel %vm2483, 1, 0
      %v2500 = vcvt.s32.f32 %v2484
      %v2501 = vcvt.s32.f32 %v2485
      %v2502 = vcvt.s32.f32 %v2486
      %v2503 = vcvt.s32.f32 %v2487
      %v2504 = vcvt.s32.f32 %v2488
      %v2505 = vcvt.s32.f32 %v2489
      %v2506 = vcvt.s32.f32 %v2490
      %v2507 = vcvt.s32.f32 %v2491
      %v2508 = vcvt.s32.f32 %v2492
      %v2509 = vcvt.s32.f32 %v2493
      %v2510 = vcvt.s32.f32 %v2494
      %v2511 = vcvt.s32.f32 %v2495
      %v2512 = vcvt.s32.f32 %v2496
      %v2513 = vcvt.s32.f32 %v2497
      %v2514 = vcvt.s32.f32 %v2498
      %v2515 = vcvt.s32.f32 %v2499
      %v2516 = vpack.c.bf16 %v2501, %v2500
      %v2517 = vpack.c.bf16 %v2503, %v2502
      %v2518 = vpack.c.bf16 %v2505, %v2504
      %v2519 = vpack.c.bf16 %v2507, %v2506
      %v2520 = vpack.c.bf16 %v2509, %v2508
      %v2521 = vpack.c.bf16 %v2511, %v2510
      %v2522 = vpack.c.bf16 %v2513, %v2512
      %v2523 = vpack.c.bf16 %v2515, %v2514
      %2524 = vmatprep.subr.bf16.mxu0 0
      %2525 = vmatpush1.bf16.msra.mxu0 %v2516
      %2526 = vmatprep.subr.bf16.mxu0 0
      %2527 = vmatpush1.bf16.msra.mxu0 %v2517
      %2528 = vmatprep.subr.bf16.mxu0 0
      %2529 = vmatpush1.bf16.msra.mxu0 %v2518
      %2530 = vmatprep.subr.bf16.mxu0 0
      %2531 = vmatpush1.bf16.msra.mxu0 %v2519
      %2532 = vmatprep.subr.bf16.mxu0 0
      %2533 = vmatpush1.bf16.msra.mxu0 %v2520
      %2534 = vmatprep.subr.bf16.mxu0 0
      %2535 = vmatpush1.bf16.msra.mxu0 %v2521
      %2536 = vmatprep.subr.bf16.mxu0 0
      %2537 = vmatpush1.bf16.msra.mxu0 %v2522
      %2538 = vmatprep.subr.bf16.mxu0 0
      %2539 = vmatpush1.bf16.msra.mxu0 %v2523
      %2540 = vmatprep.subr.bf16.mxu0 0
      %2541 = vmatpush1.bf16.msra.mxu0 0
      %2542 = vmatprep.subr.bf16.mxu0 0
      %2543 = vmatpush1.bf16.msra.mxu0 0
      %2544 = vmatprep.subr.bf16.mxu0 0
      %2545 = vmatpush1.bf16.msra.mxu0 0
      %2546 = vmatprep.subr.bf16.mxu0 0
      %2547 = vmatpush1.bf16.msra.mxu0 0
      %2548 = vmatprep.subr.bf16.mxu0 0
      %2549 = vmatpush1.bf16.msra.mxu0 0
      %2550 = vmatprep.subr.bf16.mxu0 0
      %2551 = vmatpush1.bf16.msra.mxu0 0
      %2552 = vmatprep.subr.bf16.mxu0 0
      %2553 = vmatpush1.bf16.msra.mxu0 0
      %2554 = vmatprep.subr.bf16.mxu0 0
      %2555 = vmatpush1.bf16.msra.mxu0 0
      %2556 = vmatprep.mubr.bf16.mxu0 0
      %2557 = vmatmul.mubr.bf16.gmra.mrb[0].mxu0 %v384
      %v2558 = vpop.f32.mrb[0].mxu0
      %v2559 = vadd.f32 0.0, %v2558
      %v2560 = vpop.f32.mrb[0].mxu0
      %v2561 = vpop.f32.mrb[0].mxu0
      %v2562 = vpop.f32.mrb[0].mxu0
      %2563 = vdwg.mxu0
      %v2564 = vpack.c.bf16 %v2559, %v2559
      %v2566 = vsel %vm425, %v2564, 0
      %2568 = vmatprep.subr.bf16.mxu0 0
      %2569 = vmatpush1.bf16.msra.mxu0 %v2566
      %2570 = vmatprep.subr.bf16.mxu0 0
      %2571 = vmatpush1.bf16.msra.mxu0 0
      %2572 = vmatprep.subr.bf16.mxu0 0
      %2573 = vmatpush1.bf16.msra.mxu0 0
      %2574 = vmatprep.subr.bf16.mxu0 0
      %2575 = vmatpush1.bf16.msra.mxu0 0
      %2576 = vmatprep.subr.bf16.mxu0 0
      %2577 = vmatpush1.bf16.msra.mxu0 0
      %2578 = vmatprep.subr.bf16.mxu0 0
      %2579 = vmatpush1.bf16.msra.mxu0 0
      %2580 = vmatprep.subr.bf16.mxu0 0
      %2581 = vmatpush1.bf16.msra.mxu0 0
      %2582 = vmatprep.subr.bf16.mxu0 0
      %2583 = vmatpush1.bf16.msra.mxu0 0
      %2584 = vmatprep.subr.bf16.mxu0 0
      %2585 = vmatpush1.bf16.msra.mxu0 0
      %2586 = vmatprep.subr.bf16.mxu0 0
      %2587 = vmatpush1.bf16.msra.mxu0 0
      %2588 = vmatprep.subr.bf16.mxu0 0
      %2589 = vmatpush1.bf16.msra.mxu0 0
      %2590 = vmatprep.subr.bf16.mxu0 0
      %2591 = vmatpush1.bf16.msra.mxu0 0
      %2592 = vmatprep.subr.bf16.mxu0 0
      %2593 = vmatpush1.bf16.msra.mxu0 0
      %2594 = vmatprep.subr.bf16.mxu0 0
      %2595 = vmatpush1.bf16.msra.mxu0 0
      %2596 = vmatprep.subr.bf16.mxu0 0
      %2597 = vmatpush1.bf16.msra.mxu0 0
      %2598 = vmatprep.subr.bf16.mxu0 0
      %2599 = vmatpush1.bf16.msra.mxu0 0
      %2600 = vmatprep.mubr.bf16.mxu0 0
      %2601 = vmatmul.mubr.bf16.gmra.mrb[0].mxu0 %v607
      %v2602 = vpop.f32.mrb[0].mxu0
      %v2603 = vadd.f32 %v464, %v2602
      %v2604 = vpop.f32.mrb[0].mxu0
      %v2605 = vpop.f32.mrb[0].mxu0
      %v2606 = vadd.f32 %v467, %v2605
      %v2607 = vpop.f32.mrb[0].mxu0
      %2608 = vmatprep.mubr.bf16.mxu0 0
      %2609 = vmatmul.mubr.bf16.gmra.mrb[0].mxu0 %v610
      %v2610 = vpop.f32.mrb[0].mxu0
      %v2611 = vadd.f32 %v472, %v2610
      %v2612 = vpop.f32.mrb[0].mxu0
      %v2613 = vpop.f32.mrb[0].mxu0
      %v2614 = vpop.f32.mrb[0].mxu0
      %2615 = vdwg.mxu0
      %v2616 = vmul.f32 %v2603, %v2603
      %v2617 = vmul.f32 %v2606, %v2606
      %v2618 = vmul.f32 %v2611, %v2611
      %v2619 = vmul.f32 %v2603, %v2616
      %v2620 = vmul.f32 %v2606, %v2617
      %v2621 = vmul.f32 %v2611, %v2618
      %v2622 = vmul.f32 %v2619, 0.044715
      %v2623 = vmul.f32 %v2620, 0.044715
      %v2624 = vmul.f32 %v2621, 0.044715
      %v2625 = vadd.f32 %v2603, %v2622
      %v2626 = vadd.f32 %v2606, %v2623
      %v2627 = vadd.f32 %v2611, %v2624
      %v2628 = vmul.f32 %v2625, 0.7978846
      %v2629 = vmul.f32 %v2626, 0.7978846
      %v2630 = vmul.f32 %v2627, 0.7978846
      %v2631 = vtanh.pop %v2628
      %v2632 = vtanh.pop %v2629
      %v2633 = vtanh.pop %v2630
      %v2634 = vadd.f32 %v2631, 1.0
      %v2635 = vadd.f32 %v2632, 1.0
      %v2636 = vadd.f32 %v2633, 1.0
      %v2637 = vmul.f32 %v2634, 0.5
      %v2638 = vmul.f32 %v2635, 0.5
      %v2639 = vmul.f32 %v2636, 0.5
      %v2640 = vmul.f32 %v2603, %v2637
      %v2641 = vmul.f32 %v2606, %v2638
      %v2642 = vmul.f32 %v2611, %v2639
      %v2643 = vpack.c.bf16 %v2641, %v2640
      %v2644 = vpack.c.bf16 %v2642, %v2642
      %v2646 = vsel %vm737, %v2644, 0
      %2648 = vmatprep.subr.bf16.mxu0 0
      %2649 = vmatpush1.bf16.msra.mxu0 %v2643
      %2650 = vmatprep.subr.bf16.mxu0 0
      %2651 = vmatpush1.bf16.msra.mxu0 %v2646
      %2652 = vmatprep.subr.bf16.mxu0 0
      %2653 = vmatpush1.bf16.msra.mxu0 0
      %2654 = vmatprep.subr.bf16.mxu0 0
      %2655 = vmatpush1.bf16.msra.mxu0 0
      %2656 = vmatprep.subr.bf16.mxu0 0
      %2657 = vmatpush1.bf16.msra.mxu0 0
      %2658 = vmatprep.subr.bf16.mxu0 0
      %2659 = vmatpush1.bf16.msra.mxu0 0
      %2660 = vmatprep.subr.bf16.mxu0 0
      %2661 = vmatpush1.bf16.msra.mxu0 0
      %2662 = vmatprep.subr.bf16.mxu0 0
      %2663 = vmatpush1.bf16.msra.mxu0 0
      %2664 = vmatprep.subr.bf16.mxu0 0
      %2665 = vmatpush1.bf16.msra.mxu0 0
      %2666 = vmatprep.subr.bf16.mxu0 0
      %2667 = vmatpush1.bf16.msra.mxu0 0
      %2668 = vmatprep.subr.bf16.mxu0 0
      %2669 = vmatpush1.bf16.msra.mxu0 0
      %2670 = vmatprep.subr.bf16.mxu0 0
      %2671 = vmatpush1.bf16.msra.mxu0 0
      %2672 = vmatprep.subr.bf16.mxu0 0
      %2673 = vmatpush1.bf16.msra.mxu0 0
      %2674 = vmatprep.subr.bf16.mxu0 0
      %2675 = vmatpush1.bf16.msra.mxu0 0
      %2676 = vmatprep.subr.bf16.mxu0 0
      %2677 = vmatpush1.bf16.msra.mxu0 0
      %2678 = vmatprep.subr.bf16.mxu0 0
      %2679 = vmatpush1.bf16.msra.mxu0 0
      %2680 = vmatprep.mubr.bf16.mxu0 0
      %2681 = vmatmul.mubr.bf16.gmra.mrb[0].mxu0 %v732
      %v2682 = vpop.f32.mrb[0].mxu0
      %v2683 = vadd.f32 %v703, %v2682
      %v2684 = vpop.f32.mrb[0].mxu0
      %v2685 = vpop.f32.mrb[0].mxu0
      %v2686 = vadd.f32 %v708, %v2685
      %v2687 = vpop.f32.mrb[0].mxu0
      %2688 = vmatprep.mubr.bf16.mxu0 0
      %2689 = vmatmul.mubr.bf16.gmra.mrb[0].mxu0 %v735
      %v2690 = vpop.f32.mrb[0].mxu0
      %v2691 = vadd.f32 %v713, %v2690
      %v2692 = vpop.f32.mrb[0].mxu0
      %v2693 = vpop.f32.mrb[0].mxu0
      %v2694 = vadd.f32 %v718, %v2693
      %v2695 = vpop.f32.mrb[0].mxu0
      %2696 = vdwg.mxu0
      %v2697 = vmul.f32 %v2683, %v2683
      %v2698 = vmul.f32 %v2686, %v2686
      %v2699 = vmul.f32 %v2691, %v2691
      %v2700 = vmul.f32 %v2694, %v2694
      %v2701 = vmul.f32 %v2683, %v2697
      %v2702 = vmul.f32 %v2686, %v2698
      %v2703 = vmul.f32 %v2691, %v2699
      %v2704 = vmul.f32 %v2694, %v2700
      %v2705 = vmul.f32 %v2701, 0.044715
      %v2706 = vmul.f32 %v2702, 0.044715
      %v2707 = vmul.f32 %v2703, 0.044715
      %v2708 = vmul.f32 %v2704, 0.044715
      %v2709 = vadd.f32 %v2683, %v2705
      %v2710 = vadd.f32 %v2686, %v2706
      %v2711 = vadd.f32 %v2691, %v2707
      %v2712 = vadd.f32 %v2694, %v2708
      %v2713 = vmul.f32 %v2709, 0.7978846
      %v2714 = vmul.f32 %v2710, 0.7978846
      %v2715 = vmul.f32 %v2711, 0.7978846
      %v2716 = vmul.f32 %v2712, 0.7978846
      %v2717 = vtanh.pop %v2713
      %v2718 = vtanh.pop %v2714
      %v2719 = vtanh.pop %v2715
      %v2720 = vtanh.pop %v2716
      %v2721 = vadd.f32 %v2717, 1.0
      %v2722 = vadd.f32 %v2718, 1.0
      %v2723 = vadd.f32 %v2719, 1.0
      %v2724 = vadd.f32 %v2720, 1.0
      %v2725 = vmul.f32 %v2721, 0.5
      %v2726 = vmul.f32 %v2722, 0.5
      %v2727 = vmul.f32 %v2723, 0.5
      %v2728 = vmul.f32 %v2724, 0.5
      %v2729 = vmul.f32 %v2683, %v2725
      %v2730 = vmul.f32 %v2686, %v2726
      %v2731 = vmul.f32 %v2691, %v2727
      %v2732 = vmul.f32 %v2694, %v2728
      %v2733 = vmax.f32 %v2460, %v2729
      %v2734 = vmax.f32 %v2461, %v2730
      %v2735 = vmax.f32 %v2462, %v2731
      %v2736 = vmax.f32 %v2463, %v2732
      %v2737 = vlaneseq
      %v2738 = vshrl.u32 %v2737, 7
      %v2739 = vsub.s32 0, %v2738
      %v2740 = vrot.slane %v388, %v2739
      %vm2741 = vcmp.eq.s32.totalorder %v478, %v2740
      %vm2742 = vcmp.eq.s32.totalorder %v479, %v2740
      %vm2743 = vcmp.eq.s32.totalorder %v480, %v2740
      %vm2744 = vcmp.eq.s32.totalorder %v481, %v2740
      %vm2745 = vcmp.eq.s32.totalorder %v482, %v2740
      %vm2746 = vcmp.eq.s32.totalorder %v483, %v2740
      %vm2747 = vcmp.eq.s32.totalorder %v484, %v2740
      %vm2748 = vcmp.eq.s32.totalorder %v485, %v2740
      %vm2749 = vcmp.eq.s32.totalorder %v486, %v2740
      %vm2750 = vcmp.eq.s32.totalorder %v487, %v2740
      %vm2751 = vcmp.eq.s32.totalorder %v488, %v2740
      %vm2752 = vcmp.eq.s32.totalorder %v489, %v2740
      %vm2753 = vcmp.eq.s32.totalorder %v490, %v2740
      %vm2754 = vcmp.eq.s32.totalorder %v491, %v2740
      %vm2755 = vcmp.eq.s32.totalorder %v492, %v2740
      %vm2756 = vcmp.eq.s32.totalorder %v493, %v2740
      %v2757 = vsel %vm2741, 1, 0
      %v2758 = vsel %vm2742, 1, 0
      %v2759 = vsel %vm2743, 1, 0
      %v2760 = vsel %vm2744, 1, 0
      %v2761 = vsel %vm2745, 1, 0
      %v2762 = vsel %vm2746, 1, 0
      %v2763 = vsel %vm2747, 1, 0
      %v2764 = vsel %vm2748, 1, 0
      %v2765 = vsel %vm2749, 1, 0
      %v2766 = vsel %vm2750, 1, 0
      %v2767 = vsel %vm2751, 1, 0
      %v2768 = vsel %vm2752, 1, 0
      %v2769 = vsel %vm2753, 1, 0
      %v2770 = vsel %vm2754, 1, 0
      %v2771 = vsel %vm2755, 1, 0
      %v2772 = vsel %vm2756, 1, 0
      %v2773 = vcvt.s32.f32 %v2757
      %v2774 = vcvt.s32.f32 %v2758
      %v2775 = vcvt.s32.f32 %v2759
      %v2776 = vcvt.s32.f32 %v2760
      %v2777 = vcvt.s32.f32 %v2761
      %v2778 = vcvt.s32.f32 %v2762
      %v2779 = vcvt.s32.f32 %v2763
      %v2780 = vcvt.s32.f32 %v2764
      %v2781 = vcvt.s32.f32 %v2765
      %v2782 = vcvt.s32.f32 %v2766
      %v2783 = vcvt.s32.f32 %v2767
      %v2784 = vcvt.s32.f32 %v2768
      %v2785 = vcvt.s32.f32 %v2769
      %v2786 = vcvt.s32.f32 %v2770
      %v2787 = vcvt.s32.f32 %v2771
      %v2788 = vcvt.s32.f32 %v2772
      %v2789 = vpack.c.bf16 %v2774, %v2773
      %v2790 = vpack.c.bf16 %v2776, %v2775
      %v2791 = vpack.c.bf16 %v2778, %v2777
      %v2792 = vpack.c.bf16 %v2780, %v2779
      %v2793 = vpack.c.bf16 %v2782, %v2781
      %v2794 = vpack.c.bf16 %v2784, %v2783
      %v2795 = vpack.c.bf16 %v2786, %v2785
      %v2796 = vpack.c.bf16 %v2788, %v2787
      %2797 = vmatprep.subr.bf16.mxu0 0
      %2798 = vmatpush1.bf16.msra.mxu0 %v2789
      %2799 = vmatprep.subr.bf16.mxu0 0
      %2800 = vmatpush1.bf16.msra.mxu0 %v2790
      %2801 = vmatprep.subr.bf16.mxu0 0
      %2802 = vmatpush1.bf16.msra.mxu0 %v2791
      %2803 = vmatprep.subr.bf16.mxu0 0
      %2804 = vmatpush1.bf16.msra.mxu0 %v2792
      %2805 = vmatprep.subr.bf16.mxu0 0
      %2806 = vmatpush1.bf16.msra.mxu0 %v2793
      %2807 = vmatprep.subr.bf16.mxu0 0
      %2808 = vmatpush1.bf16.msra.mxu0 %v2794
      %2809 = vmatprep.subr.bf16.mxu0 0
      %2810 = vmatpush1.bf16.msra.mxu0 %v2795
      %2811 = vmatprep.subr.bf16.mxu0 0
      %2812 = vmatpush1.bf16.msra.mxu0 %v2796
      %2813 = vmatprep.subr.bf16.mxu0 0
      %2814 = vmatpush1.bf16.msra.mxu0 0
      %2815 = vmatprep.subr.bf16.mxu0 0
      %2816 = vmatpush1.bf16.msra.mxu0 0
      %2817 = vmatprep.subr.bf16.mxu0 0
      %2818 = vmatpush1.bf16.msra.mxu0 0
      %2819 = vmatprep.subr.bf16.mxu0 0
      %2820 = vmatpush1.bf16.msra.mxu0 0
      %2821 = vmatprep.subr.bf16.mxu0 0
      %2822 = vmatpush1.bf16.msra.mxu0 0
      %2823 = vmatprep.subr.bf16.mxu0 0
      %2824 = vmatpush1.bf16.msra.mxu0 0
      %2825 = vmatprep.subr.bf16.mxu0 0
      %2826 = vmatpush1.bf16.msra.mxu0 0
      %2827 = vmatprep.subr.bf16.mxu0 0
      %2828 = vmatpush1.bf16.msra.mxu0 0
      %2829 = vmatprep.mubr.bf16.mxu0 0
      %2830 = vmatmul.mubr.bf16.gmra.mrb[0].mxu0 %v384
      %v2831 = vpop.f32.mrb[0].mxu0
      %v2832 = vadd.f32 0.0, %v2831
      %v2833 = vpop.f32.mrb[0].mxu0
      %v2834 = vpop.f32.mrb[0].mxu0
      %v2835 = vpop.f32.mrb[0].mxu0
      %2836 = vdwg.mxu0
      %v2837 = vpack.c.bf16 %v2832, %v2832
      %v2839 = vsel %vm425, %v2837, 0
      %2841 = vmatprep.subr.bf16.mxu0 0
      %2842 = vmatpush1.bf16.msra.mxu0 %v2839
      %2843 = vmatprep.subr.bf16.mxu0 0
      %2844 = vmatpush1.bf16.msra.mxu0 0
      %2845 = vmatprep.subr.bf16.mxu0 0
      %2846 = vmatpush1.bf16.msra.mxu0 0
      %2847 = vmatprep.subr.bf16.mxu0 0
      %2848 = vmatpush1.bf16.msra.mxu0 0
      %2849 = vmatprep.subr.bf16.mxu0 0
      %2850 = vmatpush1.bf16.msra.mxu0 0
      %2851 = vmatprep.subr.bf16.mxu0 0
      %2852 = vmatpush1.bf16.msra.mxu0 0
      %2853 = vmatprep.subr.bf16.mxu0 0
      %2854 = vmatpush1.bf16.msra.mxu0 0
      %2855 = vmatprep.subr.bf16.mxu0 0
      %2856 = vmatpush1.bf16.msra.mxu0 0
      %2857 = vmatprep.subr.bf16.mxu0 0
      %2858 = vmatpush1.bf16.msra.mxu0 0
      %2859 = vmatprep.subr.bf16.mxu0 0
      %2860 = vmatpush1.bf16.msra.mxu0 0
      %2861 = vmatprep.subr.bf16.mxu0 0
      %2862 = vmatpush1.bf16.msra.mxu0 0
      %2863 = vmatprep.subr.bf16.mxu0 0
      %2864 = vmatpush1.bf16.msra.mxu0 0
      %2865 = vmatprep.subr.bf16.mxu0 0
      %2866 = vmatpush1.bf16.msra.mxu0 0
      %2867 = vmatprep.subr.bf16.mxu0 0
      %2868 = vmatpush1.bf16.msra.mxu0 0
      %2869 = vmatprep.subr.bf16.mxu0 0
      %2870 = vmatpush1.bf16.msra.mxu0 0
      %2871 = vmatprep.subr.bf16.mxu0 0
      %2872 = vmatpush1.bf16.msra.mxu0 0
      %2873 = vmatprep.mubr.bf16.mxu0 0
      %2874 = vmatmul.mubr.bf16.gmra.mrb[0].mxu0 %v607
      %v2875 = vpop.f32.mrb[0].mxu0
      %v2876 = vadd.f32 %v464, %v2875
      %v2877 = vpop.f32.mrb[0].mxu0
      %v2878 = vpop.f32.mrb[0].mxu0
      %v2879 = vadd.f32 %v467, %v2878
      %v2880 = vpop.f32.mrb[0].mxu0
      %2881 = vmatprep.mubr.bf16.mxu0 0
      %2882 = vmatmul.mubr.bf16.gmra.mrb[0].mxu0 %v610
      %v2883 = vpop.f32.mrb[0].mxu0
      %v2884 = vadd.f32 %v472, %v2883
      %v2885 = vpop.f32.mrb[0].mxu0
      %v2886 = vpop.f32.mrb[0].mxu0
      %v2887 = vpop.f32.mrb[0].mxu0
      %2888 = vdwg.mxu0
      %v2889 = vmul.f32 %v2876, %v2876
      %v2890 = vmul.f32 %v2879, %v2879
      %v2891 = vmul.f32 %v2884, %v2884
      %v2892 = vmul.f32 %v2876, %v2889
      %v2893 = vmul.f32 %v2879, %v2890
      %v2894 = vmul.f32 %v2884, %v2891
      %v2895 = vmul.f32 %v2892, 0.044715
      %v2896 = vmul.f32 %v2893, 0.044715
      %v2897 = vmul.f32 %v2894, 0.044715
      %v2898 = vadd.f32 %v2876, %v2895
      %v2899 = vadd.f32 %v2879, %v2896
      %v2900 = vadd.f32 %v2884, %v2897
      %v2901 = vmul.f32 %v2898, 0.7978846
      %v2902 = vmul.f32 %v2899, 0.7978846
      %v2903 = vmul.f32 %v2900, 0.7978846
      %v2904 = vtanh.pop %v2901
      %v2905 = vtanh.pop %v2902
      %v2906 = vtanh.pop %v2903
      %v2907 = vadd.f32 %v2904, 1.0
      %v2908 = vadd.f32 %v2905, 1.0
      %v2909 = vadd.f32 %v2906, 1.0
      %v2910 = vmul.f32 %v2907, 0.5
      %v2911 = vmul.f32 %v2908, 0.5
      %v2912 = vmul.f32 %v2909, 0.5
      %v2913 = vmul.f32 %v2876, %v2910
      %v2914 = vmul.f32 %v2879, %v2911
      %v2915 = vmul.f32 %v2884, %v2912
      %v2916 = vpack.c.bf16 %v2914, %v2913
      %v2917 = vpack.c.bf16 %v2915, %v2915
      %v2919 = vsel %vm737, %v2917, 0
      %2921 = vmatprep.subr.bf16.mxu0 0
      %2922 = vmatpush1.bf16.msra.mxu0 %v2916
      %2923 = vmatprep.subr.bf16.mxu0 0
      %2924 = vmatpush1.bf16.msra.mxu0 %v2919
      %2925 = vmatprep.subr.bf16.mxu0 0
      %2926 = vmatpush1.bf16.msra.mxu0 0
      %2927 = vmatprep.subr.bf16.mxu0 0
      %2928 = vmatpush1.bf16.msra.mxu0 0
      %2929 = vmatprep.subr.bf16.mxu0 0
      %2930 = vmatpush1.bf16.msra.mxu0 0
      %2931 = vmatprep.subr.bf16.mxu0 0
      %2932 = vmatpush1.bf16.msra.mxu0 0
      %2933 = vmatprep.subr.bf16.mxu0 0
      %2934 = vmatpush1.bf16.msra.mxu0 0
      %2935 = vmatprep.subr.bf16.mxu0 0
      %2936 = vmatpush1.bf16.msra.mxu0 0
      %2937 = vmatprep.subr.bf16.mxu0 0
      %2938 = vmatpush1.bf16.msra.mxu0 0
      %2939 = vmatprep.subr.bf16.mxu0 0
      %2940 = vmatpush1.bf16.msra.mxu0 0
      %2941 = vmatprep.subr.bf16.mxu0 0
      %2942 = vmatpush1.bf16.msra.mxu0 0
      %2943 = vmatprep.subr.bf16.mxu0 0
      %2944 = vmatpush1.bf16.msra.mxu0 0
      %2945 = vmatprep.subr.bf16.mxu0 0
      %2946 = vmatpush1.bf16.msra.mxu0 0
      %2947 = vmatprep.subr.bf16.mxu0 0
      %2948 = vmatpush1.bf16.msra.mxu0 0
      %2949 = vmatprep.subr.bf16.mxu0 0
      %2950 = vmatpush1.bf16.msra.mxu0 0
      %2951 = vmatprep.subr.bf16.mxu0 0
      %2952 = vmatpush1.bf16.msra.mxu0 0
      %2953 = vmatprep.mubr.bf16.mxu0 0
      %2954 = vmatmul.mubr.bf16.gmra.mrb[0].mxu0 %v732
      %v2955 = vpop.f32.mrb[0].mxu0
      %v2956 = vadd.f32 %v703, %v2955
      %v2957 = vpop.f32.mrb[0].mxu0
      %v2958 = vpop.f32.mrb[0].mxu0
      %v2959 = vadd.f32 %v708, %v2958
      %v2960 = vpop.f32.mrb[0].mxu0
      %2961 = vmatprep.mubr.bf16.mxu0 0
      %2962 = vmatmul.mubr.bf16.gmra.mrb[0].mxu0 %v735
      %v2963 = vpop.f32.mrb[0].mxu0
      %v2964 = vadd.f32 %v713, %v2963
      %v2965 = vpop.f32.mrb[0].mxu0
      %v2966 = vpop.f32.mrb[0].mxu0
      %v2967 = vadd.f32 %v718, %v2966
      %v2968 = vpop.f32.mrb[0].mxu0
      %2969 = vdwg.mxu0
      %v2970 = vmul.f32 %v2956, %v2956
      %v2971 = vmul.f32 %v2959, %v2959
      %v2972 = vmul.f32 %v2964, %v2964
      %v2973 = vmul.f32 %v2967, %v2967
      %v2974 = vmul.f32 %v2956, %v2970
      %v2975 = vmul.f32 %v2959, %v2971
      %v2976 = vmul.f32 %v2964, %v2972
      %v2977 = vmul.f32 %v2967, %v2973
      %v2978 = vmul.f32 %v2974, 0.044715
      %v2979 = vmul.f32 %v2975, 0.044715
      %v2980 = vmul.f32 %v2976, 0.044715
      %v2981 = vmul.f32 %v2977, 0.044715
      %v2982 = vadd.f32 %v2956, %v2978
      %v2983 = vadd.f32 %v2959, %v2979
      %v2984 = vadd.f32 %v2964, %v2980
      %v2985 = vadd.f32 %v2967, %v2981
      %v2986 = vmul.f32 %v2982, 0.7978846
      %v2987 = vmul.f32 %v2983, 0.7978846
      %v2988 = vmul.f32 %v2984, 0.7978846
      %v2989 = vmul.f32 %v2985, 0.7978846
      %v2990 = vtanh.pop %v2986
      %v2991 = vtanh.pop %v2987
      %v2992 = vtanh.pop %v2988
      %v2993 = vtanh.pop %v2989
      %v2994 = vadd.f32 %v2990, 1.0
      %v2995 = vadd.f32 %v2991, 1.0
      %v2996 = vadd.f32 %v2992, 1.0
      %v2997 = vadd.f32 %v2993, 1.0
      %v2998 = vmul.f32 %v2994, 0.5
      %v2999 = vmul.f32 %v2995, 0.5
      %v3000 = vmul.f32 %v2996, 0.5
      %v3001 = vmul.f32 %v2997, 0.5
      %v3002 = vmul.f32 %v2956, %v2998
      %v3003 = vmul.f32 %v2959, %v2999
      %v3004 = vmul.f32 %v2964, %v3000
      %v3005 = vmul.f32 %v2967, %v3001
      %v3006 = vmax.f32 %v2733, %v3002
      %v3007 = vmax.f32 %v2734, %v3003
      %v3008 = vmax.f32 %v2735, %v3004
      %v3009 = vmax.f32 %v2736, %v3005
      %v3010 = vlaneseq
      %v3011 = vshrl.u32 %v3010, 7
      %v3012 = vsub.s32 1, %v3011
      %v3013 = vrot.slane %v388, %v3012
      %vm3014 = vcmp.eq.s32.totalorder %v478, %v3013
      %vm3015 = vcmp.eq.s32.totalorder %v479, %v3013
      %vm3016 = vcmp.eq.s32.totalorder %v480, %v3013
      %vm3017 = vcmp.eq.s32.totalorder %v481, %v3013
      %vm3018 = vcmp.eq.s32.totalorder %v482, %v3013
      %vm3019 = vcmp.eq.s32.totalorder %v483, %v3013
      %vm3020 = vcmp.eq.s32.totalorder %v484, %v3013
      %vm3021 = vcmp.eq.s32.totalorder %v485, %v3013
      %vm3022 = vcmp.eq.s32.totalorder %v486, %v3013
      %vm3023 = vcmp.eq.s32.totalorder %v487, %v3013
      %vm3024 = vcmp.eq.s32.totalorder %v488, %v3013
      %vm3025 = vcmp.eq.s32.totalorder %v489, %v3013
      %vm3026 = vcmp.eq.s32.totalorder %v490, %v3013
      %vm3027 = vcmp.eq.s32.totalorder %v491, %v3013
      %vm3028 = vcmp.eq.s32.totalorder %v492, %v3013
      %vm3029 = vcmp.eq.s32.totalorder %v493, %v3013
      %v3030 = vsel %vm3014, 1, 0
      %v3031 = vsel %vm3015, 1, 0
      %v3032 = vsel %vm3016, 1, 0
      %v3033 = vsel %vm3017, 1, 0
      %v3034 = vsel %vm3018, 1, 0
      %v3035 = vsel %vm3019, 1, 0
      %v3036 = vsel %vm3020, 1, 0
      %v3037 = vsel %vm3021, 1, 0
      %v3038 = vsel %vm3022, 1, 0
      %v3039 = vsel %vm3023, 1, 0
      %v3040 = vsel %vm3024, 1, 0
      %v3041 = vsel %vm3025, 1, 0
      %v3042 = vsel %vm3026, 1, 0
      %v3043 = vsel %vm3027, 1, 0
      %v3044 = vsel %vm3028, 1, 0
      %v3045 = vsel %vm3029, 1, 0
      %v3046 = vcvt.s32.f32 %v3030
      %v3047 = vcvt.s32.f32 %v3031
      %v3048 = vcvt.s32.f32 %v3032
      %v3049 = vcvt.s32.f32 %v3033
      %v3050 = vcvt.s32.f32 %v3034
      %v3051 = vcvt.s32.f32 %v3035
      %v3052 = vcvt.s32.f32 %v3036
      %v3053 = vcvt.s32.f32 %v3037
      %v3054 = vcvt.s32.f32 %v3038
      %v3055 = vcvt.s32.f32 %v3039
      %v3056 = vcvt.s32.f32 %v3040
      %v3057 = vcvt.s32.f32 %v3041
      %v3058 = vcvt.s32.f32 %v3042
      %v3059 = vcvt.s32.f32 %v3043
      %v3060 = vcvt.s32.f32 %v3044
      %v3061 = vcvt.s32.f32 %v3045
      %v3062 = vpack.c.bf16 %v3047, %v3046
      %v3063 = vpack.c.bf16 %v3049, %v3048
      %v3064 = vpack.c.bf16 %v3051, %v3050
      %v3065 = vpack.c.bf16 %v3053, %v3052
      %v3066 = vpack.c.bf16 %v3055, %v3054
      %v3067 = vpack.c.bf16 %v3057, %v3056
      %v3068 = vpack.c.bf16 %v3059, %v3058
      %v3069 = vpack.c.bf16 %v3061, %v3060
      %3070 = vmatprep.subr.bf16.mxu0 0
      %3071 = vmatpush1.bf16.msra.mxu0 %v3062
      %3072 = vmatprep.subr.bf16.mxu0 0
      %3073 = vmatpush1.bf16.msra.mxu0 %v3063
      %3074 = vmatprep.subr.bf16.mxu0 0
      %3075 = vmatpush1.bf16.msra.mxu0 %v3064
      %3076 = vmatprep.subr.bf16.mxu0 0
      %3077 = vmatpush1.bf16.msra.mxu0 %v3065
      %3078 = vmatprep.subr.bf16.mxu0 0
      %3079 = vmatpush1.bf16.msra.mxu0 %v3066
      %3080 = vmatprep.subr.bf16.mxu0 0
      %3081 = vmatpush1.bf16.msra.mxu0 %v3067
      %3082 = vmatprep.subr.bf16.mxu0 0
      %3083 = vmatpush1.bf16.msra.mxu0 %v3068
      %3084 = vmatprep.subr.bf16.mxu0 0
      %3085 = vmatpush1.bf16.msra.mxu0 %v3069
      %3086 = vmatprep.subr.bf16.mxu0 0
      %3087 = vmatpush1.bf16.msra.mxu0 0
      %3088 = vmatprep.subr.bf16.mxu0 0
      %3089 = vmatpush1.bf16.msra.mxu0 0
      %3090 = vmatprep.subr.bf16.mxu0 0
      %3091 = vmatpush1.bf16.msra.mxu0 0
      %3092 = vmatprep.subr.bf16.mxu0 0
      %3093 = vmatpush1.bf16.msra.mxu0 0
      %3094 = vmatprep.subr.bf16.mxu0 0
      %3095 = vmatpush1.bf16.msra.mxu0 0
      %3096 = vmatprep.subr.bf16.mxu0 0
      %3097 = vmatpush1.bf16.msra.mxu0 0
      %3098 = vmatprep.subr.bf16.mxu0 0
      %3099 = vmatpush1.bf16.msra.mxu0 0
      %3100 = vmatprep.subr.bf16.mxu0 0
      %3101 = vmatpush1.bf16.msra.mxu0 0
      %3102 = vmatprep.mubr.bf16.mxu0 0
      %3103 = vmatmul.mubr.bf16.gmra.mrb[0].mxu0 %v384
      %v3104 = vpop.f32.mrb[0].mxu0
      %v3105 = vadd.f32 0.0, %v3104
      %v3106 = vpop.f32.mrb[0].mxu0
      %v3107 = vpop.f32.mrb[0].mxu0
      %v3108 = vpop.f32.mrb[0].mxu0
      %3109 = vdwg.mxu0
      %v3110 = vpack.c.bf16 %v3105, %v3105
      %v3112 = vsel %vm425, %v3110, 0
      %3114 = vmatprep.subr.bf16.mxu0 0
      %3115 = vmatpush1.bf16.msra.mxu0 %v3112
      %3116 = vmatprep.subr.bf16.mxu0 0
      %3117 = vmatpush1.bf16.msra.mxu0 0
      %3118 = vmatprep.subr.bf16.mxu0 0
      %3119 = vmatpush1.bf16.msra.mxu0 0
      %3120 = vmatprep.subr.bf16.mxu0 0
      %3121 = vmatpush1.bf16.msra.mxu0 0
      %3122 = vmatprep.subr.bf16.mxu0 0
      %3123 = vmatpush1.bf16.msra.mxu0 0
      %3124 = vmatprep.subr.bf16.mxu0 0
      %3125 = vmatpush1.bf16.msra.mxu0 0
      %3126 = vmatprep.subr.bf16.mxu0 0
      %3127 = vmatpush1.bf16.msra.mxu0 0
      %3128 = vmatprep.subr.bf16.mxu0 0
      %3129 = vmatpush1.bf16.msra.mxu0 0
      %3130 = vmatprep.subr.bf16.mxu0 0
      %3131 = vmatpush1.bf16.msra.mxu0 0
      %3132 = vmatprep.subr.bf16.mxu0 0
      %3133 = vmatpush1.bf16.msra.mxu0 0
      %3134 = vmatprep.subr.bf16.mxu0 0
      %3135 = vmatpush1.bf16.msra.mxu0 0
      %3136 = vmatprep.subr.bf16.mxu0 0
      %3137 = vmatpush1.bf16.msra.mxu0 0
      %3138 = vmatprep.subr.bf16.mxu0 0
      %3139 = vmatpush1.bf16.msra.mxu0 0
      %3140 = vmatprep.subr.bf16.mxu0 0
      %3141 = vmatpush1.bf16.msra.mxu0 0
      %3142 = vmatprep.subr.bf16.mxu0 0
      %3143 = vmatpush1.bf16.msra.mxu0 0
      %3144 = vmatprep.subr.bf16.mxu0 0
      %3145 = vmatpush1.bf16.msra.mxu0 0
      %3146 = vmatprep.mubr.bf16.mxu0 0
      %3147 = vmatmul.mubr.bf16.gmra.mrb[0].mxu0 %v607
      %v3148 = vpop.f32.mrb[0].mxu0
      %v3149 = vadd.f32 %v464, %v3148
      %v3150 = vpop.f32.mrb[0].mxu0
      %v3151 = vpop.f32.mrb[0].mxu0
      %v3152 = vadd.f32 %v467, %v3151
      %v3153 = vpop.f32.mrb[0].mxu0
      %3154 = vmatprep.mubr.bf16.mxu0 0
      %3155 = vmatmul.mubr.bf16.gmra.mrb[0].mxu0 %v610
      %v3156 = vpop.f32.mrb[0].mxu0
      %v3157 = vadd.f32 %v472, %v3156
      %v3158 = vpop.f32.mrb[0].mxu0
      %v3159 = vpop.f32.mrb[0].mxu0
      %v3160 = vpop.f32.mrb[0].mxu0
      %3161 = vdwg.mxu0
      %v3162 = vmul.f32 %v3149, %v3149
      %v3163 = vmul.f32 %v3152, %v3152
      %v3164 = vmul.f32 %v3157, %v3157
      %v3165 = vmul.f32 %v3149, %v3162
      %v3166 = vmul.f32 %v3152, %v3163
      %v3167 = vmul.f32 %v3157, %v3164
      %v3168 = vmul.f32 %v3165, 0.044715
      %v3169 = vmul.f32 %v3166, 0.044715
      %v3170 = vmul.f32 %v3167, 0.044715
      %v3171 = vadd.f32 %v3149, %v3168
      %v3172 = vadd.f32 %v3152, %v3169
      %v3173 = vadd.f32 %v3157, %v3170
      %v3174 = vmul.f32 %v3171, 0.7978846
      %v3175 = vmul.f32 %v3172, 0.7978846
      %v3176 = vmul.f32 %v3173, 0.7978846
      %v3177 = vtanh.pop %v3174
      %v3178 = vtanh.pop %v3175
      %v3179 = vtanh.pop %v3176
      %v3180 = vadd.f32 %v3177, 1.0
      %v3181 = vadd.f32 %v3178, 1.0
      %v3182 = vadd.f32 %v3179, 1.0
      %v3183 = vmul.f32 %v3180, 0.5
      %v3184 = vmul.f32 %v3181, 0.5
      %v3185 = vmul.f32 %v3182, 0.5
      %v3186 = vmul.f32 %v3149, %v3183
      %v3187 = vmul.f32 %v3152, %v3184
      %v3188 = vmul.f32 %v3157, %v3185
      %v3189 = vpack.c.bf16 %v3187, %v3186
      %v3190 = vpack.c.bf16 %v3188, %v3188
      %v3192 = vsel %vm737, %v3190, 0
      %3194 = vmatprep.subr.bf16.mxu0 0
      %3195 = vmatpush1.bf16.msra.mxu0 %v3189
      %3196 = vmatprep.subr.bf16.mxu0 0
      %3197 = vmatpush1.bf16.msra.mxu0 %v3192
      %3198 = vmatprep.subr.bf16.mxu0 0
      %3199 = vmatpush1.bf16.msra.mxu0 0
      %3200 = vmatprep.subr.bf16.mxu0 0
      %3201 = vmatpush1.bf16.msra.mxu0 0
      %3202 = vmatprep.subr.bf16.mxu0 0
      %3203 = vmatpush1.bf16.msra.mxu0 0
      %3204 = vmatprep.subr.bf16.mxu0 0
      %3205 = vmatpush1.bf16.msra.mxu0 0
      %3206 = vmatprep.subr.bf16.mxu0 0
      %3207 = vmatpush1.bf16.msra.mxu0 0
      %3208 = vmatprep.subr.bf16.mxu0 0
      %3209 = vmatpush1.bf16.msra.mxu0 0
      %3210 = vmatprep.subr.bf16.mxu0 0
      %3211 = vmatpush1.bf16.msra.mxu0 0
      %3212 = vmatprep.subr.bf16.mxu0 0
      %3213 = vmatpush1.bf16.msra.mxu0 0
      %3214 = vmatprep.subr.bf16.mxu0 0
      %3215 = vmatpush1.bf16.msra.mxu0 0
      %3216 = vmatprep.subr.bf16.mxu0 0
      %3217 = vmatpush1.bf16.msra.mxu0 0
      %3218 = vmatprep.subr.bf16.mxu0 0
      %3219 = vmatpush1.bf16.msra.mxu0 0
      %3220 = vmatprep.subr.bf16.mxu0 0
      %3221 = vmatpush1.bf16.msra.mxu0 0
      %3222 = vmatprep.subr.bf16.mxu0 0
      %3223 = vmatpush1.bf16.msra.mxu0 0
      %3224 = vmatprep.subr.bf16.mxu0 0
      %3225 = vmatpush1.bf16.msra.mxu0 0
      %3226 = vmatprep.mubr.bf16.mxu0 0
      %3227 = vmatmul.mubr.bf16.gmra.mrb[0].mxu0 %v732
      %v3228 = vpop.f32.mrb[0].mxu0
      %v3229 = vadd.f32 %v703, %v3228
      %v3230 = vpop.f32.mrb[0].mxu0
      %v3231 = vpop.f32.mrb[0].mxu0
      %v3232 = vadd.f32 %v708, %v3231
      %v3233 = vpop.f32.mrb[0].mxu0
      %3234 = vmatprep.mubr.bf16.mxu0 0
      %3235 = vmatmul.mubr.bf16.gmra.mrb[0].mxu0 %v735
      %v3236 = vpop.f32.mrb[0].mxu0
      %v3237 = vadd.f32 %v713, %v3236
      %v3238 = vpop.f32.mrb[0].mxu0
      %v3239 = vpop.f32.mrb[0].mxu0
      %v3240 = vadd.f32 %v718, %v3239
      %v3241 = vpop.f32.mrb[0].mxu0
      %3242 = vdwg.mxu0
      %v3243 = vmul.f32 %v3229, %v3229
      %v3244 = vmul.f32 %v3232, %v3232
      %v3245 = vmul.f32 %v3237, %v3237
      %v3246 = vmul.f32 %v3240, %v3240
      %v3247 = vmul.f32 %v3229, %v3243
      %v3248 = vmul.f32 %v3232, %v3244
      %v3249 = vmul.f32 %v3237, %v3245
      %v3250 = vmul.f32 %v3240, %v3246
      %v3251 = vmul.f32 %v3247, 0.044715
      %v3252 = vmul.f32 %v3248, 0.044715
      %v3253 = vmul.f32 %v3249, 0.044715
      %v3254 = vmul.f32 %v3250, 0.044715
      %v3255 = vadd.f32 %v3229, %v3251
      %v3256 = vadd.f32 %v3232, %v3252
      %v3257 = vadd.f32 %v3237, %v3253
      %v3258 = vadd.f32 %v3240, %v3254
      %v3259 = vmul.f32 %v3255, 0.7978846
      %v3260 = vmul.f32 %v3256, 0.7978846
      %v3261 = vmul.f32 %v3257, 0.7978846
      %v3262 = vmul.f32 %v3258, 0.7978846
      %v3263 = vtanh.pop %v3259
      %v3264 = vtanh.pop %v3260
      %v3265 = vtanh.pop %v3261
      %v3266 = vtanh.pop %v3262
      %v3267 = vadd.f32 %v3263, 1.0
      %v3268 = vadd.f32 %v3264, 1.0
      %v3269 = vadd.f32 %v3265, 1.0
      %v3270 = vadd.f32 %v3266, 1.0
      %v3271 = vmul.f32 %v3267, 0.5
      %v3272 = vmul.f32 %v3268, 0.5
      %v3273 = vmul.f32 %v3269, 0.5
      %v3274 = vmul.f32 %v3270, 0.5
      %v3275 = vmul.f32 %v3229, %v3271
      %v3276 = vmul.f32 %v3232, %v3272
      %v3277 = vmul.f32 %v3237, %v3273
      %v3278 = vmul.f32 %v3240, %v3274
      %v3279 = vmax.f32 %v3006, %v3275
      %v3280 = vmax.f32 %v3007, %v3276
      %v3281 = vmax.f32 %v3008, %v3277
      %v3282 = vmax.f32 %v3009, %v3278
      %3283 = vst [vmem:[%s381] sm:$0xff] %v3279
      %3284 = vst [vmem:[%s381 + $0x8] sm:$0xff] %v3280
      %3285 = vst [vmem:[%s381 + $0x10] sm:$0xff] %v3281
      %3286 = vst [vmem:[%s381 + $0x18] sm:$0xff] %v3282
      %p3287 = scmp.lt.s32.totalorder %s23, 1
      %s3288 = scalar_select %p3287, %s23, 1
      %p3289 = scmp.lt.s32.totalorder %s24, 0
      %s3290 = scalar_select %p3289, %s24, 0
      %s3291 = smul.addr %s3288, 4
      %s3292 = sadd.s32 %s3290, %s3291
      %s3293 = smul.addr %s3292, 8
      %s3294 = scalar_lea.vmem %s8, %s3293
      // Predicated region
      $region53: #{_lambda_.8} parent=51 // pred_check
        %p3295 = pneg %p238
      $region54: #{_lambda_.8} parent=51 // pred_check_branch
        %3297 = sbr.rel (%p3295) target = $region56
      $region55: #{_lambda_.8} parent=51 // pred_region
        _
      $region56: #{_lambda_.8} parent=51 // pred_fallthru
        _
    $region52: #{_lambda_.8} parent=5 // pred_fallthru
      _
    %p3298 = scmp.le.s32.totalorder 2, %s14
    // Predicated region
    $region57: #{_lambda_.8} parent=5 // pred_check
      %p3299 = pneg %p3298
    $region58: #{_lambda_.8} parent=5 // pred_check_branch
      %3301 = sbr.rel (%p3299) target = $region60
    $region59: #{_lambda_.8} parent=5 // pred_region
      %s3302 = ssub.s32 %s14, 2
      // Predicated region
      $region61: #{_lambda_.8} parent=59 // pred_check
        %p3303 = pneg %p244
      $region62: #{_lambda_.8} parent=59 // pred_check_branch
        %3305 = sbr.rel (%p3303) target = $region64
      $region63: #{_lambda_.8} parent=59 // pred_region
        %p3306 = scmp.lt.s32.totalorder %s25, 1
        %s3307 = scalar_select %p3306, %s25, 1
        %p3308 = scmp.lt.s32.totalorder %s26, 0
        %s3309 = scalar_select %p3308, %s26, 0
        %s3310 = smul.addr %s3307, 4
        %s3311 = sadd.s32 %s3309, %s3310
        %s3312 = smul.addr %s3311, 8
        %s3313 = scalar_lea.vmem %s8, %s3312
      $region64: #{_lambda_.8} parent=59 // pred_fallthru
        _
    $region60: #{_lambda_.8} parent=5 // pred_fallthru
      _
  $region6: #{_lambda_.8} parent=0 // loop_footer
    %s18 = sadd.s32 1, %s14
  $region7: #{_lambda_.8} parent=0 // loop_footer_branch
    %13 = sbr.rel target = $region3
  $region8: #{_lambda_.8} parent=0 // loop_exit
    _

</llo_original>
